<compile_context>
chip_gen: v7x
topology: tpu7x:2x2x1
jax: 0.10.0
libtpu: 0.0.40
codegen_flags: <defaults>
</compile_context>

<pallas_src>
import jax
import jax.numpy as jnp
import numpy as np
from jax import lax
from jax.experimental import pallas as pl
from jax.experimental.pallas import tpu as pltpu

N_MFCCS = 20          # stands in for config.json's n_mfccs
INPUT_HEIGHT = 248    # time axis; ((248-4)//2 - 4)//2 == 59 as hard-coded in fc1
KSIZE = 5
COUT1, COUT2 = 6, 16

# Derived layout constants (hard-wired by fc1's 16*59*2 input size).
W_IN = N_MFCCS        # 20
W_PAD = 32            # input width padded so 4 rows pack into exactly 128 lanes
XR_ROWS = 73          # padded input height / 4
H_PAD = 4 * XR_ROWS   # 292
M1 = 72               # conv1 "super rows" per image (4 conv1 rows each), mult of 8
M2 = 64               # conv2 super rows per image (2 conv2 rows each), mult of 8
K1, N1 = 256, 512     # conv1 GEMM: K = 2 x 128-lane row quads, N = (wpar,gin,hpar,c,j')
K2, N2 = 384, 128     # conv2 GEMM: K = 3 x 128-lane pooled row pairs, N = (wpar,g,o,j)
D_FLAT = COUT2 * 59 * 2   # 1888
D_PAD = M2 * 32           # 2048 (fc1 rows zero-padded so the flatten is a bitcast)
TB = 8                # images per conv-kernel grid step


# ---------------------------------------------------------------------------
# Kernel 1: fused conv1 -> ReLU -> pool -> conv2 -> ReLU -> pool (TB images)
# ---------------------------------------------------------------------------
def _conv_stack_kernel(xr_ref, r1_ref, b1_ref, r2_ref, b2_ref, o_ref, p1_ref):
    """xr_ref : (TB, 73, 128) bf16  input, 4 padded rows of 32 per lane group
       r1_ref : (256, 512)    bf16  conv1 Toeplitz weights (K-concatenated)
       b1_ref : (1, 128)      f32   conv1 bias tiled over (hpar, c, j')
       r2_ref : (384, 128)    bf16  conv2 Toeplitz weights (K-concatenated)
       b2_ref : (1, 32)       f32   conv2 bias tiled over (o, j)
       o_ref  : (TB, 64, 32)  bf16  pooled conv2 output, cols = (o, j)
       p1_ref : (TB, 72, 128) bf16  scratch: pooled conv1, cols = (hpar, c, j')
    """
    tb = xr_ref.shape[0]

    # ---- conv1: one GEMM; K = 8 input rows (two 128-lane quads) ------------
    l1 = jnp.concatenate([xr_ref[:, 0:M1, :], xr_ref[:, 1:M1 + 1, :]], axis=-1)
    y1 = jnp.dot(l1.reshape(tb * M1, K1), r1_ref[...],
                 preferred_element_type=jnp.float32).reshape(tb, M1, N1)
    wp1 = jnp.maximum(y1[..., :256], y1[..., 256:])     # 2x1 width max-pool
    hp1 = jnp.maximum(wp1[..., :128], wp1[..., 128:])    # 2x1 height max-pool
    p1_ref[...] = jnp.maximum(hp1 + b1_ref[...].reshape(1, 1, 128),
                              0.0).astype(p1_ref.dtype)

    # ---- conv2: one GEMM; K = 6 pooled rows (three 128-lane pairs) ---------
    l2 = jnp.concatenate([p1_ref[:, 0:M2, :], p1_ref[:, 1:M2 + 1, :],
                          p1_ref[:, 2:M2 + 2, :]], axis=-1)
    y2 = jnp.dot(l2.reshape(tb * M2, K2), r2_ref[...],
                 preferred_element_type=jnp.float32).reshape(tb, M2, N2)
    wp2 = jnp.maximum(y2[..., :64], y2[..., 64:])        # 2x1 width max-pool
    hp2 = jnp.maximum(wp2[..., :32], wp2[..., 32:])      # 2x1 height max-pool
    o_ref[...] = jnp.maximum(hp2 + b2_ref[...].reshape(1, 1, 32),
                             0.0).astype(o_ref.dtype)


def _conv_stack(xr, r1, b1t, r2, b2t):
    bp = xr.shape[0]
    grid = (bp // TB,)
    flops = 2 * bp * (M1 * K1 * N1 + M2 * K2 * N2)
    bytes_acc = (2 * (int(xr.size) + int(r1.size) + int(r2.size))
                 + 4 * (int(b1t.size) + int(b2t.size)) + 2 * bp * M2 * 32)
    return pl.pallas_call(
        _conv_stack_kernel,
        out_shape=jax.ShapeDtypeStruct((bp, M2, 32), jnp.bfloat16),
        grid=grid,
        in_specs=[
            pl.BlockSpec((TB, XR_ROWS, 128), lambda i: (i, 0, 0)),
            pl.BlockSpec((K1, N1), lambda i: (0, 0)),
            pl.BlockSpec((1, 128), lambda i: (0, 0)),
            pl.BlockSpec((K2, N2), lambda i: (0, 0)),
            pl.BlockSpec((1, 32), lambda i: (0, 0)),
        ],
        out_specs=pl.BlockSpec((TB, M2, 32), lambda i: (i, 0, 0)),
        scratch_shapes=[pltpu.VMEM((TB, M1, 128), jnp.bfloat16)],
        compiler_params=pltpu.CompilerParams(
            dimension_semantics=("parallel",),
            vmem_limit_bytes=32 * 1024 * 1024),
        cost_estimate=pl.CostEstimate(flops=int(flops), transcendentals=0,
                                      bytes_accessed=int(bytes_acc)),
    )(xr, r1, b1t, r2, b2t)


# ---------------------------------------------------------------------------
# Kernel 2: fused FC head (fc1+ReLU, fc2+ReLU, fc3+sigmoid), weights resident
# ---------------------------------------------------------------------------
def _fc_head_kernel(f_ref, w1_ref, b1_ref, w2_ref, b2_ref, w3_ref, b3_ref,
                    o_ref):
    h = jnp.dot(f_ref[...], w1_ref[...], preferred_element_type=jnp.float32)
    h = jnp.maximum(h + b1_ref[...], 0.0).astype(jnp.bfloat16)
    h = jnp.dot(h, w2_ref[...], preferred_element_type=jnp.float32)
    h = jnp.maximum(h + b2_ref[...], 0.0)
    # fc3 (128 -> 1) on the VPU/XLU: an N=1 MXU pass would be >99% padding.
    z = jnp.sum(h * w3_ref[...], axis=-1, keepdims=True) + b3_ref[...]
    o_ref[...] = jax.nn.sigmoid(z)


def _fc_head(feats, w1, b1, w2, b2, w3, b3):
    bp, d_in = feats.shape
    tm = 512 if bp >= 512 else bp            # bp is a multiple of 8
    bp2 = pl.cdiv(bp, tm) * tm
    if bp2 != bp:
        feats = jnp.pad(feats, ((0, bp2 - bp), (0, 0)))
    flops = 2 * bp2 * (d_in * w1.shape[1] + w2.shape[0] * w2.shape[1] + 128)
    bytes_acc = (2 * (bp2 * d_in + int(w1.size) + int(w2.size))
                 + 4 * (bp2 + int(b1.size) + int(b2.size) + int(w3.size) + 1))
    out = pl.pallas_call(
        _fc_head_kernel,
        out_shape=jax.ShapeDtypeStruct((bp2, 1), jnp.float32),
        grid=(bp2 // tm,),
        in_specs=[
            pl.BlockSpec((tm, d_in), lambda i: (i, 0)),
            pl.BlockSpec(w1.shape, lambda i: (0, 0)),
            pl.BlockSpec(b1.shape, lambda i: (0, 0)),
            pl.BlockSpec(w2.shape, lambda i: (0, 0)),
            pl.BlockSpec(b2.shape, lambda i: (0, 0)),
            pl.BlockSpec(w3.shape, lambda i: (0, 0)),
            pl.BlockSpec(b3.shape, lambda i: (0, 0)),
        ],
        out_specs=pl.BlockSpec((tm, 1), lambda i: (i, 0)),
        compiler_params=pltpu.CompilerParams(
            dimension_semantics=("parallel",),
            vmem_limit_bytes=32 * 1024 * 1024),
        cost_estimate=pl.CostEstimate(flops=int(flops), transcendentals=int(bp2),
                                      bytes_accessed=int(bytes_acc)),
    )(feats, w1, b1, w2, b2, w3, b3)
    return out[:bp]


# ---------------------------------------------------------------------------
# Host-side (one-time) repacking of PyTorch-layout params into kernel layout
# ---------------------------------------------------------------------------
def _build_conv1_tables(conv1_w, conv1_b):
    """R1[k, col]: k = 128*a + 32*j + w  (input row offset dr = 4a+j, col w);
    col = 256*wpar + 128*gin + 48*hpar + 8*c + j'  holds conv1 output row
    4m + 2*hpar + gin, column 2*j' + wpar, channel c."""
    w = np.asarray(conv1_w, np.float32)
    b = np.asarray(conv1_b, np.float32)
    cout = w.shape[0]
    r1 = np.zeros((K1, N1), np.float32)
    for a in range(2):
        for j in range(4):
            dr = 4 * a + j
            for wi in range(W_IN):
                row = 128 * a + W_PAD * j + wi
                for hpar in range(2):
                    for gin in range(2):
                        di = dr - (2 * hpar + gin)
                        if di < 0 or di >= KSIZE:
                            continue
                        for wpar in range(2):
                            for jp in range(8):
                                dj = wi - (2 * jp + wpar)
                                if dj < 0 or dj >= KSIZE:
                                    continue
                                col = 256 * wpar + 128 * gin + 48 * hpar + jp
                                r1[row, col + 8 * np.arange(cout)] = w[:, 0, di, dj]
    b1t = np.zeros((1, 128), np.float32)
    for hpar in range(2):
        for c in range(cout):
            b1t[0, 48 * hpar + 8 * c: 48 * hpar + 8 * c + 8] = b[c]
    return r1, b1t


def _build_conv2_tables(conv2_w, conv2_b):
    """R2[k, col]: k = 128*a + 48*e2 + 8*c + j' (pooled row offset e = 2a+e2);
    col = 64*wpar + 32*g + 2*o + j holds conv2 output row 2n+g, column 2j+wpar."""
    w = np.asarray(conv2_w, np.float32)
    b = np.asarray(conv2_b, np.float32)
    cout, cin = w.shape[0], w.shape[1]
    r2 = np.zeros((K2, N2), np.float32)
    for a in range(3):
        for e2 in range(2):
            e = 2 * a + e2
            for c in range(cin):
                for jp in range(8):
                    row = 128 * a + 48 * e2 + 8 * c + jp
                    for g in range(2):
                        di = e - g
                        if di < 0 or di >= KSIZE:
                            continue
                        for wpar in range(2):
                            for j2 in range(2):
                                dj = jp - (2 * j2 + wpar)
                                if dj < 0 or dj >= KSIZE:
                                    continue
                                col = 64 * wpar + 32 * g + j2
                                r2[row, col + 2 * np.arange(cout)] = w[:, c, di, dj]
    b2t = np.zeros((1, 32), np.float32)
    for o in range(cout):
        b2t[0, 2 * o: 2 * o + 2] = b[o]
    return r2, b2t


def _build_fc1(fc1_w):
    """Map PyTorch's (o, n, j) flatten onto our (n, o, j) flatten and zero-pad
    to 2048 rows so the inter-kernel flatten is a free bitcast."""
    w = np.asarray(fc1_w, np.float32)
    wp = np.zeros((D_PAD, w.shape[1]), np.float32)
    for n in range(59):
        for o in range(COUT2):
            for j in range(2):
                wp[32 * n + 2 * o + j, :] = w[118 * o + 2 * n + j, :]
    return wp


def init_params(key, n_mfccs):
    d_flat = int(16 * 59 * n_mfccs / 10)
    keys = jax.random.split(key, 10)

    def w(k, shape, fan_in):
        return jax.random.normal(k, shape, jnp.float32) / jnp.sqrt(
            jnp.float32(fan_in))

    return dict(
        conv1_w=w(keys[0], (COUT1, 1, KSIZE, KSIZE), 25),
        conv1_b=w(keys[1], (COUT1,), 25),
        conv2_w=w(keys[2], (COUT2, COUT1, KSIZE, KSIZE), 150),
        conv2_b=w(keys[3], (COUT2,), 150),
        fc1_w=w(keys[4], (d_flat, 256), d_flat),
        fc1_b=w(keys[5], (256,), d_flat),
        fc2_w=w(keys[6], (256, 128), 256),
        fc2_b=w(keys[7], (128,), 256),
        fc3_w=w(keys[8], (128, 1), 128),
        fc3_b=w(keys[9], (1,), 128),
    )


def prepare_params(params):
    assert params["conv1_w"].shape == (COUT1, 1, KSIZE, KSIZE)
    assert params["conv2_w"].shape == (COUT2, COUT1, KSIZE, KSIZE)
    assert params["fc1_w"].shape == (D_FLAT, 256), params["fc1_w"].shape
    r1, b1t = _build_conv1_tables(params["conv1_w"], params["conv1_b"])
    r2, b2t = _build_conv2_tables(params["conv2_w"], params["conv2_b"])
    return dict(
        r1=jnp.asarray(r1, jnp.bfloat16),
        b1t=jnp.asarray(b1t, jnp.float32),
        r2=jnp.asarray(r2, jnp.bfloat16),
        b2t=jnp.asarray(b2t, jnp.float32),
        fc1_w=jnp.asarray(_build_fc1(params["fc1_w"]), jnp.bfloat16),
        fc1_b=jnp.asarray(np.asarray(params["fc1_b"], np.float32).reshape(1, -1)),
        fc2_w=jnp.asarray(params["fc2_w"], jnp.bfloat16),
        fc2_b=jnp.asarray(np.asarray(params["fc2_b"], np.float32).reshape(1, -1)),
        fc3_w=jnp.asarray(np.asarray(params["fc3_w"], np.float32).reshape(1, -1)),
        fc3_b=jnp.asarray(np.asarray(params["fc3_b"], np.float32).reshape(1, 1)),
    )


@jax.jit
def gender_classifier_cnn_forward(x_nchw, prep):
    b = x_nchw.shape[0]
    x = x_nchw.astype(jnp.bfloat16)[:, 0]                # x.float() -> bf16 ops
    bp = ((b + TB - 1) // TB) * TB
    x = jnp.pad(x, ((0, bp - b), (0, H_PAD - INPUT_HEIGHT), (0, W_PAD - W_IN)))
    xr = x.reshape(bp, XR_ROWS, 4 * W_PAD)               # free row-major reshape
    p2 = _conv_stack(xr, prep["r1"], prep["b1t"], prep["r2"], prep["b2t"])
    feats = p2.reshape(bp, D_PAD)                        # free flatten (fc1 rows padded)
    # TODO(synk): nn.Dropout(p=0.5) is identity at inference; a training version
    # would draw a mask with pltpu.prng_seed / pltpu.prng_random_bits in-kernel.
    out = _fc_head(feats, prep["fc1_w"], prep["fc1_b"], prep["fc2_w"],
                   prep["fc2_b"], prep["fc3_w"], prep["fc3_b"])
    return out[:b]


# ---------------------------------------------------------------------------
# Pure-JAX (XLA, f32) reference for validation
# ---------------------------------------------------------------------------
@jax.jit
def reference_forward(x_nchw, params):
    x = x_nchw.astype(jnp.float32)

    def conv_block(x, w, b):
        y = lax.conv_general_dilated(
            x, w, (1, 1), "VALID", dimension_numbers=("NCHW", "OIHW", "NCHW"))
        y = jnp.maximum(y + b[None, :, None, None], 0.0)
        return lax.reduce_window(y, -jnp.inf, lax.max,
                                 (1, 1, 2, 2), (1, 1, 2, 2), "VALID")

    x = conv_block(x, params["conv1_w"], params["conv1_b"])
    x = conv_block(x, params["conv2_w"], params["conv2_b"])
    x = x.reshape(x.shape[0], -1)
    x = jnp.maximum(x @ params["fc1_w"] + params["fc1_b"], 0.0)
    x = jnp.maximum(x @ params["fc2_w"] + params["fc2_b"], 0.0)
    return jax.nn.sigmoid(x @ params["fc3_w"] + params["fc3_b"])


if __name__ == "__main__":
    B = 16                      # 2 grid steps of TB=8 images each
    key = jax.random.PRNGKey(0)
    kx, kp = jax.random.split(key)
    x = jax.random.normal(kx, (B, 1, INPUT_HEIGHT, N_MFCCS), jnp.float32)
    params = init_params(kp, N_MFCCS)
    prep = prepare_params(params)

    out = jax.block_until_ready(gender_classifier_cnn_forward(x, prep))
    assert out.shape == (B, 1), out.shape

    ref = jax.block_until_ready(reference_forward(x, params))
    max_err = float(jnp.max(jnp.abs(out - ref)))
    # bf16 operands with f32 accumulation vs. an all-f32 XLA reference.
    assert max_err < 2e-2, f"Pallas vs XLA reference mismatch: {max_err}"

    print("KERNEL_OK")
</pallas_src>

<mosaic_0001>
module attributes {stable_mosaic.version = 11 : i64} {
  func.func @_conv_stack_kernel(%arg0: i32, %arg1: memref<8x73x128xbf16, #tpu.memory_space<vmem>>, %arg2: memref<256x512xbf16, #tpu.memory_space<vmem>>, %arg3: memref<1x128xf32, #tpu.memory_space<vmem>>, %arg4: memref<384x128xbf16, #tpu.memory_space<vmem>>, %arg5: memref<1x32xf32, #tpu.memory_space<vmem>>, %arg6: memref<8x64x32xbf16, #tpu.memory_space<vmem>>, %arg7: memref<8x72x128xbf16, #tpu.memory_space<vmem>>) attributes {dimension_semantics = [#tpu.dimension_semantics<parallel>], iteration_bounds = array<i64: 2>, scalar_prefetch = 0 : i64, scratch_operands = 1 : i64, tpu.core_type = #tpu.core_type<tc>, window_params = [{transform_indices = @transform_0, window_bounds = array<i64: 8, 73, 128>}, {pipeline_mode = #tpu.pipeline_mode<synchronous>, transform_indices = @transform_1, window_bounds = array<i64: 256, 512>}, {pipeline_mode = #tpu.pipeline_mode<synchronous>, transform_indices = @transform_2, window_bounds = array<i64: 1, 128>}, {pipeline_mode = #tpu.pipeline_mode<synchronous>, transform_indices = @transform_3, window_bounds = array<i64: 384, 128>}, {pipeline_mode = #tpu.pipeline_mode<synchronous>, transform_indices = @transform_4, window_bounds = array<i64: 1, 32>}, {transform_indices = @transform_5, window_bounds = array<i64: 8, 64, 32>}]} {
    %c0 = arith.constant 0 : index
    %c0_0 = arith.constant 0 : index
    %c0_1 = arith.constant 0 : index
    %0 = vector.load %arg1[%c0, %c0_0, %c0_1] : memref<8x73x128xbf16, #tpu.memory_space<vmem>>, vector<8x72x128xbf16>
    %c0_2 = arith.constant 0 : index
    %c1 = arith.constant 1 : index
    %c0_3 = arith.constant 0 : index
    %1 = vector.load %arg1[%c0_2, %c1, %c0_3] : memref<8x73x128xbf16, #tpu.memory_space<vmem>>, vector<8x72x128xbf16>
    %2 = tpu.concatenate %0, %1 in 2 : vector<8x72x128xbf16>, vector<8x72x128xbf16> -> vector<8x72x256xbf16>
    %3 = vector.shape_cast %2 : vector<8x72x256xbf16> to vector<576x256xbf16>
    %c0_4 = arith.constant 0 : index
    %c0_5 = arith.constant 0 : index
    %4 = vector.load %arg2[%c0_4, %c0_5] : memref<256x512xbf16, #tpu.memory_space<vmem>>, vector<256x512xbf16>
    %cst = arith.constant dense<0.000000e+00> : vector<576x512xf32>
    %5 = tpu.matmul %3, %4, %cst {dimension_numbers = #tpu.dot_dimension_numbers<[1], [0], [0], [1], [0, 0, 1, 1], [], []>} : vector<576x256xbf16>, vector<256x512xbf16>, vector<576x512xf32> -> vector<576x512xf32>
    %6 = vector.shape_cast %5 : vector<576x512xf32> to vector<8x72x512xf32>
    %7 = vector.extract_strided_slice %6 {offsets = [0, 0, 0], sizes = [8, 72, 256], strides = [1, 1, 1]} : vector<8x72x512xf32> to vector<8x72x256xf32>
    %8 = vector.extract_strided_slice %6 {offsets = [0, 0, 256], sizes = [8, 72, 256], strides = [1, 1, 1]} : vector<8x72x512xf32> to vector<8x72x256xf32>
    %9 = arith.maximumf %7, %8 : vector<8x72x256xf32>
    %10 = vector.extract_strided_slice %9 {offsets = [0, 0, 0], sizes = [8, 72, 128], strides = [1, 1, 1]} : vector<8x72x256xf32> to vector<8x72x128xf32>
    %11 = vector.extract_strided_slice %9 {offsets = [0, 0, 128], sizes = [8, 72, 128], strides = [1, 1, 1]} : vector<8x72x256xf32> to vector<8x72x128xf32>
    %12 = arith.maximumf %10, %11 : vector<8x72x128xf32>
    %c0_6 = arith.constant 0 : index
    %c0_7 = arith.constant 0 : index
    %13 = vector.load %arg3[%c0_6, %c0_7] : memref<1x128xf32, #tpu.memory_space<vmem>>, vector<1x128xf32>
    %14 = vector.shape_cast %13 : vector<1x128xf32> to vector<1x1x128xf32>
    %15 = vector.broadcast %14 : vector<1x1x128xf32> to vector<8x72x128xf32>
    %16 = arith.addf %12, %15 : vector<8x72x128xf32>
    %cst_8 = arith.constant 0.000000e+00 : f32
    %17 = vector.broadcast %cst_8 : f32 to vector<8x72x128xf32>
    %18 = arith.maximumf %16, %17 : vector<8x72x128xf32>
    %19 = arith.truncf %18 : vector<8x72x128xf32> to vector<8x72x128xbf16>
    %c0_9 = arith.constant 0 : index
    %c0_10 = arith.constant 0 : index
    %c0_11 = arith.constant 0 : index
    %20 = vector.load %arg7[%c0_9, %c0_10, %c0_11] : memref<8x72x128xbf16, #tpu.memory_space<vmem>>, vector<8x72x128xbf16>
    tpu.vector_store %arg7[%c0_9, %c0_10, %c0_11], %19 {strides = array<i32>} : memref<8x72x128xbf16, #tpu.memory_space<vmem>>, vector<8x72x128xbf16>,
    %c0_12 = arith.constant 0 : index
    %c0_13 = arith.constant 0 : index
    %c0_14 = arith.constant 0 : index
    %21 = vector.load %arg7[%c0_12, %c0_13, %c0_14] : memref<8x72x128xbf16, #tpu.memory_space<vmem>>, vector<8x64x128xbf16>
    %c0_15 = arith.constant 0 : index
    %c1_16 = arith.constant 1 : index
    %c0_17 = arith.constant 0 : index
    %22 = vector.load %arg7[%c0_15, %c1_16, %c0_17] : memref<8x72x128xbf16, #tpu.memory_space<vmem>>, vector<8x64x128xbf16>
    %c0_18 = arith.constant 0 : index
    %c2 = arith.constant 2 : index
    %c0_19 = arith.constant 0 : index
    %23 = vector.load %arg7[%c0_18, %c2, %c0_19] : memref<8x72x128xbf16, #tpu.memory_space<vmem>>, vector<8x64x128xbf16>
    %24 = tpu.concatenate %21, %22, %23 in 2 : vector<8x64x128xbf16>, vector<8x64x128xbf16>, vector<8x64x128xbf16> -> vector<8x64x384xbf16>
    %25 = vector.shape_cast %24 : vector<8x64x384xbf16> to vector<512x384xbf16>
    %c0_20 = arith.constant 0 : index
    %c0_21 = arith.constant 0 : index
    %26 = vector.load %arg4[%c0_20, %c0_21] : memref<384x128xbf16, #tpu.memory_space<vmem>>, vector<384x128xbf16>
    %cst_22 = arith.constant dense<0.000000e+00> : vector<512x128xf32>
    %27 = tpu.matmul %25, %26, %cst_22 {dimension_numbers = #tpu.dot_dimension_numbers<[1], [0], [0], [1], [0, 0, 1, 1], [], []>} : vector<512x384xbf16>, vector<384x128xbf16>, vector<512x128xf32> -> vector<512x128xf32>
    %28 = vector.shape_cast %27 : vector<512x128xf32> to vector<8x64x128xf32>
    %29 = vector.extract_strided_slice %28 {offsets = [0, 0, 0], sizes = [8, 64, 64], strides = [1, 1, 1]} : vector<8x64x128xf32> to vector<8x64x64xf32>
    %30 = vector.extract_strided_slice %28 {offsets = [0, 0, 64], sizes = [8, 64, 64], strides = [1, 1, 1]} : vector<8x64x128xf32> to vector<8x64x64xf32>
    %31 = arith.maximumf %29, %30 : vector<8x64x64xf32>
    %32 = vector.extract_strided_slice %31 {offsets = [0, 0, 0], sizes = [8, 64, 32], strides = [1, 1, 1]} : vector<8x64x64xf32> to vector<8x64x32xf32>
    %33 = vector.extract_strided_slice %31 {offsets = [0, 0, 32], sizes = [8, 64, 32], strides = [1, 1, 1]} : vector<8x64x64xf32> to vector<8x64x32xf32>
    %34 = arith.maximumf %32, %33 : vector<8x64x32xf32>
    %c0_23 = arith.constant 0 : index
    %c0_24 = arith.constant 0 : index
    %35 = vector.load %arg5[%c0_23, %c0_24] : memref<1x32xf32, #tpu.memory_space<vmem>>, vector<1x32xf32>
    %36 = vector.shape_cast %35 : vector<1x32xf32> to vector<1x1x32xf32>
    %37 = vector.broadcast %36 : vector<1x1x32xf32> to vector<8x64x32xf32>
    %38 = arith.addf %34, %37 : vector<8x64x32xf32>
    %cst_25 = arith.constant 0.000000e+00 : f32
    %39 = vector.broadcast %cst_25 : f32 to vector<8x64x32xf32>
    %40 = arith.maximumf %38, %39 : vector<8x64x32xf32>
    %41 = arith.truncf %40 : vector<8x64x32xf32> to vector<8x64x32xbf16>
    %c0_26 = arith.constant 0 : index
    %c0_27 = arith.constant 0 : index
    %c0_28 = arith.constant 0 : index
    %42 = vector.load %arg6[%c0_26, %c0_27, %c0_28] : memref<8x64x32xbf16, #tpu.memory_space<vmem>>, vector<8x64x32xbf16>
    tpu.vector_store %arg6[%c0_26, %c0_27, %c0_28], %41 {strides = array<i32>} : memref<8x64x32xbf16, #tpu.memory_space<vmem>>, vector<8x64x32xbf16>,
    return
  }
  func.func @transform_0(%arg0: i32) -> (i32, i32, i32) {
    %c0_i32 = arith.constant 0 : i32
    %c0_i32_0 = arith.constant 0 : i32
    %c0_i32_1 = arith.constant 0 : i32
    return %arg0, %c0_i32, %c0_i32_0 : i32, i32, i32
  }
  func.func @transform_1(%arg0: i32) -> (i32, i32) {
    %c0_i32 = arith.constant 0 : i32
    %c0_i32_0 = arith.constant 0 : i32
    %c0_i32_1 = arith.constant 0 : i32
    return %c0_i32, %c0_i32_0 : i32, i32
  }
  func.func @transform_2(%arg0: i32) -> (i32, i32) {
    %c0_i32 = arith.constant 0 : i32
    %c0_i32_0 = arith.constant 0 : i32
    %c0_i32_1 = arith.constant 0 : i32
    return %c0_i32, %c0_i32_0 : i32, i32
  }
  func.func @transform_3(%arg0: i32) -> (i32, i32) {
    %c0_i32 = arith.constant 0 : i32
    %c0_i32_0 = arith.constant 0 : i32
    %c0_i32_1 = arith.constant 0 : i32
    return %c0_i32, %c0_i32_0 : i32, i32
  }
  func.func @transform_4(%arg0: i32) -> (i32, i32) {
    %c0_i32 = arith.constant 0 : i32
    %c0_i32_0 = arith.constant 0 : i32
    %c0_i32_1 = arith.constant 0 : i32
    return %c0_i32, %c0_i32_0 : i32, i32
  }
  func.func @transform_5(%arg0: i32) -> (i32, i32, i32) {
    %c0_i32 = arith.constant 0 : i32
    %c0_i32_0 = arith.constant 0 : i32
    %c0_i32_1 = arith.constant 0 : i32
    return %arg0, %c0_i32, %c0_i32_0 : i32, i32, i32
  }
}

module attributes {stable_mosaic.version = 11 : i64} {
  func.func @_fc_head_kernel(%arg0: i32, %arg1: memref<16x2048xbf16, #tpu.memory_space<vmem>>, %arg2: memref<2048x256xbf16, #tpu.memory_space<vmem>>, %arg3: memref<1x256xf32, #tpu.memory_space<vmem>>, %arg4: memref<256x128xbf16, #tpu.memory_space<vmem>>, %arg5: memref<1x128xf32, #tpu.memory_space<vmem>>, %arg6: memref<1x128xf32, #tpu.memory_space<vmem>>, %arg7: memref<1x1xf32, #tpu.memory_space<vmem>>, %arg8: memref<16x1xf32, #tpu.memory_space<vmem>>) attributes {dimension_semantics = [#tpu.dimension_semantics<parallel>], iteration_bounds = array<i64: 1>, scalar_prefetch = 0 : i64, scratch_operands = 0 : i64, tpu.core_type = #tpu.core_type<tc>, window_params = [{transform_indices = @transform_0, window_bounds = array<i64: 16, 2048>}, {pipeline_mode = #tpu.pipeline_mode<synchronous>, transform_indices = @transform_1, window_bounds = array<i64: 2048, 256>}, {pipeline_mode = #tpu.pipeline_mode<synchronous>, transform_indices = @transform_2, window_bounds = array<i64: 1, 256>}, {pipeline_mode = #tpu.pipeline_mode<synchronous>, transform_indices = @transform_3, window_bounds = array<i64: 256, 128>}, {pipeline_mode = #tpu.pipeline_mode<synchronous>, transform_indices = @transform_4, window_bounds = array<i64: 1, 128>}, {pipeline_mode = #tpu.pipeline_mode<synchronous>, transform_indices = @transform_5, window_bounds = array<i64: 1, 128>}, {pipeline_mode = #tpu.pipeline_mode<synchronous>, transform_indices = @transform_6, window_bounds = array<i64: 1, 1>}, {transform_indices = @transform_7, window_bounds = array<i64: 16, 1>}]} {
    %c0 = arith.constant 0 : index
    %c0_0 = arith.constant 0 : index
    %0 = vector.load %arg1[%c0, %c0_0] : memref<16x2048xbf16, #tpu.memory_space<vmem>>, vector<16x2048xbf16>
    %c0_1 = arith.constant 0 : index
    %c0_2 = arith.constant 0 : index
    %1 = vector.load %arg2[%c0_1, %c0_2] : memref<2048x256xbf16, #tpu.memory_space<vmem>>, vector<2048x256xbf16>
    %cst = arith.constant dense<0.000000e+00> : vector<16x256xf32>
    %2 = tpu.matmul %0, %1, %cst {dimension_numbers = #tpu.dot_dimension_numbers<[1], [0], [0], [1], [0, 0, 1, 1], [], []>} : vector<16x2048xbf16>, vector<2048x256xbf16>, vector<16x256xf32> -> vector<16x256xf32>
    %c0_3 = arith.constant 0 : index
    %c0_4 = arith.constant 0 : index
    %3 = vector.load %arg3[%c0_3, %c0_4] : memref<1x256xf32, #tpu.memory_space<vmem>>, vector<1x256xf32>
    %4 = vector.broadcast %3 : vector<1x256xf32> to vector<16x256xf32>
    %5 = arith.addf %2, %4 : vector<16x256xf32>
    %cst_5 = arith.constant 0.000000e+00 : f32
    %6 = vector.broadcast %cst_5 : f32 to vector<16x256xf32>
    %7 = arith.maximumf %5, %6 : vector<16x256xf32>
    %8 = arith.truncf %7 : vector<16x256xf32> to vector<16x256xbf16>
    %c0_6 = arith.constant 0 : index
    %c0_7 = arith.constant 0 : index
    %9 = vector.load %arg4[%c0_6, %c0_7] : memref<256x128xbf16, #tpu.memory_space<vmem>>, vector<256x128xbf16>
    %cst_8 = arith.constant dense<0.000000e+00> : vector<16x128xf32>
    %10 = tpu.matmul %8, %9, %cst_8 {dimension_numbers = #tpu.dot_dimension_numbers<[1], [0], [0], [1], [0, 0, 1, 1], [], []>} : vector<16x256xbf16>, vector<256x128xbf16>, vector<16x128xf32> -> vector<16x128xf32>
    %c0_9 = arith.constant 0 : index
    %c0_10 = arith.constant 0 : index
    %11 = vector.load %arg5[%c0_9, %c0_10] : memref<1x128xf32, #tpu.memory_space<vmem>>, vector<1x128xf32>
    %12 = vector.broadcast %11 : vector<1x128xf32> to vector<16x128xf32>
    %13 = arith.addf %10, %12 : vector<16x128xf32>
    %cst_11 = arith.constant 0.000000e+00 : f32
    %14 = vector.broadcast %cst_11 : f32 to vector<16x128xf32>
    %15 = arith.maximumf %13, %14 : vector<16x128xf32>
    %c0_12 = arith.constant 0 : index
    %c0_13 = arith.constant 0 : index
    %16 = vector.load %arg6[%c0_12, %c0_13] : memref<1x128xf32, #tpu.memory_space<vmem>>, vector<1x128xf32>
    %17 = vector.broadcast %16 : vector<1x128xf32> to vector<16x128xf32>
    %18 = arith.mulf %15, %17 : vector<16x128xf32>
    %cst_14 = arith.constant dense<0.000000e+00> : vector<16xf32>
    %19 = vector.multi_reduction <add>, %18, %cst_14 [1] : vector<16x128xf32> to vector<16xf32>
    %20 = vector.shape_cast %19 : vector<16xf32> to vector<16x1xf32>
    %c0_15 = arith.constant 0 : index
    %c0_16 = arith.constant 0 : index
    %21 = vector.load %arg7[%c0_15, %c0_16] : memref<1x1xf32, #tpu.memory_space<vmem>>, vector<1x1xf32>
    %22 = vector.broadcast %21 : vector<1x1xf32> to vector<16x1xf32>
    %23 = arith.addf %20, %22 : vector<16x1xf32>
    %24 = arith.negf %23 : vector<16x1xf32>
    %25 = math.exp %24 : vector<16x1xf32>
    %cst_17 = arith.constant 1.000000e+00 : f32
    %26 = vector.broadcast %cst_17 : f32 to vector<16x1xf32>
    %27 = arith.addf %26, %25 : vector<16x1xf32>
    %28 = arith.divf %26, %27 : vector<16x1xf32>
    %c0_18 = arith.constant 0 : index
    %c0_19 = arith.constant 0 : index
    %29 = vector.load %arg8[%c0_18, %c0_19] : memref<16x1xf32, #tpu.memory_space<vmem>>, vector<16x1xf32>
    tpu.vector_store %arg8[%c0_18, %c0_19], %28 {strides = array<i32>} : memref<16x1xf32, #tpu.memory_space<vmem>>, vector<16x1xf32>,
    return
  }
  func.func @transform_0(%arg0: i32) -> (i32, i32) {
    %c0_i32 = arith.constant 0 : i32
    %c0_i32_0 = arith.constant 0 : i32
    return %arg0, %c0_i32 : i32, i32
  }
  func.func @transform_1(%arg0: i32) -> (i32, i32) {
    %c0_i32 = arith.constant 0 : i32
    %c0_i32_0 = arith.constant 0 : i32
    %c0_i32_1 = arith.constant 0 : i32
    return %c0_i32, %c0_i32_0 : i32, i32
  }
  func.func @transform_2(%arg0: i32) -> (i32, i32) {
    %c0_i32 = arith.constant 0 : i32
    %c0_i32_0 = arith.constant 0 : i32
    %c0_i32_1 = arith.constant 0 : i32
    return %c0_i32, %c0_i32_0 : i32, i32
  }
  func.func @transform_3(%arg0: i32) -> (i32, i32) {
    %c0_i32 = arith.constant 0 : i32
    %c0_i32_0 = arith.constant 0 : i32
    %c0_i32_1 = arith.constant 0 : i32
    return %c0_i32, %c0_i32_0 : i32, i32
  }
  func.func @transform_4(%arg0: i32) -> (i32, i32) {
    %c0_i32 = arith.constant 0 : i32
    %c0_i32_0 = arith.constant 0 : i32
    %c0_i32_1 = arith.constant 0 : i32
    return %c0_i32, %c0_i32_0 : i32, i32
  }
  func.func @transform_5(%arg0: i32) -> (i32, i32) {
    %c0_i32 = arith.constant 0 : i32
    %c0_i32_0 = arith.constant 0 : i32
    %c0_i32_1 = arith.constant 0 : i32
    return %c0_i32, %c0_i32_0 : i32, i32
  }
  func.func @transform_6(%arg0: i32) -> (i32, i32) {
    %c0_i32 = arith.constant 0 : i32
    %c0_i32_0 = arith.constant 0 : i32
    %c0_i32_1 = arith.constant 0 : i32
    return %c0_i32, %c0_i32_0 : i32, i32
  }
  func.func @transform_7(%arg0: i32) -> (i32, i32) {
    %c0_i32 = arith.constant 0 : i32
    %c0_i32_0 = arith.constant 0 : i32
    return %arg0, %c0_i32 : i32, i32
  }
}

</mosaic_0001>

<llo_original>
// kernel: gender_classifier_cnn_forward.2
$region0: #{gender_classifier_cnn_forward.2}
  #allocation0 [shape = 'u32[]', space=smem, size = 0x4, offset = 0x4, fixed_abs, tag = 'smem constant byte address 0x4 - core index']
  #allocation1 [shape = 'u32[144,128]{1,0:T(1,128)}', space=vmem, size = 0x12000, scoped, tag = 'internal scratch']
  #allocation2 [shape = 'bf16[8,72,128]{2,1,0:T(8,128)(2,1)}', space=vmem, size = 0x24000, scoped, tag = 'scratch operand']
  %s0 = inlined_call_operand.vmem [shape: bf16[16,73,128], index: 0, kind: input, shape index: {}]
  %s1 = inlined_call_operand.vmem [shape: bf16[256,512], index: 1, kind: input, shape index: {}]
  %s2 = inlined_call_operand.vmem [shape: f32[1,128], index: 2, kind: input, shape index: {}]
  %s3 = inlined_call_operand.vmem [shape: bf16[384,128], index: 3, kind: input, shape index: {}]
  %s4 = inlined_call_operand.vmem [shape: f32[1,32], index: 4, kind: input, shape index: {}]
  %s5 = inlined_call_operand.vmem [shape: bf16[16,64,32], index: 5, kind: output, shape index: {}]
  %s6 = sld [smem:[#allocation0]]
  $region53: #{gender_classifier_cnn_forward.2} parent=0
    _
  %s8 = ssub.s32 1, %s6
  %s9 = scalar_select 0, %s8, %s6
  loop: start=0, step=1, limit=4
  $region2: #{gender_classifier_cnn_forward.2} parent=0 // loop_pre_header
    _
  $region3: #{gender_classifier_cnn_forward.2} parent=0 // loop_header
    %s11 = sphi 0, %s15
    %p12 = scmp.ge.s32.totalorder %s11, 4
    %s21 = sphi 0, %s23
    %s24 = sphi 0, %s21
    %s25 = sphi 0, %s24
    %s41 = sphi 0, %s25
    %s45 = sphi 0, %s45
    %s47 = sphi 0, %s45
    %s48 = sphi 0, %s47
    %s62 = sphi 0, %s48
    %s66 = sphi 0, %s66
    %s68 = sphi 0, %s66
    %s69 = sphi 0, %s68
    %s83 = sphi 0, %s69
    %s87 = sphi 0, %s87
    %s89 = sphi 0, %s87
    %s90 = sphi 0, %s89
    %s104 = sphi 0, %s90
    %s108 = sphi 0, %s108
    %s110 = sphi 0, %s108
    %s111 = sphi 0, %s110
    %s125 = sphi 0, %s111
    %s131 = sphi 0, %s133
    %s134 = sphi 0, %s131
    %s135 = sphi 0, %s134
    %s151 = sphi 0, %s135
  $region4: #{gender_classifier_cnn_forward.2} parent=0 // loop_header_branch
    %14 = sbr.rel (%p12) target = $region8
  $region5: #{gender_classifier_cnn_forward.2} parent=0 // loop_body
    %s16 = ssub.s32 %s11, 1
    %s17 = ssub.s32 %s11, 2
    %s18 = sadd.s32 %s11, 1
    %s19 = ssub.s32 %s11, %s18
    %p20 = scmp.eq.s32.totalorder %s19, 0
    %s22 = sadd.s32 %s21, 1
    %s23 = scalar_select %p20, %s21, %s22
    %p26 = pneg %p20
    %p27 = scmp.eq.s32.totalorder %s11, 1
    %p28 = por %p26, %p27
    %p29 = scmp.ne.s32.totalorder %s21, %s24
    %p30 = scmp.eq.s32.totalorder %s11, 0
    %p31 = por %p29, %p30
    %p32 = scmp.ne.s32.totalorder %s21, %s24
    %p33 = scmp.eq.s32.totalorder %s16, 1
    %p34 = por %p32, %p33
    %p35 = scmp.ne.s32.totalorder %s24, %s25
    %p36 = scmp.eq.s32.totalorder %s16, 0
    %p37 = por %p35, %p36
    %p38 = scmp.ne.s32.totalorder %s24, %s25
    %p39 = scmp.eq.s32.totalorder %s17, 1
    %p40 = por %p38, %p39
    %p42 = scmp.ne.s32.totalorder %s25, %s41
    %p43 = scmp.eq.s32.totalorder %s17, 0
    %p44 = por %p42, %p43
    %s46 = sadd.s32 %s45, 1
    %p49 = scmp.eq.s32.totalorder %s11, 1
    %p50 = scmp.ne.s32.totalorder %s45, %s47
    %p51 = scmp.eq.s32.totalorder %s11, 0
    %p52 = por %p50, %p51
    %p53 = scmp.ne.s32.totalorder %s45, %s47
    %p54 = scmp.eq.s32.totalorder %s16, 1
    %p55 = por %p53, %p54
    %p56 = scmp.ne.s32.totalorder %s47, %s48
    %p57 = scmp.eq.s32.totalorder %s16, 0
    %p58 = por %p56, %p57
    %p59 = scmp.ne.s32.totalorder %s47, %s48
    %p60 = scmp.eq.s32.totalorder %s17, 1
    %p61 = por %p59, %p60
    %p63 = scmp.ne.s32.totalorder %s48, %s62
    %p64 = scmp.eq.s32.totalorder %s17, 0
    %p65 = por %p63, %p64
    %s67 = sadd.s32 %s66, 1
    %p70 = scmp.eq.s32.totalorder %s11, 1
    %p71 = scmp.ne.s32.totalorder %s66, %s68
    %p72 = scmp.eq.s32.totalorder %s11, 0
    %p73 = por %p71, %p72
    %p74 = scmp.ne.s32.totalorder %s66, %s68
    %p75 = scmp.eq.s32.totalorder %s16, 1
    %p76 = por %p74, %p75
    %p77 = scmp.ne.s32.totalorder %s68, %s69
    %p78 = scmp.eq.s32.totalorder %s16, 0
    %p79 = por %p77, %p78
    %p80 = scmp.ne.s32.totalorder %s68, %s69
    %p81 = scmp.eq.s32.totalorder %s17, 1
    %p82 = por %p80, %p81
    %p84 = scmp.ne.s32.totalorder %s69, %s83
    %p85 = scmp.eq.s32.totalorder %s17, 0
    %p86 = por %p84, %p85
    %s88 = sadd.s32 %s87, 1
    %p91 = scmp.eq.s32.totalorder %s11, 1
    %p92 = scmp.ne.s32.totalorder %s87, %s89
    %p93 = scmp.eq.s32.totalorder %s11, 0
    %p94 = por %p92, %p93
    %p95 = scmp.ne.s32.totalorder %s87, %s89
    %p96 = scmp.eq.s32.totalorder %s16, 1
    %p97 = por %p95, %p96
    %p98 = scmp.ne.s32.totalorder %s89, %s90
    %p99 = scmp.eq.s32.totalorder %s16, 0
    %p100 = por %p98, %p99
    %p101 = scmp.ne.s32.totalorder %s89, %s90
    %p102 = scmp.eq.s32.totalorder %s17, 1
    %p103 = por %p101, %p102
    %p105 = scmp.ne.s32.totalorder %s90, %s104
    %p106 = scmp.eq.s32.totalorder %s17, 0
    %p107 = por %p105, %p106
    %s109 = sadd.s32 %s108, 1
    %p112 = scmp.eq.s32.totalorder %s11, 1
    %p113 = scmp.ne.s32.totalorder %s108, %s110
    %p114 = scmp.eq.s32.totalorder %s11, 0
    %p115 = por %p113, %p114
    %p116 = scmp.ne.s32.totalorder %s108, %s110
    %p117 = scmp.eq.s32.totalorder %s16, 1
    %p118 = por %p116, %p117
    %p119 = scmp.ne.s32.totalorder %s110, %s111
    %p120 = scmp.eq.s32.totalorder %s16, 0
    %p121 = por %p119, %p120
    %p122 = scmp.ne.s32.totalorder %s110, %s111
    %p123 = scmp.eq.s32.totalorder %s17, 1
    %p124 = por %p122, %p123
    %p126 = scmp.ne.s32.totalorder %s111, %s125
    %p127 = scmp.eq.s32.totalorder %s17, 0
    %p128 = por %p126, %p127
    %s129 = ssub.s32 %s11, %s18
    %p130 = scmp.eq.s32.totalorder %s129, 0
    %s132 = sadd.s32 %s131, 1
    %s133 = scalar_select %p130, %s131, %s132
    %p136 = pneg %p130
    %p137 = scmp.eq.s32.totalorder %s11, 1
    %p138 = por %p136, %p137
    %p139 = scmp.ne.s32.totalorder %s131, %s134
    %p140 = scmp.eq.s32.totalorder %s11, 0
    %p141 = por %p139, %p140
    %p142 = scmp.ne.s32.totalorder %s131, %s134
    %p143 = scmp.eq.s32.totalorder %s16, 1
    %p144 = por %p142, %p143
    %p145 = scmp.ne.s32.totalorder %s134, %s135
    %p146 = scmp.eq.s32.totalorder %s16, 0
    %p147 = por %p145, %p146
    %p148 = scmp.ne.s32.totalorder %s134, %s135
    %p149 = scmp.eq.s32.totalorder %s17, 1
    %p150 = por %p148, %p149
    %p152 = scmp.ne.s32.totalorder %s135, %s151
    %p153 = scmp.eq.s32.totalorder %s17, 0
    %p154 = por %p152, %p153
    %p155 = scmp.le.s32.totalorder 1, %s11
    %p156 = scmp.lt.s32.totalorder %s11, 3
    %p157 = pnand %p155, %p156
    %p158 = pneg %p157
    // Predicated region
    $region9: #{gender_classifier_cnn_forward.2} parent=5 // pred_check
      _
    $region10: #{gender_classifier_cnn_forward.2} parent=5 // pred_check_branch
      %160 = sbr.rel (%p157) target = $region12
    $region11: #{gender_classifier_cnn_forward.2} parent=5 // pred_region
      %s161 = ssub.s32 %s11, 1
      // Predicated region
      $region13: #{gender_classifier_cnn_forward.2} parent=11 // pred_check
        %p162 = pneg %p58
      $region14: #{gender_classifier_cnn_forward.2} parent=11 // pred_check_branch
        %164 = sbr.rel (%p162) target = $region16
      $region15: #{gender_classifier_cnn_forward.2} parent=11 // pred_region
        _
      $region16: #{gender_classifier_cnn_forward.2} parent=11 // pred_fallthru
        _
      // Predicated region
      $region17: #{gender_classifier_cnn_forward.2} parent=11 // pred_check
        %p165 = pneg %p79
      $region18: #{gender_classifier_cnn_forward.2} parent=11 // pred_check_branch
        %167 = sbr.rel (%p165) target = $region20
      $region19: #{gender_classifier_cnn_forward.2} parent=11 // pred_region
        _
      $region20: #{gender_classifier_cnn_forward.2} parent=11 // pred_fallthru
        _
      // Predicated region
      $region21: #{gender_classifier_cnn_forward.2} parent=11 // pred_check
        %p168 = pneg %p100
      $region22: #{gender_classifier_cnn_forward.2} parent=11 // pred_check_branch
        %170 = sbr.rel (%p168) target = $region24
      $region23: #{gender_classifier_cnn_forward.2} parent=11 // pred_region
        _
      $region24: #{gender_classifier_cnn_forward.2} parent=11 // pred_fallthru
        _
      // Predicated region
      $region25: #{gender_classifier_cnn_forward.2} parent=11 // pred_check
        %p171 = pneg %p121
      $region26: #{gender_classifier_cnn_forward.2} parent=11 // pred_check_branch
        %173 = sbr.rel (%p171) target = $region28
      $region27: #{gender_classifier_cnn_forward.2} parent=11 // pred_region
        _
      $region28: #{gender_classifier_cnn_forward.2} parent=11 // pred_fallthru
        _
    $region12: #{gender_classifier_cnn_forward.2} parent=5 // pred_fallthru
      _
    %p174 = scmp.lt.s32.totalorder %s11, 2
    // Predicated region
    $region29: #{gender_classifier_cnn_forward.2} parent=5 // pred_check
      %p175 = pneg %p174
    $region30: #{gender_classifier_cnn_forward.2} parent=5 // pred_check_branch
      %177 = sbr.rel (%p175) target = $region32
    $region31: #{gender_classifier_cnn_forward.2} parent=5 // pred_region
      // Predicated region
      $region33: #{gender_classifier_cnn_forward.2} parent=31 // pred_check
        %p178 = pneg %p31
      $region34: #{gender_classifier_cnn_forward.2} parent=31 // pred_check_branch
        %180 = sbr.rel (%p178) target = $region36
      $region35: #{gender_classifier_cnn_forward.2} parent=31 // pred_region
        %s181 = smul.u32 8, %s11
        %p182 = scmp.lt.s32.totalorder %s181, 15
        %s183 = scalar_select %p182, %s181, 15
        %s184 = smul.addr %s183, 10
        %s185 = smul.addr %s184, 4
        %s186 = scalar_lea.vmem %s0, %s185
        %s187 = smul.u32 8, %s11
      $region36: #{gender_classifier_cnn_forward.2} parent=31 // pred_fallthru
        _
    $region32: #{gender_classifier_cnn_forward.2} parent=5 // pred_fallthru
      _
    %p188 = scmp.le.s32.totalorder 1, %s11
    %p189 = scmp.lt.s32.totalorder %s11, 3
    %p190 = pnand %p188, %p189
    %p191 = pneg %p190
    // Predicated region
    $region37: #{gender_classifier_cnn_forward.2} parent=5 // pred_check
      _
    $region38: #{gender_classifier_cnn_forward.2} parent=5 // pred_check_branch
      %193 = sbr.rel (%p190) target = $region40
    $region39: #{gender_classifier_cnn_forward.2} parent=5 // pred_region
      %s194 = ssub.s32 %s11, 1
      %s195 = smul.u32 8, %s16
      %p196 = scmp.lt.s32.totalorder %s195, 15
      %s197 = scalar_select %p196, %s195, 15
      %s198 = smul.addr %s197, 10
      %s199 = smul.addr %s198, 4
      %s200 = scalar_lea.vmem %s0, %s199
      %p201 = pneg %p37
      %p202 = pneg %p34
      %p203 = pneg %p58
      %p204 = pneg %p55
      %p205 = pneg %p79
      %p206 = pneg %p76
      %p207 = pneg %p100
      %p208 = pneg %p97
      %p209 = pneg %p121
      %p210 = pneg %p118
      %p211 = pneg %p147
      %p212 = pneg %p144
      %s213 = smul.u32 8, %s16
      %p214 = scmp.lt.s32.totalorder %s213, 15
      %s215 = scalar_select %p214, %s213, 15
      %s216 = smul.addr %s215, 8
      %s217 = smul.addr %s216, 4
      %s218 = scalar_lea.vmem %s5, %s217
      %s219 = smul.u32 8, %s16
      %p220 = scmp.lt.s32.totalorder %s219, 15
      %s221 = scalar_select %p220, %s219, 15
      %s222 = smul.addr %s221, 10
      %s223 = smul.addr %s222, 4
      %s224 = scalar_lea.vmem %s0, %s223
      %s225 = smul.u32 8, %s16
      %s226 = smul.u32 8, %s16
      %p227 = scmp.lt.s32.totalorder %s226, 15
      %s228 = scalar_select %p227, %s226, 15
      %s229 = smul.addr %s228, 8
      %s230 = smul.addr %s229, 4
      %s231 = scalar_lea.vmem %s5, %s230
      %s232 = smul.u32 8, %s16
      %v234 = vld [vmem:[%s224] sm:$0xf]
      %v235 = vld [vmem:[%s224 + $0x4] sm:$0xf]
      %v236 = vld [vmem:[%s224 + $0x8] sm:$0xf]
      %v237 = vld [vmem:[%s224 + $0xc] sm:$0xf]
      %v238 = vld [vmem:[%s224 + $0x10] sm:$0xf]
      %v239 = vld [vmem:[%s224 + $0x14] sm:$0xf]
      %v240 = vld [vmem:[%s224 + $0x18] sm:$0xf]
      %v241 = vld [vmem:[%s224 + $0x1c] sm:$0xf]
      %v242 = vld [vmem:[%s224 + $0x20] sm:$0xf]
      %v243 = vld [vmem:[%s224 + $0x28] sm:$0xf]
      %v244 = vld [vmem:[%s224 + $0x2c] sm:$0xf]
      %v245 = vld [vmem:[%s224 + $0x30] sm:$0xf]
      %v246 = vld [vmem:[%s224 + $0x34] sm:$0xf]
      %v247 = vld [vmem:[%s224 + $0x38] sm:$0xf]
      %v248 = vld [vmem:[%s224 + $0x3c] sm:$0xf]
      %v249 = vld [vmem:[%s224 + $0x40] sm:$0xf]
      %v250 = vld [vmem:[%s224 + $0x44] sm:$0xf]
      %v251 = vld [vmem:[%s224 + $0x48] sm:$0xf]
      %v252 = vld [vmem:[%s224 + $0x50] sm:$0xf]
      %v253 = vld [vmem:[%s224 + $0x54] sm:$0xf]
      %v254 = vld [vmem:[%s224 + $0x58] sm:$0xf]
      %v255 = vld [vmem:[%s224 + $0x5c] sm:$0xf]
      %v256 = vld [vmem:[%s224 + $0x60] sm:$0xf]
      %v257 = vld [vmem:[%s224 + $0x64] sm:$0xf]
      %v258 = vld [vmem:[%s224 + $0x68] sm:$0xf]
      %v259 = vld [vmem:[%s224 + $0x6c] sm:$0xf]
      %v260 = vld [vmem:[%s224 + $0x70] sm:$0xf]
      %v261 = vld [vmem:[%s224 + $0x78] sm:$0xf]
      %v262 = vld [vmem:[%s224 + $0x7c] sm:$0xf]
      %v263 = vld [vmem:[%s224 + $0x80] sm:$0xf]
      %v264 = vld [vmem:[%s224 + $0x84] sm:$0xf]
      %v265 = vld [vmem:[%s224 + $0x88] sm:$0xf]
      %v266 = vld [vmem:[%s224 + $0x8c] sm:$0xf]
      %v267 = vld [vmem:[%s224 + $0x90] sm:$0xf]
      %v268 = vld [vmem:[%s224 + $0x94] sm:$0xf]
      %v269 = vld [vmem:[%s224 + $0x98] sm:$0xf]
      %v270 = vld [vmem:[%s224 + $0xa0] sm:$0xf]
      %v271 = vld [vmem:[%s224 + $0xa4] sm:$0xf]
      %v272 = vld [vmem:[%s224 + $0xa8] sm:$0xf]
      %v273 = vld [vmem:[%s224 + $0xac] sm:$0xf]
      %v274 = vld [vmem:[%s224 + $0xb0] sm:$0xf]
      %v275 = vld [vmem:[%s224 + $0xb4] sm:$0xf]
      %v276 = vld [vmem:[%s224 + $0xb8] sm:$0xf]
      %v277 = vld [vmem:[%s224 + $0xbc] sm:$0xf]
      %v278 = vld [vmem:[%s224 + $0xc0] sm:$0xf]
      %v279 = vld [vmem:[%s224 + $0xc8] sm:$0xf]
      %v280 = vld [vmem:[%s224 + $0xcc] sm:$0xf]
      %v281 = vld [vmem:[%s224 + $0xd0] sm:$0xf]
      %v282 = vld [vmem:[%s224 + $0xd4] sm:$0xf]
      %v283 = vld [vmem:[%s224 + $0xd8] sm:$0xf]
      %v284 = vld [vmem:[%s224 + $0xdc] sm:$0xf]
      %v285 = vld [vmem:[%s224 + $0xe0] sm:$0xf]
      %v286 = vld [vmem:[%s224 + $0xe4] sm:$0xf]
      %v287 = vld [vmem:[%s224 + $0xe8] sm:$0xf]
      %v288 = vld [vmem:[%s224 + $0xf0] sm:$0xf]
      %v289 = vld [vmem:[%s224 + $0xf4] sm:$0xf]
      %v290 = vld [vmem:[%s224 + $0xf8] sm:$0xf]
      %v291 = vld [vmem:[%s224 + $0xfc] sm:$0xf]
      %v292 = vld [vmem:[%s224 + $0x100] sm:$0xf]
      %v293 = vld [vmem:[%s224 + $0x104] sm:$0xf]
      %v294 = vld [vmem:[%s224 + $0x108] sm:$0xf]
      %v295 = vld [vmem:[%s224 + $0x10c] sm:$0xf]
      %v296 = vld [vmem:[%s224 + $0x110] sm:$0xf]
      %v297 = vld [vmem:[%s224 + $0x118] sm:$0xf]
      %v298 = vld [vmem:[%s224 + $0x11c] sm:$0xf]
      %v299 = vld [vmem:[%s224 + $0x120] sm:$0xf]
      %v300 = vld [vmem:[%s224 + $0x124] sm:$0xf]
      %v301 = vld [vmem:[%s224 + $0x128] sm:$0xf]
      %v302 = vld [vmem:[%s224 + $0x12c] sm:$0xf]
      %v303 = vld [vmem:[%s224 + $0x130] sm:$0xf]
      %v304 = vld [vmem:[%s224 + $0x134] sm:$0xf]
      %v305 = vld [vmem:[%s224 + $0x138] sm:$0xf]
      %v306 = vld [vmem:[%s224 + $0x24] sm:$0x1]
      %v307 = vld [vmem:[%s224 + $0x4c] sm:$0x1]
      %v308 = vld [vmem:[%s224 + $0x74] sm:$0x1]
      %v309 = vld [vmem:[%s224 + $0x9c] sm:$0x1]
      %v310 = vld [vmem:[%s224 + $0xc4] sm:$0x1]
      %v311 = vld [vmem:[%s224 + $0xec] sm:$0x1]
      %v312 = vld [vmem:[%s224 + $0x114] sm:$0x1]
      %v313 = vld [vmem:[%s224 + $0x13c] sm:$0x1]
      %v386 = vunpack.c.l.b16 %v234
      %v387 = vunpack.c.l.b16 %v235
      %v388 = vunpack.c.l.b16 %v236
      %v389 = vunpack.c.l.b16 %v237
      %v390 = vunpack.c.l.b16 %v238
      %v391 = vunpack.c.l.b16 %v239
      %v392 = vunpack.c.l.b16 %v240
      %v393 = vunpack.c.l.b16 %v241
      %v394 = vunpack.c.l.b16 %v242
      %v395 = vunpack.c.l.b16 %v243
      %v396 = vunpack.c.l.b16 %v244
      %v397 = vunpack.c.l.b16 %v245
      %v398 = vunpack.c.l.b16 %v246
      %v399 = vunpack.c.l.b16 %v247
      %v400 = vunpack.c.l.b16 %v248
      %v401 = vunpack.c.l.b16 %v249
      %v402 = vunpack.c.l.b16 %v250
      %v403 = vunpack.c.l.b16 %v251
      %v404 = vunpack.c.l.b16 %v252
      %v405 = vunpack.c.l.b16 %v253
      %v406 = vunpack.c.l.b16 %v254
      %v407 = vunpack.c.l.b16 %v255
      %v408 = vunpack.c.l.b16 %v256
      %v409 = vunpack.c.l.b16 %v257
      %v410 = vunpack.c.l.b16 %v258
      %v411 = vunpack.c.l.b16 %v259
      %v412 = vunpack.c.l.b16 %v260
      %v413 = vunpack.c.l.b16 %v261
      %v414 = vunpack.c.l.b16 %v262
      %v415 = vunpack.c.l.b16 %v263
      %v416 = vunpack.c.l.b16 %v264
      %v417 = vunpack.c.l.b16 %v265
      %v418 = vunpack.c.l.b16 %v266
      %v419 = vunpack.c.l.b16 %v267
      %v420 = vunpack.c.l.b16 %v268
      %v421 = vunpack.c.l.b16 %v269
      %v422 = vunpack.c.l.b16 %v270
      %v423 = vunpack.c.l.b16 %v271
      %v424 = vunpack.c.l.b16 %v272
      %v425 = vunpack.c.l.b16 %v273
      %v426 = vunpack.c.l.b16 %v274
      %v427 = vunpack.c.l.b16 %v275
      %v428 = vunpack.c.l.b16 %v276
      %v429 = vunpack.c.l.b16 %v277
      %v430 = vunpack.c.l.b16 %v278
      %v431 = vunpack.c.l.b16 %v279
      %v432 = vunpack.c.l.b16 %v280
      %v433 = vunpack.c.l.b16 %v281
      %v434 = vunpack.c.l.b16 %v282
      %v435 = vunpack.c.l.b16 %v283
      %v436 = vunpack.c.l.b16 %v284
      %v437 = vunpack.c.l.b16 %v285
      %v438 = vunpack.c.l.b16 %v286
      %v439 = vunpack.c.l.b16 %v287
      %v440 = vunpack.c.l.b16 %v288
      %v441 = vunpack.c.l.b16 %v289
      %v442 = vunpack.c.l.b16 %v290
      %v443 = vunpack.c.l.b16 %v291
      %v444 = vunpack.c.l.b16 %v292
      %v445 = vunpack.c.l.b16 %v293
      %v446 = vunpack.c.l.b16 %v294
      %v447 = vunpack.c.l.b16 %v295
      %v448 = vunpack.c.l.b16 %v296
      %v449 = vunpack.c.l.b16 %v297
      %v450 = vunpack.c.l.b16 %v298
      %v451 = vunpack.c.l.b16 %v299
      %v452 = vunpack.c.l.b16 %v300
      %v453 = vunpack.c.l.b16 %v301
      %v454 = vunpack.c.l.b16 %v302
      %v455 = vunpack.c.l.b16 %v303
      %v456 = vunpack.c.l.b16 %v304
      %v457 = vunpack.c.l.b16 %v305
      %v466 = vunpack.c.l.b16 %v306
      %v467 = vunpack.c.l.b16 %v307
      %v468 = vunpack.c.l.b16 %v308
      %v469 = vunpack.c.l.b16 %v309
      %v470 = vunpack.c.l.b16 %v310
      %v471 = vunpack.c.l.b16 %v311
      %v472 = vunpack.c.l.b16 %v312
      %v473 = vunpack.c.l.b16 %v313
      %v474 = vpack.c.b16 %v387, %v386
      %v475 = vpack.c.b16 %v389, %v388
      %v476 = vpack.c.b16 %v391, %v390
      %v477 = vpack.c.b16 %v393, %v392
      %v478 = vpack.c.b16 %v466, %v394
      %v479 = vpack.c.b16 %v396, %v395
      %v480 = vpack.c.b16 %v398, %v397
      %v481 = vpack.c.b16 %v400, %v399
      %v482 = vpack.c.b16 %v402, %v401
      %v483 = vpack.c.b16 %v467, %v403
      %v484 = vpack.c.b16 %v405, %v404
      %v485 = vpack.c.b16 %v407, %v406
      %v486 = vpack.c.b16 %v409, %v408
      %v487 = vpack.c.b16 %v411, %v410
      %v488 = vpack.c.b16 %v468, %v412
      %v489 = vpack.c.b16 %v414, %v413
      %v490 = vpack.c.b16 %v416, %v415
      %v491 = vpack.c.b16 %v418, %v417
      %v492 = vpack.c.b16 %v420, %v419
      %v493 = vpack.c.b16 %v469, %v421
      %v494 = vpack.c.b16 %v423, %v422
      %v495 = vpack.c.b16 %v425, %v424
      %v496 = vpack.c.b16 %v427, %v426
      %v497 = vpack.c.b16 %v429, %v428
      %v498 = vpack.c.b16 %v470, %v430
      %v499 = vpack.c.b16 %v432, %v431
      %v500 = vpack.c.b16 %v434, %v433
      %v501 = vpack.c.b16 %v436, %v435
      %v502 = vpack.c.b16 %v438, %v437
      %v503 = vpack.c.b16 %v471, %v439
      %v504 = vpack.c.b16 %v441, %v440
      %v505 = vpack.c.b16 %v443, %v442
      %v506 = vpack.c.b16 %v445, %v444
      %v507 = vpack.c.b16 %v447, %v446
      %v508 = vpack.c.b16 %v472, %v448
      %v509 = vpack.c.b16 %v450, %v449
      %v510 = vpack.c.b16 %v452, %v451
      %v511 = vpack.c.b16 %v454, %v453
      %v512 = vpack.c.b16 %v456, %v455
      %v513 = vpack.c.b16 %v473, %v457
      %vm514 = vsmask.f32 7424
      %v516 = vshrl.u32 %v474, 16
      %v518 = vshll.u32 %v474, 16
      %v520 = vrot.slane %v518, 1
      %v521 = vor.u32 %v516, %v520
      %v523 = vshll.u32 %v475, 16
      %v525 = vrot.slane %v523, 1
      %v526 = vsel %vm514, %v521, %v525
      %v527 = vshrl.u32 %v475, 16
      %v529 = vor.u32 %v527, %v525
      %v531 = vshll.u32 %v476, 16
      %v533 = vrot.slane %v531, 1
      %v534 = vsel %vm514, %v529, %v533
      %v535 = vshrl.u32 %v476, 16
      %v537 = vor.u32 %v535, %v533
      %v539 = vshll.u32 %v477, 16
      %v541 = vrot.slane %v539, 1
      %v542 = vsel %vm514, %v537, %v541
      %v543 = vshrl.u32 %v477, 16
      %v545 = vor.u32 %v543, %v541
      %v547 = vshll.u32 %v478, 16
      %v549 = vrot.slane %v547, 1
      %v550 = vsel %vm514, %v545, %v549
      %v551 = vshrl.u32 %v478, 16
      %v553 = vor.u32 %v551, %v549
      %v555 = vshrl.u32 %v479, 16
      %v557 = vshll.u32 %v479, 16
      %v559 = vrot.slane %v557, 1
      %v560 = vor.u32 %v555, %v559
      %v562 = vshll.u32 %v480, 16
      %v564 = vrot.slane %v562, 1
      %v565 = vsel %vm514, %v560, %v564
      %v566 = vshrl.u32 %v480, 16
      %v568 = vor.u32 %v566, %v564
      %v570 = vshll.u32 %v481, 16
      %v572 = vrot.slane %v570, 1
      %v573 = vsel %vm514, %v568, %v572
      %v574 = vshrl.u32 %v481, 16
      %v576 = vor.u32 %v574, %v572
      %v578 = vshll.u32 %v482, 16
      %v580 = vrot.slane %v578, 1
      %v581 = vsel %vm514, %v576, %v580
      %v582 = vshrl.u32 %v482, 16
      %v584 = vor.u32 %v582, %v580
      %v586 = vshll.u32 %v483, 16
      %v588 = vrot.slane %v586, 1
      %v589 = vsel %vm514, %v584, %v588
      %v590 = vshrl.u32 %v483, 16
      %v592 = vor.u32 %v590, %v588
      %v594 = vshrl.u32 %v484, 16
      %v596 = vshll.u32 %v484, 16
      %v598 = vrot.slane %v596, 1
      %v599 = vor.u32 %v594, %v598
      %v601 = vshll.u32 %v485, 16
      %v603 = vrot.slane %v601, 1
      %v604 = vsel %vm514, %v599, %v603
      %v605 = vshrl.u32 %v485, 16
      %v607 = vor.u32 %v605, %v603
      %v609 = vshll.u32 %v486, 16
      %v611 = vrot.slane %v609, 1
      %v612 = vsel %vm514, %v607, %v611
      %v613 = vshrl.u32 %v486, 16
      %v615 = vor.u32 %v613, %v611
      %v617 = vshll.u32 %v487, 16
      %v619 = vrot.slane %v617, 1
      %v620 = vsel %vm514, %v615, %v619
      %v621 = vshrl.u32 %v487, 16
      %v623 = vor.u32 %v621, %v619
      %v625 = vshll.u32 %v488, 16
      %v627 = vrot.slane %v625, 1
      %v628 = vsel %vm514, %v623, %v627
      %v629 = vshrl.u32 %v488, 16
      %v631 = vor.u32 %v629, %v627
      %v633 = vshrl.u32 %v489, 16
      %v635 = vshll.u32 %v489, 16
      %v637 = vrot.slane %v635, 1
      %v638 = vor.u32 %v633, %v637
      %v640 = vshll.u32 %v490, 16
      %v642 = vrot.slane %v640, 1
      %v643 = vsel %vm514, %v638, %v642
      %v644 = vshrl.u32 %v490, 16
      %v646 = vor.u32 %v644, %v642
      %v648 = vshll.u32 %v491, 16
      %v650 = vrot.slane %v648, 1
      %v651 = vsel %vm514, %v646, %v650
      %v652 = vshrl.u32 %v491, 16
      %v654 = vor.u32 %v652, %v650
      %v656 = vshll.u32 %v492, 16
      %v658 = vrot.slane %v656, 1
      %v659 = vsel %vm514, %v654, %v658
      %v660 = vshrl.u32 %v492, 16
      %v662 = vor.u32 %v660, %v658
      %v664 = vshll.u32 %v493, 16
      %v666 = vrot.slane %v664, 1
      %v667 = vsel %vm514, %v662, %v666
      %v668 = vshrl.u32 %v493, 16
      %v670 = vor.u32 %v668, %v666
      %v672 = vshrl.u32 %v494, 16
      %v674 = vshll.u32 %v494, 16
      %v676 = vrot.slane %v674, 1
      %v677 = vor.u32 %v672, %v676
      %v679 = vshll.u32 %v495, 16
      %v681 = vrot.slane %v679, 1
      %v682 = vsel %vm514, %v677, %v681
      %v683 = vshrl.u32 %v495, 16
      %v685 = vor.u32 %v683, %v681
      %v687 = vshll.u32 %v496, 16
      %v689 = vrot.slane %v687, 1
      %v690 = vsel %vm514, %v685, %v689
      %v691 = vshrl.u32 %v496, 16
      %v693 = vor.u32 %v691, %v689
      %v695 = vshll.u32 %v497, 16
      %v697 = vrot.slane %v695, 1
      %v698 = vsel %vm514, %v693, %v697
      %v699 = vshrl.u32 %v497, 16
      %v701 = vor.u32 %v699, %v697
      %v703 = vshll.u32 %v498, 16
      %v705 = vrot.slane %v703, 1
      %v706 = vsel %vm514, %v701, %v705
      %v707 = vshrl.u32 %v498, 16
      %v709 = vor.u32 %v707, %v705
      %v711 = vshrl.u32 %v499, 16
      %v713 = vshll.u32 %v499, 16
      %v715 = vrot.slane %v713, 1
      %v716 = vor.u32 %v711, %v715
      %v718 = vshll.u32 %v500, 16
      %v720 = vrot.slane %v718, 1
      %v721 = vsel %vm514, %v716, %v720
      %v722 = vshrl.u32 %v500, 16
      %v724 = vor.u32 %v722, %v720
      %v726 = vshll.u32 %v501, 16
      %v728 = vrot.slane %v726, 1
      %v729 = vsel %vm514, %v724, %v728
      %v730 = vshrl.u32 %v501, 16
      %v732 = vor.u32 %v730, %v728
      %v734 = vshll.u32 %v502, 16
      %v736 = vrot.slane %v734, 1
      %v737 = vsel %vm514, %v732, %v736
      %v738 = vshrl.u32 %v502, 16
      %v740 = vor.u32 %v738, %v736
      %v742 = vshll.u32 %v503, 16
      %v744 = vrot.slane %v742, 1
      %v745 = vsel %vm514, %v740, %v744
      %v746 = vshrl.u32 %v503, 16
      %v748 = vor.u32 %v746, %v744
      %v750 = vshrl.u32 %v504, 16
      %v752 = vshll.u32 %v504, 16
      %v754 = vrot.slane %v752, 1
      %v755 = vor.u32 %v750, %v754
      %v757 = vshll.u32 %v505, 16
      %v759 = vrot.slane %v757, 1
      %v760 = vsel %vm514, %v755, %v759
      %v761 = vshrl.u32 %v505, 16
      %v763 = vor.u32 %v761, %v759
      %v765 = vshll.u32 %v506, 16
      %v767 = vrot.slane %v765, 1
      %v768 = vsel %vm514, %v763, %v767
      %v769 = vshrl.u32 %v506, 16
      %v771 = vor.u32 %v769, %v767
      %v773 = vshll.u32 %v507, 16
      %v775 = vrot.slane %v773, 1
      %v776 = vsel %vm514, %v771, %v775
      %v777 = vshrl.u32 %v507, 16
      %v779 = vor.u32 %v777, %v775
      %v781 = vshll.u32 %v508, 16
      %v783 = vrot.slane %v781, 1
      %v784 = vsel %vm514, %v779, %v783
      %v785 = vshrl.u32 %v508, 16
      %v787 = vor.u32 %v785, %v783
      %v789 = vshrl.u32 %v509, 16
      %v791 = vshll.u32 %v509, 16
      %v793 = vrot.slane %v791, 1
      %v794 = vor.u32 %v789, %v793
      %v796 = vshll.u32 %v510, 16
      %v798 = vrot.slane %v796, 1
      %v799 = vsel %vm514, %v794, %v798
      %v800 = vshrl.u32 %v510, 16
      %v802 = vor.u32 %v800, %v798
      %v804 = vshll.u32 %v511, 16
      %v806 = vrot.slane %v804, 1
      %v807 = vsel %vm514, %v802, %v806
      %v808 = vshrl.u32 %v511, 16
      %v810 = vor.u32 %v808, %v806
      %v812 = vshll.u32 %v512, 16
      %v814 = vrot.slane %v812, 1
      %v815 = vsel %vm514, %v810, %v814
      %v816 = vshrl.u32 %v512, 16
      %v818 = vor.u32 %v816, %v814
      %v820 = vshll.u32 %v513, 16
      %v822 = vrot.slane %v820, 1
      %v823 = vsel %vm514, %v818, %v822
      %v824 = vshrl.u32 %v513, 16
      %v826 = vor.u32 %v824, %v822
      %v827 = vunpack.c.l.b16 %v526
      %v828 = vunpack.c.h.b16 %v526
      %v829 = vunpack.c.l.b16 %v534
      %v830 = vunpack.c.h.b16 %v534
      %v831 = vunpack.c.l.b16 %v542
      %v832 = vunpack.c.h.b16 %v542
      %v833 = vunpack.c.l.b16 %v550
      %v834 = vunpack.c.h.b16 %v550
      %v835 = vunpack.c.l.b16 %v553
      %v836 = vunpack.c.l.b16 %v565
      %v837 = vunpack.c.h.b16 %v565
      %v838 = vunpack.c.l.b16 %v573
      %v839 = vunpack.c.h.b16 %v573
      %v840 = vunpack.c.l.b16 %v581
      %v841 = vunpack.c.h.b16 %v581
      %v842 = vunpack.c.l.b16 %v589
      %v843 = vunpack.c.h.b16 %v589
      %v844 = vunpack.c.l.b16 %v592
      %v845 = vunpack.c.l.b16 %v604
      %v846 = vunpack.c.h.b16 %v604
      %v847 = vunpack.c.l.b16 %v612
      %v848 = vunpack.c.h.b16 %v612
      %v849 = vunpack.c.l.b16 %v620
      %v850 = vunpack.c.h.b16 %v620
      %v851 = vunpack.c.l.b16 %v628
      %v852 = vunpack.c.h.b16 %v628
      %v853 = vunpack.c.l.b16 %v631
      %v854 = vunpack.c.l.b16 %v643
      %v855 = vunpack.c.h.b16 %v643
      %v856 = vunpack.c.l.b16 %v651
      %v857 = vunpack.c.h.b16 %v651
      %v858 = vunpack.c.l.b16 %v659
      %v859 = vunpack.c.h.b16 %v659
      %v860 = vunpack.c.l.b16 %v667
      %v861 = vunpack.c.h.b16 %v667
      %v862 = vunpack.c.l.b16 %v670
      %v863 = vunpack.c.l.b16 %v682
      %v864 = vunpack.c.h.b16 %v682
      %v865 = vunpack.c.l.b16 %v690
      %v866 = vunpack.c.h.b16 %v690
      %v867 = vunpack.c.l.b16 %v698
      %v868 = vunpack.c.h.b16 %v698
      %v869 = vunpack.c.l.b16 %v706
      %v870 = vunpack.c.h.b16 %v706
      %v871 = vunpack.c.l.b16 %v709
      %v872 = vunpack.c.l.b16 %v721
      %v873 = vunpack.c.h.b16 %v721
      %v874 = vunpack.c.l.b16 %v729
      %v875 = vunpack.c.h.b16 %v729
      %v876 = vunpack.c.l.b16 %v737
      %v877 = vunpack.c.h.b16 %v737
      %v878 = vunpack.c.l.b16 %v745
      %v879 = vunpack.c.h.b16 %v745
      %v880 = vunpack.c.l.b16 %v748
      %v881 = vunpack.c.l.b16 %v760
      %v882 = vunpack.c.h.b16 %v760
      %v883 = vunpack.c.l.b16 %v768
      %v884 = vunpack.c.h.b16 %v768
      %v885 = vunpack.c.l.b16 %v776
      %v886 = vunpack.c.h.b16 %v776
      %v887 = vunpack.c.l.b16 %v784
      %v888 = vunpack.c.h.b16 %v784
      %v889 = vunpack.c.l.b16 %v787
      %v890 = vunpack.c.l.b16 %v799
      %v891 = vunpack.c.h.b16 %v799
      %v892 = vunpack.c.l.b16 %v807
      %v893 = vunpack.c.h.b16 %v807
      %v894 = vunpack.c.l.b16 %v815
      %v895 = vunpack.c.h.b16 %v815
      %v896 = vunpack.c.l.b16 %v823
      %v897 = vunpack.c.h.b16 %v823
      %v898 = vunpack.c.l.b16 %v826
      %v899 = vld [vmem:[%s1] sm:$0xff]
      %v900 = vld [vmem:[%s1 + $0x8] sm:$0xff]
      %v901 = vld [vmem:[%s1 + $0x10] sm:$0xff]
      %v902 = vld [vmem:[%s1 + $0x18] sm:$0xff]
      %v903 = vld [vmem:[%s1 + $0x20] sm:$0xff]
      %v904 = vld [vmem:[%s1 + $0x28] sm:$0xff]
      %v905 = vld [vmem:[%s1 + $0x30] sm:$0xff]
      %v906 = vld [vmem:[%s1 + $0x38] sm:$0xff]
      %v907 = vld [vmem:[%s1 + $0x40] sm:$0xff]
      %v908 = vld [vmem:[%s1 + $0x48] sm:$0xff]
      %v909 = vld [vmem:[%s1 + $0x50] sm:$0xff]
      %v910 = vld [vmem:[%s1 + $0x58] sm:$0xff]
      %v911 = vld [vmem:[%s1 + $0x60] sm:$0xff]
      %v912 = vld [vmem:[%s1 + $0x68] sm:$0xff]
      %v913 = vld [vmem:[%s1 + $0x70] sm:$0xff]
      %v914 = vld [vmem:[%s1 + $0x78] sm:$0xff]
      %v915 = vld [vmem:[%s1 + $0x80] sm:$0xff]
      %v916 = vld [vmem:[%s1 + $0x88] sm:$0xff]
      %v917 = vld [vmem:[%s1 + $0x90] sm:$0xff]
      %v918 = vld [vmem:[%s1 + $0x98] sm:$0xff]
      %v919 = vld [vmem:[%s1 + $0xa0] sm:$0xff]
      %v920 = vld [vmem:[%s1 + $0xa8] sm:$0xff]
      %v921 = vld [vmem:[%s1 + $0xb0] sm:$0xff]
      %v922 = vld [vmem:[%s1 + $0xb8] sm:$0xff]
      %v923 = vld [vmem:[%s1 + $0xc0] sm:$0xff]
      %v924 = vld [vmem:[%s1 + $0xc8] sm:$0xff]
      %v925 = vld [vmem:[%s1 + $0xd0] sm:$0xff]
      %v926 = vld [vmem:[%s1 + $0xd8] sm:$0xff]
      %v927 = vld [vmem:[%s1 + $0xe0] sm:$0xff]
      %v928 = vld [vmem:[%s1 + $0xe8] sm:$0xff]
      %v929 = vld [vmem:[%s1 + $0xf0] sm:$0xff]
      %v930 = vld [vmem:[%s1 + $0xf8] sm:$0xff]
      %v931 = vld [vmem:[%s1 + $0x100] sm:$0xff]
      %v932 = vld [vmem:[%s1 + $0x108] sm:$0xff]
      %v933 = vld [vmem:[%s1 + $0x110] sm:$0xff]
      %v934 = vld [vmem:[%s1 + $0x118] sm:$0xff]
      %v935 = vld [vmem:[%s1 + $0x120] sm:$0xff]
      %v936 = vld [vmem:[%s1 + $0x128] sm:$0xff]
      %v937 = vld [vmem:[%s1 + $0x130] sm:$0xff]
      %v938 = vld [vmem:[%s1 + $0x138] sm:$0xff]
      %v939 = vld [vmem:[%s1 + $0x140] sm:$0xff]
      %v940 = vld [vmem:[%s1 + $0x148] sm:$0xff]
      %v941 = vld [vmem:[%s1 + $0x150] sm:$0xff]
      %v942 = vld [vmem:[%s1 + $0x158] sm:$0xff]
      %v943 = vld [vmem:[%s1 + $0x160] sm:$0xff]
      %v944 = vld [vmem:[%s1 + $0x168] sm:$0xff]
      %v945 = vld [vmem:[%s1 + $0x170] sm:$0xff]
      %v946 = vld [vmem:[%s1 + $0x178] sm:$0xff]
      %v947 = vld [vmem:[%s1 + $0x180] sm:$0xff]
      %v948 = vld [vmem:[%s1 + $0x188] sm:$0xff]
      %v949 = vld [vmem:[%s1 + $0x190] sm:$0xff]
      %v950 = vld [vmem:[%s1 + $0x198] sm:$0xff]
      %v951 = vld [vmem:[%s1 + $0x1a0] sm:$0xff]
      %v952 = vld [vmem:[%s1 + $0x1a8] sm:$0xff]
      %v953 = vld [vmem:[%s1 + $0x1b0] sm:$0xff]
      %v954 = vld [vmem:[%s1 + $0x1b8] sm:$0xff]
      %v955 = vld [vmem:[%s1 + $0x1c0] sm:$0xff]
      %v956 = vld [vmem:[%s1 + $0x1c8] sm:$0xff]
      %v957 = vld [vmem:[%s1 + $0x1d0] sm:$0xff]
      %v958 = vld [vmem:[%s1 + $0x1d8] sm:$0xff]
      %v959 = vld [vmem:[%s1 + $0x1e0] sm:$0xff]
      %v960 = vld [vmem:[%s1 + $0x1e8] sm:$0xff]
      %v961 = vld [vmem:[%s1 + $0x1f0] sm:$0xff]
      %v962 = vld [vmem:[%s1 + $0x1f8] sm:$0xff]
      %v963 = vpack.c.b16 %v828, %v827
      %v964 = vpack.c.b16 %v830, %v829
      %v965 = vpack.c.b16 %v832, %v831
      %v966 = vpack.c.b16 %v834, %v833
      %v967 = vpack.c.b16 %v395, %v394
      %v968 = vpack.c.b16 %v836, %v835
      %v969 = vpack.c.b16 %v397, %v396
      %v970 = vpack.c.b16 %v838, %v837
      %v971 = vpack.c.b16 %v399, %v398
      %v972 = vpack.c.b16 %v840, %v839
      %v973 = vpack.c.b16 %v401, %v400
      %v974 = vpack.c.b16 %v842, %v841
      %v975 = vpack.c.b16 %v403, %v402
      %v976 = vpack.c.b16 %v844, %v843
      %v977 = vpack.c.b16 %v846, %v845
      %v978 = vpack.c.b16 %v848, %v847
      %v979 = vpack.c.b16 %v850, %v849
      %v980 = vpack.c.b16 %v852, %v851
      %v981 = vpack.c.b16 %v413, %v412
      %v982 = vpack.c.b16 %v854, %v853
      %v983 = vpack.c.b16 %v415, %v414
      %v984 = vpack.c.b16 %v856, %v855
      %v985 = vpack.c.b16 %v417, %v416
      %v986 = vpack.c.b16 %v858, %v857
      %v987 = vpack.c.b16 %v419, %v418
      %v988 = vpack.c.b16 %v860, %v859
      %v989 = vpack.c.b16 %v421, %v420
      %v990 = vpack.c.b16 %v862, %v861
      %v991 = vpack.c.b16 %v864, %v863
      %v992 = vpack.c.b16 %v866, %v865
      %v993 = vpack.c.b16 %v868, %v867
      %v994 = vpack.c.b16 %v870, %v869
      %v995 = vpack.c.b16 %v431, %v430
      %v996 = vpack.c.b16 %v872, %v871
      %v997 = vpack.c.b16 %v433, %v432
      %v998 = vpack.c.b16 %v874, %v873
      %v999 = vpack.c.b16 %v435, %v434
      %v1000 = vpack.c.b16 %v876, %v875
      %v1001 = vpack.c.b16 %v437, %v436
      %v1002 = vpack.c.b16 %v878, %v877
      %v1003 = vpack.c.b16 %v439, %v438
      %v1004 = vpack.c.b16 %v880, %v879
      %v1005 = vpack.c.b16 %v882, %v881
      %v1006 = vpack.c.b16 %v884, %v883
      %v1007 = vpack.c.b16 %v886, %v885
      %v1008 = vpack.c.b16 %v888, %v887
      %v1009 = vpack.c.b16 %v449, %v448
      %v1010 = vpack.c.b16 %v890, %v889
      %v1011 = vpack.c.b16 %v451, %v450
      %v1012 = vpack.c.b16 %v892, %v891
      %v1013 = vpack.c.b16 %v453, %v452
      %v1014 = vpack.c.b16 %v894, %v893
      %v1015 = vpack.c.b16 %v455, %v454
      %v1016 = vpack.c.b16 %v896, %v895
      %v1017 = vpack.c.b16 %v457, %v456
      %v1018 = vpack.c.b16 %v898, %v897
      %v1155 = vunpack.c.l.b16 %v899
      %v1156 = vunpack.c.h.b16 %v899
      %v1157 = vunpack.c.l.b16 %v900
      %v1158 = vunpack.c.h.b16 %v900
      %v1159 = vunpack.c.l.b16 %v901
      %v1160 = vunpack.c.h.b16 %v901
      %v1161 = vunpack.c.l.b16 %v902
      %v1162 = vunpack.c.h.b16 %v902
      %v1163 = vunpack.c.l.b16 %v903
      %v1164 = vunpack.c.h.b16 %v903
      %v1165 = vunpack.c.l.b16 %v904
      %v1166 = vunpack.c.h.b16 %v904
      %v1167 = vunpack.c.l.b16 %v905
      %v1168 = vunpack.c.h.b16 %v905
      %v1169 = vunpack.c.l.b16 %v906
      %v1170 = vunpack.c.h.b16 %v906
      %v1171 = vunpack.c.l.b16 %v907
      %v1172 = vunpack.c.h.b16 %v907
      %v1173 = vunpack.c.l.b16 %v908
      %v1174 = vunpack.c.h.b16 %v908
      %v1175 = vunpack.c.l.b16 %v909
      %v1176 = vunpack.c.h.b16 %v909
      %v1177 = vunpack.c.l.b16 %v910
      %v1178 = vunpack.c.h.b16 %v910
      %v1179 = vunpack.c.l.b16 %v911
      %v1180 = vunpack.c.h.b16 %v911
      %v1181 = vunpack.c.l.b16 %v912
      %v1182 = vunpack.c.h.b16 %v912
      %v1183 = vunpack.c.l.b16 %v913
      %v1184 = vunpack.c.h.b16 %v913
      %v1185 = vunpack.c.l.b16 %v914
      %v1186 = vunpack.c.h.b16 %v914
      %v1187 = vunpack.c.l.b16 %v915
      %v1188 = vunpack.c.h.b16 %v915
      %v1189 = vunpack.c.l.b16 %v916
      %v1190 = vunpack.c.h.b16 %v916
      %v1191 = vunpack.c.l.b16 %v917
      %v1192 = vunpack.c.h.b16 %v917
      %v1193 = vunpack.c.l.b16 %v918
      %v1194 = vunpack.c.h.b16 %v918
      %v1195 = vunpack.c.l.b16 %v919
      %v1196 = vunpack.c.h.b16 %v919
      %v1197 = vunpack.c.l.b16 %v920
      %v1198 = vunpack.c.h.b16 %v920
      %v1199 = vunpack.c.l.b16 %v921
      %v1200 = vunpack.c.h.b16 %v921
      %v1201 = vunpack.c.l.b16 %v922
      %v1202 = vunpack.c.h.b16 %v922
      %v1203 = vunpack.c.l.b16 %v923
      %v1204 = vunpack.c.h.b16 %v923
      %v1205 = vunpack.c.l.b16 %v924
      %v1206 = vunpack.c.h.b16 %v924
      %v1207 = vunpack.c.l.b16 %v925
      %v1208 = vunpack.c.h.b16 %v925
      %v1209 = vunpack.c.l.b16 %v926
      %v1210 = vunpack.c.h.b16 %v926
      %v1211 = vunpack.c.l.b16 %v927
      %v1212 = vunpack.c.h.b16 %v927
      %v1213 = vunpack.c.l.b16 %v928
      %v1214 = vunpack.c.h.b16 %v928
      %v1215 = vunpack.c.l.b16 %v929
      %v1216 = vunpack.c.h.b16 %v929
      %v1217 = vunpack.c.l.b16 %v930
      %v1218 = vunpack.c.h.b16 %v930
      %v1219 = vunpack.c.l.b16 %v931
      %v1220 = vunpack.c.h.b16 %v931
      %v1221 = vunpack.c.l.b16 %v932
      %v1222 = vunpack.c.h.b16 %v932
      %v1223 = vunpack.c.l.b16 %v933
      %v1224 = vunpack.c.h.b16 %v933
      %v1225 = vunpack.c.l.b16 %v934
      %v1226 = vunpack.c.h.b16 %v934
      %v1227 = vunpack.c.l.b16 %v935
      %v1228 = vunpack.c.h.b16 %v935
      %v1229 = vunpack.c.l.b16 %v936
      %v1230 = vunpack.c.h.b16 %v936
      %v1231 = vunpack.c.l.b16 %v937
      %v1232 = vunpack.c.h.b16 %v937
      %v1233 = vunpack.c.l.b16 %v938
      %v1234 = vunpack.c.h.b16 %v938
      %v1235 = vunpack.c.l.b16 %v939
      %v1236 = vunpack.c.h.b16 %v939
      %v1237 = vunpack.c.l.b16 %v940
      %v1238 = vunpack.c.h.b16 %v940
      %v1239 = vunpack.c.l.b16 %v941
      %v1240 = vunpack.c.h.b16 %v941
      %v1241 = vunpack.c.l.b16 %v942
      %v1242 = vunpack.c.h.b16 %v942
      %v1243 = vunpack.c.l.b16 %v943
      %v1244 = vunpack.c.h.b16 %v943
      %v1245 = vunpack.c.l.b16 %v944
      %v1246 = vunpack.c.h.b16 %v944
      %v1247 = vunpack.c.l.b16 %v945
      %v1248 = vunpack.c.h.b16 %v945
      %v1249 = vunpack.c.l.b16 %v946
      %v1250 = vunpack.c.h.b16 %v946
      %v1251 = vunpack.c.l.b16 %v947
      %v1252 = vunpack.c.h.b16 %v947
      %v1253 = vunpack.c.l.b16 %v948
      %v1254 = vunpack.c.h.b16 %v948
      %v1255 = vunpack.c.l.b16 %v949
      %v1256 = vunpack.c.h.b16 %v949
      %v1257 = vunpack.c.l.b16 %v950
      %v1258 = vunpack.c.h.b16 %v950
      %v1259 = vunpack.c.l.b16 %v951
      %v1260 = vunpack.c.h.b16 %v951
      %v1261 = vunpack.c.l.b16 %v952
      %v1262 = vunpack.c.h.b16 %v952
      %v1263 = vunpack.c.l.b16 %v953
      %v1264 = vunpack.c.h.b16 %v953
      %v1265 = vunpack.c.l.b16 %v954
      %v1266 = vunpack.c.h.b16 %v954
      %v1267 = vunpack.c.l.b16 %v955
      %v1268 = vunpack.c.h.b16 %v955
      %v1269 = vunpack.c.l.b16 %v956
      %v1270 = vunpack.c.h.b16 %v956
      %v1271 = vunpack.c.l.b16 %v957
      %v1272 = vunpack.c.h.b16 %v957
      %v1273 = vunpack.c.l.b16 %v958
      %v1274 = vunpack.c.h.b16 %v958
      %v1275 = vunpack.c.l.b16 %v959
      %v1276 = vunpack.c.h.b16 %v959
      %v1277 = vunpack.c.l.b16 %v960
      %v1278 = vunpack.c.h.b16 %v960
      %v1279 = vunpack.c.l.b16 %v961
      %v1280 = vunpack.c.h.b16 %v961
      %v1281 = vunpack.c.l.b16 %v962
      %v1282 = vunpack.c.h.b16 %v962
      %v1283 = vpack.c.b16 %v1159, %v1155
      %v1284 = vpack.c.b16 %v1160, %v1156
      %v1285 = vpack.c.b16 %v1161, %v1157
      %v1286 = vpack.c.b16 %v1162, %v1158
      %v1287 = vpack.c.b16 %v1167, %v1163
      %v1288 = vpack.c.b16 %v1168, %v1164
      %v1289 = vpack.c.b16 %v1169, %v1165
      %v1290 = vpack.c.b16 %v1170, %v1166
      %v1291 = vpack.c.b16 %v1175, %v1171
      %v1292 = vpack.c.b16 %v1176, %v1172
      %v1293 = vpack.c.b16 %v1177, %v1173
      %v1294 = vpack.c.b16 %v1178, %v1174
      %v1295 = vpack.c.b16 %v1183, %v1179
      %v1296 = vpack.c.b16 %v1184, %v1180
      %v1297 = vpack.c.b16 %v1185, %v1181
      %v1298 = vpack.c.b16 %v1186, %v1182
      %v1299 = vpack.c.b16 %v1191, %v1187
      %v1300 = vpack.c.b16 %v1192, %v1188
      %v1301 = vpack.c.b16 %v1193, %v1189
      %v1302 = vpack.c.b16 %v1194, %v1190
      %v1303 = vpack.c.b16 %v1199, %v1195
      %v1304 = vpack.c.b16 %v1200, %v1196
      %v1305 = vpack.c.b16 %v1201, %v1197
      %v1306 = vpack.c.b16 %v1202, %v1198
      %v1307 = vpack.c.b16 %v1207, %v1203
      %v1308 = vpack.c.b16 %v1208, %v1204
      %v1309 = vpack.c.b16 %v1209, %v1205
      %v1310 = vpack.c.b16 %v1210, %v1206
      %v1311 = vpack.c.b16 %v1215, %v1211
      %v1312 = vpack.c.b16 %v1216, %v1212
      %v1313 = vpack.c.b16 %v1217, %v1213
      %v1314 = vpack.c.b16 %v1218, %v1214
      %v1315 = vpack.c.b16 %v1223, %v1219
      %v1316 = vpack.c.b16 %v1224, %v1220
      %v1317 = vpack.c.b16 %v1225, %v1221
      %v1318 = vpack.c.b16 %v1226, %v1222
      %v1319 = vpack.c.b16 %v1231, %v1227
      %v1320 = vpack.c.b16 %v1232, %v1228
      %v1321 = vpack.c.b16 %v1233, %v1229
      %v1322 = vpack.c.b16 %v1234, %v1230
      %v1323 = vpack.c.b16 %v1239, %v1235
      %v1324 = vpack.c.b16 %v1240, %v1236
      %v1325 = vpack.c.b16 %v1241, %v1237
      %v1326 = vpack.c.b16 %v1242, %v1238
      %v1327 = vpack.c.b16 %v1247, %v1243
      %v1328 = vpack.c.b16 %v1248, %v1244
      %v1329 = vpack.c.b16 %v1249, %v1245
      %v1330 = vpack.c.b16 %v1250, %v1246
      %v1331 = vpack.c.b16 %v1255, %v1251
      %v1332 = vpack.c.b16 %v1256, %v1252
      %v1333 = vpack.c.b16 %v1257, %v1253
      %v1334 = vpack.c.b16 %v1258, %v1254
      %v1335 = vpack.c.b16 %v1263, %v1259
      %v1336 = vpack.c.b16 %v1264, %v1260
      %v1337 = vpack.c.b16 %v1265, %v1261
      %v1338 = vpack.c.b16 %v1266, %v1262
      %v1339 = vpack.c.b16 %v1271, %v1267
      %v1340 = vpack.c.b16 %v1272, %v1268
      %v1341 = vpack.c.b16 %v1273, %v1269
      %v1342 = vpack.c.b16 %v1274, %v1270
      %v1343 = vpack.c.b16 %v1279, %v1275
      %v1344 = vpack.c.b16 %v1280, %v1276
      %v1345 = vpack.c.b16 %v1281, %v1277
      %v1346 = vpack.c.b16 %v1282, %v1278
      %1411 = vmatprep.subr.bf16.mxu0 %v1284
      %1412 = vmatpush1.bf16.msra.mxu0 %v1283
      %1413 = vmatprep.subr.bf16.mxu0 %v1288
      %1414 = vmatpush1.bf16.msra.mxu0 %v1287
      %1415 = vmatprep.subr.bf16.mxu0 %v1292
      %1416 = vmatpush1.bf16.msra.mxu0 %v1291
      %1417 = vmatprep.subr.bf16.mxu0 %v1296
      %1418 = vmatpush1.bf16.msra.mxu0 %v1295
      %1419 = vmatprep.subr.bf16.mxu0 %v1300
      %1420 = vmatpush1.bf16.msra.mxu0 %v1299
      %1421 = vmatprep.subr.bf16.mxu0 %v1304
      %1422 = vmatpush1.bf16.msra.mxu0 %v1303
      %1423 = vmatprep.subr.bf16.mxu0 %v1308
      %1424 = vmatpush1.bf16.msra.mxu0 %v1307
      %1425 = vmatprep.subr.bf16.mxu0 %v1312
      %1426 = vmatpush1.bf16.msra.mxu0 %v1311
      %1427 = vmatprep.subr.bf16.mxu0 %v1316
      %1428 = vmatpush1.bf16.msra.mxu0 %v1315
      %1429 = vmatprep.subr.bf16.mxu0 %v1320
      %1430 = vmatpush1.bf16.msra.mxu0 %v1319
      %1431 = vmatprep.subr.bf16.mxu0 %v1324
      %1432 = vmatpush1.bf16.msra.mxu0 %v1323
      %1433 = vmatprep.subr.bf16.mxu0 %v1328
      %1434 = vmatpush1.bf16.msra.mxu0 %v1327
      %1435 = vmatprep.subr.bf16.mxu0 %v1332
      %1436 = vmatpush1.bf16.msra.mxu0 %v1331
      %1437 = vmatprep.subr.bf16.mxu0 %v1336
      %1438 = vmatpush1.bf16.msra.mxu0 %v1335
      %1439 = vmatprep.subr.bf16.mxu0 %v1340
      %1440 = vmatpush1.bf16.msra.mxu0 %v1339
      %1441 = vmatprep.subr.bf16.mxu0 %v1344
      %1442 = vmatpush1.bf16.msra.mxu0 %v1343
      %1443 = vmatprep.mubr.bf16.mxu0 %v963
      %1444 = vmatmul.mubr.bf16.gmra.mrb[0].mxu0 %v474
      %v1445 = vpop.f32.mrb[0].mxu0
      %v1446 = vadd.f32 0.0, %v1445
      %v1447 = vpop.f32.mrb[0].mxu0
      %v1448 = vadd.f32 0.0, %v1447
      %v1449 = vpop.f32.mrb[0].mxu0
      %v1450 = vadd.f32 0.0, %v1449
      %v1451 = vpop.f32.mrb[0].mxu0
      %v1452 = vadd.f32 0.0, %v1451
      %1453 = vmatprep.mubr.bf16.mxu0 %v964
      %1454 = vmatmul.mubr.bf16.gmra.mrb[0].mxu0 %v475
      %v1455 = vpop.f32.mrb[0].mxu0
      %v1456 = vadd.f32 0.0, %v1455
      %v1457 = vpop.f32.mrb[0].mxu0
      %v1458 = vadd.f32 0.0, %v1457
      %v1459 = vpop.f32.mrb[0].mxu0
      %v1460 = vadd.f32 0.0, %v1459
      %v1461 = vpop.f32.mrb[0].mxu0
      %v1462 = vadd.f32 0.0, %v1461
      %1463 = vmatprep.mubr.bf16.mxu0 %v965
      %1464 = vmatmul.mubr.bf16.gmra.mrb[0].mxu0 %v476
      %v1465 = vpop.f32.mrb[0].mxu0
      %v1466 = vadd.f32 0.0, %v1465
      %v1467 = vpop.f32.mrb[0].mxu0
      %v1468 = vadd.f32 0.0, %v1467
      %v1469 = vpop.f32.mrb[0].mxu0
      %v1470 = vadd.f32 0.0, %v1469
      %v1471 = vpop.f32.mrb[0].mxu0
      %v1472 = vadd.f32 0.0, %v1471
      %1473 = vmatprep.mubr.bf16.mxu0 %v966
      %1474 = vmatmul.mubr.bf16.gmra.mrb[0].mxu0 %v477
      %v1475 = vpop.f32.mrb[0].mxu0
      %v1476 = vadd.f32 0.0, %v1475
      %v1477 = vpop.f32.mrb[0].mxu0
      %v1478 = vadd.f32 0.0, %v1477
      %v1479 = vpop.f32.mrb[0].mxu0
      %v1480 = vadd.f32 0.0, %v1479
      %v1481 = vpop.f32.mrb[0].mxu0
      %v1482 = vadd.f32 0.0, %v1481
      %1483 = vmatprep.mubr.bf16.mxu0 %v968
      %1484 = vmatmul.mubr.bf16.gmra.mrb[0].mxu0 %v967
      %v1485 = vpop.f32.mrb[0].mxu0
      %v1486 = vadd.f32 0.0, %v1485
      %v1487 = vpop.f32.mrb[0].mxu0
      %v1488 = vadd.f32 0.0, %v1487
      %v1489 = vpop.f32.mrb[0].mxu0
      %v1490 = vadd.f32 0.0, %v1489
      %v1491 = vpop.f32.mrb[0].mxu0
      %v1492 = vadd.f32 0.0, %v1491
      %1493 = vmatprep.mubr.bf16.mxu0 %v970
      %1494 = vmatmul.mubr.bf16.gmra.mrb[0].mxu0 %v969
      %v1495 = vpop.f32.mrb[0].mxu0
      %v1496 = vadd.f32 0.0, %v1495
      %v1497 = vpop.f32.mrb[0].mxu0
      %v1498 = vadd.f32 0.0, %v1497
      %v1499 = vpop.f32.mrb[0].mxu0
      %v1500 = vadd.f32 0.0, %v1499
      %v1501 = vpop.f32.mrb[0].mxu0
      %v1502 = vadd.f32 0.0, %v1501
      %1503 = vmatprep.mubr.bf16.mxu0 %v972
      %1504 = vmatmul.mubr.bf16.gmra.mrb[0].mxu0 %v971
      %v1505 = vpop.f32.mrb[0].mxu0
      %v1506 = vadd.f32 0.0, %v1505
      %v1507 = vpop.f32.mrb[0].mxu0
      %v1508 = vadd.f32 0.0, %v1507
      %v1509 = vpop.f32.mrb[0].mxu0
      %v1510 = vadd.f32 0.0, %v1509
      %v1511 = vpop.f32.mrb[0].mxu0
      %v1512 = vadd.f32 0.0, %v1511
      %1513 = vmatprep.mubr.bf16.mxu0 %v974
      %1514 = vmatmul.mubr.bf16.gmra.mrb[0].mxu0 %v973
      %v1515 = vpop.f32.mrb[0].mxu0
      %v1516 = vadd.f32 0.0, %v1515
      %v1517 = vpop.f32.mrb[0].mxu0
      %v1518 = vadd.f32 0.0, %v1517
      %v1519 = vpop.f32.mrb[0].mxu0
      %v1520 = vadd.f32 0.0, %v1519
      %v1521 = vpop.f32.mrb[0].mxu0
      %v1522 = vadd.f32 0.0, %v1521
      %1523 = vmatprep.mubr.bf16.mxu0 %v976
      %1524 = vmatmul.mubr.bf16.gmra.mrb[0].mxu0 %v975
      %v1525 = vpop.f32.mrb[0].mxu0
      %v1526 = vadd.f32 0.0, %v1525
      %v1527 = vpop.f32.mrb[0].mxu0
      %v1528 = vadd.f32 0.0, %v1527
      %v1529 = vpop.f32.mrb[0].mxu0
      %v1530 = vadd.f32 0.0, %v1529
      %v1531 = vpop.f32.mrb[0].mxu0
      %v1532 = vadd.f32 0.0, %v1531
      %1533 = vmatprep.mubr.bf16.mxu0 %v977
      %1534 = vmatmul.mubr.bf16.gmra.mrb[0].mxu0 %v484
      %v1535 = vpop.f32.mrb[0].mxu0
      %v1536 = vadd.f32 0.0, %v1535
      %v1537 = vpop.f32.mrb[0].mxu0
      %v1538 = vadd.f32 0.0, %v1537
      %v1539 = vpop.f32.mrb[0].mxu0
      %v1540 = vadd.f32 0.0, %v1539
      %v1541 = vpop.f32.mrb[0].mxu0
      %v1542 = vadd.f32 0.0, %v1541
      %1543 = vmatprep.mubr.bf16.mxu0 %v978
      %1544 = vmatmul.mubr.bf16.gmra.mrb[0].mxu0 %v485
      %v1545 = vpop.f32.mrb[0].mxu0
      %v1546 = vadd.f32 0.0, %v1545
      %v1547 = vpop.f32.mrb[0].mxu0
      %v1548 = vadd.f32 0.0, %v1547
      %v1549 = vpop.f32.mrb[0].mxu0
      %v1550 = vadd.f32 0.0, %v1549
      %v1551 = vpop.f32.mrb[0].mxu0
      %v1552 = vadd.f32 0.0, %v1551
      %1553 = vmatprep.mubr.bf16.mxu0 %v979
      %1554 = vmatmul.mubr.bf16.gmra.mrb[0].mxu0 %v486
      %v1555 = vpop.f32.mrb[0].mxu0
      %v1556 = vadd.f32 0.0, %v1555
      %v1557 = vpop.f32.mrb[0].mxu0
      %v1558 = vadd.f32 0.0, %v1557
      %v1559 = vpop.f32.mrb[0].mxu0
      %v1560 = vadd.f32 0.0, %v1559
      %v1561 = vpop.f32.mrb[0].mxu0
      %v1562 = vadd.f32 0.0, %v1561
      %1563 = vmatprep.mubr.bf16.mxu0 %v980
      %1564 = vmatmul.mubr.bf16.gmra.mrb[0].mxu0 %v487
      %v1565 = vpop.f32.mrb[0].mxu0
      %v1566 = vadd.f32 0.0, %v1565
      %v1567 = vpop.f32.mrb[0].mxu0
      %v1568 = vadd.f32 0.0, %v1567
      %v1569 = vpop.f32.mrb[0].mxu0
      %v1570 = vadd.f32 0.0, %v1569
      %v1571 = vpop.f32.mrb[0].mxu0
      %v1572 = vadd.f32 0.0, %v1571
      %1573 = vmatprep.mubr.bf16.mxu0 %v982
      %1574 = vmatmul.mubr.bf16.gmra.mrb[0].mxu0 %v981
      %v1575 = vpop.f32.mrb[0].mxu0
      %v1576 = vadd.f32 0.0, %v1575
      %v1577 = vpop.f32.mrb[0].mxu0
      %v1578 = vadd.f32 0.0, %v1577
      %v1579 = vpop.f32.mrb[0].mxu0
      %v1580 = vadd.f32 0.0, %v1579
      %v1581 = vpop.f32.mrb[0].mxu0
      %v1582 = vadd.f32 0.0, %v1581
      %1583 = vmatprep.mubr.bf16.mxu0 %v984
      %1584 = vmatmul.mubr.bf16.gmra.mrb[0].mxu0 %v983
      %v1585 = vpop.f32.mrb[0].mxu0
      %v1586 = vadd.f32 0.0, %v1585
      %v1587 = vpop.f32.mrb[0].mxu0
      %v1588 = vadd.f32 0.0, %v1587
      %v1589 = vpop.f32.mrb[0].mxu0
      %v1590 = vadd.f32 0.0, %v1589
      %v1591 = vpop.f32.mrb[0].mxu0
      %v1592 = vadd.f32 0.0, %v1591
      %1593 = vmatprep.mubr.bf16.mxu0 %v986
      %1594 = vmatmul.mubr.bf16.gmra.mrb[0].mxu0 %v985
      %v1595 = vpop.f32.mrb[0].mxu0
      %v1596 = vadd.f32 0.0, %v1595
      %v1597 = vpop.f32.mrb[0].mxu0
      %v1598 = vadd.f32 0.0, %v1597
      %v1599 = vpop.f32.mrb[0].mxu0
      %v1600 = vadd.f32 0.0, %v1599
      %v1601 = vpop.f32.mrb[0].mxu0
      %v1602 = vadd.f32 0.0, %v1601
      %1603 = vmatprep.mubr.bf16.mxu0 %v988
      %1604 = vmatmul.mubr.bf16.gmra.mrb[0].mxu0 %v987
      %v1605 = vpop.f32.mrb[0].mxu0
      %v1606 = vadd.f32 0.0, %v1605
      %v1607 = vpop.f32.mrb[0].mxu0
      %v1608 = vadd.f32 0.0, %v1607
      %v1609 = vpop.f32.mrb[0].mxu0
      %v1610 = vadd.f32 0.0, %v1609
      %v1611 = vpop.f32.mrb[0].mxu0
      %v1612 = vadd.f32 0.0, %v1611
      %1613 = vmatprep.mubr.bf16.mxu0 %v990
      %1614 = vmatmul.mubr.bf16.gmra.mrb[0].mxu0 %v989
      %v1615 = vpop.f32.mrb[0].mxu0
      %v1616 = vadd.f32 0.0, %v1615
      %v1617 = vpop.f32.mrb[0].mxu0
      %v1618 = vadd.f32 0.0, %v1617
      %v1619 = vpop.f32.mrb[0].mxu0
      %v1620 = vadd.f32 0.0, %v1619
      %v1621 = vpop.f32.mrb[0].mxu0
      %v1622 = vadd.f32 0.0, %v1621
      %1623 = vmatprep.mubr.bf16.mxu0 %v991
      %1624 = vmatmul.mubr.bf16.gmra.mrb[0].mxu0 %v494
      %v1625 = vpop.f32.mrb[0].mxu0
      %v1626 = vadd.f32 0.0, %v1625
      %v1627 = vpop.f32.mrb[0].mxu0
      %v1628 = vadd.f32 0.0, %v1627
      %v1629 = vpop.f32.mrb[0].mxu0
      %v1630 = vadd.f32 0.0, %v1629
      %v1631 = vpop.f32.mrb[0].mxu0
      %v1632 = vadd.f32 0.0, %v1631
      %1633 = vmatprep.mubr.bf16.mxu0 %v992
      %1634 = vmatmul.mubr.bf16.gmra.mrb[0].mxu0 %v495
      %v1635 = vpop.f32.mrb[0].mxu0
      %v1636 = vadd.f32 0.0, %v1635
      %v1637 = vpop.f32.mrb[0].mxu0
      %v1638 = vadd.f32 0.0, %v1637
      %v1639 = vpop.f32.mrb[0].mxu0
      %v1640 = vadd.f32 0.0, %v1639
      %v1641 = vpop.f32.mrb[0].mxu0
      %v1642 = vadd.f32 0.0, %v1641
      %1643 = vmatprep.mubr.bf16.mxu0 %v993
      %1644 = vmatmul.mubr.bf16.gmra.mrb[0].mxu0 %v496
      %v1645 = vpop.f32.mrb[0].mxu0
      %v1646 = vadd.f32 0.0, %v1645
      %v1647 = vpop.f32.mrb[0].mxu0
      %v1648 = vadd.f32 0.0, %v1647
      %v1649 = vpop.f32.mrb[0].mxu0
      %v1650 = vadd.f32 0.0, %v1649
      %v1651 = vpop.f32.mrb[0].mxu0
      %v1652 = vadd.f32 0.0, %v1651
      %1653 = vmatprep.mubr.bf16.mxu0 %v994
      %1654 = vmatmul.mubr.bf16.gmra.mrb[0].mxu0 %v497
      %v1655 = vpop.f32.mrb[0].mxu0
      %v1656 = vadd.f32 0.0, %v1655
      %v1657 = vpop.f32.mrb[0].mxu0
      %v1658 = vadd.f32 0.0, %v1657
      %v1659 = vpop.f32.mrb[0].mxu0
      %v1660 = vadd.f32 0.0, %v1659
      %v1661 = vpop.f32.mrb[0].mxu0
      %v1662 = vadd.f32 0.0, %v1661
      %1663 = vmatprep.mubr.bf16.mxu0 %v996
      %1664 = vmatmul.mubr.bf16.gmra.mrb[0].mxu0 %v995
      %v1665 = vpop.f32.mrb[0].mxu0
      %v1666 = vadd.f32 0.0, %v1665
      %v1667 = vpop.f32.mrb[0].mxu0
      %v1668 = vadd.f32 0.0, %v1667
      %v1669 = vpop.f32.mrb[0].mxu0
      %v1670 = vadd.f32 0.0, %v1669
      %v1671 = vpop.f32.mrb[0].mxu0
      %v1672 = vadd.f32 0.0, %v1671
      %1673 = vmatprep.mubr.bf16.mxu0 %v998
      %1674 = vmatmul.mubr.bf16.gmra.mrb[0].mxu0 %v997
      %v1675 = vpop.f32.mrb[0].mxu0
      %v1676 = vadd.f32 0.0, %v1675
      %v1677 = vpop.f32.mrb[0].mxu0
      %v1678 = vadd.f32 0.0, %v1677
      %v1679 = vpop.f32.mrb[0].mxu0
      %v1680 = vadd.f32 0.0, %v1679
      %v1681 = vpop.f32.mrb[0].mxu0
      %v1682 = vadd.f32 0.0, %v1681
      %1683 = vmatprep.mubr.bf16.mxu0 %v1000
      %1684 = vmatmul.mubr.bf16.gmra.mrb[0].mxu0 %v999
      %v1685 = vpop.f32.mrb[0].mxu0
      %v1686 = vadd.f32 0.0, %v1685
      %v1687 = vpop.f32.mrb[0].mxu0
      %v1688 = vadd.f32 0.0, %v1687
      %v1689 = vpop.f32.mrb[0].mxu0
      %v1690 = vadd.f32 0.0, %v1689
      %v1691 = vpop.f32.mrb[0].mxu0
      %v1692 = vadd.f32 0.0, %v1691
      %1693 = vmatprep.mubr.bf16.mxu0 %v1002
      %1694 = vmatmul.mubr.bf16.gmra.mrb[0].mxu0 %v1001
      %v1695 = vpop.f32.mrb[0].mxu0
      %v1696 = vadd.f32 0.0, %v1695
      %v1697 = vpop.f32.mrb[0].mxu0
      %v1698 = vadd.f32 0.0, %v1697
      %v1699 = vpop.f32.mrb[0].mxu0
      %v1700 = vadd.f32 0.0, %v1699
      %v1701 = vpop.f32.mrb[0].mxu0
      %v1702 = vadd.f32 0.0, %v1701
      %1703 = vmatprep.mubr.bf16.mxu0 %v1004
      %1704 = vmatmul.mubr.bf16.gmra.mrb[0].mxu0 %v1003
      %v1705 = vpop.f32.mrb[0].mxu0
      %v1706 = vadd.f32 0.0, %v1705
      %v1707 = vpop.f32.mrb[0].mxu0
      %v1708 = vadd.f32 0.0, %v1707
      %v1709 = vpop.f32.mrb[0].mxu0
      %v1710 = vadd.f32 0.0, %v1709
      %v1711 = vpop.f32.mrb[0].mxu0
      %v1712 = vadd.f32 0.0, %v1711
      %1713 = vmatprep.mubr.bf16.mxu0 %v1005
      %1714 = vmatmul.mubr.bf16.gmra.mrb[0].mxu0 %v504
      %v1715 = vpop.f32.mrb[0].mxu0
      %v1716 = vadd.f32 0.0, %v1715
      %v1717 = vpop.f32.mrb[0].mxu0
      %v1718 = vadd.f32 0.0, %v1717
      %v1719 = vpop.f32.mrb[0].mxu0
      %v1720 = vadd.f32 0.0, %v1719
      %v1721 = vpop.f32.mrb[0].mxu0
      %v1722 = vadd.f32 0.0, %v1721
      %1723 = vmatprep.mubr.bf16.mxu0 %v1006
      %1724 = vmatmul.mubr.bf16.gmra.mrb[0].mxu0 %v505
      %v1725 = vpop.f32.mrb[0].mxu0
      %v1726 = vadd.f32 0.0, %v1725
      %v1727 = vpop.f32.mrb[0].mxu0
      %v1728 = vadd.f32 0.0, %v1727
      %v1729 = vpop.f32.mrb[0].mxu0
      %v1730 = vadd.f32 0.0, %v1729
      %v1731 = vpop.f32.mrb[0].mxu0
      %v1732 = vadd.f32 0.0, %v1731
      %1733 = vmatprep.mubr.bf16.mxu0 %v1007
      %1734 = vmatmul.mubr.bf16.gmra.mrb[0].mxu0 %v506
      %v1735 = vpop.f32.mrb[0].mxu0
      %v1736 = vadd.f32 0.0, %v1735
      %v1737 = vpop.f32.mrb[0].mxu0
      %v1738 = vadd.f32 0.0, %v1737
      %v1739 = vpop.f32.mrb[0].mxu0
      %v1740 = vadd.f32 0.0, %v1739
      %v1741 = vpop.f32.mrb[0].mxu0
      %v1742 = vadd.f32 0.0, %v1741
      %1743 = vmatprep.mubr.bf16.mxu0 %v1008
      %1744 = vmatmul.mubr.bf16.gmra.mrb[0].mxu0 %v507
      %v1745 = vpop.f32.mrb[0].mxu0
      %v1746 = vadd.f32 0.0, %v1745
      %v1747 = vpop.f32.mrb[0].mxu0
      %v1748 = vadd.f32 0.0, %v1747
      %v1749 = vpop.f32.mrb[0].mxu0
      %v1750 = vadd.f32 0.0, %v1749
      %v1751 = vpop.f32.mrb[0].mxu0
      %v1752 = vadd.f32 0.0, %v1751
      %1753 = vmatprep.mubr.bf16.mxu0 %v1010
      %1754 = vmatmul.mubr.bf16.gmra.mrb[0].mxu0 %v1009
      %v1755 = vpop.f32.mrb[0].mxu0
      %v1756 = vadd.f32 0.0, %v1755
      %v1757 = vpop.f32.mrb[0].mxu0
      %v1758 = vadd.f32 0.0, %v1757
      %v1759 = vpop.f32.mrb[0].mxu0
      %v1760 = vadd.f32 0.0, %v1759
      %v1761 = vpop.f32.mrb[0].mxu0
      %v1762 = vadd.f32 0.0, %v1761
      %1763 = vmatprep.mubr.bf16.mxu0 %v1012
      %1764 = vmatmul.mubr.bf16.gmra.mrb[0].mxu0 %v1011
      %v1765 = vpop.f32.mrb[0].mxu0
      %v1766 = vadd.f32 0.0, %v1765
      %v1767 = vpop.f32.mrb[0].mxu0
      %v1768 = vadd.f32 0.0, %v1767
      %v1769 = vpop.f32.mrb[0].mxu0
      %v1770 = vadd.f32 0.0, %v1769
      %v1771 = vpop.f32.mrb[0].mxu0
      %v1772 = vadd.f32 0.0, %v1771
      %1773 = vmatprep.mubr.bf16.mxu0 %v1014
      %1774 = vmatmul.mubr.bf16.gmra.mrb[0].mxu0 %v1013
      %v1775 = vpop.f32.mrb[0].mxu0
      %v1776 = vadd.f32 0.0, %v1775
      %v1777 = vpop.f32.mrb[0].mxu0
      %v1778 = vadd.f32 0.0, %v1777
      %v1779 = vpop.f32.mrb[0].mxu0
      %v1780 = vadd.f32 0.0, %v1779
      %v1781 = vpop.f32.mrb[0].mxu0
      %v1782 = vadd.f32 0.0, %v1781
      %1783 = vmatprep.mubr.bf16.mxu0 %v1016
      %1784 = vmatmul.mubr.bf16.gmra.mrb[0].mxu0 %v1015
      %v1785 = vpop.f32.mrb[0].mxu0
      %v1786 = vadd.f32 0.0, %v1785
      %v1787 = vpop.f32.mrb[0].mxu0
      %v1788 = vadd.f32 0.0, %v1787
      %v1789 = vpop.f32.mrb[0].mxu0
      %v1790 = vadd.f32 0.0, %v1789
      %v1791 = vpop.f32.mrb[0].mxu0
      %v1792 = vadd.f32 0.0, %v1791
      %1793 = vmatprep.mubr.bf16.mxu0 %v1018
      %1794 = vmatmul.mubr.bf16.gmra.mrb[0].mxu0 %v1017
      %v1795 = vpop.f32.mrb[0].mxu0
      %v1796 = vadd.f32 0.0, %v1795
      %v1797 = vpop.f32.mrb[0].mxu0
      %v1798 = vadd.f32 0.0, %v1797
      %v1799 = vpop.f32.mrb[0].mxu0
      %v1800 = vadd.f32 0.0, %v1799
      %v1801 = vpop.f32.mrb[0].mxu0
      %v1802 = vadd.f32 0.0, %v1801
      %1803 = vdwg.mxu0
      %1804 = vmatprep.subr.bf16.mxu0 %v1286
      %1805 = vmatpush1.bf16.msra.mxu0 %v1285
      %1806 = vmatprep.subr.bf16.mxu0 %v1290
      %1807 = vmatpush1.bf16.msra.mxu0 %v1289
      %1808 = vmatprep.subr.bf16.mxu0 %v1294
      %1809 = vmatpush1.bf16.msra.mxu0 %v1293
      %1810 = vmatprep.subr.bf16.mxu0 %v1298
      %1811 = vmatpush1.bf16.msra.mxu0 %v1297
      %1812 = vmatprep.subr.bf16.mxu0 %v1302
      %1813 = vmatpush1.bf16.msra.mxu0 %v1301
      %1814 = vmatprep.subr.bf16.mxu0 %v1306
      %1815 = vmatpush1.bf16.msra.mxu0 %v1305
      %1816 = vmatprep.subr.bf16.mxu0 %v1310
      %1817 = vmatpush1.bf16.msra.mxu0 %v1309
      %1818 = vmatprep.subr.bf16.mxu0 %v1314
      %1819 = vmatpush1.bf16.msra.mxu0 %v1313
      %1820 = vmatprep.subr.bf16.mxu0 %v1318
      %1821 = vmatpush1.bf16.msra.mxu0 %v1317
      %1822 = vmatprep.subr.bf16.mxu0 %v1322
      %1823 = vmatpush1.bf16.msra.mxu0 %v1321
      %1824 = vmatprep.subr.bf16.mxu0 %v1326
      %1825 = vmatpush1.bf16.msra.mxu0 %v1325
      %1826 = vmatprep.subr.bf16.mxu0 %v1330
      %1827 = vmatpush1.bf16.msra.mxu0 %v1329
      %1828 = vmatprep.subr.bf16.mxu0 %v1334
      %1829 = vmatpush1.bf16.msra.mxu0 %v1333
      %1830 = vmatprep.subr.bf16.mxu0 %v1338
      %1831 = vmatpush1.bf16.msra.mxu0 %v1337
      %1832 = vmatprep.subr.bf16.mxu0 %v1342
      %1833 = vmatpush1.bf16.msra.mxu0 %v1341
      %1834 = vmatprep.subr.bf16.mxu0 %v1346
      %1835 = vmatpush1.bf16.msra.mxu0 %v1345
      %1836 = vmatprep.mubr.bf16.mxu0 %v963
      %1837 = vmatmul.mubr.bf16.gmra.mrb[0].mxu0 %v474
      %v1838 = vpop.f32.mrb[0].mxu0
      %v1839 = vadd.f32 0.0, %v1838
      %v1840 = vpop.f32.mrb[0].mxu0
      %v1841 = vadd.f32 0.0, %v1840
      %v1842 = vpop.f32.mrb[0].mxu0
      %v1843 = vadd.f32 0.0, %v1842
      %v1844 = vpop.f32.mrb[0].mxu0
      %v1845 = vadd.f32 0.0, %v1844
      %1846 = vmatprep.mubr.bf16.mxu0 %v964
      %1847 = vmatmul.mubr.bf16.gmra.mrb[0].mxu0 %v475
      %v1848 = vpop.f32.mrb[0].mxu0
      %v1849 = vadd.f32 0.0, %v1848
      %v1850 = vpop.f32.mrb[0].mxu0
      %v1851 = vadd.f32 0.0, %v1850
      %v1852 = vpop.f32.mrb[0].mxu0
      %v1853 = vadd.f32 0.0, %v1852
      %v1854 = vpop.f32.mrb[0].mxu0
      %v1855 = vadd.f32 0.0, %v1854
      %1856 = vmatprep.mubr.bf16.mxu0 %v965
      %1857 = vmatmul.mubr.bf16.gmra.mrb[0].mxu0 %v476
      %v1858 = vpop.f32.mrb[0].mxu0
      %v1859 = vadd.f32 0.0, %v1858
      %v1860 = vpop.f32.mrb[0].mxu0
      %v1861 = vadd.f32 0.0, %v1860
      %v1862 = vpop.f32.mrb[0].mxu0
      %v1863 = vadd.f32 0.0, %v1862
      %v1864 = vpop.f32.mrb[0].mxu0
      %v1865 = vadd.f32 0.0, %v1864
      %1866 = vmatprep.mubr.bf16.mxu0 %v966
      %1867 = vmatmul.mubr.bf16.gmra.mrb[0].mxu0 %v477
      %v1868 = vpop.f32.mrb[0].mxu0
      %v1869 = vadd.f32 0.0, %v1868
      %v1870 = vpop.f32.mrb[0].mxu0
      %v1871 = vadd.f32 0.0, %v1870
      %v1872 = vpop.f32.mrb[0].mxu0
      %v1873 = vadd.f32 0.0, %v1872
      %v1874 = vpop.f32.mrb[0].mxu0
      %v1875 = vadd.f32 0.0, %v1874
      %1876 = vmatprep.mubr.bf16.mxu0 %v968
      %1877 = vmatmul.mubr.bf16.gmra.mrb[0].mxu0 %v967
      %v1878 = vpop.f32.mrb[0].mxu0
      %v1879 = vadd.f32 0.0, %v1878
      %v1880 = vpop.f32.mrb[0].mxu0
      %v1881 = vadd.f32 0.0, %v1880
      %v1882 = vpop.f32.mrb[0].mxu0
      %v1883 = vadd.f32 0.0, %v1882
      %v1884 = vpop.f32.mrb[0].mxu0
      %v1885 = vadd.f32 0.0, %v1884
      %1886 = vmatprep.mubr.bf16.mxu0 %v970
      %1887 = vmatmul.mubr.bf16.gmra.mrb[0].mxu0 %v969
      %v1888 = vpop.f32.mrb[0].mxu0
      %v1889 = vadd.f32 0.0, %v1888
      %v1890 = vpop.f32.mrb[0].mxu0
      %v1891 = vadd.f32 0.0, %v1890
      %v1892 = vpop.f32.mrb[0].mxu0
      %v1893 = vadd.f32 0.0, %v1892
      %v1894 = vpop.f32.mrb[0].mxu0
      %v1895 = vadd.f32 0.0, %v1894
      %1896 = vmatprep.mubr.bf16.mxu0 %v972
      %1897 = vmatmul.mubr.bf16.gmra.mrb[0].mxu0 %v971
      %v1898 = vpop.f32.mrb[0].mxu0
      %v1899 = vadd.f32 0.0, %v1898
      %v1900 = vpop.f32.mrb[0].mxu0
      %v1901 = vadd.f32 0.0, %v1900
      %v1902 = vpop.f32.mrb[0].mxu0
      %v1903 = vadd.f32 0.0, %v1902
      %v1904 = vpop.f32.mrb[0].mxu0
      %v1905 = vadd.f32 0.0, %v1904
      %1906 = vmatprep.mubr.bf16.mxu0 %v974
      %1907 = vmatmul.mubr.bf16.gmra.mrb[0].mxu0 %v973
      %v1908 = vpop.f32.mrb[0].mxu0
      %v1909 = vadd.f32 0.0, %v1908
      %v1910 = vpop.f32.mrb[0].mxu0
      %v1911 = vadd.f32 0.0, %v1910
      %v1912 = vpop.f32.mrb[0].mxu0
      %v1913 = vadd.f32 0.0, %v1912
      %v1914 = vpop.f32.mrb[0].mxu0
      %v1915 = vadd.f32 0.0, %v1914
      %1916 = vmatprep.mubr.bf16.mxu0 %v976
      %1917 = vmatmul.mubr.bf16.gmra.mrb[0].mxu0 %v975
      %v1918 = vpop.f32.mrb[0].mxu0
      %v1919 = vadd.f32 0.0, %v1918
      %v1920 = vpop.f32.mrb[0].mxu0
      %v1921 = vadd.f32 0.0, %v1920
      %v1922 = vpop.f32.mrb[0].mxu0
      %v1923 = vadd.f32 0.0, %v1922
      %v1924 = vpop.f32.mrb[0].mxu0
      %v1925 = vadd.f32 0.0, %v1924
      %1926 = vmatprep.mubr.bf16.mxu0 %v977
      %1927 = vmatmul.mubr.bf16.gmra.mrb[0].mxu0 %v484
      %v1928 = vpop.f32.mrb[0].mxu0
      %v1929 = vadd.f32 0.0, %v1928
      %v1930 = vpop.f32.mrb[0].mxu0
      %v1931 = vadd.f32 0.0, %v1930
      %v1932 = vpop.f32.mrb[0].mxu0
      %v1933 = vadd.f32 0.0, %v1932
      %v1934 = vpop.f32.mrb[0].mxu0
      %v1935 = vadd.f32 0.0, %v1934
      %1936 = vmatprep.mubr.bf16.mxu0 %v978
      %1937 = vmatmul.mubr.bf16.gmra.mrb[0].mxu0 %v485
      %v1938 = vpop.f32.mrb[0].mxu0
      %v1939 = vadd.f32 0.0, %v1938
      %v1940 = vpop.f32.mrb[0].mxu0
      %v1941 = vadd.f32 0.0, %v1940
      %v1942 = vpop.f32.mrb[0].mxu0
      %v1943 = vadd.f32 0.0, %v1942
      %v1944 = vpop.f32.mrb[0].mxu0
      %v1945 = vadd.f32 0.0, %v1944
      %1946 = vmatprep.mubr.bf16.mxu0 %v979
      %1947 = vmatmul.mubr.bf16.gmra.mrb[0].mxu0 %v486
      %v1948 = vpop.f32.mrb[0].mxu0
      %v1949 = vadd.f32 0.0, %v1948
      %v1950 = vpop.f32.mrb[0].mxu0
      %v1951 = vadd.f32 0.0, %v1950
      %v1952 = vpop.f32.mrb[0].mxu0
      %v1953 = vadd.f32 0.0, %v1952
      %v1954 = vpop.f32.mrb[0].mxu0
      %v1955 = vadd.f32 0.0, %v1954
      %1956 = vmatprep.mubr.bf16.mxu0 %v980
      %1957 = vmatmul.mubr.bf16.gmra.mrb[0].mxu0 %v487
      %v1958 = vpop.f32.mrb[0].mxu0
      %v1959 = vadd.f32 0.0, %v1958
      %v1960 = vpop.f32.mrb[0].mxu0
      %v1961 = vadd.f32 0.0, %v1960
      %v1962 = vpop.f32.mrb[0].mxu0
      %v1963 = vadd.f32 0.0, %v1962
      %v1964 = vpop.f32.mrb[0].mxu0
      %v1965 = vadd.f32 0.0, %v1964
      %1966 = vmatprep.mubr.bf16.mxu0 %v982
      %1967 = vmatmul.mubr.bf16.gmra.mrb[0].mxu0 %v981
      %v1968 = vpop.f32.mrb[0].mxu0
      %v1969 = vadd.f32 0.0, %v1968
      %v1970 = vpop.f32.mrb[0].mxu0
      %v1971 = vadd.f32 0.0, %v1970
      %v1972 = vpop.f32.mrb[0].mxu0
      %v1973 = vadd.f32 0.0, %v1972
      %v1974 = vpop.f32.mrb[0].mxu0
      %v1975 = vadd.f32 0.0, %v1974
      %1976 = vmatprep.mubr.bf16.mxu0 %v984
      %1977 = vmatmul.mubr.bf16.gmra.mrb[0].mxu0 %v983
      %v1978 = vpop.f32.mrb[0].mxu0
      %v1979 = vadd.f32 0.0, %v1978
      %v1980 = vpop.f32.mrb[0].mxu0
      %v1981 = vadd.f32 0.0, %v1980
      %v1982 = vpop.f32.mrb[0].mxu0
      %v1983 = vadd.f32 0.0, %v1982
      %v1984 = vpop.f32.mrb[0].mxu0
      %v1985 = vadd.f32 0.0, %v1984
      %1986 = vmatprep.mubr.bf16.mxu0 %v986
      %1987 = vmatmul.mubr.bf16.gmra.mrb[0].mxu0 %v985
      %v1988 = vpop.f32.mrb[0].mxu0
      %v1989 = vadd.f32 0.0, %v1988
      %v1990 = vpop.f32.mrb[0].mxu0
      %v1991 = vadd.f32 0.0, %v1990
      %v1992 = vpop.f32.mrb[0].mxu0
      %v1993 = vadd.f32 0.0, %v1992
      %v1994 = vpop.f32.mrb[0].mxu0
      %v1995 = vadd.f32 0.0, %v1994
      %1996 = vmatprep.mubr.bf16.mxu0 %v988
      %1997 = vmatmul.mubr.bf16.gmra.mrb[0].mxu0 %v987
      %v1998 = vpop.f32.mrb[0].mxu0
      %v1999 = vadd.f32 0.0, %v1998
      %v2000 = vpop.f32.mrb[0].mxu0
      %v2001 = vadd.f32 0.0, %v2000
      %v2002 = vpop.f32.mrb[0].mxu0
      %v2003 = vadd.f32 0.0, %v2002
      %v2004 = vpop.f32.mrb[0].mxu0
      %v2005 = vadd.f32 0.0, %v2004
      %2006 = vmatprep.mubr.bf16.mxu0 %v990
      %2007 = vmatmul.mubr.bf16.gmra.mrb[0].mxu0 %v989
      %v2008 = vpop.f32.mrb[0].mxu0
      %v2009 = vadd.f32 0.0, %v2008
      %v2010 = vpop.f32.mrb[0].mxu0
      %v2011 = vadd.f32 0.0, %v2010
      %v2012 = vpop.f32.mrb[0].mxu0
      %v2013 = vadd.f32 0.0, %v2012
      %v2014 = vpop.f32.mrb[0].mxu0
      %v2015 = vadd.f32 0.0, %v2014
      %2016 = vmatprep.mubr.bf16.mxu0 %v991
      %2017 = vmatmul.mubr.bf16.gmra.mrb[0].mxu0 %v494
      %v2018 = vpop.f32.mrb[0].mxu0
      %v2019 = vadd.f32 0.0, %v2018
      %v2020 = vpop.f32.mrb[0].mxu0
      %v2021 = vadd.f32 0.0, %v2020
      %v2022 = vpop.f32.mrb[0].mxu0
      %v2023 = vadd.f32 0.0, %v2022
      %v2024 = vpop.f32.mrb[0].mxu0
      %v2025 = vadd.f32 0.0, %v2024
      %2026 = vmatprep.mubr.bf16.mxu0 %v992
      %2027 = vmatmul.mubr.bf16.gmra.mrb[0].mxu0 %v495
      %v2028 = vpop.f32.mrb[0].mxu0
      %v2029 = vadd.f32 0.0, %v2028
      %v2030 = vpop.f32.mrb[0].mxu0
      %v2031 = vadd.f32 0.0, %v2030
      %v2032 = vpop.f32.mrb[0].mxu0
      %v2033 = vadd.f32 0.0, %v2032
      %v2034 = vpop.f32.mrb[0].mxu0
      %v2035 = vadd.f32 0.0, %v2034
      %2036 = vmatprep.mubr.bf16.mxu0 %v993
      %2037 = vmatmul.mubr.bf16.gmra.mrb[0].mxu0 %v496
      %v2038 = vpop.f32.mrb[0].mxu0
      %v2039 = vadd.f32 0.0, %v2038
      %v2040 = vpop.f32.mrb[0].mxu0
      %v2041 = vadd.f32 0.0, %v2040
      %v2042 = vpop.f32.mrb[0].mxu0
      %v2043 = vadd.f32 0.0, %v2042
      %v2044 = vpop.f32.mrb[0].mxu0
      %v2045 = vadd.f32 0.0, %v2044
      %2046 = vmatprep.mubr.bf16.mxu0 %v994
      %2047 = vmatmul.mubr.bf16.gmra.mrb[0].mxu0 %v497
      %v2048 = vpop.f32.mrb[0].mxu0
      %v2049 = vadd.f32 0.0, %v2048
      %v2050 = vpop.f32.mrb[0].mxu0
      %v2051 = vadd.f32 0.0, %v2050
      %v2052 = vpop.f32.mrb[0].mxu0
      %v2053 = vadd.f32 0.0, %v2052
      %v2054 = vpop.f32.mrb[0].mxu0
      %v2055 = vadd.f32 0.0, %v2054
      %2056 = vmatprep.mubr.bf16.mxu0 %v996
      %2057 = vmatmul.mubr.bf16.gmra.mrb[0].mxu0 %v995
      %v2058 = vpop.f32.mrb[0].mxu0
      %v2059 = vadd.f32 0.0, %v2058
      %v2060 = vpop.f32.mrb[0].mxu0
      %v2061 = vadd.f32 0.0, %v2060
      %v2062 = vpop.f32.mrb[0].mxu0
      %v2063 = vadd.f32 0.0, %v2062
      %v2064 = vpop.f32.mrb[0].mxu0
      %v2065 = vadd.f32 0.0, %v2064
      %2066 = vmatprep.mubr.bf16.mxu0 %v998
      %2067 = vmatmul.mubr.bf16.gmra.mrb[0].mxu0 %v997
      %v2068 = vpop.f32.mrb[0].mxu0
      %v2069 = vadd.f32 0.0, %v2068
      %v2070 = vpop.f32.mrb[0].mxu0
      %v2071 = vadd.f32 0.0, %v2070
      %v2072 = vpop.f32.mrb[0].mxu0
      %v2073 = vadd.f32 0.0, %v2072
      %v2074 = vpop.f32.mrb[0].mxu0
      %v2075 = vadd.f32 0.0, %v2074
      %2076 = vmatprep.mubr.bf16.mxu0 %v1000
      %2077 = vmatmul.mubr.bf16.gmra.mrb[0].mxu0 %v999
      %v2078 = vpop.f32.mrb[0].mxu0
      %v2079 = vadd.f32 0.0, %v2078
      %v2080 = vpop.f32.mrb[0].mxu0
      %v2081 = vadd.f32 0.0, %v2080
      %v2082 = vpop.f32.mrb[0].mxu0
      %v2083 = vadd.f32 0.0, %v2082
      %v2084 = vpop.f32.mrb[0].mxu0
      %v2085 = vadd.f32 0.0, %v2084
      %2086 = vmatprep.mubr.bf16.mxu0 %v1002
      %2087 = vmatmul.mubr.bf16.gmra.mrb[0].mxu0 %v1001
      %v2088 = vpop.f32.mrb[0].mxu0
      %v2089 = vadd.f32 0.0, %v2088
      %v2090 = vpop.f32.mrb[0].mxu0
      %v2091 = vadd.f32 0.0, %v2090
      %v2092 = vpop.f32.mrb[0].mxu0
      %v2093 = vadd.f32 0.0, %v2092
      %v2094 = vpop.f32.mrb[0].mxu0
      %v2095 = vadd.f32 0.0, %v2094
      %2096 = vmatprep.mubr.bf16.mxu0 %v1004
      %2097 = vmatmul.mubr.bf16.gmra.mrb[0].mxu0 %v1003
      %v2098 = vpop.f32.mrb[0].mxu0
      %v2099 = vadd.f32 0.0, %v2098
      %v2100 = vpop.f32.mrb[0].mxu0
      %v2101 = vadd.f32 0.0, %v2100
      %v2102 = vpop.f32.mrb[0].mxu0
      %v2103 = vadd.f32 0.0, %v2102
      %v2104 = vpop.f32.mrb[0].mxu0
      %v2105 = vadd.f32 0.0, %v2104
      %2106 = vmatprep.mubr.bf16.mxu0 %v1005
      %2107 = vmatmul.mubr.bf16.gmra.mrb[0].mxu0 %v504
      %v2108 = vpop.f32.mrb[0].mxu0
      %v2109 = vadd.f32 0.0, %v2108
      %v2110 = vpop.f32.mrb[0].mxu0
      %v2111 = vadd.f32 0.0, %v2110
      %v2112 = vpop.f32.mrb[0].mxu0
      %v2113 = vadd.f32 0.0, %v2112
      %v2114 = vpop.f32.mrb[0].mxu0
      %v2115 = vadd.f32 0.0, %v2114
      %2116 = vmatprep.mubr.bf16.mxu0 %v1006
      %2117 = vmatmul.mubr.bf16.gmra.mrb[0].mxu0 %v505
      %v2118 = vpop.f32.mrb[0].mxu0
      %v2119 = vadd.f32 0.0, %v2118
      %v2120 = vpop.f32.mrb[0].mxu0
      %v2121 = vadd.f32 0.0, %v2120
      %v2122 = vpop.f32.mrb[0].mxu0
      %v2123 = vadd.f32 0.0, %v2122
      %v2124 = vpop.f32.mrb[0].mxu0
      %v2125 = vadd.f32 0.0, %v2124
      %2126 = vmatprep.mubr.bf16.mxu0 %v1007
      %2127 = vmatmul.mubr.bf16.gmra.mrb[0].mxu0 %v506
      %v2128 = vpop.f32.mrb[0].mxu0
      %v2129 = vadd.f32 0.0, %v2128
      %v2130 = vpop.f32.mrb[0].mxu0
      %v2131 = vadd.f32 0.0, %v2130
      %v2132 = vpop.f32.mrb[0].mxu0
      %v2133 = vadd.f32 0.0, %v2132
      %v2134 = vpop.f32.mrb[0].mxu0
      %v2135 = vadd.f32 0.0, %v2134
      %2136 = vmatprep.mubr.bf16.mxu0 %v1008
      %2137 = vmatmul.mubr.bf16.gmra.mrb[0].mxu0 %v507
      %v2138 = vpop.f32.mrb[0].mxu0
      %v2139 = vadd.f32 0.0, %v2138
      %v2140 = vpop.f32.mrb[0].mxu0
      %v2141 = vadd.f32 0.0, %v2140
      %v2142 = vpop.f32.mrb[0].mxu0
      %v2143 = vadd.f32 0.0, %v2142
      %v2144 = vpop.f32.mrb[0].mxu0
      %v2145 = vadd.f32 0.0, %v2144
      %2146 = vmatprep.mubr.bf16.mxu0 %v1010
      %2147 = vmatmul.mubr.bf16.gmra.mrb[0].mxu0 %v1009
      %v2148 = vpop.f32.mrb[0].mxu0
      %v2149 = vadd.f32 0.0, %v2148
      %v2150 = vpop.f32.mrb[0].mxu0
      %v2151 = vadd.f32 0.0, %v2150
      %v2152 = vpop.f32.mrb[0].mxu0
      %v2153 = vadd.f32 0.0, %v2152
      %v2154 = vpop.f32.mrb[0].mxu0
      %v2155 = vadd.f32 0.0, %v2154
      %2156 = vmatprep.mubr.bf16.mxu0 %v1012
      %2157 = vmatmul.mubr.bf16.gmra.mrb[0].mxu0 %v1011
      %v2158 = vpop.f32.mrb[0].mxu0
      %v2159 = vadd.f32 0.0, %v2158
      %v2160 = vpop.f32.mrb[0].mxu0
      %v2161 = vadd.f32 0.0, %v2160
      %v2162 = vpop.f32.mrb[0].mxu0
      %v2163 = vadd.f32 0.0, %v2162
      %v2164 = vpop.f32.mrb[0].mxu0
      %v2165 = vadd.f32 0.0, %v2164
      %2166 = vmatprep.mubr.bf16.mxu0 %v1014
      %2167 = vmatmul.mubr.bf16.gmra.mrb[0].mxu0 %v1013
      %v2168 = vpop.f32.mrb[0].mxu0
      %v2169 = vadd.f32 0.0, %v2168
      %v2170 = vpop.f32.mrb[0].mxu0
      %v2171 = vadd.f32 0.0, %v2170
      %v2172 = vpop.f32.mrb[0].mxu0
      %v2173 = vadd.f32 0.0, %v2172
      %v2174 = vpop.f32.mrb[0].mxu0
      %v2175 = vadd.f32 0.0, %v2174
      %2176 = vmatprep.mubr.bf16.mxu0 %v1016
      %2177 = vmatmul.mubr.bf16.gmra.mrb[0].mxu0 %v1015
      %v2178 = vpop.f32.mrb[0].mxu0
      %v2179 = vadd.f32 0.0, %v2178
      %v2180 = vpop.f32.mrb[0].mxu0
      %v2181 = vadd.f32 0.0, %v2180
      %v2182 = vpop.f32.mrb[0].mxu0
      %v2183 = vadd.f32 0.0, %v2182
      %v2184 = vpop.f32.mrb[0].mxu0
      %v2185 = vadd.f32 0.0, %v2184
      %2186 = vmatprep.mubr.bf16.mxu0 %v1018
      %2187 = vmatmul.mubr.bf16.gmra.mrb[0].mxu0 %v1017
      %v2188 = vpop.f32.mrb[0].mxu0
      %v2189 = vadd.f32 0.0, %v2188
      %v2190 = vpop.f32.mrb[0].mxu0
      %v2191 = vadd.f32 0.0, %v2190
      %v2192 = vpop.f32.mrb[0].mxu0
      %v2193 = vadd.f32 0.0, %v2192
      %v2194 = vpop.f32.mrb[0].mxu0
      %v2195 = vadd.f32 0.0, %v2194
      %2196 = vdwg.mxu0
      %v2197 = vmax.f32 %v1446, %v1839
      %v2198 = vmax.f32 %v1448, %v1841
      %v2199 = vmax.f32 %v1450, %v1843
      %v2200 = vmax.f32 %v1452, %v1845
      %v2201 = vmax.f32 %v1456, %v1849
      %v2202 = vmax.f32 %v1458, %v1851
      %v2203 = vmax.f32 %v1460, %v1853
      %v2204 = vmax.f32 %v1462, %v1855
      %v2205 = vmax.f32 %v1466, %v1859
      %v2206 = vmax.f32 %v1468, %v1861
      %v2207 = vmax.f32 %v1470, %v1863
      %v2208 = vmax.f32 %v1472, %v1865
      %v2209 = vmax.f32 %v1476, %v1869
      %v2210 = vmax.f32 %v1478, %v1871
      %v2211 = vmax.f32 %v1480, %v1873
      %v2212 = vmax.f32 %v1482, %v1875
      %v2213 = vmax.f32 %v1486, %v1879
      %v2214 = vmax.f32 %v1488, %v1881
      %v2215 = vmax.f32 %v1490, %v1883
      %v2216 = vmax.f32 %v1492, %v1885
      %v2217 = vmax.f32 %v1496, %v1889
      %v2218 = vmax.f32 %v1498, %v1891
      %v2219 = vmax.f32 %v1500, %v1893
      %v2220 = vmax.f32 %v1502, %v1895
      %v2221 = vmax.f32 %v1506, %v1899
      %v2222 = vmax.f32 %v1508, %v1901
      %v2223 = vmax.f32 %v1510, %v1903
      %v2224 = vmax.f32 %v1512, %v1905
      %v2225 = vmax.f32 %v1516, %v1909
      %v2226 = vmax.f32 %v1518, %v1911
      %v2227 = vmax.f32 %v1520, %v1913
      %v2228 = vmax.f32 %v1522, %v1915
      %v2229 = vmax.f32 %v1526, %v1919
      %v2230 = vmax.f32 %v1528, %v1921
      %v2231 = vmax.f32 %v1530, %v1923
      %v2232 = vmax.f32 %v1532, %v1925
      %v2233 = vmax.f32 %v1536, %v1929
      %v2234 = vmax.f32 %v1538, %v1931
      %v2235 = vmax.f32 %v1540, %v1933
      %v2236 = vmax.f32 %v1542, %v1935
      %v2237 = vmax.f32 %v1546, %v1939
      %v2238 = vmax.f32 %v1548, %v1941
      %v2239 = vmax.f32 %v1550, %v1943
      %v2240 = vmax.f32 %v1552, %v1945
      %v2241 = vmax.f32 %v1556, %v1949
      %v2242 = vmax.f32 %v1558, %v1951
      %v2243 = vmax.f32 %v1560, %v1953
      %v2244 = vmax.f32 %v1562, %v1955
      %v2245 = vmax.f32 %v1566, %v1959
      %v2246 = vmax.f32 %v1568, %v1961
      %v2247 = vmax.f32 %v1570, %v1963
      %v2248 = vmax.f32 %v1572, %v1965
      %v2249 = vmax.f32 %v1576, %v1969
      %v2250 = vmax.f32 %v1578, %v1971
      %v2251 = vmax.f32 %v1580, %v1973
      %v2252 = vmax.f32 %v1582, %v1975
      %v2253 = vmax.f32 %v1586, %v1979
      %v2254 = vmax.f32 %v1588, %v1981
      %v2255 = vmax.f32 %v1590, %v1983
      %v2256 = vmax.f32 %v1592, %v1985
      %v2257 = vmax.f32 %v1596, %v1989
      %v2258 = vmax.f32 %v1598, %v1991
      %v2259 = vmax.f32 %v1600, %v1993
      %v2260 = vmax.f32 %v1602, %v1995
      %v2261 = vmax.f32 %v1606, %v1999
      %v2262 = vmax.f32 %v1608, %v2001
      %v2263 = vmax.f32 %v1610, %v2003
      %v2264 = vmax.f32 %v1612, %v2005
      %v2265 = vmax.f32 %v1616, %v2009
      %v2266 = vmax.f32 %v1618, %v2011
      %v2267 = vmax.f32 %v1620, %v2013
      %v2268 = vmax.f32 %v1622, %v2015
      %v2269 = vmax.f32 %v1626, %v2019
      %v2270 = vmax.f32 %v1628, %v2021
      %v2271 = vmax.f32 %v1630, %v2023
      %v2272 = vmax.f32 %v1632, %v2025
      %v2273 = vmax.f32 %v1636, %v2029
      %v2274 = vmax.f32 %v1638, %v2031
      %v2275 = vmax.f32 %v1640, %v2033
      %v2276 = vmax.f32 %v1642, %v2035
      %v2277 = vmax.f32 %v1646, %v2039
      %v2278 = vmax.f32 %v1648, %v2041
      %v2279 = vmax.f32 %v1650, %v2043
      %v2280 = vmax.f32 %v1652, %v2045
      %v2281 = vmax.f32 %v1656, %v2049
      %v2282 = vmax.f32 %v1658, %v2051
      %v2283 = vmax.f32 %v1660, %v2053
      %v2284 = vmax.f32 %v1662, %v2055
      %v2285 = vmax.f32 %v1666, %v2059
      %v2286 = vmax.f32 %v1668, %v2061
      %v2287 = vmax.f32 %v1670, %v2063
      %v2288 = vmax.f32 %v1672, %v2065
      %v2289 = vmax.f32 %v1676, %v2069
      %v2290 = vmax.f32 %v1678, %v2071
      %v2291 = vmax.f32 %v1680, %v2073
      %v2292 = vmax.f32 %v1682, %v2075
      %v2293 = vmax.f32 %v1686, %v2079
      %v2294 = vmax.f32 %v1688, %v2081
      %v2295 = vmax.f32 %v1690, %v2083
      %v2296 = vmax.f32 %v1692, %v2085
      %v2297 = vmax.f32 %v1696, %v2089
      %v2298 = vmax.f32 %v1698, %v2091
      %v2299 = vmax.f32 %v1700, %v2093
      %v2300 = vmax.f32 %v1702, %v2095
      %v2301 = vmax.f32 %v1706, %v2099
      %v2302 = vmax.f32 %v1708, %v2101
      %v2303 = vmax.f32 %v1710, %v2103
      %v2304 = vmax.f32 %v1712, %v2105
      %v2305 = vmax.f32 %v1716, %v2109
      %v2306 = vmax.f32 %v1718, %v2111
      %v2307 = vmax.f32 %v1720, %v2113
      %v2308 = vmax.f32 %v1722, %v2115
      %v2309 = vmax.f32 %v1726, %v2119
      %v2310 = vmax.f32 %v1728, %v2121
      %v2311 = vmax.f32 %v1730, %v2123
      %v2312 = vmax.f32 %v1732, %v2125
      %v2313 = vmax.f32 %v1736, %v2129
      %v2314 = vmax.f32 %v1738, %v2131
      %v2315 = vmax.f32 %v1740, %v2133
      %v2316 = vmax.f32 %v1742, %v2135
      %v2317 = vmax.f32 %v1746, %v2139
      %v2318 = vmax.f32 %v1748, %v2141
      %v2319 = vmax.f32 %v1750, %v2143
      %v2320 = vmax.f32 %v1752, %v2145
      %v2321 = vmax.f32 %v1756, %v2149
      %v2322 = vmax.f32 %v1758, %v2151
      %v2323 = vmax.f32 %v1760, %v2153
      %v2324 = vmax.f32 %v1762, %v2155
      %v2325 = vmax.f32 %v1766, %v2159
      %v2326 = vmax.f32 %v1768, %v2161
      %v2327 = vmax.f32 %v1770, %v2163
      %v2328 = vmax.f32 %v1772, %v2165
      %v2329 = vmax.f32 %v1776, %v2169
      %v2330 = vmax.f32 %v1778, %v2171
      %v2331 = vmax.f32 %v1780, %v2173
      %v2332 = vmax.f32 %v1782, %v2175
      %v2333 = vmax.f32 %v1786, %v2179
      %v2334 = vmax.f32 %v1788, %v2181
      %v2335 = vmax.f32 %v1790, %v2183
      %v2336 = vmax.f32 %v1792, %v2185
      %v2337 = vmax.f32 %v1796, %v2189
      %v2338 = vmax.f32 %v1798, %v2191
      %v2339 = vmax.f32 %v1800, %v2193
      %v2340 = vmax.f32 %v1802, %v2195
      %v2341 = vmax.f32 %v2197, %v2198
      %v2342 = vmax.f32 %v2199, %v2200
      %v2343 = vmax.f32 %v2201, %v2202
      %v2344 = vmax.f32 %v2203, %v2204
      %v2345 = vmax.f32 %v2205, %v2206
      %v2346 = vmax.f32 %v2207, %v2208
      %v2347 = vmax.f32 %v2209, %v2210
      %v2348 = vmax.f32 %v2211, %v2212
      %v2349 = vmax.f32 %v2213, %v2214
      %v2350 = vmax.f32 %v2215, %v2216
      %v2351 = vmax.f32 %v2217, %v2218
      %v2352 = vmax.f32 %v2219, %v2220
      %v2353 = vmax.f32 %v2221, %v2222
      %v2354 = vmax.f32 %v2223, %v2224
      %v2355 = vmax.f32 %v2225, %v2226
      %v2356 = vmax.f32 %v2227, %v2228
      %v2357 = vmax.f32 %v2229, %v2230
      %v2358 = vmax.f32 %v2231, %v2232
      %v2359 = vmax.f32 %v2233, %v2234
      %v2360 = vmax.f32 %v2235, %v2236
      %v2361 = vmax.f32 %v2237, %v2238
      %v2362 = vmax.f32 %v2239, %v2240
      %v2363 = vmax.f32 %v2241, %v2242
      %v2364 = vmax.f32 %v2243, %v2244
      %v2365 = vmax.f32 %v2245, %v2246
      %v2366 = vmax.f32 %v2247, %v2248
      %v2367 = vmax.f32 %v2249, %v2250
      %v2368 = vmax.f32 %v2251, %v2252
      %v2369 = vmax.f32 %v2253, %v2254
      %v2370 = vmax.f32 %v2255, %v2256
      %v2371 = vmax.f32 %v2257, %v2258
      %v2372 = vmax.f32 %v2259, %v2260
      %v2373 = vmax.f32 %v2261, %v2262
      %v2374 = vmax.f32 %v2263, %v2264
      %v2375 = vmax.f32 %v2265, %v2266
      %v2376 = vmax.f32 %v2267, %v2268
      %v2377 = vmax.f32 %v2269, %v2270
      %v2378 = vmax.f32 %v2271, %v2272
      %v2379 = vmax.f32 %v2273, %v2274
      %v2380 = vmax.f32 %v2275, %v2276
      %v2381 = vmax.f32 %v2277, %v2278
      %v2382 = vmax.f32 %v2279, %v2280
      %v2383 = vmax.f32 %v2281, %v2282
      %v2384 = vmax.f32 %v2283, %v2284
      %v2385 = vmax.f32 %v2285, %v2286
      %v2386 = vmax.f32 %v2287, %v2288
      %v2387 = vmax.f32 %v2289, %v2290
      %v2388 = vmax.f32 %v2291, %v2292
      %v2389 = vmax.f32 %v2293, %v2294
      %v2390 = vmax.f32 %v2295, %v2296
      %v2391 = vmax.f32 %v2297, %v2298
      %v2392 = vmax.f32 %v2299, %v2300
      %v2393 = vmax.f32 %v2301, %v2302
      %v2394 = vmax.f32 %v2303, %v2304
      %v2395 = vmax.f32 %v2305, %v2306
      %v2396 = vmax.f32 %v2307, %v2308
      %v2397 = vmax.f32 %v2309, %v2310
      %v2398 = vmax.f32 %v2311, %v2312
      %v2399 = vmax.f32 %v2313, %v2314
      %v2400 = vmax.f32 %v2315, %v2316
      %v2401 = vmax.f32 %v2317, %v2318
      %v2402 = vmax.f32 %v2319, %v2320
      %v2403 = vmax.f32 %v2321, %v2322
      %v2404 = vmax.f32 %v2323, %v2324
      %v2405 = vmax.f32 %v2325, %v2326
      %v2406 = vmax.f32 %v2327, %v2328
      %v2407 = vmax.f32 %v2329, %v2330
      %v2408 = vmax.f32 %v2331, %v2332
      %v2409 = vmax.f32 %v2333, %v2334
      %v2410 = vmax.f32 %v2335, %v2336
      %v2411 = vmax.f32 %v2337, %v2338
      %v2412 = vmax.f32 %v2339, %v2340
      %v2413 = vld [vmem:[%s2] sm:$0x1]
      %v2415 = vlaneseq
      %v2416 = vshrl.u32 %v2415, 7
      %v2417 = vsub.s32 0, %v2416
      %v2418 = vrot.slane %v2413, %v2417
      %v2420 = vadd.f32 %v2341, %v2418
      %v2421 = vadd.f32 %v2342, %v2418
      %v2422 = vadd.f32 %v2343, %v2418
      %v2423 = vadd.f32 %v2344, %v2418
      %v2424 = vadd.f32 %v2345, %v2418
      %v2425 = vadd.f32 %v2346, %v2418
      %v2426 = vadd.f32 %v2347, %v2418
      %v2427 = vadd.f32 %v2348, %v2418
      %v2428 = vadd.f32 %v2349, %v2418
      %v2429 = vadd.f32 %v2350, %v2418
      %v2430 = vadd.f32 %v2351, %v2418
      %v2431 = vadd.f32 %v2352, %v2418
      %v2432 = vadd.f32 %v2353, %v2418
      %v2433 = vadd.f32 %v2354, %v2418
      %v2434 = vadd.f32 %v2355, %v2418
      %v2435 = vadd.f32 %v2356, %v2418
      %v2436 = vadd.f32 %v2357, %v2418
      %v2437 = vadd.f32 %v2358, %v2418
      %v2438 = vadd.f32 %v2359, %v2418
      %v2439 = vadd.f32 %v2360, %v2418
      %v2440 = vadd.f32 %v2361, %v2418
      %v2441 = vadd.f32 %v2362, %v2418
      %v2442 = vadd.f32 %v2363, %v2418
      %v2443 = vadd.f32 %v2364, %v2418
      %v2444 = vadd.f32 %v2365, %v2418
      %v2445 = vadd.f32 %v2366, %v2418
      %v2446 = vadd.f32 %v2367, %v2418
      %v2447 = vadd.f32 %v2368, %v2418
      %v2448 = vadd.f32 %v2369, %v2418
      %v2449 = vadd.f32 %v2370, %v2418
      %v2450 = vadd.f32 %v2371, %v2418
      %v2451 = vadd.f32 %v2372, %v2418
      %v2452 = vadd.f32 %v2373, %v2418
      %v2453 = vadd.f32 %v2374, %v2418
      %v2454 = vadd.f32 %v2375, %v2418
      %v2455 = vadd.f32 %v2376, %v2418
      %v2456 = vadd.f32 %v2377, %v2418
      %v2457 = vadd.f32 %v2378, %v2418
      %v2458 = vadd.f32 %v2379, %v2418
      %v2459 = vadd.f32 %v2380, %v2418
      %v2460 = vadd.f32 %v2381, %v2418
      %v2461 = vadd.f32 %v2382, %v2418
      %v2462 = vadd.f32 %v2383, %v2418
      %v2463 = vadd.f32 %v2384, %v2418
      %v2464 = vadd.f32 %v2385, %v2418
      %v2465 = vadd.f32 %v2386, %v2418
      %v2466 = vadd.f32 %v2387, %v2418
      %v2467 = vadd.f32 %v2388, %v2418
      %v2468 = vadd.f32 %v2389, %v2418
      %v2469 = vadd.f32 %v2390, %v2418
      %v2470 = vadd.f32 %v2391, %v2418
      %v2471 = vadd.f32 %v2392, %v2418
      %v2472 = vadd.f32 %v2393, %v2418
      %v2473 = vadd.f32 %v2394, %v2418
      %v2474 = vadd.f32 %v2395, %v2418
      %v2475 = vadd.f32 %v2396, %v2418
      %v2476 = vadd.f32 %v2397, %v2418
      %v2477 = vadd.f32 %v2398, %v2418
      %v2478 = vadd.f32 %v2399, %v2418
      %v2479 = vadd.f32 %v2400, %v2418
      %v2480 = vadd.f32 %v2401, %v2418
      %v2481 = vadd.f32 %v2402, %v2418
      %v2482 = vadd.f32 %v2403, %v2418
      %v2483 = vadd.f32 %v2404, %v2418
      %v2484 = vadd.f32 %v2405, %v2418
      %v2485 = vadd.f32 %v2406, %v2418
      %v2486 = vadd.f32 %v2407, %v2418
      %v2487 = vadd.f32 %v2408, %v2418
      %v2488 = vadd.f32 %v2409, %v2418
      %v2489 = vadd.f32 %v2410, %v2418
      %v2490 = vadd.f32 %v2411, %v2418
      %v2491 = vadd.f32 %v2412, %v2418
      %v2492 = vmax.f32 %v2420, 0.0
      %v2493 = vmax.f32 %v2421, 0.0
      %v2494 = vmax.f32 %v2422, 0.0
      %v2495 = vmax.f32 %v2423, 0.0
      %v2496 = vmax.f32 %v2424, 0.0
      %v2497 = vmax.f32 %v2425, 0.0
      %v2498 = vmax.f32 %v2426, 0.0
      %v2499 = vmax.f32 %v2427, 0.0
      %v2500 = vmax.f32 %v2428, 0.0
      %v2501 = vmax.f32 %v2429, 0.0
      %v2502 = vmax.f32 %v2430, 0.0
      %v2503 = vmax.f32 %v2431, 0.0
      %v2504 = vmax.f32 %v2432, 0.0
      %v2505 = vmax.f32 %v2433, 0.0
      %v2506 = vmax.f32 %v2434, 0.0
      %v2507 = vmax.f32 %v2435, 0.0
      %v2508 = vmax.f32 %v2436, 0.0
      %v2509 = vmax.f32 %v2437, 0.0
      %v2510 = vmax.f32 %v2438, 0.0
      %v2511 = vmax.f32 %v2439, 0.0
      %v2512 = vmax.f32 %v2440, 0.0
      %v2513 = vmax.f32 %v2441, 0.0
      %v2514 = vmax.f32 %v2442, 0.0
      %v2515 = vmax.f32 %v2443, 0.0
      %v2516 = vmax.f32 %v2444, 0.0
      %v2517 = vmax.f32 %v2445, 0.0
      %v2518 = vmax.f32 %v2446, 0.0
      %v2519 = vmax.f32 %v2447, 0.0
      %v2520 = vmax.f32 %v2448, 0.0
      %v2521 = vmax.f32 %v2449, 0.0
      %v2522 = vmax.f32 %v2450, 0.0
      %v2523 = vmax.f32 %v2451, 0.0
      %v2524 = vmax.f32 %v2452, 0.0
      %v2525 = vmax.f32 %v2453, 0.0
      %v2526 = vmax.f32 %v2454, 0.0
      %v2527 = vmax.f32 %v2455, 0.0
      %v2528 = vmax.f32 %v2456, 0.0
      %v2529 = vmax.f32 %v2457, 0.0
      %v2530 = vmax.f32 %v2458, 0.0
      %v2531 = vmax.f32 %v2459, 0.0
      %v2532 = vmax.f32 %v2460, 0.0
      %v2533 = vmax.f32 %v2461, 0.0
      %v2534 = vmax.f32 %v2462, 0.0
      %v2535 = vmax.f32 %v2463, 0.0
      %v2536 = vmax.f32 %v2464, 0.0
      %v2537 = vmax.f32 %v2465, 0.0
      %v2538 = vmax.f32 %v2466, 0.0
      %v2539 = vmax.f32 %v2467, 0.0
      %v2540 = vmax.f32 %v2468, 0.0
      %v2541 = vmax.f32 %v2469, 0.0
      %v2542 = vmax.f32 %v2470, 0.0
      %v2543 = vmax.f32 %v2471, 0.0
      %v2544 = vmax.f32 %v2472, 0.0
      %v2545 = vmax.f32 %v2473, 0.0
      %v2546 = vmax.f32 %v2474, 0.0
      %v2547 = vmax.f32 %v2475, 0.0
      %v2548 = vmax.f32 %v2476, 0.0
      %v2549 = vmax.f32 %v2477, 0.0
      %v2550 = vmax.f32 %v2478, 0.0
      %v2551 = vmax.f32 %v2479, 0.0
      %v2552 = vmax.f32 %v2480, 0.0
      %v2553 = vmax.f32 %v2481, 0.0
      %v2554 = vmax.f32 %v2482, 0.0
      %v2555 = vmax.f32 %v2483, 0.0
      %v2556 = vmax.f32 %v2484, 0.0
      %v2557 = vmax.f32 %v2485, 0.0
      %v2558 = vmax.f32 %v2486, 0.0
      %v2559 = vmax.f32 %v2487, 0.0
      %v2560 = vmax.f32 %v2488, 0.0
      %v2561 = vmax.f32 %v2489, 0.0
      %v2562 = vmax.f32 %v2490, 0.0
      %v2563 = vmax.f32 %v2491, 0.0
      %v2564 = vpack.c.bf16 %v2493, %v2492
      %v2565 = vpack.c.bf16 %v2495, %v2494
      %v2566 = vpack.c.bf16 %v2497, %v2496
      %v2567 = vpack.c.bf16 %v2499, %v2498
      %v2568 = vpack.c.bf16 %v2500, %v2500
      %v2569 = vpack.c.bf16 %v2502, %v2501
      %v2570 = vpack.c.bf16 %v2504, %v2503
      %v2571 = vpack.c.bf16 %v2506, %v2505
      %v2572 = vpack.c.bf16 %v2508, %v2507
      %v2573 = vpack.c.bf16 %v2509, %v2509
      %v2574 = vpack.c.bf16 %v2511, %v2510
      %v2575 = vpack.c.bf16 %v2513, %v2512
      %v2576 = vpack.c.bf16 %v2515, %v2514
      %v2577 = vpack.c.bf16 %v2517, %v2516
      %v2578 = vpack.c.bf16 %v2518, %v2518
      %v2579 = vpack.c.bf16 %v2520, %v2519
      %v2580 = vpack.c.bf16 %v2522, %v2521
      %v2581 = vpack.c.bf16 %v2524, %v2523
      %v2582 = vpack.c.bf16 %v2526, %v2525
      %v2583 = vpack.c.bf16 %v2527, %v2527
      %v2584 = vpack.c.bf16 %v2529, %v2528
      %v2585 = vpack.c.bf16 %v2531, %v2530
      %v2586 = vpack.c.bf16 %v2533, %v2532
      %v2587 = vpack.c.bf16 %v2535, %v2534
      %v2588 = vpack.c.bf16 %v2536, %v2536
      %v2589 = vpack.c.bf16 %v2538, %v2537
      %v2590 = vpack.c.bf16 %v2540, %v2539
      %v2591 = vpack.c.bf16 %v2542, %v2541
      %v2592 = vpack.c.bf16 %v2544, %v2543
      %v2593 = vpack.c.bf16 %v2545, %v2545
      %v2594 = vpack.c.bf16 %v2547, %v2546
      %v2595 = vpack.c.bf16 %v2549, %v2548
      %v2596 = vpack.c.bf16 %v2551, %v2550
      %v2597 = vpack.c.bf16 %v2553, %v2552
      %v2598 = vpack.c.bf16 %v2554, %v2554
      %v2599 = vpack.c.bf16 %v2556, %v2555
      %v2600 = vpack.c.bf16 %v2558, %v2557
      %v2601 = vpack.c.bf16 %v2560, %v2559
      %v2602 = vpack.c.bf16 %v2562, %v2561
      %v2603 = vpack.c.bf16 %v2563, %v2563
      %v2644 = vunpack.c.l.b16 %v2564
      %v2645 = vunpack.c.h.b16 %v2564
      %v2646 = vunpack.c.l.b16 %v2565
      %v2647 = vunpack.c.h.b16 %v2565
      %v2648 = vunpack.c.l.b16 %v2566
      %v2649 = vunpack.c.h.b16 %v2566
      %v2650 = vunpack.c.l.b16 %v2567
      %v2651 = vunpack.c.h.b16 %v2567
      %v2652 = vunpack.c.l.b16 %v2568
      %v2653 = vunpack.c.l.b16 %v2569
      %v2654 = vunpack.c.h.b16 %v2569
      %v2655 = vunpack.c.l.b16 %v2570
      %v2656 = vunpack.c.h.b16 %v2570
      %v2657 = vunpack.c.l.b16 %v2571
      %v2658 = vunpack.c.h.b16 %v2571
      %v2659 = vunpack.c.l.b16 %v2572
      %v2660 = vunpack.c.h.b16 %v2572
      %v2661 = vunpack.c.l.b16 %v2573
      %v2662 = vunpack.c.l.b16 %v2574
      %v2663 = vunpack.c.h.b16 %v2574
      %v2664 = vunpack.c.l.b16 %v2575
      %v2665 = vunpack.c.h.b16 %v2575
      %v2666 = vunpack.c.l.b16 %v2576
      %v2667 = vunpack.c.h.b16 %v2576
      %v2668 = vunpack.c.l.b16 %v2577
      %v2669 = vunpack.c.h.b16 %v2577
      %v2670 = vunpack.c.l.b16 %v2578
      %v2671 = vunpack.c.l.b16 %v2579
      %v2672 = vunpack.c.h.b16 %v2579
      %v2673 = vunpack.c.l.b16 %v2580
      %v2674 = vunpack.c.h.b16 %v2580
      %v2675 = vunpack.c.l.b16 %v2581
      %v2676 = vunpack.c.h.b16 %v2581
      %v2677 = vunpack.c.l.b16 %v2582
      %v2678 = vunpack.c.h.b16 %v2582
      %v2679 = vunpack.c.l.b16 %v2583
      %v2680 = vunpack.c.l.b16 %v2584
      %v2681 = vunpack.c.h.b16 %v2584
      %v2682 = vunpack.c.l.b16 %v2585
      %v2683 = vunpack.c.h.b16 %v2585
      %v2684 = vunpack.c.l.b16 %v2586
      %v2685 = vunpack.c.h.b16 %v2586
      %v2686 = vunpack.c.l.b16 %v2587
      %v2687 = vunpack.c.h.b16 %v2587
      %v2688 = vunpack.c.l.b16 %v2588
      %v2689 = vunpack.c.l.b16 %v2589
      %v2690 = vunpack.c.h.b16 %v2589
      %v2691 = vunpack.c.l.b16 %v2590
      %v2692 = vunpack.c.h.b16 %v2590
      %v2693 = vunpack.c.l.b16 %v2591
      %v2694 = vunpack.c.h.b16 %v2591
      %v2695 = vunpack.c.l.b16 %v2592
      %v2696 = vunpack.c.h.b16 %v2592
      %v2697 = vunpack.c.l.b16 %v2593
      %v2698 = vunpack.c.l.b16 %v2594
      %v2699 = vunpack.c.h.b16 %v2594
      %v2700 = vunpack.c.l.b16 %v2595
      %v2701 = vunpack.c.h.b16 %v2595
      %v2702 = vunpack.c.l.b16 %v2596
      %v2703 = vunpack.c.h.b16 %v2596
      %v2704 = vunpack.c.l.b16 %v2597
      %v2705 = vunpack.c.h.b16 %v2597
      %v2706 = vunpack.c.l.b16 %v2598
      %v2707 = vunpack.c.l.b16 %v2599
      %v2708 = vunpack.c.h.b16 %v2599
      %v2709 = vunpack.c.l.b16 %v2600
      %v2710 = vunpack.c.h.b16 %v2600
      %v2711 = vunpack.c.l.b16 %v2601
      %v2712 = vunpack.c.h.b16 %v2601
      %v2713 = vunpack.c.l.b16 %v2602
      %v2714 = vunpack.c.h.b16 %v2602
      %v2715 = vunpack.c.l.b16 %v2603
      %v2716 = vpack.c.b16 %v2644, %v2644
      %v2717 = vpack.c.b16 %v2645, %v2645
      %v2718 = vpack.c.b16 %v2646, %v2646
      %v2719 = vpack.c.b16 %v2647, %v2647
      %v2720 = vpack.c.b16 %v2648, %v2648
      %v2721 = vpack.c.b16 %v2649, %v2649
      %v2722 = vpack.c.b16 %v2650, %v2650
      %v2723 = vpack.c.b16 %v2651, %v2651
      %v2724 = vpack.c.b16 %v2652, %v2652
      %v2725 = vpack.c.b16 %v2653, %v2653
      %v2726 = vpack.c.b16 %v2654, %v2654
      %v2727 = vpack.c.b16 %v2655, %v2655
      %v2728 = vpack.c.b16 %v2656, %v2656
      %v2729 = vpack.c.b16 %v2657, %v2657
      %v2730 = vpack.c.b16 %v2658, %v2658
      %v2731 = vpack.c.b16 %v2659, %v2659
      %v2732 = vpack.c.b16 %v2660, %v2660
      %v2733 = vpack.c.b16 %v2661, %v2661
      %v2734 = vpack.c.b16 %v2662, %v2662
      %v2735 = vpack.c.b16 %v2663, %v2663
      %v2736 = vpack.c.b16 %v2664, %v2664
      %v2737 = vpack.c.b16 %v2665, %v2665
      %v2738 = vpack.c.b16 %v2666, %v2666
      %v2739 = vpack.c.b16 %v2667, %v2667
      %v2740 = vpack.c.b16 %v2668, %v2668
      %v2741 = vpack.c.b16 %v2669, %v2669
      %v2742 = vpack.c.b16 %v2670, %v2670
      %v2743 = vpack.c.b16 %v2671, %v2671
      %v2744 = vpack.c.b16 %v2672, %v2672
      %v2745 = vpack.c.b16 %v2673, %v2673
      %v2746 = vpack.c.b16 %v2674, %v2674
      %v2747 = vpack.c.b16 %v2675, %v2675
      %v2748 = vpack.c.b16 %v2676, %v2676
      %v2749 = vpack.c.b16 %v2677, %v2677
      %v2750 = vpack.c.b16 %v2678, %v2678
      %v2751 = vpack.c.b16 %v2679, %v2679
      %v2752 = vpack.c.b16 %v2680, %v2680
      %v2753 = vpack.c.b16 %v2681, %v2681
      %v2754 = vpack.c.b16 %v2682, %v2682
      %v2755 = vpack.c.b16 %v2683, %v2683
      %v2756 = vpack.c.b16 %v2684, %v2684
      %v2757 = vpack.c.b16 %v2685, %v2685
      %v2758 = vpack.c.b16 %v2686, %v2686
      %v2759 = vpack.c.b16 %v2687, %v2687
      %v2760 = vpack.c.b16 %v2688, %v2688
      %v2761 = vpack.c.b16 %v2689, %v2689
      %v2762 = vpack.c.b16 %v2690, %v2690
      %v2763 = vpack.c.b16 %v2691, %v2691
      %v2764 = vpack.c.b16 %v2692, %v2692
      %v2765 = vpack.c.b16 %v2693, %v2693
      %v2766 = vpack.c.b16 %v2694, %v2694
      %v2767 = vpack.c.b16 %v2695, %v2695
      %v2768 = vpack.c.b16 %v2696, %v2696
      %v2769 = vpack.c.b16 %v2697, %v2697
      %v2770 = vpack.c.b16 %v2698, %v2698
      %v2771 = vpack.c.b16 %v2699, %v2699
      %v2772 = vpack.c.b16 %v2700, %v2700
      %v2773 = vpack.c.b16 %v2701, %v2701
      %v2774 = vpack.c.b16 %v2702, %v2702
      %v2775 = vpack.c.b16 %v2703, %v2703
      %v2776 = vpack.c.b16 %v2704, %v2704
      %v2777 = vpack.c.b16 %v2705, %v2705
      %v2778 = vpack.c.b16 %v2706, %v2706
      %v2779 = vpack.c.b16 %v2707, %v2707
      %v2780 = vpack.c.b16 %v2708, %v2708
      %v2781 = vpack.c.b16 %v2709, %v2709
      %v2782 = vpack.c.b16 %v2710, %v2710
      %v2783 = vpack.c.b16 %v2711, %v2711
      %v2784 = vpack.c.b16 %v2712, %v2712
      %v2785 = vpack.c.b16 %v2713, %v2713
      %v2786 = vpack.c.b16 %v2714, %v2714
      %v2787 = vpack.c.b16 %v2715, %v2715
      %2860 = vst [vmem:[#allocation2] sm:$0xf] %v2716
      %2861 = vst [vmem:[#allocation2 + $0x4] sm:$0xf] %v2717
      %2862 = vst [vmem:[#allocation2 + $0x8] sm:$0xf] %v2718
      %2863 = vst [vmem:[#allocation2 + $0xc] sm:$0xf] %v2719
      %2864 = vst [vmem:[#allocation2 + $0x10] sm:$0xf] %v2720
      %2865 = vst [vmem:[#allocation2 + $0x14] sm:$0xf] %v2721
      %2866 = vst [vmem:[#allocation2 + $0x18] sm:$0xf] %v2722
      %2867 = vst [vmem:[#allocation2 + $0x1c] sm:$0xf] %v2723
      %2868 = vst [vmem:[#allocation2 + $0x20] sm:$0xf] %v2724
      %2869 = vst [vmem:[#allocation2 + $0x24] sm:$0xf] %v2725
      %2870 = vst [vmem:[#allocation2 + $0x28] sm:$0xf] %v2726
      %2871 = vst [vmem:[#allocation2 + $0x2c] sm:$0xf] %v2727
      %2872 = vst [vmem:[#allocation2 + $0x30] sm:$0xf] %v2728
      %2873 = vst [vmem:[#allocation2 + $0x34] sm:$0xf] %v2729
      %2874 = vst [vmem:[#allocation2 + $0x38] sm:$0xf] %v2730
      %2875 = vst [vmem:[#allocation2 + $0x3c] sm:$0xf] %v2731
      %2876 = vst [vmem:[#allocation2 + $0x40] sm:$0xf] %v2732
      %2877 = vst [vmem:[#allocation2 + $0x44] sm:$0xf] %v2733
      %2878 = vst [vmem:[#allocation2 + $0x48] sm:$0xf] %v2734
      %2879 = vst [vmem:[#allocation2 + $0x4c] sm:$0xf] %v2735
      %2880 = vst [vmem:[#allocation2 + $0x50] sm:$0xf] %v2736
      %2881 = vst [vmem:[#allocation2 + $0x54] sm:$0xf] %v2737
      %2882 = vst [vmem:[#allocation2 + $0x58] sm:$0xf] %v2738
      %2883 = vst [vmem:[#allocation2 + $0x5c] sm:$0xf] %v2739
      %2884 = vst [vmem:[#allocation2 + $0x60] sm:$0xf] %v2740
      %2885 = vst [vmem:[#allocation2 + $0x64] sm:$0xf] %v2741
      %2886 = vst [vmem:[#allocation2 + $0x68] sm:$0xf] %v2742
      %2887 = vst [vmem:[#allocation2 + $0x6c] sm:$0xf] %v2743
      %2888 = vst [vmem:[#allocation2 + $0x70] sm:$0xf] %v2744
      %2889 = vst [vmem:[#allocation2 + $0x74] sm:$0xf] %v2745
      %2890 = vst [vmem:[#allocation2 + $0x78] sm:$0xf] %v2746
      %2891 = vst [vmem:[#allocation2 + $0x7c] sm:$0xf] %v2747
      %2892 = vst [vmem:[#allocation2 + $0x80] sm:$0xf] %v2748
      %2893 = vst [vmem:[#allocation2 + $0x84] sm:$0xf] %v2749
      %2894 = vst [vmem:[#allocation2 + $0x88] sm:$0xf] %v2750
      %2895 = vst [vmem:[#allocation2 + $0x8c] sm:$0xf] %v2751
      %2896 = vst [vmem:[#allocation2 + $0x90] sm:$0xf] %v2752
      %2897 = vst [vmem:[#allocation2 + $0x94] sm:$0xf] %v2753
      %2898 = vst [vmem:[#allocation2 + $0x98] sm:$0xf] %v2754
      %2899 = vst [vmem:[#allocation2 + $0x9c] sm:$0xf] %v2755
      %2900 = vst [vmem:[#allocation2 + $0xa0] sm:$0xf] %v2756
      %2901 = vst [vmem:[#allocation2 + $0xa4] sm:$0xf] %v2757
      %2902 = vst [vmem:[#allocation2 + $0xa8] sm:$0xf] %v2758
      %2903 = vst [vmem:[#allocation2 + $0xac] sm:$0xf] %v2759
      %2904 = vst [vmem:[#allocation2 + $0xb0] sm:$0xf] %v2760
      %2905 = vst [vmem:[#allocation2 + $0xb4] sm:$0xf] %v2761
      %2906 = vst [vmem:[#allocation2 + $0xb8] sm:$0xf] %v2762
      %2907 = vst [vmem:[#allocation2 + $0xbc] sm:$0xf] %v2763
      %2908 = vst [vmem:[#allocation2 + $0xc0] sm:$0xf] %v2764
      %2909 = vst [vmem:[#allocation2 + $0xc4] sm:$0xf] %v2765
      %2910 = vst [vmem:[#allocation2 + $0xc8] sm:$0xf] %v2766
      %2911 = vst [vmem:[#allocation2 + $0xcc] sm:$0xf] %v2767
      %2912 = vst [vmem:[#allocation2 + $0xd0] sm:$0xf] %v2768
      %2913 = vst [vmem:[#allocation2 + $0xd4] sm:$0xf] %v2769
      %2914 = vst [vmem:[#allocation2 + $0xd8] sm:$0xf] %v2770
      %2915 = vst [vmem:[#allocation2 + $0xdc] sm:$0xf] %v2771
      %2916 = vst [vmem:[#allocation2 + $0xe0] sm:$0xf] %v2772
      %2917 = vst [vmem:[#allocation2 + $0xe4] sm:$0xf] %v2773
      %2918 = vst [vmem:[#allocation2 + $0xe8] sm:$0xf] %v2774
      %2919 = vst [vmem:[#allocation2 + $0xec] sm:$0xf] %v2775
      %2920 = vst [vmem:[#allocation2 + $0xf0] sm:$0xf] %v2776
      %2921 = vst [vmem:[#allocation2 + $0xf4] sm:$0xf] %v2777
      %2922 = vst [vmem:[#allocation2 + $0xf8] sm:$0xf] %v2778
      %2923 = vst [vmem:[#allocation2 + $0xfc] sm:$0xf] %v2779
      %2924 = vst [vmem:[#allocation2 + $0x100] sm:$0xf] %v2780
      %2925 = vst [vmem:[#allocation2 + $0x104] sm:$0xf] %v2781
      %2926 = vst [vmem:[#allocation2 + $0x108] sm:$0xf] %v2782
      %2927 = vst [vmem:[#allocation2 + $0x10c] sm:$0xf] %v2783
      %2928 = vst [vmem:[#allocation2 + $0x110] sm:$0xf] %v2784
      %2929 = vst [vmem:[#allocation2 + $0x114] sm:$0xf] %v2785
      %2930 = vst [vmem:[#allocation2 + $0x118] sm:$0xf] %v2786
      %2931 = vst [vmem:[#allocation2 + $0x11c] sm:$0xf] %v2787
      %v2932 = vld [vmem:[#allocation2] sm:$0xf]
      %v2933 = vld [vmem:[#allocation2 + $0x4] sm:$0xf]
      %v2934 = vld [vmem:[#allocation2 + $0x8] sm:$0xf]
      %v2935 = vld [vmem:[#allocation2 + $0xc] sm:$0xf]
      %v2936 = vld [vmem:[#allocation2 + $0x10] sm:$0xf]
      %v2937 = vld [vmem:[#allocation2 + $0x14] sm:$0xf]
      %v2938 = vld [vmem:[#allocation2 + $0x18] sm:$0xf]
      %v2939 = vld [vmem:[#allocation2 + $0x1c] sm:$0xf]
      %v2940 = vld [vmem:[#allocation2 + $0x24] sm:$0xf]
      %v2941 = vld [vmem:[#allocation2 + $0x28] sm:$0xf]
      %v2942 = vld [vmem:[#allocation2 + $0x2c] sm:$0xf]
      %v2943 = vld [vmem:[#allocation2 + $0x30] sm:$0xf]
      %v2944 = vld [vmem:[#allocation2 + $0x34] sm:$0xf]
      %v2945 = vld [vmem:[#allocation2 + $0x38] sm:$0xf]
      %v2946 = vld [vmem:[#allocation2 + $0x3c] sm:$0xf]
      %v2947 = vld [vmem:[#allocation2 + $0x40] sm:$0xf]
      %v2948 = vld [vmem:[#allocation2 + $0x48] sm:$0xf]
      %v2949 = vld [vmem:[#allocation2 + $0x4c] sm:$0xf]
      %v2950 = vld [vmem:[#allocation2 + $0x50] sm:$0xf]
      %v2951 = vld [vmem:[#allocation2 + $0x54] sm:$0xf]
      %v2952 = vld [vmem:[#allocation2 + $0x58] sm:$0xf]
      %v2953 = vld [vmem:[#allocation2 + $0x5c] sm:$0xf]
      %v2954 = vld [vmem:[#allocation2 + $0x60] sm:$0xf]
      %v2955 = vld [vmem:[#allocation2 + $0x64] sm:$0xf]
      %v2956 = vld [vmem:[#allocation2 + $0x6c] sm:$0xf]
      %v2957 = vld [vmem:[#allocation2 + $0x70] sm:$0xf]
      %v2958 = vld [vmem:[#allocation2 + $0x74] sm:$0xf]
      %v2959 = vld [vmem:[#allocation2 + $0x78] sm:$0xf]
      %v2960 = vld [vmem:[#allocation2 + $0x7c] sm:$0xf]
      %v2961 = vld [vmem:[#allocation2 + $0x80] sm:$0xf]
      %v2962 = vld [vmem:[#allocation2 + $0x84] sm:$0xf]
      %v2963 = vld [vmem:[#allocation2 + $0x88] sm:$0xf]
      %v2964 = vld [vmem:[#allocation2 + $0x90] sm:$0xf]
      %v2965 = vld [vmem:[#allocation2 + $0x94] sm:$0xf]
      %v2966 = vld [vmem:[#allocation2 + $0x98] sm:$0xf]
      %v2967 = vld [vmem:[#allocation2 + $0x9c] sm:$0xf]
      %v2968 = vld [vmem:[#allocation2 + $0xa0] sm:$0xf]
      %v2969 = vld [vmem:[#allocation2 + $0xa4] sm:$0xf]
      %v2970 = vld [vmem:[#allocation2 + $0xa8] sm:$0xf]
      %v2971 = vld [vmem:[#allocation2 + $0xac] sm:$0xf]
      %v2972 = vld [vmem:[#allocation2 + $0xb4] sm:$0xf]
      %v2973 = vld [vmem:[#allocation2 + $0xb8] sm:$0xf]
      %v2974 = vld [vmem:[#allocation2 + $0xbc] sm:$0xf]
      %v2975 = vld [vmem:[#allocation2 + $0xc0] sm:$0xf]
      %v2976 = vld [vmem:[#allocation2 + $0xc4] sm:$0xf]
      %v2977 = vld [vmem:[#allocation2 + $0xc8] sm:$0xf]
      %v2978 = vld [vmem:[#allocation2 + $0xcc] sm:$0xf]
      %v2979 = vld [vmem:[#allocation2 + $0xd0] sm:$0xf]
      %v2980 = vld [vmem:[#allocation2 + $0xd8] sm:$0xf]
      %v2981 = vld [vmem:[#allocation2 + $0xdc] sm:$0xf]
      %v2982 = vld [vmem:[#allocation2 + $0xe0] sm:$0xf]
      %v2983 = vld [vmem:[#allocation2 + $0xe4] sm:$0xf]
      %v2984 = vld [vmem:[#allocation2 + $0xe8] sm:$0xf]
      %v2985 = vld [vmem:[#allocation2 + $0xec] sm:$0xf]
      %v2986 = vld [vmem:[#allocation2 + $0xf0] sm:$0xf]
      %v2987 = vld [vmem:[#allocation2 + $0xf4] sm:$0xf]
      %v2988 = vld [vmem:[#allocation2 + $0xfc] sm:$0xf]
      %v2989 = vld [vmem:[#allocation2 + $0x100] sm:$0xf]
      %v2990 = vld [vmem:[#allocation2 + $0x104] sm:$0xf]
      %v2991 = vld [vmem:[#allocation2 + $0x108] sm:$0xf]
      %v2992 = vld [vmem:[#allocation2 + $0x10c] sm:$0xf]
      %v2993 = vld [vmem:[#allocation2 + $0x110] sm:$0xf]
      %v2994 = vld [vmem:[#allocation2 + $0x114] sm:$0xf]
      %v2995 = vld [vmem:[#allocation2 + $0x118] sm:$0xf]
      %v2996 = vld [vmem:[#allocation2] sm:$0xf]
      %v2997 = vld [vmem:[#allocation2 + $0x4] sm:$0xf]
      %v2998 = vld [vmem:[#allocation2 + $0x8] sm:$0xf]
      %v2999 = vld [vmem:[#allocation2 + $0xc] sm:$0xf]
      %v3000 = vld [vmem:[#allocation2 + $0x10] sm:$0xf]
      %v3001 = vld [vmem:[#allocation2 + $0x14] sm:$0xf]
      %v3002 = vld [vmem:[#allocation2 + $0x18] sm:$0xf]
      %v3003 = vld [vmem:[#allocation2 + $0x1c] sm:$0xf]
      %v3004 = vld [vmem:[#allocation2 + $0x20] sm:$0x1]
      %v3005 = vld [vmem:[#allocation2 + $0x24] sm:$0xf]
      %v3006 = vld [vmem:[#allocation2 + $0x28] sm:$0xf]
      %v3007 = vld [vmem:[#allocation2 + $0x2c] sm:$0xf]
      %v3008 = vld [vmem:[#allocation2 + $0x30] sm:$0xf]
      %v3009 = vld [vmem:[#allocation2 + $0x34] sm:$0xf]
      %v3010 = vld [vmem:[#allocation2 + $0x38] sm:$0xf]
      %v3011 = vld [vmem:[#allocation2 + $0x3c] sm:$0xf]
      %v3012 = vld [vmem:[#allocation2 + $0x40] sm:$0xf]
      %v3013 = vld [vmem:[#allocation2 + $0x44] sm:$0x1]
      %v3014 = vld [vmem:[#allocation2 + $0x48] sm:$0xf]
      %v3015 = vld [vmem:[#allocation2 + $0x4c] sm:$0xf]
      %v3016 = vld [vmem:[#allocation2 + $0x50] sm:$0xf]
      %v3017 = vld [vmem:[#allocation2 + $0x54] sm:$0xf]
      %v3018 = vld [vmem:[#allocation2 + $0x58] sm:$0xf]
      %v3019 = vld [vmem:[#allocation2 + $0x5c] sm:$0xf]
      %v3020 = vld [vmem:[#allocation2 + $0x60] sm:$0xf]
      %v3021 = vld [vmem:[#allocation2 + $0x64] sm:$0xf]
      %v3022 = vld [vmem:[#allocation2 + $0x68] sm:$0x1]
      %v3023 = vld [vmem:[#allocation2 + $0x6c] sm:$0xf]
      %v3024 = vld [vmem:[#allocation2 + $0x70] sm:$0xf]
      %v3025 = vld [vmem:[#allocation2 + $0x74] sm:$0xf]
      %v3026 = vld [vmem:[#allocation2 + $0x78] sm:$0xf]
      %v3027 = vld [vmem:[#allocation2 + $0x7c] sm:$0xf]
      %v3028 = vld [vmem:[#allocation2 + $0x80] sm:$0xf]
      %v3029 = vld [vmem:[#allocation2 + $0x84] sm:$0xf]
      %v3030 = vld [vmem:[#allocation2 + $0x88] sm:$0xf]
      %v3031 = vld [vmem:[#allocation2 + $0x8c] sm:$0x1]
      %v3032 = vld [vmem:[#allocation2 + $0x90] sm:$0xf]
      %v3033 = vld [vmem:[#allocation2 + $0x94] sm:$0xf]
      %v3034 = vld [vmem:[#allocation2 + $0x98] sm:$0xf]
      %v3035 = vld [vmem:[#allocation2 + $0x9c] sm:$0xf]
      %v3036 = vld [vmem:[#allocation2 + $0xa0] sm:$0xf]
      %v3037 = vld [vmem:[#allocation2 + $0xa4] sm:$0xf]
      %v3038 = vld [vmem:[#allocation2 + $0xa8] sm:$0xf]
      %v3039 = vld [vmem:[#allocation2 + $0xac] sm:$0xf]
      %v3040 = vld [vmem:[#allocation2 + $0xb0] sm:$0x1]
      %v3041 = vld [vmem:[#allocation2 + $0xb4] sm:$0xf]
      %v3042 = vld [vmem:[#allocation2 + $0xb8] sm:$0xf]
      %v3043 = vld [vmem:[#allocation2 + $0xbc] sm:$0xf]
      %v3044 = vld [vmem:[#allocation2 + $0xc0] sm:$0xf]
      %v3045 = vld [vmem:[#allocation2 + $0xc4] sm:$0xf]
      %v3046 = vld [vmem:[#allocation2 + $0xc8] sm:$0xf]
      %v3047 = vld [vmem:[#allocation2 + $0xcc] sm:$0xf]
      %v3048 = vld [vmem:[#allocation2 + $0xd0] sm:$0xf]
      %v3049 = vld [vmem:[#allocation2 + $0xd4] sm:$0x1]
      %v3050 = vld [vmem:[#allocation2 + $0xd8] sm:$0xf]
      %v3051 = vld [vmem:[#allocation2 + $0xdc] sm:$0xf]
      %v3052 = vld [vmem:[#allocation2 + $0xe0] sm:$0xf]
      %v3053 = vld [vmem:[#allocation2 + $0xe4] sm:$0xf]
      %v3054 = vld [vmem:[#allocation2 + $0xe8] sm:$0xf]
      %v3055 = vld [vmem:[#allocation2 + $0xec] sm:$0xf]
      %v3056 = vld [vmem:[#allocation2 + $0xf0] sm:$0xf]
      %v3057 = vld [vmem:[#allocation2 + $0xf4] sm:$0xf]
      %v3058 = vld [vmem:[#allocation2 + $0xf8] sm:$0x1]
      %v3059 = vld [vmem:[#allocation2 + $0xfc] sm:$0xf]
      %v3060 = vld [vmem:[#allocation2 + $0x100] sm:$0xf]
      %v3061 = vld [vmem:[#allocation2 + $0x104] sm:$0xf]
      %v3062 = vld [vmem:[#allocation2 + $0x108] sm:$0xf]
      %v3063 = vld [vmem:[#allocation2 + $0x10c] sm:$0xf]
      %v3064 = vld [vmem:[#allocation2 + $0x110] sm:$0xf]
      %v3065 = vld [vmem:[#allocation2 + $0x114] sm:$0xf]
      %v3066 = vld [vmem:[#allocation2 + $0x118] sm:$0xf]
      %v3067 = vld [vmem:[#allocation2 + $0x11c] sm:$0x1]
      %v3068 = vld [vmem:[#allocation2] sm:$0xe]
      %v3069 = vld [vmem:[#allocation2 + $0x24] sm:$0xe]
      %v3070 = vld [vmem:[#allocation2 + $0x48] sm:$0xe]
      %v3071 = vld [vmem:[#allocation2 + $0x6c] sm:$0xe]
      %v3072 = vld [vmem:[#allocation2 + $0x90] sm:$0xe]
      %v3073 = vld [vmem:[#allocation2 + $0xb4] sm:$0xe]
      %v3074 = vld [vmem:[#allocation2 + $0xd8] sm:$0xe]
      %v3075 = vld [vmem:[#allocation2 + $0xfc] sm:$0xe]
      %v3140 = vunpack.c.l.b16 %v2932
      %v3141 = vunpack.c.l.b16 %v2933
      %v3142 = vunpack.c.l.b16 %v2934
      %v3143 = vunpack.c.l.b16 %v2935
      %v3144 = vunpack.c.l.b16 %v2936
      %v3145 = vunpack.c.l.b16 %v2937
      %v3146 = vunpack.c.l.b16 %v2938
      %v3147 = vunpack.c.l.b16 %v2939
      %v3148 = vunpack.c.l.b16 %v2940
      %v3149 = vunpack.c.l.b16 %v2941
      %v3150 = vunpack.c.l.b16 %v2942
      %v3151 = vunpack.c.l.b16 %v2943
      %v3152 = vunpack.c.l.b16 %v2944
      %v3153 = vunpack.c.l.b16 %v2945
      %v3154 = vunpack.c.l.b16 %v2946
      %v3155 = vunpack.c.l.b16 %v2947
      %v3156 = vunpack.c.l.b16 %v2948
      %v3157 = vunpack.c.l.b16 %v2949
      %v3158 = vunpack.c.l.b16 %v2950
      %v3159 = vunpack.c.l.b16 %v2951
      %v3160 = vunpack.c.l.b16 %v2952
      %v3161 = vunpack.c.l.b16 %v2953
      %v3162 = vunpack.c.l.b16 %v2954
      %v3163 = vunpack.c.l.b16 %v2955
      %v3164 = vunpack.c.l.b16 %v2956
      %v3165 = vunpack.c.l.b16 %v2957
      %v3166 = vunpack.c.l.b16 %v2958
      %v3167 = vunpack.c.l.b16 %v2959
      %v3168 = vunpack.c.l.b16 %v2960
      %v3169 = vunpack.c.l.b16 %v2961
      %v3170 = vunpack.c.l.b16 %v2962
      %v3171 = vunpack.c.l.b16 %v2963
      %v3172 = vunpack.c.l.b16 %v2964
      %v3173 = vunpack.c.l.b16 %v2965
      %v3174 = vunpack.c.l.b16 %v2966
      %v3175 = vunpack.c.l.b16 %v2967
      %v3176 = vunpack.c.l.b16 %v2968
      %v3177 = vunpack.c.l.b16 %v2969
      %v3178 = vunpack.c.l.b16 %v2970
      %v3179 = vunpack.c.l.b16 %v2971
      %v3180 = vunpack.c.l.b16 %v2972
      %v3181 = vunpack.c.l.b16 %v2973
      %v3182 = vunpack.c.l.b16 %v2974
      %v3183 = vunpack.c.l.b16 %v2975
      %v3184 = vunpack.c.l.b16 %v2976
      %v3185 = vunpack.c.l.b16 %v2977
      %v3186 = vunpack.c.l.b16 %v2978
      %v3187 = vunpack.c.l.b16 %v2979
      %v3188 = vunpack.c.l.b16 %v2980
      %v3189 = vunpack.c.l.b16 %v2981
      %v3190 = vunpack.c.l.b16 %v2982
      %v3191 = vunpack.c.l.b16 %v2983
      %v3192 = vunpack.c.l.b16 %v2984
      %v3193 = vunpack.c.l.b16 %v2985
      %v3194 = vunpack.c.l.b16 %v2986
      %v3195 = vunpack.c.l.b16 %v2987
      %v3196 = vunpack.c.l.b16 %v2988
      %v3197 = vunpack.c.l.b16 %v2989
      %v3198 = vunpack.c.l.b16 %v2990
      %v3199 = vunpack.c.l.b16 %v2991
      %v3200 = vunpack.c.l.b16 %v2992
      %v3201 = vunpack.c.l.b16 %v2993
      %v3202 = vunpack.c.l.b16 %v2994
      %v3203 = vunpack.c.l.b16 %v2995
      %v3204 = vpack.c.b16 %v3141, %v3140
      %v3205 = vpack.c.b16 %v3143, %v3142
      %v3206 = vpack.c.b16 %v3145, %v3144
      %v3207 = vpack.c.b16 %v3147, %v3146
      %v3208 = vpack.c.b16 %v3149, %v3148
      %v3209 = vpack.c.b16 %v3151, %v3150
      %v3210 = vpack.c.b16 %v3153, %v3152
      %v3211 = vpack.c.b16 %v3155, %v3154
      %v3212 = vpack.c.b16 %v3157, %v3156
      %v3213 = vpack.c.b16 %v3159, %v3158
      %v3214 = vpack.c.b16 %v3161, %v3160
      %v3215 = vpack.c.b16 %v3163, %v3162
      %v3216 = vpack.c.b16 %v3165, %v3164
      %v3217 = vpack.c.b16 %v3167, %v3166
      %v3218 = vpack.c.b16 %v3169, %v3168
      %v3219 = vpack.c.b16 %v3171, %v3170
      %v3220 = vpack.c.b16 %v3173, %v3172
      %v3221 = vpack.c.b16 %v3175, %v3174
      %v3222 = vpack.c.b16 %v3177, %v3176
      %v3223 = vpack.c.b16 %v3179, %v3178
      %v3224 = vpack.c.b16 %v3181, %v3180
      %v3225 = vpack.c.b16 %v3183, %v3182
      %v3226 = vpack.c.b16 %v3185, %v3184
      %v3227 = vpack.c.b16 %v3187, %v3186
      %v3228 = vpack.c.b16 %v3189, %v3188
      %v3229 = vpack.c.b16 %v3191, %v3190
      %v3230 = vpack.c.b16 %v3193, %v3192
      %v3231 = vpack.c.b16 %v3195, %v3194
      %v3232 = vpack.c.b16 %v3197, %v3196
      %v3233 = vpack.c.b16 %v3199, %v3198
      %v3234 = vpack.c.b16 %v3201, %v3200
      %v3235 = vpack.c.b16 %v3203, %v3202
      %v3340 = vunpack.c.l.b16 %v2996
      %v3341 = vunpack.c.l.b16 %v2997
      %v3342 = vunpack.c.l.b16 %v2998
      %v3343 = vunpack.c.l.b16 %v2999
      %v3344 = vunpack.c.l.b16 %v3000
      %v3345 = vunpack.c.l.b16 %v3001
      %v3346 = vunpack.c.l.b16 %v3002
      %v3347 = vunpack.c.l.b16 %v3003
      %v3348 = vunpack.c.l.b16 %v3004
      %v3349 = vunpack.c.l.b16 %v3005
      %v3350 = vunpack.c.l.b16 %v3006
      %v3351 = vunpack.c.l.b16 %v3007
      %v3352 = vunpack.c.l.b16 %v3008
      %v3353 = vunpack.c.l.b16 %v3009
      %v3354 = vunpack.c.l.b16 %v3010
      %v3355 = vunpack.c.l.b16 %v3011
      %v3356 = vunpack.c.l.b16 %v3012
      %v3357 = vunpack.c.l.b16 %v3013
      %v3358 = vunpack.c.l.b16 %v3014
      %v3359 = vunpack.c.l.b16 %v3015
      %v3360 = vunpack.c.l.b16 %v3016
      %v3361 = vunpack.c.l.b16 %v3017
      %v3362 = vunpack.c.l.b16 %v3018
      %v3363 = vunpack.c.l.b16 %v3019
      %v3364 = vunpack.c.l.b16 %v3020
      %v3365 = vunpack.c.l.b16 %v3021
      %v3366 = vunpack.c.l.b16 %v3022
      %v3367 = vunpack.c.l.b16 %v3023
      %v3368 = vunpack.c.l.b16 %v3024
      %v3369 = vunpack.c.l.b16 %v3025
      %v3370 = vunpack.c.l.b16 %v3026
      %v3371 = vunpack.c.l.b16 %v3027
      %v3372 = vunpack.c.l.b16 %v3028
      %v3373 = vunpack.c.l.b16 %v3029
      %v3374 = vunpack.c.l.b16 %v3030
      %v3375 = vunpack.c.l.b16 %v3031
      %v3376 = vunpack.c.l.b16 %v3032
      %v3377 = vunpack.c.l.b16 %v3033
      %v3378 = vunpack.c.l.b16 %v3034
      %v3379 = vunpack.c.l.b16 %v3035
      %v3380 = vunpack.c.l.b16 %v3036
      %v3381 = vunpack.c.l.b16 %v3037
      %v3382 = vunpack.c.l.b16 %v3038
      %v3383 = vunpack.c.l.b16 %v3039
      %v3384 = vunpack.c.l.b16 %v3040
      %v3385 = vunpack.c.l.b16 %v3041
      %v3386 = vunpack.c.l.b16 %v3042
      %v3387 = vunpack.c.l.b16 %v3043
      %v3388 = vunpack.c.l.b16 %v3044
      %v3389 = vunpack.c.l.b16 %v3045
      %v3390 = vunpack.c.l.b16 %v3046
      %v3391 = vunpack.c.l.b16 %v3047
      %v3392 = vunpack.c.l.b16 %v3048
      %v3393 = vunpack.c.l.b16 %v3049
      %v3394 = vunpack.c.l.b16 %v3050
      %v3395 = vunpack.c.l.b16 %v3051
      %v3396 = vunpack.c.l.b16 %v3052
      %v3397 = vunpack.c.l.b16 %v3053
      %v3398 = vunpack.c.l.b16 %v3054
      %v3399 = vunpack.c.l.b16 %v3055
      %v3400 = vunpack.c.l.b16 %v3056
      %v3401 = vunpack.c.l.b16 %v3057
      %v3402 = vunpack.c.l.b16 %v3058
      %v3403 = vunpack.c.l.b16 %v3059
      %v3404 = vunpack.c.l.b16 %v3060
      %v3405 = vunpack.c.l.b16 %v3061
      %v3406 = vunpack.c.l.b16 %v3062
      %v3407 = vunpack.c.l.b16 %v3063
      %v3408 = vunpack.c.l.b16 %v3064
      %v3409 = vunpack.c.l.b16 %v3065
      %v3410 = vunpack.c.l.b16 %v3066
      %v3411 = vunpack.c.l.b16 %v3067
      %v3412 = vpack.c.b16 %v3341, %v3340
      %v3413 = vpack.c.b16 %v3343, %v3342
      %v3414 = vpack.c.b16 %v3345, %v3344
      %v3415 = vpack.c.b16 %v3347, %v3346
      %v3416 = vpack.c.b16 %v3348, %v3348
      %v3417 = vpack.c.b16 %v3350, %v3349
      %v3418 = vpack.c.b16 %v3352, %v3351
      %v3419 = vpack.c.b16 %v3354, %v3353
      %v3420 = vpack.c.b16 %v3356, %v3355
      %v3421 = vpack.c.b16 %v3357, %v3357
      %v3422 = vpack.c.b16 %v3359, %v3358
      %v3423 = vpack.c.b16 %v3361, %v3360
      %v3424 = vpack.c.b16 %v3363, %v3362
      %v3425 = vpack.c.b16 %v3365, %v3364
      %v3426 = vpack.c.b16 %v3366, %v3366
      %v3427 = vpack.c.b16 %v3368, %v3367
      %v3428 = vpack.c.b16 %v3370, %v3369
      %v3429 = vpack.c.b16 %v3372, %v3371
      %v3430 = vpack.c.b16 %v3374, %v3373
      %v3431 = vpack.c.b16 %v3375, %v3375
      %v3432 = vpack.c.b16 %v3377, %v3376
      %v3433 = vpack.c.b16 %v3379, %v3378
      %v3434 = vpack.c.b16 %v3381, %v3380
      %v3435 = vpack.c.b16 %v3383, %v3382
      %v3436 = vpack.c.b16 %v3384, %v3384
      %v3437 = vpack.c.b16 %v3386, %v3385
      %v3438 = vpack.c.b16 %v3388, %v3387
      %v3439 = vpack.c.b16 %v3390, %v3389
      %v3440 = vpack.c.b16 %v3392, %v3391
      %v3441 = vpack.c.b16 %v3393, %v3393
      %v3442 = vpack.c.b16 %v3395, %v3394
      %v3443 = vpack.c.b16 %v3397, %v3396
      %v3444 = vpack.c.b16 %v3399, %v3398
      %v3445 = vpack.c.b16 %v3401, %v3400
      %v3446 = vpack.c.b16 %v3402, %v3402
      %v3447 = vpack.c.b16 %v3404, %v3403
      %v3448 = vpack.c.b16 %v3406, %v3405
      %v3449 = vpack.c.b16 %v3408, %v3407
      %v3450 = vpack.c.b16 %v3410, %v3409
      %v3451 = vpack.c.b16 %v3411, %v3411
      %v3453 = vshrl.u32 %v3412, 16
      %v3455 = vshll.u32 %v3412, 16
      %v3457 = vrot.slane %v3455, 1
      %v3458 = vor.u32 %v3453, %v3457
      %v3460 = vshll.u32 %v3413, 16
      %v3462 = vrot.slane %v3460, 1
      %v3463 = vsel %vm514, %v3458, %v3462
      %v3464 = vshrl.u32 %v3413, 16
      %v3466 = vor.u32 %v3464, %v3462
      %v3468 = vshll.u32 %v3414, 16
      %v3470 = vrot.slane %v3468, 1
      %v3471 = vsel %vm514, %v3466, %v3470
      %v3472 = vshrl.u32 %v3414, 16
      %v3474 = vor.u32 %v3472, %v3470
      %v3476 = vshll.u32 %v3415, 16
      %v3478 = vrot.slane %v3476, 1
      %v3479 = vsel %vm514, %v3474, %v3478
      %v3480 = vshrl.u32 %v3415, 16
      %v3482 = vor.u32 %v3480, %v3478
      %v3484 = vshll.u32 %v3416, 16
      %v3486 = vrot.slane %v3484, 1
      %v3487 = vsel %vm514, %v3482, %v3486
      %v3489 = vshrl.u32 %v3417, 16
      %v3491 = vshll.u32 %v3417, 16
      %v3493 = vrot.slane %v3491, 1
      %v3494 = vor.u32 %v3489, %v3493
      %v3496 = vshll.u32 %v3418, 16
      %v3498 = vrot.slane %v3496, 1
      %v3499 = vsel %vm514, %v3494, %v3498
      %v3500 = vshrl.u32 %v3418, 16
      %v3502 = vor.u32 %v3500, %v3498
      %v3504 = vshll.u32 %v3419, 16
      %v3506 = vrot.slane %v3504, 1
      %v3507 = vsel %vm514, %v3502, %v3506
      %v3508 = vshrl.u32 %v3419, 16
      %v3510 = vor.u32 %v3508, %v3506
      %v3512 = vshll.u32 %v3420, 16
      %v3514 = vrot.slane %v3512, 1
      %v3515 = vsel %vm514, %v3510, %v3514
      %v3516 = vshrl.u32 %v3420, 16
      %v3518 = vor.u32 %v3516, %v3514
      %v3520 = vshll.u32 %v3421, 16
      %v3522 = vrot.slane %v3520, 1
      %v3523 = vsel %vm514, %v3518, %v3522
      %v3525 = vshrl.u32 %v3422, 16
      %v3527 = vshll.u32 %v3422, 16
      %v3529 = vrot.slane %v3527, 1
      %v3530 = vor.u32 %v3525, %v3529
      %v3532 = vshll.u32 %v3423, 16
      %v3534 = vrot.slane %v3532, 1
      %v3535 = vsel %vm514, %v3530, %v3534
      %v3536 = vshrl.u32 %v3423, 16
      %v3538 = vor.u32 %v3536, %v3534
      %v3540 = vshll.u32 %v3424, 16
      %v3542 = vrot.slane %v3540, 1
      %v3543 = vsel %vm514, %v3538, %v3542
      %v3544 = vshrl.u32 %v3424, 16
      %v3546 = vor.u32 %v3544, %v3542
      %v3548 = vshll.u32 %v3425, 16
      %v3550 = vrot.slane %v3548, 1
      %v3551 = vsel %vm514, %v3546, %v3550
      %v3552 = vshrl.u32 %v3425, 16
      %v3554 = vor.u32 %v3552, %v3550
      %v3556 = vshll.u32 %v3426, 16
      %v3558 = vrot.slane %v3556, 1
      %v3559 = vsel %vm514, %v3554, %v3558
      %v3561 = vshrl.u32 %v3427, 16
      %v3563 = vshll.u32 %v3427, 16
      %v3565 = vrot.slane %v3563, 1
      %v3566 = vor.u32 %v3561, %v3565
      %v3568 = vshll.u32 %v3428, 16
      %v3570 = vrot.slane %v3568, 1
      %v3571 = vsel %vm514, %v3566, %v3570
      %v3572 = vshrl.u32 %v3428, 16
      %v3574 = vor.u32 %v3572, %v3570
      %v3576 = vshll.u32 %v3429, 16
      %v3578 = vrot.slane %v3576, 1
      %v3579 = vsel %vm514, %v3574, %v3578
      %v3580 = vshrl.u32 %v3429, 16
      %v3582 = vor.u32 %v3580, %v3578
      %v3584 = vshll.u32 %v3430, 16
      %v3586 = vrot.slane %v3584, 1
      %v3587 = vsel %vm514, %v3582, %v3586
      %v3588 = vshrl.u32 %v3430, 16
      %v3590 = vor.u32 %v3588, %v3586
      %v3592 = vshll.u32 %v3431, 16
      %v3594 = vrot.slane %v3592, 1
      %v3595 = vsel %vm514, %v3590, %v3594
      %v3597 = vshrl.u32 %v3432, 16
      %v3599 = vshll.u32 %v3432, 16
      %v3601 = vrot.slane %v3599, 1
      %v3602 = vor.u32 %v3597, %v3601
      %v3604 = vshll.u32 %v3433, 16
      %v3606 = vrot.slane %v3604, 1
      %v3607 = vsel %vm514, %v3602, %v3606
      %v3608 = vshrl.u32 %v3433, 16
      %v3610 = vor.u32 %v3608, %v3606
      %v3612 = vshll.u32 %v3434, 16
      %v3614 = vrot.slane %v3612, 1
      %v3615 = vsel %vm514, %v3610, %v3614
      %v3616 = vshrl.u32 %v3434, 16
      %v3618 = vor.u32 %v3616, %v3614
      %v3620 = vshll.u32 %v3435, 16
      %v3622 = vrot.slane %v3620, 1
      %v3623 = vsel %vm514, %v3618, %v3622
      %v3624 = vshrl.u32 %v3435, 16
      %v3626 = vor.u32 %v3624, %v3622
      %v3628 = vshll.u32 %v3436, 16
      %v3630 = vrot.slane %v3628, 1
      %v3631 = vsel %vm514, %v3626, %v3630
      %v3633 = vshrl.u32 %v3437, 16
      %v3635 = vshll.u32 %v3437, 16
      %v3637 = vrot.slane %v3635, 1
      %v3638 = vor.u32 %v3633, %v3637
      %v3640 = vshll.u32 %v3438, 16
      %v3642 = vrot.slane %v3640, 1
      %v3643 = vsel %vm514, %v3638, %v3642
      %v3644 = vshrl.u32 %v3438, 16
      %v3646 = vor.u32 %v3644, %v3642
      %v3648 = vshll.u32 %v3439, 16
      %v3650 = vrot.slane %v3648, 1
      %v3651 = vsel %vm514, %v3646, %v3650
      %v3652 = vshrl.u32 %v3439, 16
      %v3654 = vor.u32 %v3652, %v3650
      %v3656 = vshll.u32 %v3440, 16
      %v3658 = vrot.slane %v3656, 1
      %v3659 = vsel %vm514, %v3654, %v3658
      %v3660 = vshrl.u32 %v3440, 16
      %v3662 = vor.u32 %v3660, %v3658
      %v3664 = vshll.u32 %v3441, 16
      %v3666 = vrot.slane %v3664, 1
      %v3667 = vsel %vm514, %v3662, %v3666
      %v3669 = vshrl.u32 %v3442, 16
      %v3671 = vshll.u32 %v3442, 16
      %v3673 = vrot.slane %v3671, 1
      %v3674 = vor.u32 %v3669, %v3673
      %v3676 = vshll.u32 %v3443, 16
      %v3678 = vrot.slane %v3676, 1
      %v3679 = vsel %vm514, %v3674, %v3678
      %v3680 = vshrl.u32 %v3443, 16
      %v3682 = vor.u32 %v3680, %v3678
      %v3684 = vshll.u32 %v3444, 16
      %v3686 = vrot.slane %v3684, 1
      %v3687 = vsel %vm514, %v3682, %v3686
      %v3688 = vshrl.u32 %v3444, 16
      %v3690 = vor.u32 %v3688, %v3686
      %v3692 = vshll.u32 %v3445, 16
      %v3694 = vrot.slane %v3692, 1
      %v3695 = vsel %vm514, %v3690, %v3694
      %v3696 = vshrl.u32 %v3445, 16
      %v3698 = vor.u32 %v3696, %v3694
      %v3700 = vshll.u32 %v3446, 16
      %v3702 = vrot.slane %v3700, 1
      %v3703 = vsel %vm514, %v3698, %v3702
      %v3705 = vshrl.u32 %v3447, 16
      %v3707 = vshll.u32 %v3447, 16
      %v3709 = vrot.slane %v3707, 1
      %v3710 = vor.u32 %v3705, %v3709
      %v3712 = vshll.u32 %v3448, 16
      %v3714 = vrot.slane %v3712, 1
      %v3715 = vsel %vm514, %v3710, %v3714
      %v3716 = vshrl.u32 %v3448, 16
      %v3718 = vor.u32 %v3716, %v3714
      %v3720 = vshll.u32 %v3449, 16
      %v3722 = vrot.slane %v3720, 1
      %v3723 = vsel %vm514, %v3718, %v3722
      %v3724 = vshrl.u32 %v3449, 16
      %v3726 = vor.u32 %v3724, %v3722
      %v3728 = vshll.u32 %v3450, 16
      %v3730 = vrot.slane %v3728, 1
      %v3731 = vsel %vm514, %v3726, %v3730
      %v3732 = vshrl.u32 %v3450, 16
      %v3734 = vor.u32 %v3732, %v3730
      %v3736 = vshll.u32 %v3451, 16
      %v3738 = vrot.slane %v3736, 1
      %v3739 = vsel %vm514, %v3734, %v3738
      %v3780 = vunpack.c.l.b16 %v3068
      %v3781 = vunpack.c.l.b16 %v3069
      %v3782 = vunpack.c.l.b16 %v3070
      %v3783 = vunpack.c.l.b16 %v3071
      %v3784 = vunpack.c.l.b16 %v3072
      %v3785 = vunpack.c.l.b16 %v3073
      %v3786 = vunpack.c.l.b16 %v3074
      %v3787 = vunpack.c.l.b16 %v3075
      %v3788 = vpack.c.b16 %v3341, %v3780
      %v3789 = vpack.c.b16 %v3350, %v3781
      %v3790 = vpack.c.b16 %v3359, %v3782
      %v3791 = vpack.c.b16 %v3368, %v3783
      %v3792 = vpack.c.b16 %v3377, %v3784
      %v3793 = vpack.c.b16 %v3386, %v3785
      %v3794 = vpack.c.b16 %v3395, %v3786
      %v3795 = vpack.c.b16 %v3404, %v3787
      %vm3796 = vcmask 1046528
      %v3797 = vrot.slane %v3788, 1
      %v3798 = vrot.slane %v3413, 1
      %v3799 = vsel %vm3796, %v3797, %v3798
      %v3800 = vrot.slane %v3414, 1
      %v3801 = vsel %vm3796, %v3798, %v3800
      %v3802 = vrot.slane %v3415, 1
      %v3803 = vsel %vm3796, %v3800, %v3802
      %v3804 = vrot.slane %v3416, 1
      %v3805 = vsel %vm3796, %v3802, %v3804
      %v3806 = vrot.slane %v3789, 1
      %v3807 = vrot.slane %v3418, 1
      %v3808 = vsel %vm3796, %v3806, %v3807
      %v3809 = vrot.slane %v3419, 1
      %v3810 = vsel %vm3796, %v3807, %v3809
      %v3811 = vrot.slane %v3420, 1
      %v3812 = vsel %vm3796, %v3809, %v3811
      %v3813 = vrot.slane %v3421, 1
      %v3814 = vsel %vm3796, %v3811, %v3813
      %v3815 = vrot.slane %v3790, 1
      %v3816 = vrot.slane %v3423, 1
      %v3817 = vsel %vm3796, %v3815, %v3816
      %v3818 = vrot.slane %v3424, 1
      %v3819 = vsel %vm3796, %v3816, %v3818
      %v3820 = vrot.slane %v3425, 1
      %v3821 = vsel %vm3796, %v3818, %v3820
      %v3822 = vrot.slane %v3426, 1
      %v3823 = vsel %vm3796, %v3820, %v3822
      %v3824 = vrot.slane %v3791, 1
      %v3825 = vrot.slane %v3428, 1
      %v3826 = vsel %vm3796, %v3824, %v3825
      %v3827 = vrot.slane %v3429, 1
      %v3828 = vsel %vm3796, %v3825, %v3827
      %v3829 = vrot.slane %v3430, 1
      %v3830 = vsel %vm3796, %v3827, %v3829
      %v3831 = vrot.slane %v3431, 1
      %v3832 = vsel %vm3796, %v3829, %v3831
      %v3833 = vrot.slane %v3792, 1
      %v3834 = vrot.slane %v3433, 1
      %v3835 = vsel %vm3796, %v3833, %v3834
      %v3836 = vrot.slane %v3434, 1
      %v3837 = vsel %vm3796, %v3834, %v3836
      %v3838 = vrot.slane %v3435, 1
      %v3839 = vsel %vm3796, %v3836, %v3838
      %v3840 = vrot.slane %v3436, 1
      %v3841 = vsel %vm3796, %v3838, %v3840
      %v3842 = vrot.slane %v3793, 1
      %v3843 = vrot.slane %v3438, 1
      %v3844 = vsel %vm3796, %v3842, %v3843
      %v3845 = vrot.slane %v3439, 1
      %v3846 = vsel %vm3796, %v3843, %v3845
      %v3847 = vrot.slane %v3440, 1
      %v3848 = vsel %vm3796, %v3845, %v3847
      %v3849 = vrot.slane %v3441, 1
      %v3850 = vsel %vm3796, %v3847, %v3849
      %v3851 = vrot.slane %v3794, 1
      %v3852 = vrot.slane %v3443, 1
      %v3853 = vsel %vm3796, %v3851, %v3852
      %v3854 = vrot.slane %v3444, 1
      %v3855 = vsel %vm3796, %v3852, %v3854
      %v3856 = vrot.slane %v3445, 1
      %v3857 = vsel %vm3796, %v3854, %v3856
      %v3858 = vrot.slane %v3446, 1
      %v3859 = vsel %vm3796, %v3856, %v3858
      %v3860 = vrot.slane %v3795, 1
      %v3861 = vrot.slane %v3448, 1
      %v3862 = vsel %vm3796, %v3860, %v3861
      %v3863 = vrot.slane %v3449, 1
      %v3864 = vsel %vm3796, %v3861, %v3863
      %v3865 = vrot.slane %v3450, 1
      %v3866 = vsel %vm3796, %v3863, %v3865
      %v3867 = vrot.slane %v3451, 1
      %v3868 = vsel %vm3796, %v3865, %v3867
      %v3901 = vld [vmem:[%s3] sm:$0xf]
      %v3902 = vld [vmem:[%s3 + $0x4] sm:$0xf]
      %v3903 = vld [vmem:[%s3 + $0x8] sm:$0xf]
      %v3904 = vld [vmem:[%s3 + $0xc] sm:$0xf]
      %v3905 = vld [vmem:[%s3 + $0x10] sm:$0xf]
      %v3906 = vld [vmem:[%s3 + $0x14] sm:$0xf]
      %v3907 = vld [vmem:[%s3 + $0x18] sm:$0xf]
      %v3908 = vld [vmem:[%s3 + $0x1c] sm:$0xf]
      %v3909 = vld [vmem:[%s3 + $0x20] sm:$0xf]
      %v3910 = vld [vmem:[%s3 + $0x24] sm:$0xf]
      %v3911 = vld [vmem:[%s3 + $0x28] sm:$0xf]
      %v3912 = vld [vmem:[%s3 + $0x2c] sm:$0xf]
      %v3913 = vld [vmem:[%s3 + $0x30] sm:$0xf]
      %v3914 = vld [vmem:[%s3 + $0x34] sm:$0xf]
      %v3915 = vld [vmem:[%s3 + $0x38] sm:$0xf]
      %v3916 = vld [vmem:[%s3 + $0x3c] sm:$0xf]
      %v3917 = vld [vmem:[%s3 + $0x40] sm:$0xf]
      %v3918 = vld [vmem:[%s3 + $0x44] sm:$0xf]
      %v3919 = vld [vmem:[%s3 + $0x48] sm:$0xf]
      %v3920 = vld [vmem:[%s3 + $0x4c] sm:$0xf]
      %v3921 = vld [vmem:[%s3 + $0x50] sm:$0xf]
      %v3922 = vld [vmem:[%s3 + $0x54] sm:$0xf]
      %v3923 = vld [vmem:[%s3 + $0x58] sm:$0xf]
      %v3924 = vld [vmem:[%s3 + $0x5c] sm:$0xf]
      %v3925 = vld [vmem:[%s3 + $0x60] sm:$0xf]
      %v3926 = vld [vmem:[%s3 + $0x64] sm:$0xf]
      %v3927 = vld [vmem:[%s3 + $0x68] sm:$0xf]
      %v3928 = vld [vmem:[%s3 + $0x6c] sm:$0xf]
      %v3929 = vld [vmem:[%s3 + $0x70] sm:$0xf]
      %v3930 = vld [vmem:[%s3 + $0x74] sm:$0xf]
      %v3931 = vld [vmem:[%s3 + $0x78] sm:$0xf]
      %v3932 = vld [vmem:[%s3 + $0x7c] sm:$0xf]
      %v3933 = vld [vmem:[%s3 + $0x80] sm:$0xf]
      %v3934 = vld [vmem:[%s3 + $0x84] sm:$0xf]
      %v3935 = vld [vmem:[%s3 + $0x88] sm:$0xf]
      %v3936 = vld [vmem:[%s3 + $0x8c] sm:$0xf]
      %v3937 = vld [vmem:[%s3 + $0x90] sm:$0xf]
      %v3938 = vld [vmem:[%s3 + $0x94] sm:$0xf]
      %v3939 = vld [vmem:[%s3 + $0x98] sm:$0xf]
      %v3940 = vld [vmem:[%s3 + $0x9c] sm:$0xf]
      %v3941 = vld [vmem:[%s3 + $0xa0] sm:$0xf]
      %v3942 = vld [vmem:[%s3 + $0xa4] sm:$0xf]
      %v3943 = vld [vmem:[%s3 + $0xa8] sm:$0xf]
      %v3944 = vld [vmem:[%s3 + $0xac] sm:$0xf]
      %v3945 = vld [vmem:[%s3 + $0xb0] sm:$0xf]
      %v3946 = vld [vmem:[%s3 + $0xb4] sm:$0xf]
      %v3947 = vld [vmem:[%s3 + $0xb8] sm:$0xf]
      %v3948 = vld [vmem:[%s3 + $0xbc] sm:$0xf]
      %v3997 = vunpack.c.l.b16 %v3901
      %v3998 = vunpack.c.l.b16 %v3902
      %v3999 = vunpack.c.l.b16 %v3903
      %v4000 = vunpack.c.l.b16 %v3904
      %v4001 = vunpack.c.l.b16 %v3905
      %v4002 = vunpack.c.l.b16 %v3906
      %v4003 = vunpack.c.l.b16 %v3907
      %v4004 = vunpack.c.l.b16 %v3908
      %v4005 = vunpack.c.l.b16 %v3909
      %v4006 = vunpack.c.l.b16 %v3910
      %v4007 = vunpack.c.l.b16 %v3911
      %v4008 = vunpack.c.l.b16 %v3912
      %v4009 = vunpack.c.l.b16 %v3913
      %v4010 = vunpack.c.l.b16 %v3914
      %v4011 = vunpack.c.l.b16 %v3915
      %v4012 = vunpack.c.l.b16 %v3916
      %v4013 = vunpack.c.l.b16 %v3917
      %v4014 = vunpack.c.l.b16 %v3918
      %v4015 = vunpack.c.l.b16 %v3919
      %v4016 = vunpack.c.l.b16 %v3920
      %v4017 = vunpack.c.l.b16 %v3921
      %v4018 = vunpack.c.l.b16 %v3922
      %v4019 = vunpack.c.l.b16 %v3923
      %v4020 = vunpack.c.l.b16 %v3924
      %v4021 = vunpack.c.l.b16 %v3925
      %v4022 = vunpack.c.l.b16 %v3926
      %v4023 = vunpack.c.l.b16 %v3927
      %v4024 = vunpack.c.l.b16 %v3928
      %v4025 = vunpack.c.l.b16 %v3929
      %v4026 = vunpack.c.l.b16 %v3930
      %v4027 = vunpack.c.l.b16 %v3931
      %v4028 = vunpack.c.l.b16 %v3932
      %v4029 = vunpack.c.l.b16 %v3933
      %v4030 = vunpack.c.l.b16 %v3934
      %v4031 = vunpack.c.l.b16 %v3935
      %v4032 = vunpack.c.l.b16 %v3936
      %v4033 = vunpack.c.l.b16 %v3937
      %v4034 = vunpack.c.l.b16 %v3938
      %v4035 = vunpack.c.l.b16 %v3939
      %v4036 = vunpack.c.l.b16 %v3940
      %v4037 = vunpack.c.l.b16 %v3941
      %v4038 = vunpack.c.l.b16 %v3942
      %v4039 = vunpack.c.l.b16 %v3943
      %v4040 = vunpack.c.l.b16 %v3944
      %v4041 = vunpack.c.l.b16 %v3945
      %v4042 = vunpack.c.l.b16 %v3946
      %v4043 = vunpack.c.l.b16 %v3947
      %v4044 = vunpack.c.l.b16 %v3948
      %v4045 = vpack.c.b16 %v3998, %v3997
      %v4046 = vpack.c.b16 %v4000, %v3999
      %v4047 = vpack.c.b16 %v4002, %v4001
      %v4048 = vpack.c.b16 %v4004, %v4003
      %v4049 = vpack.c.b16 %v4006, %v4005
      %v4050 = vpack.c.b16 %v4008, %v4007
      %v4051 = vpack.c.b16 %v4010, %v4009
      %v4052 = vpack.c.b16 %v4012, %v4011
      %v4053 = vpack.c.b16 %v4014, %v4013
      %v4054 = vpack.c.b16 %v4016, %v4015
      %v4055 = vpack.c.b16 %v4018, %v4017
      %v4056 = vpack.c.b16 %v4020, %v4019
      %v4057 = vpack.c.b16 %v4022, %v4021
      %v4058 = vpack.c.b16 %v4024, %v4023
      %v4059 = vpack.c.b16 %v4026, %v4025
      %v4060 = vpack.c.b16 %v4028, %v4027
      %v4061 = vpack.c.b16 %v4030, %v4029
      %v4062 = vpack.c.b16 %v4032, %v4031
      %v4063 = vpack.c.b16 %v4034, %v4033
      %v4064 = vpack.c.b16 %v4036, %v4035
      %v4065 = vpack.c.b16 %v4038, %v4037
      %v4066 = vpack.c.b16 %v4040, %v4039
      %v4067 = vpack.c.b16 %v4042, %v4041
      %v4068 = vpack.c.b16 %v4044, %v4043
      %4093 = vmatprep.subr.bf16.mxu0 0
      %4094 = vmatpush1.bf16.msra.mxu0 %v4045
      %4095 = vmatprep.subr.bf16.mxu0 0
      %4096 = vmatpush1.bf16.msra.mxu0 %v4046
      %4097 = vmatprep.subr.bf16.mxu0 0
      %4098 = vmatpush1.bf16.msra.mxu0 %v4047
      %4099 = vmatprep.subr.bf16.mxu0 0
      %4100 = vmatpush1.bf16.msra.mxu0 %v4048
      %4101 = vmatprep.subr.bf16.mxu0 0
      %4102 = vmatpush1.bf16.msra.mxu0 %v4049
      %4103 = vmatprep.subr.bf16.mxu0 0
      %4104 = vmatpush1.bf16.msra.mxu0 %v4050
      %4105 = vmatprep.subr.bf16.mxu0 0
      %4106 = vmatpush1.bf16.msra.mxu0 %v4051
      %4107 = vmatprep.subr.bf16.mxu0 0
      %4108 = vmatpush1.bf16.msra.mxu0 %v4052
      %4109 = vmatprep.subr.bf16.mxu0 0
      %4110 = vmatpush1.bf16.msra.mxu0 %v4053
      %4111 = vmatprep.subr.bf16.mxu0 0
      %4112 = vmatpush1.bf16.msra.mxu0 %v4054
      %4113 = vmatprep.subr.bf16.mxu0 0
      %4114 = vmatpush1.bf16.msra.mxu0 %v4055
      %4115 = vmatprep.subr.bf16.mxu0 0
      %4116 = vmatpush1.bf16.msra.mxu0 %v4056
      %4117 = vmatprep.subr.bf16.mxu0 0
      %4118 = vmatpush1.bf16.msra.mxu0 %v4057
      %4119 = vmatprep.subr.bf16.mxu0 0
      %4120 = vmatpush1.bf16.msra.mxu0 %v4058
      %4121 = vmatprep.subr.bf16.mxu0 0
      %4122 = vmatpush1.bf16.msra.mxu0 %v4059
      %4123 = vmatprep.subr.bf16.mxu0 0
      %4124 = vmatpush1.bf16.msra.mxu0 %v4060
      %4125 = vmatprep.mubr.bf16.mxu0 %v3463
      %4126 = vmatmul.mubr.bf16.gmra.mrb[0].mxu0 %v3204
      %v4127 = vpop.f32.mrb[0].mxu0
      %v4128 = vadd.f32 0.0, %v4127
      %v4129 = vpop.f32.mrb[0].mxu0
      %v4130 = vpop.f32.mrb[0].mxu0
      %v4131 = vadd.f32 0.0, %v4130
      %v4132 = vpop.f32.mrb[0].mxu0
      %4133 = vmatprep.mubr.bf16.mxu0 %v3471
      %4134 = vmatmul.mubr.bf16.gmra.mrb[0].mxu0 %v3205
      %v4135 = vpop.f32.mrb[0].mxu0
      %v4136 = vadd.f32 0.0, %v4135
      %v4137 = vpop.f32.mrb[0].mxu0
      %v4138 = vpop.f32.mrb[0].mxu0
      %v4139 = vadd.f32 0.0, %v4138
      %v4140 = vpop.f32.mrb[0].mxu0
      %4141 = vmatprep.mubr.bf16.mxu0 %v3479
      %4142 = vmatmul.mubr.bf16.gmra.mrb[0].mxu0 %v3206
      %v4143 = vpop.f32.mrb[0].mxu0
      %v4144 = vadd.f32 0.0, %v4143
      %v4145 = vpop.f32.mrb[0].mxu0
      %v4146 = vpop.f32.mrb[0].mxu0
      %v4147 = vadd.f32 0.0, %v4146
      %v4148 = vpop.f32.mrb[0].mxu0
      %4149 = vmatprep.mubr.bf16.mxu0 %v3487
      %4150 = vmatmul.mubr.bf16.gmra.mrb[0].mxu0 %v3207
      %v4151 = vpop.f32.mrb[0].mxu0
      %v4152 = vadd.f32 0.0, %v4151
      %v4153 = vpop.f32.mrb[0].mxu0
      %v4154 = vpop.f32.mrb[0].mxu0
      %v4155 = vadd.f32 0.0, %v4154
      %v4156 = vpop.f32.mrb[0].mxu0
      %4157 = vmatprep.mubr.bf16.mxu0 %v3499
      %4158 = vmatmul.mubr.bf16.gmra.mrb[0].mxu0 %v3208
      %v4159 = vpop.f32.mrb[0].mxu0
      %v4160 = vadd.f32 0.0, %v4159
      %v4161 = vpop.f32.mrb[0].mxu0
      %v4162 = vpop.f32.mrb[0].mxu0
      %v4163 = vadd.f32 0.0, %v4162
      %v4164 = vpop.f32.mrb[0].mxu0
      %4165 = vmatprep.mubr.bf16.mxu0 %v3507
      %4166 = vmatmul.mubr.bf16.gmra.mrb[0].mxu0 %v3209
      %v4167 = vpop.f32.mrb[0].mxu0
      %v4168 = vadd.f32 0.0, %v4167
      %v4169 = vpop.f32.mrb[0].mxu0
      %v4170 = vpop.f32.mrb[0].mxu0
      %v4171 = vadd.f32 0.0, %v4170
      %v4172 = vpop.f32.mrb[0].mxu0
      %4173 = vmatprep.mubr.bf16.mxu0 %v3515
      %4174 = vmatmul.mubr.bf16.gmra.mrb[0].mxu0 %v3210
      %v4175 = vpop.f32.mrb[0].mxu0
      %v4176 = vadd.f32 0.0, %v4175
      %v4177 = vpop.f32.mrb[0].mxu0
      %v4178 = vpop.f32.mrb[0].mxu0
      %v4179 = vadd.f32 0.0, %v4178
      %v4180 = vpop.f32.mrb[0].mxu0
      %4181 = vmatprep.mubr.bf16.mxu0 %v3523
      %4182 = vmatmul.mubr.bf16.gmra.mrb[0].mxu0 %v3211
      %v4183 = vpop.f32.mrb[0].mxu0
      %v4184 = vadd.f32 0.0, %v4183
      %v4185 = vpop.f32.mrb[0].mxu0
      %v4186 = vpop.f32.mrb[0].mxu0
      %v4187 = vadd.f32 0.0, %v4186
      %v4188 = vpop.f32.mrb[0].mxu0
      %4189 = vmatprep.mubr.bf16.mxu0 %v3535
      %4190 = vmatmul.mubr.bf16.gmra.mrb[0].mxu0 %v3212
      %v4191 = vpop.f32.mrb[0].mxu0
      %v4192 = vadd.f32 0.0, %v4191
      %v4193 = vpop.f32.mrb[0].mxu0
      %v4194 = vpop.f32.mrb[0].mxu0
      %v4195 = vadd.f32 0.0, %v4194
      %v4196 = vpop.f32.mrb[0].mxu0
      %4197 = vmatprep.mubr.bf16.mxu0 %v3543
      %4198 = vmatmul.mubr.bf16.gmra.mrb[0].mxu0 %v3213
      %v4199 = vpop.f32.mrb[0].mxu0
      %v4200 = vadd.f32 0.0, %v4199
      %v4201 = vpop.f32.mrb[0].mxu0
      %v4202 = vpop.f32.mrb[0].mxu0
      %v4203 = vadd.f32 0.0, %v4202
      %v4204 = vpop.f32.mrb[0].mxu0
      %4205 = vmatprep.mubr.bf16.mxu0 %v3551
      %4206 = vmatmul.mubr.bf16.gmra.mrb[0].mxu0 %v3214
      %v4207 = vpop.f32.mrb[0].mxu0
      %v4208 = vadd.f32 0.0, %v4207
      %v4209 = vpop.f32.mrb[0].mxu0
      %v4210 = vpop.f32.mrb[0].mxu0
      %v4211 = vadd.f32 0.0, %v4210
      %v4212 = vpop.f32.mrb[0].mxu0
      %4213 = vmatprep.mubr.bf16.mxu0 %v3559
      %4214 = vmatmul.mubr.bf16.gmra.mrb[0].mxu0 %v3215
      %v4215 = vpop.f32.mrb[0].mxu0
      %v4216 = vadd.f32 0.0, %v4215
      %v4217 = vpop.f32.mrb[0].mxu0
      %v4218 = vpop.f32.mrb[0].mxu0
      %v4219 = vadd.f32 0.0, %v4218
      %v4220 = vpop.f32.mrb[0].mxu0
      %4221 = vmatprep.mubr.bf16.mxu0 %v3571
      %4222 = vmatmul.mubr.bf16.gmra.mrb[0].mxu0 %v3216
      %v4223 = vpop.f32.mrb[0].mxu0
      %v4224 = vadd.f32 0.0, %v4223
      %v4225 = vpop.f32.mrb[0].mxu0
      %v4226 = vpop.f32.mrb[0].mxu0
      %v4227 = vadd.f32 0.0, %v4226
      %v4228 = vpop.f32.mrb[0].mxu0
      %4229 = vmatprep.mubr.bf16.mxu0 %v3579
      %4230 = vmatmul.mubr.bf16.gmra.mrb[0].mxu0 %v3217
      %v4231 = vpop.f32.mrb[0].mxu0
      %v4232 = vadd.f32 0.0, %v4231
      %v4233 = vpop.f32.mrb[0].mxu0
      %v4234 = vpop.f32.mrb[0].mxu0
      %v4235 = vadd.f32 0.0, %v4234
      %v4236 = vpop.f32.mrb[0].mxu0
      %4237 = vmatprep.mubr.bf16.mxu0 %v3587
      %4238 = vmatmul.mubr.bf16.gmra.mrb[0].mxu0 %v3218
      %v4239 = vpop.f32.mrb[0].mxu0
      %v4240 = vadd.f32 0.0, %v4239
      %v4241 = vpop.f32.mrb[0].mxu0
      %v4242 = vpop.f32.mrb[0].mxu0
      %v4243 = vadd.f32 0.0, %v4242
      %v4244 = vpop.f32.mrb[0].mxu0
      %4245 = vmatprep.mubr.bf16.mxu0 %v3595
      %4246 = vmatmul.mubr.bf16.gmra.mrb[0].mxu0 %v3219
      %v4247 = vpop.f32.mrb[0].mxu0
      %v4248 = vadd.f32 0.0, %v4247
      %v4249 = vpop.f32.mrb[0].mxu0
      %v4250 = vpop.f32.mrb[0].mxu0
      %v4251 = vadd.f32 0.0, %v4250
      %v4252 = vpop.f32.mrb[0].mxu0
      %4253 = vmatprep.mubr.bf16.mxu0 %v3607
      %4254 = vmatmul.mubr.bf16.gmra.mrb[0].mxu0 %v3220
      %v4255 = vpop.f32.mrb[0].mxu0
      %v4256 = vadd.f32 0.0, %v4255
      %v4257 = vpop.f32.mrb[0].mxu0
      %v4258 = vpop.f32.mrb[0].mxu0
      %v4259 = vadd.f32 0.0, %v4258
      %v4260 = vpop.f32.mrb[0].mxu0
      %4261 = vmatprep.mubr.bf16.mxu0 %v3615
      %4262 = vmatmul.mubr.bf16.gmra.mrb[0].mxu0 %v3221
      %v4263 = vpop.f32.mrb[0].mxu0
      %v4264 = vadd.f32 0.0, %v4263
      %v4265 = vpop.f32.mrb[0].mxu0
      %v4266 = vpop.f32.mrb[0].mxu0
      %v4267 = vadd.f32 0.0, %v4266
      %v4268 = vpop.f32.mrb[0].mxu0
      %4269 = vmatprep.mubr.bf16.mxu0 %v3623
      %4270 = vmatmul.mubr.bf16.gmra.mrb[0].mxu0 %v3222
      %v4271 = vpop.f32.mrb[0].mxu0
      %v4272 = vadd.f32 0.0, %v4271
      %v4273 = vpop.f32.mrb[0].mxu0
      %v4274 = vpop.f32.mrb[0].mxu0
      %v4275 = vadd.f32 0.0, %v4274
      %v4276 = vpop.f32.mrb[0].mxu0
      %4277 = vmatprep.mubr.bf16.mxu0 %v3631
      %4278 = vmatmul.mubr.bf16.gmra.mrb[0].mxu0 %v3223
      %v4279 = vpop.f32.mrb[0].mxu0
      %v4280 = vadd.f32 0.0, %v4279
      %v4281 = vpop.f32.mrb[0].mxu0
      %v4282 = vpop.f32.mrb[0].mxu0
      %v4283 = vadd.f32 0.0, %v4282
      %v4284 = vpop.f32.mrb[0].mxu0
      %4285 = vmatprep.mubr.bf16.mxu0 %v3643
      %4286 = vmatmul.mubr.bf16.gmra.mrb[0].mxu0 %v3224
      %v4287 = vpop.f32.mrb[0].mxu0
      %v4288 = vadd.f32 0.0, %v4287
      %v4289 = vpop.f32.mrb[0].mxu0
      %v4290 = vpop.f32.mrb[0].mxu0
      %v4291 = vadd.f32 0.0, %v4290
      %v4292 = vpop.f32.mrb[0].mxu0
      %4293 = vmatprep.mubr.bf16.mxu0 %v3651
      %4294 = vmatmul.mubr.bf16.gmra.mrb[0].mxu0 %v3225
      %v4295 = vpop.f32.mrb[0].mxu0
      %v4296 = vadd.f32 0.0, %v4295
      %v4297 = vpop.f32.mrb[0].mxu0
      %v4298 = vpop.f32.mrb[0].mxu0
      %v4299 = vadd.f32 0.0, %v4298
      %v4300 = vpop.f32.mrb[0].mxu0
      %4301 = vmatprep.mubr.bf16.mxu0 %v3659
      %4302 = vmatmul.mubr.bf16.gmra.mrb[0].mxu0 %v3226
      %v4303 = vpop.f32.mrb[0].mxu0
      %v4304 = vadd.f32 0.0, %v4303
      %v4305 = vpop.f32.mrb[0].mxu0
      %v4306 = vpop.f32.mrb[0].mxu0
      %v4307 = vadd.f32 0.0, %v4306
      %v4308 = vpop.f32.mrb[0].mxu0
      %4309 = vmatprep.mubr.bf16.mxu0 %v3667
      %4310 = vmatmul.mubr.bf16.gmra.mrb[0].mxu0 %v3227
      %v4311 = vpop.f32.mrb[0].mxu0
      %v4312 = vadd.f32 0.0, %v4311
      %v4313 = vpop.f32.mrb[0].mxu0
      %v4314 = vpop.f32.mrb[0].mxu0
      %v4315 = vadd.f32 0.0, %v4314
      %v4316 = vpop.f32.mrb[0].mxu0
      %4317 = vmatprep.mubr.bf16.mxu0 %v3679
      %4318 = vmatmul.mubr.bf16.gmra.mrb[0].mxu0 %v3228
      %v4319 = vpop.f32.mrb[0].mxu0
      %v4320 = vadd.f32 0.0, %v4319
      %v4321 = vpop.f32.mrb[0].mxu0
      %v4322 = vpop.f32.mrb[0].mxu0
      %v4323 = vadd.f32 0.0, %v4322
      %v4324 = vpop.f32.mrb[0].mxu0
      %4325 = vmatprep.mubr.bf16.mxu0 %v3687
      %4326 = vmatmul.mubr.bf16.gmra.mrb[0].mxu0 %v3229
      %v4327 = vpop.f32.mrb[0].mxu0
      %v4328 = vadd.f32 0.0, %v4327
      %v4329 = vpop.f32.mrb[0].mxu0
      %v4330 = vpop.f32.mrb[0].mxu0
      %v4331 = vadd.f32 0.0, %v4330
      %v4332 = vpop.f32.mrb[0].mxu0
      %4333 = vmatprep.mubr.bf16.mxu0 %v3695
      %4334 = vmatmul.mubr.bf16.gmra.mrb[0].mxu0 %v3230
      %v4335 = vpop.f32.mrb[0].mxu0
      %v4336 = vadd.f32 0.0, %v4335
      %v4337 = vpop.f32.mrb[0].mxu0
      %v4338 = vpop.f32.mrb[0].mxu0
      %v4339 = vadd.f32 0.0, %v4338
      %v4340 = vpop.f32.mrb[0].mxu0
      %4341 = vmatprep.mubr.bf16.mxu0 %v3703
      %4342 = vmatmul.mubr.bf16.gmra.mrb[0].mxu0 %v3231
      %v4343 = vpop.f32.mrb[0].mxu0
      %v4344 = vadd.f32 0.0, %v4343
      %v4345 = vpop.f32.mrb[0].mxu0
      %v4346 = vpop.f32.mrb[0].mxu0
      %v4347 = vadd.f32 0.0, %v4346
      %v4348 = vpop.f32.mrb[0].mxu0
      %4349 = vmatprep.mubr.bf16.mxu0 %v3715
      %4350 = vmatmul.mubr.bf16.gmra.mrb[0].mxu0 %v3232
      %v4351 = vpop.f32.mrb[0].mxu0
      %v4352 = vadd.f32 0.0, %v4351
      %v4353 = vpop.f32.mrb[0].mxu0
      %v4354 = vpop.f32.mrb[0].mxu0
      %v4355 = vadd.f32 0.0, %v4354
      %v4356 = vpop.f32.mrb[0].mxu0
      %4357 = vmatprep.mubr.bf16.mxu0 %v3723
      %4358 = vmatmul.mubr.bf16.gmra.mrb[0].mxu0 %v3233
      %v4359 = vpop.f32.mrb[0].mxu0
      %v4360 = vadd.f32 0.0, %v4359
      %v4361 = vpop.f32.mrb[0].mxu0
      %v4362 = vpop.f32.mrb[0].mxu0
      %v4363 = vadd.f32 0.0, %v4362
      %v4364 = vpop.f32.mrb[0].mxu0
      %4365 = vmatprep.mubr.bf16.mxu0 %v3731
      %4366 = vmatmul.mubr.bf16.gmra.mrb[0].mxu0 %v3234
      %v4367 = vpop.f32.mrb[0].mxu0
      %v4368 = vadd.f32 0.0, %v4367
      %v4369 = vpop.f32.mrb[0].mxu0
      %v4370 = vpop.f32.mrb[0].mxu0
      %v4371 = vadd.f32 0.0, %v4370
      %v4372 = vpop.f32.mrb[0].mxu0
      %4373 = vmatprep.mubr.bf16.mxu0 %v3739
      %4374 = vmatmul.mubr.bf16.gmra.mrb[0].mxu0 %v3235
      %v4375 = vpop.f32.mrb[0].mxu0
      %v4376 = vadd.f32 0.0, %v4375
      %v4377 = vpop.f32.mrb[0].mxu0
      %v4378 = vpop.f32.mrb[0].mxu0
      %v4379 = vadd.f32 0.0, %v4378
      %v4380 = vpop.f32.mrb[0].mxu0
      %4381 = vdwg.mxu0
      %4382 = vmatprep.subr.bf16.mxu0 0
      %4383 = vmatpush1.bf16.msra.mxu0 %v4061
      %4384 = vmatprep.subr.bf16.mxu0 0
      %4385 = vmatpush1.bf16.msra.mxu0 %v4062
      %4386 = vmatprep.subr.bf16.mxu0 0
      %4387 = vmatpush1.bf16.msra.mxu0 %v4063
      %4388 = vmatprep.subr.bf16.mxu0 0
      %4389 = vmatpush1.bf16.msra.mxu0 %v4064
      %4390 = vmatprep.subr.bf16.mxu0 0
      %4391 = vmatpush1.bf16.msra.mxu0 %v4065
      %4392 = vmatprep.subr.bf16.mxu0 0
      %4393 = vmatpush1.bf16.msra.mxu0 %v4066
      %4394 = vmatprep.subr.bf16.mxu0 0
      %4395 = vmatpush1.bf16.msra.mxu0 %v4067
      %4396 = vmatprep.subr.bf16.mxu0 0
      %4397 = vmatpush1.bf16.msra.mxu0 %v4068
      %4398 = vmatprep.subr.bf16.mxu0 0
      %4399 = vmatpush1.bf16.msra.mxu0 0
      %4400 = vmatprep.subr.bf16.mxu0 0
      %4401 = vmatpush1.bf16.msra.mxu0 0
      %4402 = vmatprep.subr.bf16.mxu0 0
      %4403 = vmatpush1.bf16.msra.mxu0 0
      %4404 = vmatprep.subr.bf16.mxu0 0
      %4405 = vmatpush1.bf16.msra.mxu0 0
      %4406 = vmatprep.subr.bf16.mxu0 0
      %4407 = vmatpush1.bf16.msra.mxu0 0
      %4408 = vmatprep.subr.bf16.mxu0 0
      %4409 = vmatpush1.bf16.msra.mxu0 0
      %4410 = vmatprep.subr.bf16.mxu0 0
      %4411 = vmatpush1.bf16.msra.mxu0 0
      %4412 = vmatprep.subr.bf16.mxu0 0
      %4413 = vmatpush1.bf16.msra.mxu0 0
      %4414 = vmatprep.mubr.bf16.mxu0 0
      %4415 = vmatmul.mubr.bf16.gmra.mrb[0].mxu0 %v3799
      %v4416 = vpop.f32.mrb[0].mxu0
      %v4417 = vadd.f32 %v4128, %v4416
      %v4418 = vpop.f32.mrb[0].mxu0
      %v4419 = vpop.f32.mrb[0].mxu0
      %v4420 = vadd.f32 %v4131, %v4419
      %v4421 = vpop.f32.mrb[0].mxu0
      %4422 = vmatprep.mubr.bf16.mxu0 0
      %4423 = vmatmul.mubr.bf16.gmra.mrb[0].mxu0 %v3801
      %v4424 = vpop.f32.mrb[0].mxu0
      %v4425 = vadd.f32 %v4136, %v4424
      %v4426 = vpop.f32.mrb[0].mxu0
      %v4427 = vpop.f32.mrb[0].mxu0
      %v4428 = vadd.f32 %v4139, %v4427
      %v4429 = vpop.f32.mrb[0].mxu0
      %4430 = vmatprep.mubr.bf16.mxu0 0
      %4431 = vmatmul.mubr.bf16.gmra.mrb[0].mxu0 %v3803
      %v4432 = vpop.f32.mrb[0].mxu0
      %v4433 = vadd.f32 %v4144, %v4432
      %v4434 = vpop.f32.mrb[0].mxu0
      %v4435 = vpop.f32.mrb[0].mxu0
      %v4436 = vadd.f32 %v4147, %v4435
      %v4437 = vpop.f32.mrb[0].mxu0
      %4438 = vmatprep.mubr.bf16.mxu0 0
      %4439 = vmatmul.mubr.bf16.gmra.mrb[0].mxu0 %v3805
      %v4440 = vpop.f32.mrb[0].mxu0
      %v4441 = vadd.f32 %v4152, %v4440
      %v4442 = vpop.f32.mrb[0].mxu0
      %v4443 = vpop.f32.mrb[0].mxu0
      %v4444 = vadd.f32 %v4155, %v4443
      %v4445 = vpop.f32.mrb[0].mxu0
      %4446 = vmatprep.mubr.bf16.mxu0 0
      %4447 = vmatmul.mubr.bf16.gmra.mrb[0].mxu0 %v3808
      %v4448 = vpop.f32.mrb[0].mxu0
      %v4449 = vadd.f32 %v4160, %v4448
      %v4450 = vpop.f32.mrb[0].mxu0
      %v4451 = vpop.f32.mrb[0].mxu0
      %v4452 = vadd.f32 %v4163, %v4451
      %v4453 = vpop.f32.mrb[0].mxu0
      %4454 = vmatprep.mubr.bf16.mxu0 0
      %4455 = vmatmul.mubr.bf16.gmra.mrb[0].mxu0 %v3810
      %v4456 = vpop.f32.mrb[0].mxu0
      %v4457 = vadd.f32 %v4168, %v4456
      %v4458 = vpop.f32.mrb[0].mxu0
      %v4459 = vpop.f32.mrb[0].mxu0
      %v4460 = vadd.f32 %v4171, %v4459
      %v4461 = vpop.f32.mrb[0].mxu0
      %4462 = vmatprep.mubr.bf16.mxu0 0
      %4463 = vmatmul.mubr.bf16.gmra.mrb[0].mxu0 %v3812
      %v4464 = vpop.f32.mrb[0].mxu0
      %v4465 = vadd.f32 %v4176, %v4464
      %v4466 = vpop.f32.mrb[0].mxu0
      %v4467 = vpop.f32.mrb[0].mxu0
      %v4468 = vadd.f32 %v4179, %v4467
      %v4469 = vpop.f32.mrb[0].mxu0
      %4470 = vmatprep.mubr.bf16.mxu0 0
      %4471 = vmatmul.mubr.bf16.gmra.mrb[0].mxu0 %v3814
      %v4472 = vpop.f32.mrb[0].mxu0
      %v4473 = vadd.f32 %v4184, %v4472
      %v4474 = vpop.f32.mrb[0].mxu0
      %v4475 = vpop.f32.mrb[0].mxu0
      %v4476 = vadd.f32 %v4187, %v4475
      %v4477 = vpop.f32.mrb[0].mxu0
      %4478 = vmatprep.mubr.bf16.mxu0 0
      %4479 = vmatmul.mubr.bf16.gmra.mrb[0].mxu0 %v3817
      %v4480 = vpop.f32.mrb[0].mxu0
      %v4481 = vadd.f32 %v4192, %v4480
      %v4482 = vpop.f32.mrb[0].mxu0
      %v4483 = vpop.f32.mrb[0].mxu0
      %v4484 = vadd.f32 %v4195, %v4483
      %v4485 = vpop.f32.mrb[0].mxu0
      %4486 = vmatprep.mubr.bf16.mxu0 0
      %4487 = vmatmul.mubr.bf16.gmra.mrb[0].mxu0 %v3819
      %v4488 = vpop.f32.mrb[0].mxu0
      %v4489 = vadd.f32 %v4200, %v4488
      %v4490 = vpop.f32.mrb[0].mxu0
      %v4491 = vpop.f32.mrb[0].mxu0
      %v4492 = vadd.f32 %v4203, %v4491
      %v4493 = vpop.f32.mrb[0].mxu0
      %4494 = vmatprep.mubr.bf16.mxu0 0
      %4495 = vmatmul.mubr.bf16.gmra.mrb[0].mxu0 %v3821
      %v4496 = vpop.f32.mrb[0].mxu0
      %v4497 = vadd.f32 %v4208, %v4496
      %v4498 = vpop.f32.mrb[0].mxu0
      %v4499 = vpop.f32.mrb[0].mxu0
      %v4500 = vadd.f32 %v4211, %v4499
      %v4501 = vpop.f32.mrb[0].mxu0
      %4502 = vmatprep.mubr.bf16.mxu0 0
      %4503 = vmatmul.mubr.bf16.gmra.mrb[0].mxu0 %v3823
      %v4504 = vpop.f32.mrb[0].mxu0
      %v4505 = vadd.f32 %v4216, %v4504
      %v4506 = vpop.f32.mrb[0].mxu0
      %v4507 = vpop.f32.mrb[0].mxu0
      %v4508 = vadd.f32 %v4219, %v4507
      %v4509 = vpop.f32.mrb[0].mxu0
      %4510 = vmatprep.mubr.bf16.mxu0 0
      %4511 = vmatmul.mubr.bf16.gmra.mrb[0].mxu0 %v3826
      %v4512 = vpop.f32.mrb[0].mxu0
      %v4513 = vadd.f32 %v4224, %v4512
      %v4514 = vpop.f32.mrb[0].mxu0
      %v4515 = vpop.f32.mrb[0].mxu0
      %v4516 = vadd.f32 %v4227, %v4515
      %v4517 = vpop.f32.mrb[0].mxu0
      %4518 = vmatprep.mubr.bf16.mxu0 0
      %4519 = vmatmul.mubr.bf16.gmra.mrb[0].mxu0 %v3828
      %v4520 = vpop.f32.mrb[0].mxu0
      %v4521 = vadd.f32 %v4232, %v4520
      %v4522 = vpop.f32.mrb[0].mxu0
      %v4523 = vpop.f32.mrb[0].mxu0
      %v4524 = vadd.f32 %v4235, %v4523
      %v4525 = vpop.f32.mrb[0].mxu0
      %4526 = vmatprep.mubr.bf16.mxu0 0
      %4527 = vmatmul.mubr.bf16.gmra.mrb[0].mxu0 %v3830
      %v4528 = vpop.f32.mrb[0].mxu0
      %v4529 = vadd.f32 %v4240, %v4528
      %v4530 = vpop.f32.mrb[0].mxu0
      %v4531 = vpop.f32.mrb[0].mxu0
      %v4532 = vadd.f32 %v4243, %v4531
      %v4533 = vpop.f32.mrb[0].mxu0
      %4534 = vmatprep.mubr.bf16.mxu0 0
      %4535 = vmatmul.mubr.bf16.gmra.mrb[0].mxu0 %v3832
      %v4536 = vpop.f32.mrb[0].mxu0
      %v4537 = vadd.f32 %v4248, %v4536
      %v4538 = vpop.f32.mrb[0].mxu0
      %v4539 = vpop.f32.mrb[0].mxu0
      %v4540 = vadd.f32 %v4251, %v4539
      %v4541 = vpop.f32.mrb[0].mxu0
      %4542 = vmatprep.mubr.bf16.mxu0 0
      %4543 = vmatmul.mubr.bf16.gmra.mrb[0].mxu0 %v3835
      %v4544 = vpop.f32.mrb[0].mxu0
      %v4545 = vadd.f32 %v4256, %v4544
      %v4546 = vpop.f32.mrb[0].mxu0
      %v4547 = vpop.f32.mrb[0].mxu0
      %v4548 = vadd.f32 %v4259, %v4547
      %v4549 = vpop.f32.mrb[0].mxu0
      %4550 = vmatprep.mubr.bf16.mxu0 0
      %4551 = vmatmul.mubr.bf16.gmra.mrb[0].mxu0 %v3837
      %v4552 = vpop.f32.mrb[0].mxu0
      %v4553 = vadd.f32 %v4264, %v4552
      %v4554 = vpop.f32.mrb[0].mxu0
      %v4555 = vpop.f32.mrb[0].mxu0
      %v4556 = vadd.f32 %v4267, %v4555
      %v4557 = vpop.f32.mrb[0].mxu0
      %4558 = vmatprep.mubr.bf16.mxu0 0
      %4559 = vmatmul.mubr.bf16.gmra.mrb[0].mxu0 %v3839
      %v4560 = vpop.f32.mrb[0].mxu0
      %v4561 = vadd.f32 %v4272, %v4560
      %v4562 = vpop.f32.mrb[0].mxu0
      %v4563 = vpop.f32.mrb[0].mxu0
      %v4564 = vadd.f32 %v4275, %v4563
      %v4565 = vpop.f32.mrb[0].mxu0
      %4566 = vmatprep.mubr.bf16.mxu0 0
      %4567 = vmatmul.mubr.bf16.gmra.mrb[0].mxu0 %v3841
      %v4568 = vpop.f32.mrb[0].mxu0
      %v4569 = vadd.f32 %v4280, %v4568
      %v4570 = vpop.f32.mrb[0].mxu0
      %v4571 = vpop.f32.mrb[0].mxu0
      %v4572 = vadd.f32 %v4283, %v4571
      %v4573 = vpop.f32.mrb[0].mxu0
      %4574 = vmatprep.mubr.bf16.mxu0 0
      %4575 = vmatmul.mubr.bf16.gmra.mrb[0].mxu0 %v3844
      %v4576 = vpop.f32.mrb[0].mxu0
      %v4577 = vadd.f32 %v4288, %v4576
      %v4578 = vpop.f32.mrb[0].mxu0
      %v4579 = vpop.f32.mrb[0].mxu0
      %v4580 = vadd.f32 %v4291, %v4579
      %v4581 = vpop.f32.mrb[0].mxu0
      %4582 = vmatprep.mubr.bf16.mxu0 0
      %4583 = vmatmul.mubr.bf16.gmra.mrb[0].mxu0 %v3846
      %v4584 = vpop.f32.mrb[0].mxu0
      %v4585 = vadd.f32 %v4296, %v4584
      %v4586 = vpop.f32.mrb[0].mxu0
      %v4587 = vpop.f32.mrb[0].mxu0
      %v4588 = vadd.f32 %v4299, %v4587
      %v4589 = vpop.f32.mrb[0].mxu0
      %4590 = vmatprep.mubr.bf16.mxu0 0
      %4591 = vmatmul.mubr.bf16.gmra.mrb[0].mxu0 %v3848
      %v4592 = vpop.f32.mrb[0].mxu0
      %v4593 = vadd.f32 %v4304, %v4592
      %v4594 = vpop.f32.mrb[0].mxu0
      %v4595 = vpop.f32.mrb[0].mxu0
      %v4596 = vadd.f32 %v4307, %v4595
      %v4597 = vpop.f32.mrb[0].mxu0
      %4598 = vmatprep.mubr.bf16.mxu0 0
      %4599 = vmatmul.mubr.bf16.gmra.mrb[0].mxu0 %v3850
      %v4600 = vpop.f32.mrb[0].mxu0
      %v4601 = vadd.f32 %v4312, %v4600
      %v4602 = vpop.f32.mrb[0].mxu0
      %v4603 = vpop.f32.mrb[0].mxu0
      %v4604 = vadd.f32 %v4315, %v4603
      %v4605 = vpop.f32.mrb[0].mxu0
      %4606 = vmatprep.mubr.bf16.mxu0 0
      %4607 = vmatmul.mubr.bf16.gmra.mrb[0].mxu0 %v3853
      %v4608 = vpop.f32.mrb[0].mxu0
      %v4609 = vadd.f32 %v4320, %v4608
      %v4610 = vpop.f32.mrb[0].mxu0
      %v4611 = vpop.f32.mrb[0].mxu0
      %v4612 = vadd.f32 %v4323, %v4611
      %v4613 = vpop.f32.mrb[0].mxu0
      %4614 = vmatprep.mubr.bf16.mxu0 0
      %4615 = vmatmul.mubr.bf16.gmra.mrb[0].mxu0 %v3855
      %v4616 = vpop.f32.mrb[0].mxu0
      %v4617 = vadd.f32 %v4328, %v4616
      %v4618 = vpop.f32.mrb[0].mxu0
      %v4619 = vpop.f32.mrb[0].mxu0
      %v4620 = vadd.f32 %v4331, %v4619
      %v4621 = vpop.f32.mrb[0].mxu0
      %4622 = vmatprep.mubr.bf16.mxu0 0
      %4623 = vmatmul.mubr.bf16.gmra.mrb[0].mxu0 %v3857
      %v4624 = vpop.f32.mrb[0].mxu0
      %v4625 = vadd.f32 %v4336, %v4624
      %v4626 = vpop.f32.mrb[0].mxu0
      %v4627 = vpop.f32.mrb[0].mxu0
      %v4628 = vadd.f32 %v4339, %v4627
      %v4629 = vpop.f32.mrb[0].mxu0
      %4630 = vmatprep.mubr.bf16.mxu0 0
      %4631 = vmatmul.mubr.bf16.gmra.mrb[0].mxu0 %v3859
      %v4632 = vpop.f32.mrb[0].mxu0
      %v4633 = vadd.f32 %v4344, %v4632
      %v4634 = vpop.f32.mrb[0].mxu0
      %v4635 = vpop.f32.mrb[0].mxu0
      %v4636 = vadd.f32 %v4347, %v4635
      %v4637 = vpop.f32.mrb[0].mxu0
      %4638 = vmatprep.mubr.bf16.mxu0 0
      %4639 = vmatmul.mubr.bf16.gmra.mrb[0].mxu0 %v3862
      %v4640 = vpop.f32.mrb[0].mxu0
      %v4641 = vadd.f32 %v4352, %v4640
      %v4642 = vpop.f32.mrb[0].mxu0
      %v4643 = vpop.f32.mrb[0].mxu0
      %v4644 = vadd.f32 %v4355, %v4643
      %v4645 = vpop.f32.mrb[0].mxu0
      %4646 = vmatprep.mubr.bf16.mxu0 0
      %4647 = vmatmul.mubr.bf16.gmra.mrb[0].mxu0 %v3864
      %v4648 = vpop.f32.mrb[0].mxu0
      %v4649 = vadd.f32 %v4360, %v4648
      %v4650 = vpop.f32.mrb[0].mxu0
      %v4651 = vpop.f32.mrb[0].mxu0
      %v4652 = vadd.f32 %v4363, %v4651
      %v4653 = vpop.f32.mrb[0].mxu0
      %4654 = vmatprep.mubr.bf16.mxu0 0
      %4655 = vmatmul.mubr.bf16.gmra.mrb[0].mxu0 %v3866
      %v4656 = vpop.f32.mrb[0].mxu0
      %v4657 = vadd.f32 %v4368, %v4656
      %v4658 = vpop.f32.mrb[0].mxu0
      %v4659 = vpop.f32.mrb[0].mxu0
      %v4660 = vadd.f32 %v4371, %v4659
      %v4661 = vpop.f32.mrb[0].mxu0
      %4662 = vmatprep.mubr.bf16.mxu0 0
      %4663 = vmatmul.mubr.bf16.gmra.mrb[0].mxu0 %v3868
      %v4664 = vpop.f32.mrb[0].mxu0
      %v4665 = vadd.f32 %v4376, %v4664
      %v4666 = vpop.f32.mrb[0].mxu0
      %v4667 = vpop.f32.mrb[0].mxu0
      %v4668 = vadd.f32 %v4379, %v4667
      %v4669 = vpop.f32.mrb[0].mxu0
      %4670 = vdwg.mxu0
      %4735 = vrot.lane.b32.xlu0 %v4417, 64
      %v4736 = vpop.permute.xlu0 %4735
      %4737 = vrot.lane.b32.xlu0 %v4420, 64
      %v4738 = vpop.permute.xlu0 %4737
      %4739 = vrot.lane.b32.xlu0 %v4425, 64
      %v4740 = vpop.permute.xlu0 %4739
      %4741 = vrot.lane.b32.xlu0 %v4428, 64
      %v4742 = vpop.permute.xlu0 %4741
      %4743 = vrot.lane.b32.xlu0 %v4433, 64
      %v4744 = vpop.permute.xlu0 %4743
      %4745 = vrot.lane.b32.xlu0 %v4436, 64
      %v4746 = vpop.permute.xlu0 %4745
      %4747 = vrot.lane.b32.xlu0 %v4441, 64
      %v4748 = vpop.permute.xlu0 %4747
      %4749 = vrot.lane.b32.xlu0 %v4444, 64
      %v4750 = vpop.permute.xlu0 %4749
      %4751 = vrot.lane.b32.xlu0 %v4449, 64
      %v4752 = vpop.permute.xlu0 %4751
      %4753 = vrot.lane.b32.xlu0 %v4452, 64
      %v4754 = vpop.permute.xlu0 %4753
      %4755 = vrot.lane.b32.xlu0 %v4457, 64
      %v4756 = vpop.permute.xlu0 %4755
      %4757 = vrot.lane.b32.xlu0 %v4460, 64
      %v4758 = vpop.permute.xlu0 %4757
      %4759 = vrot.lane.b32.xlu0 %v4465, 64
      %v4760 = vpop.permute.xlu0 %4759
      %4761 = vrot.lane.b32.xlu0 %v4468, 64
      %v4762 = vpop.permute.xlu0 %4761
      %4763 = vrot.lane.b32.xlu0 %v4473, 64
      %v4764 = vpop.permute.xlu0 %4763
      %4765 = vrot.lane.b32.xlu0 %v4476, 64
      %v4766 = vpop.permute.xlu0 %4765
      %4767 = vrot.lane.b32.xlu0 %v4481, 64
      %v4768 = vpop.permute.xlu0 %4767
      %4769 = vrot.lane.b32.xlu0 %v4484, 64
      %v4770 = vpop.permute.xlu0 %4769
      %4771 = vrot.lane.b32.xlu0 %v4489, 64
      %v4772 = vpop.permute.xlu0 %4771
      %4773 = vrot.lane.b32.xlu0 %v4492, 64
      %v4774 = vpop.permute.xlu0 %4773
      %4775 = vrot.lane.b32.xlu0 %v4497, 64
      %v4776 = vpop.permute.xlu0 %4775
      %4777 = vrot.lane.b32.xlu0 %v4500, 64
      %v4778 = vpop.permute.xlu0 %4777
      %4779 = vrot.lane.b32.xlu0 %v4505, 64
      %v4780 = vpop.permute.xlu0 %4779
      %4781 = vrot.lane.b32.xlu0 %v4508, 64
      %v4782 = vpop.permute.xlu0 %4781
      %4783 = vrot.lane.b32.xlu0 %v4513, 64
      %v4784 = vpop.permute.xlu0 %4783
      %4785 = vrot.lane.b32.xlu0 %v4516, 64
      %v4786 = vpop.permute.xlu0 %4785
      %4787 = vrot.lane.b32.xlu0 %v4521, 64
      %v4788 = vpop.permute.xlu0 %4787
      %4789 = vrot.lane.b32.xlu0 %v4524, 64
      %v4790 = vpop.permute.xlu0 %4789
      %4791 = vrot.lane.b32.xlu0 %v4529, 64
      %v4792 = vpop.permute.xlu0 %4791
      %4793 = vrot.lane.b32.xlu0 %v4532, 64
      %v4794 = vpop.permute.xlu0 %4793
      %4795 = vrot.lane.b32.xlu0 %v4537, 64
      %v4796 = vpop.permute.xlu0 %4795
      %4797 = vrot.lane.b32.xlu0 %v4540, 64
      %v4798 = vpop.permute.xlu0 %4797
      %4799 = vrot.lane.b32.xlu0 %v4545, 64
      %v4800 = vpop.permute.xlu0 %4799
      %4801 = vrot.lane.b32.xlu0 %v4548, 64
      %v4802 = vpop.permute.xlu0 %4801
      %4803 = vrot.lane.b32.xlu0 %v4553, 64
      %v4804 = vpop.permute.xlu0 %4803
      %4805 = vrot.lane.b32.xlu0 %v4556, 64
      %v4806 = vpop.permute.xlu0 %4805
      %4807 = vrot.lane.b32.xlu0 %v4561, 64
      %v4808 = vpop.permute.xlu0 %4807
      %4809 = vrot.lane.b32.xlu0 %v4564, 64
      %v4810 = vpop.permute.xlu0 %4809
      %4811 = vrot.lane.b32.xlu0 %v4569, 64
      %v4812 = vpop.permute.xlu0 %4811
      %4813 = vrot.lane.b32.xlu0 %v4572, 64
      %v4814 = vpop.permute.xlu0 %4813
      %4815 = vrot.lane.b32.xlu0 %v4577, 64
      %v4816 = vpop.permute.xlu0 %4815
      %4817 = vrot.lane.b32.xlu0 %v4580, 64
      %v4818 = vpop.permute.xlu0 %4817
      %4819 = vrot.lane.b32.xlu0 %v4585, 64
      %v4820 = vpop.permute.xlu0 %4819
      %4821 = vrot.lane.b32.xlu0 %v4588, 64
      %v4822 = vpop.permute.xlu0 %4821
      %4823 = vrot.lane.b32.xlu0 %v4593, 64
      %v4824 = vpop.permute.xlu0 %4823
      %4825 = vrot.lane.b32.xlu0 %v4596, 64
      %v4826 = vpop.permute.xlu0 %4825
      %4827 = vrot.lane.b32.xlu0 %v4601, 64
      %v4828 = vpop.permute.xlu0 %4827
      %4829 = vrot.lane.b32.xlu0 %v4604, 64
      %v4830 = vpop.permute.xlu0 %4829
      %4831 = vrot.lane.b32.xlu0 %v4609, 64
      %v4832 = vpop.permute.xlu0 %4831
      %4833 = vrot.lane.b32.xlu0 %v4612, 64
      %v4834 = vpop.permute.xlu0 %4833
      %4835 = vrot.lane.b32.xlu0 %v4617, 64
      %v4836 = vpop.permute.xlu0 %4835
      %4837 = vrot.lane.b32.xlu0 %v4620, 64
      %v4838 = vpop.permute.xlu0 %4837
      %4839 = vrot.lane.b32.xlu0 %v4625, 64
      %v4840 = vpop.permute.xlu0 %4839
      %4841 = vrot.lane.b32.xlu0 %v4628, 64
      %v4842 = vpop.permute.xlu0 %4841
      %4843 = vrot.lane.b32.xlu0 %v4633, 64
      %v4844 = vpop.permute.xlu0 %4843
      %4845 = vrot.lane.b32.xlu0 %v4636, 64
      %v4846 = vpop.permute.xlu0 %4845
      %4847 = vrot.lane.b32.xlu0 %v4641, 64
      %v4848 = vpop.permute.xlu0 %4847
      %4849 = vrot.lane.b32.xlu0 %v4644, 64
      %v4850 = vpop.permute.xlu0 %4849
      %4851 = vrot.lane.b32.xlu0 %v4649, 64
      %v4852 = vpop.permute.xlu0 %4851
      %4853 = vrot.lane.b32.xlu0 %v4652, 64
      %v4854 = vpop.permute.xlu0 %4853
      %4855 = vrot.lane.b32.xlu0 %v4657, 64
      %v4856 = vpop.permute.xlu0 %4855
      %4857 = vrot.lane.b32.xlu0 %v4660, 64
      %v4858 = vpop.permute.xlu0 %4857
      %4859 = vrot.lane.b32.xlu0 %v4665, 64
      %v4860 = vpop.permute.xlu0 %4859
      %4861 = vrot.lane.b32.xlu0 %v4668, 64
      %v4862 = vpop.permute.xlu0 %4861
      %v4927 = vmax.f32 %v4417, %v4736
      %v4928 = vmax.f32 %v4420, %v4738
      %v4929 = vmax.f32 %v4425, %v4740
      %v4930 = vmax.f32 %v4428, %v4742
      %v4931 = vmax.f32 %v4433, %v4744
      %v4932 = vmax.f32 %v4436, %v4746
      %v4933 = vmax.f32 %v4441, %v4748
      %v4934 = vmax.f32 %v4444, %v4750
      %v4935 = vmax.f32 %v4449, %v4752
      %v4936 = vmax.f32 %v4452, %v4754
      %v4937 = vmax.f32 %v4457, %v4756
      %v4938 = vmax.f32 %v4460, %v4758
      %v4939 = vmax.f32 %v4465, %v4760
      %v4940 = vmax.f32 %v4468, %v4762
      %v4941 = vmax.f32 %v4473, %v4764
      %v4942 = vmax.f32 %v4476, %v4766
      %v4943 = vmax.f32 %v4481, %v4768
      %v4944 = vmax.f32 %v4484, %v4770
      %v4945 = vmax.f32 %v4489, %v4772
      %v4946 = vmax.f32 %v4492, %v4774
      %v4947 = vmax.f32 %v4497, %v4776
      %v4948 = vmax.f32 %v4500, %v4778
      %v4949 = vmax.f32 %v4505, %v4780
      %v4950 = vmax.f32 %v4508, %v4782
      %v4951 = vmax.f32 %v4513, %v4784
      %v4952 = vmax.f32 %v4516, %v4786
      %v4953 = vmax.f32 %v4521, %v4788
      %v4954 = vmax.f32 %v4524, %v4790
      %v4955 = vmax.f32 %v4529, %v4792
      %v4956 = vmax.f32 %v4532, %v4794
      %v4957 = vmax.f32 %v4537, %v4796
      %v4958 = vmax.f32 %v4540, %v4798
      %v4959 = vmax.f32 %v4545, %v4800
      %v4960 = vmax.f32 %v4548, %v4802
      %v4961 = vmax.f32 %v4553, %v4804
      %v4962 = vmax.f32 %v4556, %v4806
      %v4963 = vmax.f32 %v4561, %v4808
      %v4964 = vmax.f32 %v4564, %v4810
      %v4965 = vmax.f32 %v4569, %v4812
      %v4966 = vmax.f32 %v4572, %v4814
      %v4967 = vmax.f32 %v4577, %v4816
      %v4968 = vmax.f32 %v4580, %v4818
      %v4969 = vmax.f32 %v4585, %v4820
      %v4970 = vmax.f32 %v4588, %v4822
      %v4971 = vmax.f32 %v4593, %v4824
      %v4972 = vmax.f32 %v4596, %v4826
      %v4973 = vmax.f32 %v4601, %v4828
      %v4974 = vmax.f32 %v4604, %v4830
      %v4975 = vmax.f32 %v4609, %v4832
      %v4976 = vmax.f32 %v4612, %v4834
      %v4977 = vmax.f32 %v4617, %v4836
      %v4978 = vmax.f32 %v4620, %v4838
      %v4979 = vmax.f32 %v4625, %v4840
      %v4980 = vmax.f32 %v4628, %v4842
      %v4981 = vmax.f32 %v4633, %v4844
      %v4982 = vmax.f32 %v4636, %v4846
      %v4983 = vmax.f32 %v4641, %v4848
      %v4984 = vmax.f32 %v4644, %v4850
      %v4985 = vmax.f32 %v4649, %v4852
      %v4986 = vmax.f32 %v4652, %v4854
      %v4987 = vmax.f32 %v4657, %v4856
      %v4988 = vmax.f32 %v4660, %v4858
      %v4989 = vmax.f32 %v4665, %v4860
      %v4990 = vmax.f32 %v4668, %v4862
      %5055 = vrot.lane.b32.xlu0 %v4927, 96
      %v5056 = vpop.permute.xlu0 %5055
      %5057 = vrot.lane.b32.xlu0 %v4928, 96
      %v5058 = vpop.permute.xlu0 %5057
      %5059 = vrot.lane.b32.xlu0 %v4929, 96
      %v5060 = vpop.permute.xlu0 %5059
      %5061 = vrot.lane.b32.xlu0 %v4930, 96
      %v5062 = vpop.permute.xlu0 %5061
      %5063 = vrot.lane.b32.xlu0 %v4931, 96
      %v5064 = vpop.permute.xlu0 %5063
      %5065 = vrot.lane.b32.xlu0 %v4932, 96
      %v5066 = vpop.permute.xlu0 %5065
      %5067 = vrot.lane.b32.xlu0 %v4933, 96
      %v5068 = vpop.permute.xlu0 %5067
      %5069 = vrot.lane.b32.xlu0 %v4934, 96
      %v5070 = vpop.permute.xlu0 %5069
      %5071 = vrot.lane.b32.xlu0 %v4935, 96
      %v5072 = vpop.permute.xlu0 %5071
      %5073 = vrot.lane.b32.xlu0 %v4936, 96
      %v5074 = vpop.permute.xlu0 %5073
      %5075 = vrot.lane.b32.xlu0 %v4937, 96
      %v5076 = vpop.permute.xlu0 %5075
      %5077 = vrot.lane.b32.xlu0 %v4938, 96
      %v5078 = vpop.permute.xlu0 %5077
      %5079 = vrot.lane.b32.xlu0 %v4939, 96
      %v5080 = vpop.permute.xlu0 %5079
      %5081 = vrot.lane.b32.xlu0 %v4940, 96
      %v5082 = vpop.permute.xlu0 %5081
      %5083 = vrot.lane.b32.xlu0 %v4941, 96
      %v5084 = vpop.permute.xlu0 %5083
      %5085 = vrot.lane.b32.xlu0 %v4942, 96
      %v5086 = vpop.permute.xlu0 %5085
      %5087 = vrot.lane.b32.xlu0 %v4943, 96
      %v5088 = vpop.permute.xlu0 %5087
      %5089 = vrot.lane.b32.xlu0 %v4944, 96
      %v5090 = vpop.permute.xlu0 %5089
      %5091 = vrot.lane.b32.xlu0 %v4945, 96
      %v5092 = vpop.permute.xlu0 %5091
      %5093 = vrot.lane.b32.xlu0 %v4946, 96
      %v5094 = vpop.permute.xlu0 %5093
      %5095 = vrot.lane.b32.xlu0 %v4947, 96
      %v5096 = vpop.permute.xlu0 %5095
      %5097 = vrot.lane.b32.xlu0 %v4948, 96
      %v5098 = vpop.permute.xlu0 %5097
      %5099 = vrot.lane.b32.xlu0 %v4949, 96
      %v5100 = vpop.permute.xlu0 %5099
      %5101 = vrot.lane.b32.xlu0 %v4950, 96
      %v5102 = vpop.permute.xlu0 %5101
      %5103 = vrot.lane.b32.xlu0 %v4951, 96
      %v5104 = vpop.permute.xlu0 %5103
      %5105 = vrot.lane.b32.xlu0 %v4952, 96
      %v5106 = vpop.permute.xlu0 %5105
      %5107 = vrot.lane.b32.xlu0 %v4953, 96
      %v5108 = vpop.permute.xlu0 %5107
      %5109 = vrot.lane.b32.xlu0 %v4954, 96
      %v5110 = vpop.permute.xlu0 %5109
      %5111 = vrot.lane.b32.xlu0 %v4955, 96
      %v5112 = vpop.permute.xlu0 %5111
      %5113 = vrot.lane.b32.xlu0 %v4956, 96
      %v5114 = vpop.permute.xlu0 %5113
      %5115 = vrot.lane.b32.xlu0 %v4957, 96
      %v5116 = vpop.permute.xlu0 %5115
      %5117 = vrot.lane.b32.xlu0 %v4958, 96
      %v5118 = vpop.permute.xlu0 %5117
      %5119 = vrot.lane.b32.xlu0 %v4959, 96
      %v5120 = vpop.permute.xlu0 %5119
      %5121 = vrot.lane.b32.xlu0 %v4960, 96
      %v5122 = vpop.permute.xlu0 %5121
      %5123 = vrot.lane.b32.xlu0 %v4961, 96
      %v5124 = vpop.permute.xlu0 %5123
      %5125 = vrot.lane.b32.xlu0 %v4962, 96
      %v5126 = vpop.permute.xlu0 %5125
      %5127 = vrot.lane.b32.xlu0 %v4963, 96
      %v5128 = vpop.permute.xlu0 %5127
      %5129 = vrot.lane.b32.xlu0 %v4964, 96
      %v5130 = vpop.permute.xlu0 %5129
      %5131 = vrot.lane.b32.xlu0 %v4965, 96
      %v5132 = vpop.permute.xlu0 %5131
      %5133 = vrot.lane.b32.xlu0 %v4966, 96
      %v5134 = vpop.permute.xlu0 %5133
      %5135 = vrot.lane.b32.xlu0 %v4967, 96
      %v5136 = vpop.permute.xlu0 %5135
      %5137 = vrot.lane.b32.xlu0 %v4968, 96
      %v5138 = vpop.permute.xlu0 %5137
      %5139 = vrot.lane.b32.xlu0 %v4969, 96
      %v5140 = vpop.permute.xlu0 %5139
      %5141 = vrot.lane.b32.xlu0 %v4970, 96
      %v5142 = vpop.permute.xlu0 %5141
      %5143 = vrot.lane.b32.xlu0 %v4971, 96
      %v5144 = vpop.permute.xlu0 %5143
      %5145 = vrot.lane.b32.xlu0 %v4972, 96
      %v5146 = vpop.permute.xlu0 %5145
      %5147 = vrot.lane.b32.xlu0 %v4973, 96
      %v5148 = vpop.permute.xlu0 %5147
      %5149 = vrot.lane.b32.xlu0 %v4974, 96
      %v5150 = vpop.permute.xlu0 %5149
      %5151 = vrot.lane.b32.xlu0 %v4975, 96
      %v5152 = vpop.permute.xlu0 %5151
      %5153 = vrot.lane.b32.xlu0 %v4976, 96
      %v5154 = vpop.permute.xlu0 %5153
      %5155 = vrot.lane.b32.xlu0 %v4977, 96
      %v5156 = vpop.permute.xlu0 %5155
      %5157 = vrot.lane.b32.xlu0 %v4978, 96
      %v5158 = vpop.permute.xlu0 %5157
      %5159 = vrot.lane.b32.xlu0 %v4979, 96
      %v5160 = vpop.permute.xlu0 %5159
      %5161 = vrot.lane.b32.xlu0 %v4980, 96
      %v5162 = vpop.permute.xlu0 %5161
      %5163 = vrot.lane.b32.xlu0 %v4981, 96
      %v5164 = vpop.permute.xlu0 %5163
      %5165 = vrot.lane.b32.xlu0 %v4982, 96
      %v5166 = vpop.permute.xlu0 %5165
      %5167 = vrot.lane.b32.xlu0 %v4983, 96
      %v5168 = vpop.permute.xlu0 %5167
      %5169 = vrot.lane.b32.xlu0 %v4984, 96
      %v5170 = vpop.permute.xlu0 %5169
      %5171 = vrot.lane.b32.xlu0 %v4985, 96
      %v5172 = vpop.permute.xlu0 %5171
      %5173 = vrot.lane.b32.xlu0 %v4986, 96
      %v5174 = vpop.permute.xlu0 %5173
      %5175 = vrot.lane.b32.xlu0 %v4987, 96
      %v5176 = vpop.permute.xlu0 %5175
      %5177 = vrot.lane.b32.xlu0 %v4988, 96
      %v5178 = vpop.permute.xlu0 %5177
      %5179 = vrot.lane.b32.xlu0 %v4989, 96
      %v5180 = vpop.permute.xlu0 %5179
      %5181 = vrot.lane.b32.xlu0 %v4990, 96
      %v5182 = vpop.permute.xlu0 %5181
      %v5247 = vmax.f32 %v4927, %v5056
      %v5248 = vmax.f32 %v4928, %v5058
      %v5249 = vmax.f32 %v4929, %v5060
      %v5250 = vmax.f32 %v4930, %v5062
      %v5251 = vmax.f32 %v4931, %v5064
      %v5252 = vmax.f32 %v4932, %v5066
      %v5253 = vmax.f32 %v4933, %v5068
      %v5254 = vmax.f32 %v4934, %v5070
      %v5255 = vmax.f32 %v4935, %v5072
      %v5256 = vmax.f32 %v4936, %v5074
      %v5257 = vmax.f32 %v4937, %v5076
      %v5258 = vmax.f32 %v4938, %v5078
      %v5259 = vmax.f32 %v4939, %v5080
      %v5260 = vmax.f32 %v4940, %v5082
      %v5261 = vmax.f32 %v4941, %v5084
      %v5262 = vmax.f32 %v4942, %v5086
      %v5263 = vmax.f32 %v4943, %v5088
      %v5264 = vmax.f32 %v4944, %v5090
      %v5265 = vmax.f32 %v4945, %v5092
      %v5266 = vmax.f32 %v4946, %v5094
      %v5267 = vmax.f32 %v4947, %v5096
      %v5268 = vmax.f32 %v4948, %v5098
      %v5269 = vmax.f32 %v4949, %v5100
      %v5270 = vmax.f32 %v4950, %v5102
      %v5271 = vmax.f32 %v4951, %v5104
      %v5272 = vmax.f32 %v4952, %v5106
      %v5273 = vmax.f32 %v4953, %v5108
      %v5274 = vmax.f32 %v4954, %v5110
      %v5275 = vmax.f32 %v4955, %v5112
      %v5276 = vmax.f32 %v4956, %v5114
      %v5277 = vmax.f32 %v4957, %v5116
      %v5278 = vmax.f32 %v4958, %v5118
      %v5279 = vmax.f32 %v4959, %v5120
      %v5280 = vmax.f32 %v4960, %v5122
      %v5281 = vmax.f32 %v4961, %v5124
      %v5282 = vmax.f32 %v4962, %v5126
      %v5283 = vmax.f32 %v4963, %v5128
      %v5284 = vmax.f32 %v4964, %v5130
      %v5285 = vmax.f32 %v4965, %v5132
      %v5286 = vmax.f32 %v4966, %v5134
      %v5287 = vmax.f32 %v4967, %v5136
      %v5288 = vmax.f32 %v4968, %v5138
      %v5289 = vmax.f32 %v4969, %v5140
      %v5290 = vmax.f32 %v4970, %v5142
      %v5291 = vmax.f32 %v4971, %v5144
      %v5292 = vmax.f32 %v4972, %v5146
      %v5293 = vmax.f32 %v4973, %v5148
      %v5294 = vmax.f32 %v4974, %v5150
      %v5295 = vmax.f32 %v4975, %v5152
      %v5296 = vmax.f32 %v4976, %v5154
      %v5297 = vmax.f32 %v4977, %v5156
      %v5298 = vmax.f32 %v4978, %v5158
      %v5299 = vmax.f32 %v4979, %v5160
      %v5300 = vmax.f32 %v4980, %v5162
      %v5301 = vmax.f32 %v4981, %v5164
      %v5302 = vmax.f32 %v4982, %v5166
      %v5303 = vmax.f32 %v4983, %v5168
      %v5304 = vmax.f32 %v4984, %v5170
      %v5305 = vmax.f32 %v4985, %v5172
      %v5306 = vmax.f32 %v4986, %v5174
      %v5307 = vmax.f32 %v4987, %v5176
      %v5308 = vmax.f32 %v4988, %v5178
      %v5309 = vmax.f32 %v4989, %v5180
      %v5310 = vmax.f32 %v4990, %v5182
      %v5311 = vld [vmem:[%s4] sm:$0x1]
      %v5313 = vlaneseq
      %v5314 = vshrl.u32 %v5313, 7
      %v5315 = vsub.s32 0, %v5314
      %v5316 = vrot.slane %v5311, %v5315
      %v5318 = vadd.f32 %v5247, %v5316
      %v5319 = vadd.f32 %v5248, %v5316
      %v5320 = vadd.f32 %v5249, %v5316
      %v5321 = vadd.f32 %v5250, %v5316
      %v5322 = vadd.f32 %v5251, %v5316
      %v5323 = vadd.f32 %v5252, %v5316
      %v5324 = vadd.f32 %v5253, %v5316
      %v5325 = vadd.f32 %v5254, %v5316
      %v5326 = vadd.f32 %v5255, %v5316
      %v5327 = vadd.f32 %v5256, %v5316
      %v5328 = vadd.f32 %v5257, %v5316
      %v5329 = vadd.f32 %v5258, %v5316
      %v5330 = vadd.f32 %v5259, %v5316
      %v5331 = vadd.f32 %v5260, %v5316
      %v5332 = vadd.f32 %v5261, %v5316
      %v5333 = vadd.f32 %v5262, %v5316
      %v5334 = vadd.f32 %v5263, %v5316
      %v5335 = vadd.f32 %v5264, %v5316
      %v5336 = vadd.f32 %v5265, %v5316
      %v5337 = vadd.f32 %v5266, %v5316
      %v5338 = vadd.f32 %v5267, %v5316
      %v5339 = vadd.f32 %v5268, %v5316
      %v5340 = vadd.f32 %v5269, %v5316
      %v5341 = vadd.f32 %v5270, %v5316
      %v5342 = vadd.f32 %v5271, %v5316
      %v5343 = vadd.f32 %v5272, %v5316
      %v5344 = vadd.f32 %v5273, %v5316
      %v5345 = vadd.f32 %v5274, %v5316
      %v5346 = vadd.f32 %v5275, %v5316
      %v5347 = vadd.f32 %v5276, %v5316
      %v5348 = vadd.f32 %v5277, %v5316
      %v5349 = vadd.f32 %v5278, %v5316
      %v5350 = vadd.f32 %v5279, %v5316
      %v5351 = vadd.f32 %v5280, %v5316
      %v5352 = vadd.f32 %v5281, %v5316
      %v5353 = vadd.f32 %v5282, %v5316
      %v5354 = vadd.f32 %v5283, %v5316
      %v5355 = vadd.f32 %v5284, %v5316
      %v5356 = vadd.f32 %v5285, %v5316
      %v5357 = vadd.f32 %v5286, %v5316
      %v5358 = vadd.f32 %v5287, %v5316
      %v5359 = vadd.f32 %v5288, %v5316
      %v5360 = vadd.f32 %v5289, %v5316
      %v5361 = vadd.f32 %v5290, %v5316
      %v5362 = vadd.f32 %v5291, %v5316
      %v5363 = vadd.f32 %v5292, %v5316
      %v5364 = vadd.f32 %v5293, %v5316
      %v5365 = vadd.f32 %v5294, %v5316
      %v5366 = vadd.f32 %v5295, %v5316
      %v5367 = vadd.f32 %v5296, %v5316
      %v5368 = vadd.f32 %v5297, %v5316
      %v5369 = vadd.f32 %v5298, %v5316
      %v5370 = vadd.f32 %v5299, %v5316
      %v5371 = vadd.f32 %v5300, %v5316
      %v5372 = vadd.f32 %v5301, %v5316
      %v5373 = vadd.f32 %v5302, %v5316
      %v5374 = vadd.f32 %v5303, %v5316
      %v5375 = vadd.f32 %v5304, %v5316
      %v5376 = vadd.f32 %v5305, %v5316
      %v5377 = vadd.f32 %v5306, %v5316
      %v5378 = vadd.f32 %v5307, %v5316
      %v5379 = vadd.f32 %v5308, %v5316
      %v5380 = vadd.f32 %v5309, %v5316
      %v5381 = vadd.f32 %v5310, %v5316
      %v5382 = vmax.f32 %v5318, 0.0
      %v5383 = vmax.f32 %v5319, 0.0
      %v5384 = vmax.f32 %v5320, 0.0
      %v5385 = vmax.f32 %v5321, 0.0
      %v5386 = vmax.f32 %v5322, 0.0
      %v5387 = vmax.f32 %v5323, 0.0
      %v5388 = vmax.f32 %v5324, 0.0
      %v5389 = vmax.f32 %v5325, 0.0
      %v5390 = vmax.f32 %v5326, 0.0
      %v5391 = vmax.f32 %v5327, 0.0
      %v5392 = vmax.f32 %v5328, 0.0
      %v5393 = vmax.f32 %v5329, 0.0
      %v5394 = vmax.f32 %v5330, 0.0
      %v5395 = vmax.f32 %v5331, 0.0
      %v5396 = vmax.f32 %v5332, 0.0
      %v5397 = vmax.f32 %v5333, 0.0
      %v5398 = vmax.f32 %v5334, 0.0
      %v5399 = vmax.f32 %v5335, 0.0
      %v5400 = vmax.f32 %v5336, 0.0
      %v5401 = vmax.f32 %v5337, 0.0
      %v5402 = vmax.f32 %v5338, 0.0
      %v5403 = vmax.f32 %v5339, 0.0
      %v5404 = vmax.f32 %v5340, 0.0
      %v5405 = vmax.f32 %v5341, 0.0
      %v5406 = vmax.f32 %v5342, 0.0
      %v5407 = vmax.f32 %v5343, 0.0
      %v5408 = vmax.f32 %v5344, 0.0
      %v5409 = vmax.f32 %v5345, 0.0
      %v5410 = vmax.f32 %v5346, 0.0
      %v5411 = vmax.f32 %v5347, 0.0
      %v5412 = vmax.f32 %v5348, 0.0
      %v5413 = vmax.f32 %v5349, 0.0
      %v5414 = vmax.f32 %v5350, 0.0
      %v5415 = vmax.f32 %v5351, 0.0
      %v5416 = vmax.f32 %v5352, 0.0
      %v5417 = vmax.f32 %v5353, 0.0
      %v5418 = vmax.f32 %v5354, 0.0
      %v5419 = vmax.f32 %v5355, 0.0
      %v5420 = vmax.f32 %v5356, 0.0
      %v5421 = vmax.f32 %v5357, 0.0
      %v5422 = vmax.f32 %v5358, 0.0
      %v5423 = vmax.f32 %v5359, 0.0
      %v5424 = vmax.f32 %v5360, 0.0
      %v5425 = vmax.f32 %v5361, 0.0
      %v5426 = vmax.f32 %v5362, 0.0
      %v5427 = vmax.f32 %v5363, 0.0
      %v5428 = vmax.f32 %v5364, 0.0
      %v5429 = vmax.f32 %v5365, 0.0
      %v5430 = vmax.f32 %v5366, 0.0
      %v5431 = vmax.f32 %v5367, 0.0
      %v5432 = vmax.f32 %v5368, 0.0
      %v5433 = vmax.f32 %v5369, 0.0
      %v5434 = vmax.f32 %v5370, 0.0
      %v5435 = vmax.f32 %v5371, 0.0
      %v5436 = vmax.f32 %v5372, 0.0
      %v5437 = vmax.f32 %v5373, 0.0
      %v5438 = vmax.f32 %v5374, 0.0
      %v5439 = vmax.f32 %v5375, 0.0
      %v5440 = vmax.f32 %v5376, 0.0
      %v5441 = vmax.f32 %v5377, 0.0
      %v5442 = vmax.f32 %v5378, 0.0
      %v5443 = vmax.f32 %v5379, 0.0
      %v5444 = vmax.f32 %v5380, 0.0
      %v5445 = vmax.f32 %v5381, 0.0
      %v5446 = vpack.c.bf16 %v5383, %v5382
      %v5447 = vpack.c.bf16 %v5385, %v5384
      %v5448 = vpack.c.bf16 %v5387, %v5386
      %v5449 = vpack.c.bf16 %v5389, %v5388
      %v5450 = vpack.c.bf16 %v5391, %v5390
      %v5451 = vpack.c.bf16 %v5393, %v5392
      %v5452 = vpack.c.bf16 %v5395, %v5394
      %v5453 = vpack.c.bf16 %v5397, %v5396
      %v5454 = vpack.c.bf16 %v5399, %v5398
      %v5455 = vpack.c.bf16 %v5401, %v5400
      %v5456 = vpack.c.bf16 %v5403, %v5402
      %v5457 = vpack.c.bf16 %v5405, %v5404
      %v5458 = vpack.c.bf16 %v5407, %v5406
      %v5459 = vpack.c.bf16 %v5409, %v5408
      %v5460 = vpack.c.bf16 %v5411, %v5410
      %v5461 = vpack.c.bf16 %v5413, %v5412
      %v5462 = vpack.c.bf16 %v5415, %v5414
      %v5463 = vpack.c.bf16 %v5417, %v5416
      %v5464 = vpack.c.bf16 %v5419, %v5418
      %v5465 = vpack.c.bf16 %v5421, %v5420
      %v5466 = vpack.c.bf16 %v5423, %v5422
      %v5467 = vpack.c.bf16 %v5425, %v5424
      %v5468 = vpack.c.bf16 %v5427, %v5426
      %v5469 = vpack.c.bf16 %v5429, %v5428
      %v5470 = vpack.c.bf16 %v5431, %v5430
      %v5471 = vpack.c.bf16 %v5433, %v5432
      %v5472 = vpack.c.bf16 %v5435, %v5434
      %v5473 = vpack.c.bf16 %v5437, %v5436
      %v5474 = vpack.c.bf16 %v5439, %v5438
      %v5475 = vpack.c.bf16 %v5441, %v5440
      %v5476 = vpack.c.bf16 %v5443, %v5442
      %v5477 = vpack.c.bf16 %v5445, %v5444
      %v5510 = vunpack.c.l.b16 %v5446
      %v5511 = vunpack.c.h.b16 %v5446
      %v5512 = vunpack.c.l.b16 %v5447
      %v5513 = vunpack.c.h.b16 %v5447
      %v5514 = vunpack.c.l.b16 %v5448
      %v5515 = vunpack.c.h.b16 %v5448
      %v5516 = vunpack.c.l.b16 %v5449
      %v5517 = vunpack.c.h.b16 %v5449
      %v5518 = vunpack.c.l.b16 %v5450
      %v5519 = vunpack.c.h.b16 %v5450
      %v5520 = vunpack.c.l.b16 %v5451
      %v5521 = vunpack.c.h.b16 %v5451
      %v5522 = vunpack.c.l.b16 %v5452
      %v5523 = vunpack.c.h.b16 %v5452
      %v5524 = vunpack.c.l.b16 %v5453
      %v5525 = vunpack.c.h.b16 %v5453
      %v5526 = vunpack.c.l.b16 %v5454
      %v5527 = vunpack.c.h.b16 %v5454
      %v5528 = vunpack.c.l.b16 %v5455
      %v5529 = vunpack.c.h.b16 %v5455
      %v5530 = vunpack.c.l.b16 %v5456
      %v5531 = vunpack.c.h.b16 %v5456
      %v5532 = vunpack.c.l.b16 %v5457
      %v5533 = vunpack.c.h.b16 %v5457
      %v5534 = vunpack.c.l.b16 %v5458
      %v5535 = vunpack.c.h.b16 %v5458
      %v5536 = vunpack.c.l.b16 %v5459
      %v5537 = vunpack.c.h.b16 %v5459
      %v5538 = vunpack.c.l.b16 %v5460
      %v5539 = vunpack.c.h.b16 %v5460
      %v5540 = vunpack.c.l.b16 %v5461
      %v5541 = vunpack.c.h.b16 %v5461
      %v5542 = vunpack.c.l.b16 %v5462
      %v5543 = vunpack.c.h.b16 %v5462
      %v5544 = vunpack.c.l.b16 %v5463
      %v5545 = vunpack.c.h.b16 %v5463
      %v5546 = vunpack.c.l.b16 %v5464
      %v5547 = vunpack.c.h.b16 %v5464
      %v5548 = vunpack.c.l.b16 %v5465
      %v5549 = vunpack.c.h.b16 %v5465
      %v5550 = vunpack.c.l.b16 %v5466
      %v5551 = vunpack.c.h.b16 %v5466
      %v5552 = vunpack.c.l.b16 %v5467
      %v5553 = vunpack.c.h.b16 %v5467
      %v5554 = vunpack.c.l.b16 %v5468
      %v5555 = vunpack.c.h.b16 %v5468
      %v5556 = vunpack.c.l.b16 %v5469
      %v5557 = vunpack.c.h.b16 %v5469
      %v5558 = vunpack.c.l.b16 %v5470
      %v5559 = vunpack.c.h.b16 %v5470
      %v5560 = vunpack.c.l.b16 %v5471
      %v5561 = vunpack.c.h.b16 %v5471
      %v5562 = vunpack.c.l.b16 %v5472
      %v5563 = vunpack.c.h.b16 %v5472
      %v5564 = vunpack.c.l.b16 %v5473
      %v5565 = vunpack.c.h.b16 %v5473
      %v5566 = vunpack.c.l.b16 %v5474
      %v5567 = vunpack.c.h.b16 %v5474
      %v5568 = vunpack.c.l.b16 %v5475
      %v5569 = vunpack.c.h.b16 %v5475
      %v5570 = vunpack.c.l.b16 %v5476
      %v5571 = vunpack.c.h.b16 %v5476
      %v5572 = vunpack.c.l.b16 %v5477
      %v5573 = vunpack.c.h.b16 %v5477
      %v5574 = vpack.c.b16 %v5510, %v5510
      %v5575 = vpack.c.b16 %v5511, %v5511
      %v5576 = vpack.c.b16 %v5512, %v5512
      %v5577 = vpack.c.b16 %v5513, %v5513
      %v5578 = vpack.c.b16 %v5514, %v5514
      %v5579 = vpack.c.b16 %v5515, %v5515
      %v5580 = vpack.c.b16 %v5516, %v5516
      %v5581 = vpack.c.b16 %v5517, %v5517
      %v5582 = vpack.c.b16 %v5518, %v5518
      %v5583 = vpack.c.b16 %v5519, %v5519
      %v5584 = vpack.c.b16 %v5520, %v5520
      %v5585 = vpack.c.b16 %v5521, %v5521
      %v5586 = vpack.c.b16 %v5522, %v5522
      %v5587 = vpack.c.b16 %v5523, %v5523
      %v5588 = vpack.c.b16 %v5524, %v5524
      %v5589 = vpack.c.b16 %v5525, %v5525
      %v5590 = vpack.c.b16 %v5526, %v5526
      %v5591 = vpack.c.b16 %v5527, %v5527
      %v5592 = vpack.c.b16 %v5528, %v5528
      %v5593 = vpack.c.b16 %v5529, %v5529
      %v5594 = vpack.c.b16 %v5530, %v5530
      %v5595 = vpack.c.b16 %v5531, %v5531
      %v5596 = vpack.c.b16 %v5532, %v5532
      %v5597 = vpack.c.b16 %v5533, %v5533
      %v5598 = vpack.c.b16 %v5534, %v5534
      %v5599 = vpack.c.b16 %v5535, %v5535
      %v5600 = vpack.c.b16 %v5536, %v5536
      %v5601 = vpack.c.b16 %v5537, %v5537
      %v5602 = vpack.c.b16 %v5538, %v5538
      %v5603 = vpack.c.b16 %v5539, %v5539
      %v5604 = vpack.c.b16 %v5540, %v5540
      %v5605 = vpack.c.b16 %v5541, %v5541
      %v5606 = vpack.c.b16 %v5542, %v5542
      %v5607 = vpack.c.b16 %v5543, %v5543
      %v5608 = vpack.c.b16 %v5544, %v5544
      %v5609 = vpack.c.b16 %v5545, %v5545
      %v5610 = vpack.c.b16 %v5546, %v5546
      %v5611 = vpack.c.b16 %v5547, %v5547
      %v5612 = vpack.c.b16 %v5548, %v5548
      %v5613 = vpack.c.b16 %v5549, %v5549
      %v5614 = vpack.c.b16 %v5550, %v5550
      %v5615 = vpack.c.b16 %v5551, %v5551
      %v5616 = vpack.c.b16 %v5552, %v5552
      %v5617 = vpack.c.b16 %v5553, %v5553
      %v5618 = vpack.c.b16 %v5554, %v5554
      %v5619 = vpack.c.b16 %v5555, %v5555
      %v5620 = vpack.c.b16 %v5556, %v5556
      %v5621 = vpack.c.b16 %v5557, %v5557
      %v5622 = vpack.c.b16 %v5558, %v5558
      %v5623 = vpack.c.b16 %v5559, %v5559
      %v5624 = vpack.c.b16 %v5560, %v5560
      %v5625 = vpack.c.b16 %v5561, %v5561
      %v5626 = vpack.c.b16 %v5562, %v5562
      %v5627 = vpack.c.b16 %v5563, %v5563
      %v5628 = vpack.c.b16 %v5564, %v5564
      %v5629 = vpack.c.b16 %v5565, %v5565
      %v5630 = vpack.c.b16 %v5566, %v5566
      %v5631 = vpack.c.b16 %v5567, %v5567
      %v5632 = vpack.c.b16 %v5568, %v5568
      %v5633 = vpack.c.b16 %v5569, %v5569
      %v5634 = vpack.c.b16 %v5570, %v5570
      %v5635 = vpack.c.b16 %v5571, %v5571
      %v5636 = vpack.c.b16 %v5572, %v5572
      %v5637 = vpack.c.b16 %v5573, %v5573
      %vm5702 = vcmask 257024
      %5703 = vst.msk [vmem:[%s231] sm:$0xf] %vm5702, %v5574
      %5704 = vst.msk [vmem:[%s231 + $0x4] sm:$0xf] %vm5702, %v5575
      %5705 = vst.msk [vmem:[%s231 + $0x8] sm:$0xf] %vm5702, %v5576
      %5706 = vst.msk [vmem:[%s231 + $0xc] sm:$0xf] %vm5702, %v5577
      %5707 = vst.msk [vmem:[%s231 + $0x10] sm:$0xf] %vm5702, %v5578
      %5708 = vst.msk [vmem:[%s231 + $0x14] sm:$0xf] %vm5702, %v5579
      %5709 = vst.msk [vmem:[%s231 + $0x18] sm:$0xf] %vm5702, %v5580
      %5710 = vst.msk [vmem:[%s231 + $0x1c] sm:$0xf] %vm5702, %v5581
      %5711 = vst.msk [vmem:[%s231 + $0x20] sm:$0xf] %vm5702, %v5582
      %5712 = vst.msk [vmem:[%s231 + $0x24] sm:$0xf] %vm5702, %v5583
      %5713 = vst.msk [vmem:[%s231 + $0x28] sm:$0xf] %vm5702, %v5584
      %5714 = vst.msk [vmem:[%s231 + $0x2c] sm:$0xf] %vm5702, %v5585
      %5715 = vst.msk [vmem:[%s231 + $0x30] sm:$0xf] %vm5702, %v5586
      %5716 = vst.msk [vmem:[%s231 + $0x34] sm:$0xf] %vm5702, %v5587
      %5717 = vst.msk [vmem:[%s231 + $0x38] sm:$0xf] %vm5702, %v5588
      %5718 = vst.msk [vmem:[%s231 + $0x3c] sm:$0xf] %vm5702, %v5589
      %5719 = vst.msk [vmem:[%s231 + $0x40] sm:$0xf] %vm5702, %v5590
      %5720 = vst.msk [vmem:[%s231 + $0x44] sm:$0xf] %vm5702, %v5591
      %5721 = vst.msk [vmem:[%s231 + $0x48] sm:$0xf] %vm5702, %v5592
      %5722 = vst.msk [vmem:[%s231 + $0x4c] sm:$0xf] %vm5702, %v5593
      %5723 = vst.msk [vmem:[%s231 + $0x50] sm:$0xf] %vm5702, %v5594
      %5724 = vst.msk [vmem:[%s231 + $0x54] sm:$0xf] %vm5702, %v5595
      %5725 = vst.msk [vmem:[%s231 + $0x58] sm:$0xf] %vm5702, %v5596
      %5726 = vst.msk [vmem:[%s231 + $0x5c] sm:$0xf] %vm5702, %v5597
      %5727 = vst.msk [vmem:[%s231 + $0x60] sm:$0xf] %vm5702, %v5598
      %5728 = vst.msk [vmem:[%s231 + $0x64] sm:$0xf] %vm5702, %v5599
      %5729 = vst.msk [vmem:[%s231 + $0x68] sm:$0xf] %vm5702, %v5600
      %5730 = vst.msk [vmem:[%s231 + $0x6c] sm:$0xf] %vm5702, %v5601
      %5731 = vst.msk [vmem:[%s231 + $0x70] sm:$0xf] %vm5702, %v5602
      %5732 = vst.msk [vmem:[%s231 + $0x74] sm:$0xf] %vm5702, %v5603
      %5733 = vst.msk [vmem:[%s231 + $0x78] sm:$0xf] %vm5702, %v5604
      %5734 = vst.msk [vmem:[%s231 + $0x7c] sm:$0xf] %vm5702, %v5605
      %5735 = vst.msk [vmem:[%s231 + $0x80] sm:$0xf] %vm5702, %v5606
      %5736 = vst.msk [vmem:[%s231 + $0x84] sm:$0xf] %vm5702, %v5607
      %5737 = vst.msk [vmem:[%s231 + $0x88] sm:$0xf] %vm5702, %v5608
      %5738 = vst.msk [vmem:[%s231 + $0x8c] sm:$0xf] %vm5702, %v5609
      %5739 = vst.msk [vmem:[%s231 + $0x90] sm:$0xf] %vm5702, %v5610
      %5740 = vst.msk [vmem:[%s231 + $0x94] sm:$0xf] %vm5702, %v5611
      %5741 = vst.msk [vmem:[%s231 + $0x98] sm:$0xf] %vm5702, %v5612
      %5742 = vst.msk [vmem:[%s231 + $0x9c] sm:$0xf] %vm5702, %v5613
      %5743 = vst.msk [vmem:[%s231 + $0xa0] sm:$0xf] %vm5702, %v5614
      %5744 = vst.msk [vmem:[%s231 + $0xa4] sm:$0xf] %vm5702, %v5615
      %5745 = vst.msk [vmem:[%s231 + $0xa8] sm:$0xf] %vm5702, %v5616
      %5746 = vst.msk [vmem:[%s231 + $0xac] sm:$0xf] %vm5702, %v5617
      %5747 = vst.msk [vmem:[%s231 + $0xb0] sm:$0xf] %vm5702, %v5618
      %5748 = vst.msk [vmem:[%s231 + $0xb4] sm:$0xf] %vm5702, %v5619
      %5749 = vst.msk [vmem:[%s231 + $0xb8] sm:$0xf] %vm5702, %v5620
      %5750 = vst.msk [vmem:[%s231 + $0xbc] sm:$0xf] %vm5702, %v5621
      %5751 = vst.msk [vmem:[%s231 + $0xc0] sm:$0xf] %vm5702, %v5622
      %5752 = vst.msk [vmem:[%s231 + $0xc4] sm:$0xf] %vm5702, %v5623
      %5753 = vst.msk [vmem:[%s231 + $0xc8] sm:$0xf] %vm5702, %v5624
      %5754 = vst.msk [vmem:[%s231 + $0xcc] sm:$0xf] %vm5702, %v5625
      %5755 = vst.msk [vmem:[%s231 + $0xd0] sm:$0xf] %vm5702, %v5626
      %5756 = vst.msk [vmem:[%s231 + $0xd4] sm:$0xf] %vm5702, %v5627
      %5757 = vst.msk [vmem:[%s231 + $0xd8] sm:$0xf] %vm5702, %v5628
      %5758 = vst.msk [vmem:[%s231 + $0xdc] sm:$0xf] %vm5702, %v5629
      %5759 = vst.msk [vmem:[%s231 + $0xe0] sm:$0xf] %vm5702, %v5630
      %5760 = vst.msk [vmem:[%s231 + $0xe4] sm:$0xf] %vm5702, %v5631
      %5761 = vst.msk [vmem:[%s231 + $0xe8] sm:$0xf] %vm5702, %v5632
      %5762 = vst.msk [vmem:[%s231 + $0xec] sm:$0xf] %vm5702, %v5633
      %5763 = vst.msk [vmem:[%s231 + $0xf0] sm:$0xf] %vm5702, %v5634
      %5764 = vst.msk [vmem:[%s231 + $0xf4] sm:$0xf] %vm5702, %v5635
      %5765 = vst.msk [vmem:[%s231 + $0xf8] sm:$0xf] %vm5702, %v5636
      %5766 = vst.msk [vmem:[%s231 + $0xfc] sm:$0xf] %vm5702, %v5637
      %s5767 = smul.u32 8, %s16
      %p5768 = scmp.lt.s32.totalorder %s5767, 15
      %s5769 = scalar_select %p5768, %s5767, 15
      %s5770 = smul.addr %s5769, 8
      %s5771 = smul.addr %s5770, 4
      %s5772 = scalar_lea.vmem %s5, %s5771
      // Predicated region
      $region41: #{gender_classifier_cnn_forward.2} parent=39 // pred_check
        %p5773 = pneg %p144
      $region42: #{gender_classifier_cnn_forward.2} parent=39 // pred_check_branch
        %5775 = sbr.rel (%p5773) target = $region44
      $region43: #{gender_classifier_cnn_forward.2} parent=39 // pred_region
        %s5776 = smul.u32 8, %s16
      $region44: #{gender_classifier_cnn_forward.2} parent=39 // pred_fallthru
        _
    $region40: #{gender_classifier_cnn_forward.2} parent=5 // pred_fallthru
      _
    %p5777 = scmp.le.s32.totalorder 2, %s11
    // Predicated region
    $region45: #{gender_classifier_cnn_forward.2} parent=5 // pred_check
      %p5778 = pneg %p5777
    $region46: #{gender_classifier_cnn_forward.2} parent=5 // pred_check_branch
      %5780 = sbr.rel (%p5778) target = $region48
    $region47: #{gender_classifier_cnn_forward.2} parent=5 // pred_region
      %s5781 = ssub.s32 %s11, 2
      // Predicated region
      $region49: #{gender_classifier_cnn_forward.2} parent=47 // pred_check
        %p5782 = pneg %p150
      $region50: #{gender_classifier_cnn_forward.2} parent=47 // pred_check_branch
        %5784 = sbr.rel (%p5782) target = $region52
      $region51: #{gender_classifier_cnn_forward.2} parent=47 // pred_region
        %s5785 = smul.u32 8, %s17
        %p5786 = scmp.lt.s32.totalorder %s5785, 15
        %s5787 = scalar_select %p5786, %s5785, 15
        %s5788 = smul.addr %s5787, 8
        %s5789 = smul.addr %s5788, 4
        %s5790 = scalar_lea.vmem %s5, %s5789
      $region52: #{gender_classifier_cnn_forward.2} parent=47 // pred_fallthru
        _
    $region48: #{gender_classifier_cnn_forward.2} parent=5 // pred_fallthru
      _
  $region6: #{gender_classifier_cnn_forward.2} parent=0 // loop_footer
    %s15 = sadd.s32 1, %s11
  $region7: #{gender_classifier_cnn_forward.2} parent=0 // loop_footer_branch
    %10 = sbr.rel target = $region3
  $region8: #{gender_classifier_cnn_forward.2} parent=0 // loop_exit
    _

// kernel: gender_classifier_cnn_forward.3
$region0: #{gender_classifier_cnn_forward.3}
  #allocation0 [shape = 'u32[]', space=smem, size = 0x4, offset = 0x4, fixed_abs, tag = 'smem constant byte address 0x4 - core index']
  #allocation1 [shape = 'u32[144,128]{1,0:T(1,128)}', space=vmem, size = 0x12000, scoped, tag = 'internal scratch']
  #allocation2 [shape = 'f32[1,1]{1,0:T(1,128)S(1)}', space=vmem, size = 0x200, scoped, tag = 'scoped memory for gender_classifier_cnn_forward.3']
  %s0 = inlined_call_operand.vmem [shape: bf16[16,2048], index: 0, kind: input, shape index: {}]
  %s1 = inlined_call_operand.vmem [shape: bf16[2048,256], index: 1, kind: input, shape index: {}]
  %s2 = inlined_call_operand.vmem [shape: f32[1,256], index: 2, kind: input, shape index: {}]
  %s3 = inlined_call_operand.vmem [shape: bf16[256,128], index: 3, kind: input, shape index: {}]
  %s4 = inlined_call_operand.vmem [shape: f32[1,128], index: 4, kind: input, shape index: {}]
  %s5 = inlined_call_operand.vmem [shape: f32[1,128], index: 5, kind: input, shape index: {}]
  %s6 = inlined_call_operand.<no memory space> [shape: f32[1,1], index: 6, kind: input, shape index: {}]
  %s7 = inlined_call_operand.vmem [shape: f32[16,1], index: 7, kind: output, shape index: {}]
  %s8 = sld [smem:[#allocation0]]
  $region38: #{gender_classifier_cnn_forward.3} parent=0
    _
  %s10 = ssub.s32 1, %s8
  %s11 = scalar_select 0, %s10, %s8
  %v12 = vstv %s6
  %13 = vst [vmem:[#allocation2] sm:$0x1] %v12
  // Predicated region
  $region2: #{gender_classifier_cnn_forward.3} parent=0 // pred_check
    _
  $region3: #{gender_classifier_cnn_forward.3} parent=0 // pred_check_branch
    %15 = sbr.rel (0) target = $region5
  $region4: #{gender_classifier_cnn_forward.3} parent=0 // pred_region
    _
  $region5: #{gender_classifier_cnn_forward.3} parent=0 // pred_fallthru
    _
  // Predicated region
  $region6: #{gender_classifier_cnn_forward.3} parent=0 // pred_check
    _
  $region7: #{gender_classifier_cnn_forward.3} parent=0 // pred_check_branch
    %17 = sbr.rel (0) target = $region9
  $region8: #{gender_classifier_cnn_forward.3} parent=0 // pred_region
    _
  $region9: #{gender_classifier_cnn_forward.3} parent=0 // pred_fallthru
    _
  // Predicated region
  $region10: #{gender_classifier_cnn_forward.3} parent=0 // pred_check
    _
  $region11: #{gender_classifier_cnn_forward.3} parent=0 // pred_check_branch
    %19 = sbr.rel (0) target = $region13
  $region12: #{gender_classifier_cnn_forward.3} parent=0 // pred_region
    _
  $region13: #{gender_classifier_cnn_forward.3} parent=0 // pred_fallthru
    _
  // Predicated region
  $region14: #{gender_classifier_cnn_forward.3} parent=0 // pred_check
    _
  $region15: #{gender_classifier_cnn_forward.3} parent=0 // pred_check_branch
    %21 = sbr.rel (0) target = $region17
  $region16: #{gender_classifier_cnn_forward.3} parent=0 // pred_region
    _
  $region17: #{gender_classifier_cnn_forward.3} parent=0 // pred_fallthru
    _
  // Predicated region
  $region18: #{gender_classifier_cnn_forward.3} parent=0 // pred_check
    _
  $region19: #{gender_classifier_cnn_forward.3} parent=0 // pred_check_branch
    %23 = sbr.rel (0) target = $region21
  $region20: #{gender_classifier_cnn_forward.3} parent=0 // pred_region
    _
  $region21: #{gender_classifier_cnn_forward.3} parent=0 // pred_fallthru
    _
  // Predicated region
  $region22: #{gender_classifier_cnn_forward.3} parent=0 // pred_check
    _
  $region23: #{gender_classifier_cnn_forward.3} parent=0 // pred_check_branch
    %25 = sbr.rel (0) target = $region25
  $region24: #{gender_classifier_cnn_forward.3} parent=0 // pred_region
    _
  $region25: #{gender_classifier_cnn_forward.3} parent=0 // pred_fallthru
    _
  // Predicated region
  $region26: #{gender_classifier_cnn_forward.3} parent=0 // pred_check
    _
  $region27: #{gender_classifier_cnn_forward.3} parent=0 // pred_check_branch
    %27 = sbr.rel (0) target = $region29
  $region28: #{gender_classifier_cnn_forward.3} parent=0 // pred_region
    _
  $region29: #{gender_classifier_cnn_forward.3} parent=0 // pred_fallthru
    _
  %v29 = vld [vmem:[%s0] sm:$0xff]
  %v30 = vld [vmem:[%s0 + $0x8] sm:$0xff]
  %v31 = vld [vmem:[%s0 + $0x10] sm:$0xff]
  %v32 = vld [vmem:[%s0 + $0x18] sm:$0xff]
  %v33 = vld [vmem:[%s0 + $0x20] sm:$0xff]
  %v34 = vld [vmem:[%s0 + $0x28] sm:$0xff]
  %v35 = vld [vmem:[%s0 + $0x30] sm:$0xff]
  %v36 = vld [vmem:[%s0 + $0x38] sm:$0xff]
  %v37 = vld [vmem:[%s0 + $0x40] sm:$0xff]
  %v38 = vld [vmem:[%s0 + $0x48] sm:$0xff]
  %v39 = vld [vmem:[%s0 + $0x50] sm:$0xff]
  %v40 = vld [vmem:[%s0 + $0x58] sm:$0xff]
  %v41 = vld [vmem:[%s0 + $0x60] sm:$0xff]
  %v42 = vld [vmem:[%s0 + $0x68] sm:$0xff]
  %v43 = vld [vmem:[%s0 + $0x70] sm:$0xff]
  %v44 = vld [vmem:[%s0 + $0x78] sm:$0xff]
  %v45 = vld [vmem:[%s1] sm:$0xff]
  %v46 = vld [vmem:[%s1 + $0x8] sm:$0xff]
  %v47 = vld [vmem:[%s1 + $0x10] sm:$0xff]
  %v48 = vld [vmem:[%s1 + $0x18] sm:$0xff]
  %v49 = vld [vmem:[%s1 + $0x20] sm:$0xff]
  %v50 = vld [vmem:[%s1 + $0x28] sm:$0xff]
  %v51 = vld [vmem:[%s1 + $0x30] sm:$0xff]
  %v52 = vld [vmem:[%s1 + $0x38] sm:$0xff]
  %v53 = vld [vmem:[%s1 + $0x40] sm:$0xff]
  %v54 = vld [vmem:[%s1 + $0x48] sm:$0xff]
  %v55 = vld [vmem:[%s1 + $0x50] sm:$0xff]
  %v56 = vld [vmem:[%s1 + $0x58] sm:$0xff]
  %v57 = vld [vmem:[%s1 + $0x60] sm:$0xff]
  %v58 = vld [vmem:[%s1 + $0x68] sm:$0xff]
  %v59 = vld [vmem:[%s1 + $0x70] sm:$0xff]
  %v60 = vld [vmem:[%s1 + $0x78] sm:$0xff]
  %v61 = vld [vmem:[%s1 + $0x80] sm:$0xff]
  %v62 = vld [vmem:[%s1 + $0x88] sm:$0xff]
  %v63 = vld [vmem:[%s1 + $0x90] sm:$0xff]
  %v64 = vld [vmem:[%s1 + $0x98] sm:$0xff]
  %v65 = vld [vmem:[%s1 + $0xa0] sm:$0xff]
  %v66 = vld [vmem:[%s1 + $0xa8] sm:$0xff]
  %v67 = vld [vmem:[%s1 + $0xb0] sm:$0xff]
  %v68 = vld [vmem:[%s1 + $0xb8] sm:$0xff]
  %v69 = vld [vmem:[%s1 + $0xc0] sm:$0xff]
  %v70 = vld [vmem:[%s1 + $0xc8] sm:$0xff]
  %v71 = vld [vmem:[%s1 + $0xd0] sm:$0xff]
  %v72 = vld [vmem:[%s1 + $0xd8] sm:$0xff]
  %v73 = vld [vmem:[%s1 + $0xe0] sm:$0xff]
  %v74 = vld [vmem:[%s1 + $0xe8] sm:$0xff]
  %v75 = vld [vmem:[%s1 + $0xf0] sm:$0xff]
  %v76 = vld [vmem:[%s1 + $0xf8] sm:$0xff]
  %v77 = vld [vmem:[%s1 + $0x100] sm:$0xff]
  %v78 = vld [vmem:[%s1 + $0x108] sm:$0xff]
  %v79 = vld [vmem:[%s1 + $0x110] sm:$0xff]
  %v80 = vld [vmem:[%s1 + $0x118] sm:$0xff]
  %v81 = vld [vmem:[%s1 + $0x120] sm:$0xff]
  %v82 = vld [vmem:[%s1 + $0x128] sm:$0xff]
  %v83 = vld [vmem:[%s1 + $0x130] sm:$0xff]
  %v84 = vld [vmem:[%s1 + $0x138] sm:$0xff]
  %v85 = vld [vmem:[%s1 + $0x140] sm:$0xff]
  %v86 = vld [vmem:[%s1 + $0x148] sm:$0xff]
  %v87 = vld [vmem:[%s1 + $0x150] sm:$0xff]
  %v88 = vld [vmem:[%s1 + $0x158] sm:$0xff]
  %v89 = vld [vmem:[%s1 + $0x160] sm:$0xff]
  %v90 = vld [vmem:[%s1 + $0x168] sm:$0xff]
  %v91 = vld [vmem:[%s1 + $0x170] sm:$0xff]
  %v92 = vld [vmem:[%s1 + $0x178] sm:$0xff]
  %v93 = vld [vmem:[%s1 + $0x180] sm:$0xff]
  %v94 = vld [vmem:[%s1 + $0x188] sm:$0xff]
  %v95 = vld [vmem:[%s1 + $0x190] sm:$0xff]
  %v96 = vld [vmem:[%s1 + $0x198] sm:$0xff]
  %v97 = vld [vmem:[%s1 + $0x1a0] sm:$0xff]
  %v98 = vld [vmem:[%s1 + $0x1a8] sm:$0xff]
  %v99 = vld [vmem:[%s1 + $0x1b0] sm:$0xff]
  %v100 = vld [vmem:[%s1 + $0x1b8] sm:$0xff]
  %v101 = vld [vmem:[%s1 + $0x1c0] sm:$0xff]
  %v102 = vld [vmem:[%s1 + $0x1c8] sm:$0xff]
  %v103 = vld [vmem:[%s1 + $0x1d0] sm:$0xff]
  %v104 = vld [vmem:[%s1 + $0x1d8] sm:$0xff]
  %v105 = vld [vmem:[%s1 + $0x1e0] sm:$0xff]
  %v106 = vld [vmem:[%s1 + $0x1e8] sm:$0xff]
  %v107 = vld [vmem:[%s1 + $0x1f0] sm:$0xff]
  %v108 = vld [vmem:[%s1 + $0x1f8] sm:$0xff]
  %v109 = vld [vmem:[%s1 + $0x200] sm:$0xff]
  %v110 = vld [vmem:[%s1 + $0x208] sm:$0xff]
  %v111 = vld [vmem:[%s1 + $0x210] sm:$0xff]
  %v112 = vld [vmem:[%s1 + $0x218] sm:$0xff]
  %v113 = vld [vmem:[%s1 + $0x220] sm:$0xff]
  %v114 = vld [vmem:[%s1 + $0x228] sm:$0xff]
  %v115 = vld [vmem:[%s1 + $0x230] sm:$0xff]
  %v116 = vld [vmem:[%s1 + $0x238] sm:$0xff]
  %v117 = vld [vmem:[%s1 + $0x240] sm:$0xff]
  %v118 = vld [vmem:[%s1 + $0x248] sm:$0xff]
  %v119 = vld [vmem:[%s1 + $0x250] sm:$0xff]
  %v120 = vld [vmem:[%s1 + $0x258] sm:$0xff]
  %v121 = vld [vmem:[%s1 + $0x260] sm:$0xff]
  %v122 = vld [vmem:[%s1 + $0x268] sm:$0xff]
  %v123 = vld [vmem:[%s1 + $0x270] sm:$0xff]
  %v124 = vld [vmem:[%s1 + $0x278] sm:$0xff]
  %v125 = vld [vmem:[%s1 + $0x280] sm:$0xff]
  %v126 = vld [vmem:[%s1 + $0x288] sm:$0xff]
  %v127 = vld [vmem:[%s1 + $0x290] sm:$0xff]
  %v128 = vld [vmem:[%s1 + $0x298] sm:$0xff]
  %v129 = vld [vmem:[%s1 + $0x2a0] sm:$0xff]
  %v130 = vld [vmem:[%s1 + $0x2a8] sm:$0xff]
  %v131 = vld [vmem:[%s1 + $0x2b0] sm:$0xff]
  %v132 = vld [vmem:[%s1 + $0x2b8] sm:$0xff]
  %v133 = vld [vmem:[%s1 + $0x2c0] sm:$0xff]
  %v134 = vld [vmem:[%s1 + $0x2c8] sm:$0xff]
  %v135 = vld [vmem:[%s1 + $0x2d0] sm:$0xff]
  %v136 = vld [vmem:[%s1 + $0x2d8] sm:$0xff]
  %v137 = vld [vmem:[%s1 + $0x2e0] sm:$0xff]
  %v138 = vld [vmem:[%s1 + $0x2e8] sm:$0xff]
  %v139 = vld [vmem:[%s1 + $0x2f0] sm:$0xff]
  %v140 = vld [vmem:[%s1 + $0x2f8] sm:$0xff]
  %v141 = vld [vmem:[%s1 + $0x300] sm:$0xff]
  %v142 = vld [vmem:[%s1 + $0x308] sm:$0xff]
  %v143 = vld [vmem:[%s1 + $0x310] sm:$0xff]
  %v144 = vld [vmem:[%s1 + $0x318] sm:$0xff]
  %v145 = vld [vmem:[%s1 + $0x320] sm:$0xff]
  %v146 = vld [vmem:[%s1 + $0x328] sm:$0xff]
  %v147 = vld [vmem:[%s1 + $0x330] sm:$0xff]
  %v148 = vld [vmem:[%s1 + $0x338] sm:$0xff]
  %v149 = vld [vmem:[%s1 + $0x340] sm:$0xff]
  %v150 = vld [vmem:[%s1 + $0x348] sm:$0xff]
  %v151 = vld [vmem:[%s1 + $0x350] sm:$0xff]
  %v152 = vld [vmem:[%s1 + $0x358] sm:$0xff]
  %v153 = vld [vmem:[%s1 + $0x360] sm:$0xff]
  %v154 = vld [vmem:[%s1 + $0x368] sm:$0xff]
  %v155 = vld [vmem:[%s1 + $0x370] sm:$0xff]
  %v156 = vld [vmem:[%s1 + $0x378] sm:$0xff]
  %v157 = vld [vmem:[%s1 + $0x380] sm:$0xff]
  %v158 = vld [vmem:[%s1 + $0x388] sm:$0xff]
  %v159 = vld [vmem:[%s1 + $0x390] sm:$0xff]
  %v160 = vld [vmem:[%s1 + $0x398] sm:$0xff]
  %v161 = vld [vmem:[%s1 + $0x3a0] sm:$0xff]
  %v162 = vld [vmem:[%s1 + $0x3a8] sm:$0xff]
  %v163 = vld [vmem:[%s1 + $0x3b0] sm:$0xff]
  %v164 = vld [vmem:[%s1 + $0x3b8] sm:$0xff]
  %v165 = vld [vmem:[%s1 + $0x3c0] sm:$0xff]
  %v166 = vld [vmem:[%s1 + $0x3c8] sm:$0xff]
  %v167 = vld [vmem:[%s1 + $0x3d0] sm:$0xff]
  %v168 = vld [vmem:[%s1 + $0x3d8] sm:$0xff]
  %v169 = vld [vmem:[%s1 + $0x3e0] sm:$0xff]
  %v170 = vld [vmem:[%s1 + $0x3e8] sm:$0xff]
  %v171 = vld [vmem:[%s1 + $0x3f0] sm:$0xff]
  %v172 = vld [vmem:[%s1 + $0x3f8] sm:$0xff]
  %v173 = vld [vmem:[%s1 + $0x400] sm:$0xff]
  %v174 = vld [vmem:[%s1 + $0x408] sm:$0xff]
  %v175 = vld [vmem:[%s1 + $0x410] sm:$0xff]
  %v176 = vld [vmem:[%s1 + $0x418] sm:$0xff]
  %v177 = vld [vmem:[%s1 + $0x420] sm:$0xff]
  %v178 = vld [vmem:[%s1 + $0x428] sm:$0xff]
  %v179 = vld [vmem:[%s1 + $0x430] sm:$0xff]
  %v180 = vld [vmem:[%s1 + $0x438] sm:$0xff]
  %v181 = vld [vmem:[%s1 + $0x440] sm:$0xff]
  %v182 = vld [vmem:[%s1 + $0x448] sm:$0xff]
  %v183 = vld [vmem:[%s1 + $0x450] sm:$0xff]
  %v184 = vld [vmem:[%s1 + $0x458] sm:$0xff]
  %v185 = vld [vmem:[%s1 + $0x460] sm:$0xff]
  %v186 = vld [vmem:[%s1 + $0x468] sm:$0xff]
  %v187 = vld [vmem:[%s1 + $0x470] sm:$0xff]
  %v188 = vld [vmem:[%s1 + $0x478] sm:$0xff]
  %v189 = vld [vmem:[%s1 + $0x480] sm:$0xff]
  %v190 = vld [vmem:[%s1 + $0x488] sm:$0xff]
  %v191 = vld [vmem:[%s1 + $0x490] sm:$0xff]
  %v192 = vld [vmem:[%s1 + $0x498] sm:$0xff]
  %v193 = vld [vmem:[%s1 + $0x4a0] sm:$0xff]
  %v194 = vld [vmem:[%s1 + $0x4a8] sm:$0xff]
  %v195 = vld [vmem:[%s1 + $0x4b0] sm:$0xff]
  %v196 = vld [vmem:[%s1 + $0x4b8] sm:$0xff]
  %v197 = vld [vmem:[%s1 + $0x4c0] sm:$0xff]
  %v198 = vld [vmem:[%s1 + $0x4c8] sm:$0xff]
  %v199 = vld [vmem:[%s1 + $0x4d0] sm:$0xff]
  %v200 = vld [vmem:[%s1 + $0x4d8] sm:$0xff]
  %v201 = vld [vmem:[%s1 + $0x4e0] sm:$0xff]
  %v202 = vld [vmem:[%s1 + $0x4e8] sm:$0xff]
  %v203 = vld [vmem:[%s1 + $0x4f0] sm:$0xff]
  %v204 = vld [vmem:[%s1 + $0x4f8] sm:$0xff]
  %v205 = vld [vmem:[%s1 + $0x500] sm:$0xff]
  %v206 = vld [vmem:[%s1 + $0x508] sm:$0xff]
  %v207 = vld [vmem:[%s1 + $0x510] sm:$0xff]
  %v208 = vld [vmem:[%s1 + $0x518] sm:$0xff]
  %v209 = vld [vmem:[%s1 + $0x520] sm:$0xff]
  %v210 = vld [vmem:[%s1 + $0x528] sm:$0xff]
  %v211 = vld [vmem:[%s1 + $0x530] sm:$0xff]
  %v212 = vld [vmem:[%s1 + $0x538] sm:$0xff]
  %v213 = vld [vmem:[%s1 + $0x540] sm:$0xff]
  %v214 = vld [vmem:[%s1 + $0x548] sm:$0xff]
  %v215 = vld [vmem:[%s1 + $0x550] sm:$0xff]
  %v216 = vld [vmem:[%s1 + $0x558] sm:$0xff]
  %v217 = vld [vmem:[%s1 + $0x560] sm:$0xff]
  %v218 = vld [vmem:[%s1 + $0x568] sm:$0xff]
  %v219 = vld [vmem:[%s1 + $0x570] sm:$0xff]
  %v220 = vld [vmem:[%s1 + $0x578] sm:$0xff]
  %v221 = vld [vmem:[%s1 + $0x580] sm:$0xff]
  %v222 = vld [vmem:[%s1 + $0x588] sm:$0xff]
  %v223 = vld [vmem:[%s1 + $0x590] sm:$0xff]
  %v224 = vld [vmem:[%s1 + $0x598] sm:$0xff]
  %v225 = vld [vmem:[%s1 + $0x5a0] sm:$0xff]
  %v226 = vld [vmem:[%s1 + $0x5a8] sm:$0xff]
  %v227 = vld [vmem:[%s1 + $0x5b0] sm:$0xff]
  %v228 = vld [vmem:[%s1 + $0x5b8] sm:$0xff]
  %v229 = vld [vmem:[%s1 + $0x5c0] sm:$0xff]
  %v230 = vld [vmem:[%s1 + $0x5c8] sm:$0xff]
  %v231 = vld [vmem:[%s1 + $0x5d0] sm:$0xff]
  %v232 = vld [vmem:[%s1 + $0x5d8] sm:$0xff]
  %v233 = vld [vmem:[%s1 + $0x5e0] sm:$0xff]
  %v234 = vld [vmem:[%s1 + $0x5e8] sm:$0xff]
  %v235 = vld [vmem:[%s1 + $0x5f0] sm:$0xff]
  %v236 = vld [vmem:[%s1 + $0x5f8] sm:$0xff]
  %v237 = vld [vmem:[%s1 + $0x600] sm:$0xff]
  %v238 = vld [vmem:[%s1 + $0x608] sm:$0xff]
  %v239 = vld [vmem:[%s1 + $0x610] sm:$0xff]
  %v240 = vld [vmem:[%s1 + $0x618] sm:$0xff]
  %v241 = vld [vmem:[%s1 + $0x620] sm:$0xff]
  %v242 = vld [vmem:[%s1 + $0x628] sm:$0xff]
  %v243 = vld [vmem:[%s1 + $0x630] sm:$0xff]
  %v244 = vld [vmem:[%s1 + $0x638] sm:$0xff]
  %v245 = vld [vmem:[%s1 + $0x640] sm:$0xff]
  %v246 = vld [vmem:[%s1 + $0x648] sm:$0xff]
  %v247 = vld [vmem:[%s1 + $0x650] sm:$0xff]
  %v248 = vld [vmem:[%s1 + $0x658] sm:$0xff]
  %v249 = vld [vmem:[%s1 + $0x660] sm:$0xff]
  %v250 = vld [vmem:[%s1 + $0x668] sm:$0xff]
  %v251 = vld [vmem:[%s1 + $0x670] sm:$0xff]
  %v252 = vld [vmem:[%s1 + $0x678] sm:$0xff]
  %v253 = vld [vmem:[%s1 + $0x680] sm:$0xff]
  %v254 = vld [vmem:[%s1 + $0x688] sm:$0xff]
  %v255 = vld [vmem:[%s1 + $0x690] sm:$0xff]
  %v256 = vld [vmem:[%s1 + $0x698] sm:$0xff]
  %v257 = vld [vmem:[%s1 + $0x6a0] sm:$0xff]
  %v258 = vld [vmem:[%s1 + $0x6a8] sm:$0xff]
  %v259 = vld [vmem:[%s1 + $0x6b0] sm:$0xff]
  %v260 = vld [vmem:[%s1 + $0x6b8] sm:$0xff]
  %v261 = vld [vmem:[%s1 + $0x6c0] sm:$0xff]
  %v262 = vld [vmem:[%s1 + $0x6c8] sm:$0xff]
  %v263 = vld [vmem:[%s1 + $0x6d0] sm:$0xff]
  %v264 = vld [vmem:[%s1 + $0x6d8] sm:$0xff]
  %v265 = vld [vmem:[%s1 + $0x6e0] sm:$0xff]
  %v266 = vld [vmem:[%s1 + $0x6e8] sm:$0xff]
  %v267 = vld [vmem:[%s1 + $0x6f0] sm:$0xff]
  %v268 = vld [vmem:[%s1 + $0x6f8] sm:$0xff]
  %v269 = vld [vmem:[%s1 + $0x700] sm:$0xff]
  %v270 = vld [vmem:[%s1 + $0x708] sm:$0xff]
  %v271 = vld [vmem:[%s1 + $0x710] sm:$0xff]
  %v272 = vld [vmem:[%s1 + $0x718] sm:$0xff]
  %v273 = vld [vmem:[%s1 + $0x720] sm:$0xff]
  %v274 = vld [vmem:[%s1 + $0x728] sm:$0xff]
  %v275 = vld [vmem:[%s1 + $0x730] sm:$0xff]
  %v276 = vld [vmem:[%s1 + $0x738] sm:$0xff]
  %v277 = vld [vmem:[%s1 + $0x740] sm:$0xff]
  %v278 = vld [vmem:[%s1 + $0x748] sm:$0xff]
  %v279 = vld [vmem:[%s1 + $0x750] sm:$0xff]
  %v280 = vld [vmem:[%s1 + $0x758] sm:$0xff]
  %v281 = vld [vmem:[%s1 + $0x760] sm:$0xff]
  %v282 = vld [vmem:[%s1 + $0x768] sm:$0xff]
  %v283 = vld [vmem:[%s1 + $0x770] sm:$0xff]
  %v284 = vld [vmem:[%s1 + $0x778] sm:$0xff]
  %v285 = vld [vmem:[%s1 + $0x780] sm:$0xff]
  %v286 = vld [vmem:[%s1 + $0x788] sm:$0xff]
  %v287 = vld [vmem:[%s1 + $0x790] sm:$0xff]
  %v288 = vld [vmem:[%s1 + $0x798] sm:$0xff]
  %v289 = vld [vmem:[%s1 + $0x7a0] sm:$0xff]
  %v290 = vld [vmem:[%s1 + $0x7a8] sm:$0xff]
  %v291 = vld [vmem:[%s1 + $0x7b0] sm:$0xff]
  %v292 = vld [vmem:[%s1 + $0x7b8] sm:$0xff]
  %v293 = vld [vmem:[%s1 + $0x7c0] sm:$0xff]
  %v294 = vld [vmem:[%s1 + $0x7c8] sm:$0xff]
  %v295 = vld [vmem:[%s1 + $0x7d0] sm:$0xff]
  %v296 = vld [vmem:[%s1 + $0x7d8] sm:$0xff]
  %v297 = vld [vmem:[%s1 + $0x7e0] sm:$0xff]
  %v298 = vld [vmem:[%s1 + $0x7e8] sm:$0xff]
  %v299 = vld [vmem:[%s1 + $0x7f0] sm:$0xff]
  %v300 = vld [vmem:[%s1 + $0x7f8] sm:$0xff]
  %v301 = vld [vmem:[%s2] sm:$0x3]
  %v303 = vlaneseq
  %v304 = vshrl.u32 %v303, 7
  %v305 = vsub.s32 0, %v304
  %v306 = vrot.slane %v301, %v305
  %v307 = vlaneseq
  %v308 = vshrl.u32 %v307, 7
  %v309 = vsub.s32 1, %v308
  %v310 = vrot.slane %v301, %v309
  %v329 = vunpack.c.l.b16 %v29
  %v330 = vunpack.c.h.b16 %v29
  %v331 = vunpack.c.l.b16 %v30
  %v332 = vunpack.c.h.b16 %v30
  %v333 = vunpack.c.l.b16 %v31
  %v334 = vunpack.c.h.b16 %v31
  %v335 = vunpack.c.l.b16 %v32
  %v336 = vunpack.c.h.b16 %v32
  %v337 = vunpack.c.l.b16 %v33
  %v338 = vunpack.c.h.b16 %v33
  %v339 = vunpack.c.l.b16 %v34
  %v340 = vunpack.c.h.b16 %v34
  %v341 = vunpack.c.l.b16 %v35
  %v342 = vunpack.c.h.b16 %v35
  %v343 = vunpack.c.l.b16 %v36
  %v344 = vunpack.c.h.b16 %v36
  %v345 = vunpack.c.l.b16 %v37
  %v346 = vunpack.c.h.b16 %v37
  %v347 = vunpack.c.l.b16 %v38
  %v348 = vunpack.c.h.b16 %v38
  %v349 = vunpack.c.l.b16 %v39
  %v350 = vunpack.c.h.b16 %v39
  %v351 = vunpack.c.l.b16 %v40
  %v352 = vunpack.c.h.b16 %v40
  %v353 = vunpack.c.l.b16 %v41
  %v354 = vunpack.c.h.b16 %v41
  %v355 = vunpack.c.l.b16 %v42
  %v356 = vunpack.c.h.b16 %v42
  %v357 = vunpack.c.l.b16 %v43
  %v358 = vunpack.c.h.b16 %v43
  %v359 = vunpack.c.l.b16 %v44
  %v360 = vunpack.c.h.b16 %v44
  %v361 = vpack.c.b16 %v345, %v329
  %v362 = vpack.c.b16 %v346, %v330
  %v363 = vpack.c.b16 %v347, %v331
  %v364 = vpack.c.b16 %v348, %v332
  %v365 = vpack.c.b16 %v349, %v333
  %v366 = vpack.c.b16 %v350, %v334
  %v367 = vpack.c.b16 %v351, %v335
  %v368 = vpack.c.b16 %v352, %v336
  %v369 = vpack.c.b16 %v353, %v337
  %v370 = vpack.c.b16 %v354, %v338
  %v371 = vpack.c.b16 %v355, %v339
  %v372 = vpack.c.b16 %v356, %v340
  %v373 = vpack.c.b16 %v357, %v341
  %v374 = vpack.c.b16 %v358, %v342
  %v375 = vpack.c.b16 %v359, %v343
  %v376 = vpack.c.b16 %v360, %v344
  %v649 = vunpack.c.l.b16 %v45
  %v650 = vunpack.c.h.b16 %v45
  %v651 = vunpack.c.l.b16 %v46
  %v652 = vunpack.c.h.b16 %v46
  %v653 = vunpack.c.l.b16 %v47
  %v654 = vunpack.c.h.b16 %v47
  %v655 = vunpack.c.l.b16 %v48
  %v656 = vunpack.c.h.b16 %v48
  %v657 = vunpack.c.l.b16 %v49
  %v658 = vunpack.c.h.b16 %v49
  %v659 = vunpack.c.l.b16 %v50
  %v660 = vunpack.c.h.b16 %v50
  %v661 = vunpack.c.l.b16 %v51
  %v662 = vunpack.c.h.b16 %v51
  %v663 = vunpack.c.l.b16 %v52
  %v664 = vunpack.c.h.b16 %v52
  %v665 = vunpack.c.l.b16 %v53
  %v666 = vunpack.c.h.b16 %v53
  %v667 = vunpack.c.l.b16 %v54
  %v668 = vunpack.c.h.b16 %v54
  %v669 = vunpack.c.l.b16 %v55
  %v670 = vunpack.c.h.b16 %v55
  %v671 = vunpack.c.l.b16 %v56
  %v672 = vunpack.c.h.b16 %v56
  %v673 = vunpack.c.l.b16 %v57
  %v674 = vunpack.c.h.b16 %v57
  %v675 = vunpack.c.l.b16 %v58
  %v676 = vunpack.c.h.b16 %v58
  %v677 = vunpack.c.l.b16 %v59
  %v678 = vunpack.c.h.b16 %v59
  %v679 = vunpack.c.l.b16 %v60
  %v680 = vunpack.c.h.b16 %v60
  %v681 = vunpack.c.l.b16 %v61
  %v682 = vunpack.c.h.b16 %v61
  %v683 = vunpack.c.l.b16 %v62
  %v684 = vunpack.c.h.b16 %v62
  %v685 = vunpack.c.l.b16 %v63
  %v686 = vunpack.c.h.b16 %v63
  %v687 = vunpack.c.l.b16 %v64
  %v688 = vunpack.c.h.b16 %v64
  %v689 = vunpack.c.l.b16 %v65
  %v690 = vunpack.c.h.b16 %v65
  %v691 = vunpack.c.l.b16 %v66
  %v692 = vunpack.c.h.b16 %v66
  %v693 = vunpack.c.l.b16 %v67
  %v694 = vunpack.c.h.b16 %v67
  %v695 = vunpack.c.l.b16 %v68
  %v696 = vunpack.c.h.b16 %v68
  %v697 = vunpack.c.l.b16 %v69
  %v698 = vunpack.c.h.b16 %v69
  %v699 = vunpack.c.l.b16 %v70
  %v700 = vunpack.c.h.b16 %v70
  %v701 = vunpack.c.l.b16 %v71
  %v702 = vunpack.c.h.b16 %v71
  %v703 = vunpack.c.l.b16 %v72
  %v704 = vunpack.c.h.b16 %v72
  %v705 = vunpack.c.l.b16 %v73
  %v706 = vunpack.c.h.b16 %v73
  %v707 = vunpack.c.l.b16 %v74
  %v708 = vunpack.c.h.b16 %v74
  %v709 = vunpack.c.l.b16 %v75
  %v710 = vunpack.c.h.b16 %v75
  %v711 = vunpack.c.l.b16 %v76
  %v712 = vunpack.c.h.b16 %v76
  %v713 = vunpack.c.l.b16 %v77
  %v714 = vunpack.c.h.b16 %v77
  %v715 = vunpack.c.l.b16 %v78
  %v716 = vunpack.c.h.b16 %v78
  %v717 = vunpack.c.l.b16 %v79
  %v718 = vunpack.c.h.b16 %v79
  %v719 = vunpack.c.l.b16 %v80
  %v720 = vunpack.c.h.b16 %v80
  %v721 = vunpack.c.l.b16 %v81
  %v722 = vunpack.c.h.b16 %v81
  %v723 = vunpack.c.l.b16 %v82
  %v724 = vunpack.c.h.b16 %v82
  %v725 = vunpack.c.l.b16 %v83
  %v726 = vunpack.c.h.b16 %v83
  %v727 = vunpack.c.l.b16 %v84
  %v728 = vunpack.c.h.b16 %v84
  %v729 = vunpack.c.l.b16 %v85
  %v730 = vunpack.c.h.b16 %v85
  %v731 = vunpack.c.l.b16 %v86
  %v732 = vunpack.c.h.b16 %v86
  %v733 = vunpack.c.l.b16 %v87
  %v734 = vunpack.c.h.b16 %v87
  %v735 = vunpack.c.l.b16 %v88
  %v736 = vunpack.c.h.b16 %v88
  %v737 = vunpack.c.l.b16 %v89
  %v738 = vunpack.c.h.b16 %v89
  %v739 = vunpack.c.l.b16 %v90
  %v740 = vunpack.c.h.b16 %v90
  %v741 = vunpack.c.l.b16 %v91
  %v742 = vunpack.c.h.b16 %v91
  %v743 = vunpack.c.l.b16 %v92
  %v744 = vunpack.c.h.b16 %v92
  %v745 = vunpack.c.l.b16 %v93
  %v746 = vunpack.c.h.b16 %v93
  %v747 = vunpack.c.l.b16 %v94
  %v748 = vunpack.c.h.b16 %v94
  %v749 = vunpack.c.l.b16 %v95
  %v750 = vunpack.c.h.b16 %v95
  %v751 = vunpack.c.l.b16 %v96
  %v752 = vunpack.c.h.b16 %v96
  %v753 = vunpack.c.l.b16 %v97
  %v754 = vunpack.c.h.b16 %v97
  %v755 = vunpack.c.l.b16 %v98
  %v756 = vunpack.c.h.b16 %v98
  %v757 = vunpack.c.l.b16 %v99
  %v758 = vunpack.c.h.b16 %v99
  %v759 = vunpack.c.l.b16 %v100
  %v760 = vunpack.c.h.b16 %v100
  %v761 = vunpack.c.l.b16 %v101
  %v762 = vunpack.c.h.b16 %v101
  %v763 = vunpack.c.l.b16 %v102
  %v764 = vunpack.c.h.b16 %v102
  %v765 = vunpack.c.l.b16 %v103
  %v766 = vunpack.c.h.b16 %v103
  %v767 = vunpack.c.l.b16 %v104
  %v768 = vunpack.c.h.b16 %v104
  %v769 = vunpack.c.l.b16 %v105
  %v770 = vunpack.c.h.b16 %v105
  %v771 = vunpack.c.l.b16 %v106
  %v772 = vunpack.c.h.b16 %v106
  %v773 = vunpack.c.l.b16 %v107
  %v774 = vunpack.c.h.b16 %v107
  %v775 = vunpack.c.l.b16 %v108
  %v776 = vunpack.c.h.b16 %v108
  %v777 = vunpack.c.l.b16 %v109
  %v778 = vunpack.c.h.b16 %v109
  %v779 = vunpack.c.l.b16 %v110
  %v780 = vunpack.c.h.b16 %v110
  %v781 = vunpack.c.l.b16 %v111
  %v782 = vunpack.c.h.b16 %v111
  %v783 = vunpack.c.l.b16 %v112
  %v784 = vunpack.c.h.b16 %v112
  %v785 = vunpack.c.l.b16 %v113
  %v786 = vunpack.c.h.b16 %v113
  %v787 = vunpack.c.l.b16 %v114
  %v788 = vunpack.c.h.b16 %v114
  %v789 = vunpack.c.l.b16 %v115
  %v790 = vunpack.c.h.b16 %v115
  %v791 = vunpack.c.l.b16 %v116
  %v792 = vunpack.c.h.b16 %v116
  %v793 = vunpack.c.l.b16 %v117
  %v794 = vunpack.c.h.b16 %v117
  %v795 = vunpack.c.l.b16 %v118
  %v796 = vunpack.c.h.b16 %v118
  %v797 = vunpack.c.l.b16 %v119
  %v798 = vunpack.c.h.b16 %v119
  %v799 = vunpack.c.l.b16 %v120
  %v800 = vunpack.c.h.b16 %v120
  %v801 = vunpack.c.l.b16 %v121
  %v802 = vunpack.c.h.b16 %v121
  %v803 = vunpack.c.l.b16 %v122
  %v804 = vunpack.c.h.b16 %v122
  %v805 = vunpack.c.l.b16 %v123
  %v806 = vunpack.c.h.b16 %v123
  %v807 = vunpack.c.l.b16 %v124
  %v808 = vunpack.c.h.b16 %v124
  %v809 = vunpack.c.l.b16 %v125
  %v810 = vunpack.c.h.b16 %v125
  %v811 = vunpack.c.l.b16 %v126
  %v812 = vunpack.c.h.b16 %v126
  %v813 = vunpack.c.l.b16 %v127
  %v814 = vunpack.c.h.b16 %v127
  %v815 = vunpack.c.l.b16 %v128
  %v816 = vunpack.c.h.b16 %v128
  %v817 = vunpack.c.l.b16 %v129
  %v818 = vunpack.c.h.b16 %v129
  %v819 = vunpack.c.l.b16 %v130
  %v820 = vunpack.c.h.b16 %v130
  %v821 = vunpack.c.l.b16 %v131
  %v822 = vunpack.c.h.b16 %v131
  %v823 = vunpack.c.l.b16 %v132
  %v824 = vunpack.c.h.b16 %v132
  %v825 = vunpack.c.l.b16 %v133
  %v826 = vunpack.c.h.b16 %v133
  %v827 = vunpack.c.l.b16 %v134
  %v828 = vunpack.c.h.b16 %v134
  %v829 = vunpack.c.l.b16 %v135
  %v830 = vunpack.c.h.b16 %v135
  %v831 = vunpack.c.l.b16 %v136
  %v832 = vunpack.c.h.b16 %v136
  %v833 = vunpack.c.l.b16 %v137
  %v834 = vunpack.c.h.b16 %v137
  %v835 = vunpack.c.l.b16 %v138
  %v836 = vunpack.c.h.b16 %v138
  %v837 = vunpack.c.l.b16 %v139
  %v838 = vunpack.c.h.b16 %v139
  %v839 = vunpack.c.l.b16 %v140
  %v840 = vunpack.c.h.b16 %v140
  %v841 = vunpack.c.l.b16 %v141
  %v842 = vunpack.c.h.b16 %v141
  %v843 = vunpack.c.l.b16 %v142
  %v844 = vunpack.c.h.b16 %v142
  %v845 = vunpack.c.l.b16 %v143
  %v846 = vunpack.c.h.b16 %v143
  %v847 = vunpack.c.l.b16 %v144
  %v848 = vunpack.c.h.b16 %v144
  %v849 = vunpack.c.l.b16 %v145
  %v850 = vunpack.c.h.b16 %v145
  %v851 = vunpack.c.l.b16 %v146
  %v852 = vunpack.c.h.b16 %v146
  %v853 = vunpack.c.l.b16 %v147
  %v854 = vunpack.c.h.b16 %v147
  %v855 = vunpack.c.l.b16 %v148
  %v856 = vunpack.c.h.b16 %v148
  %v857 = vunpack.c.l.b16 %v149
  %v858 = vunpack.c.h.b16 %v149
  %v859 = vunpack.c.l.b16 %v150
  %v860 = vunpack.c.h.b16 %v150
  %v861 = vunpack.c.l.b16 %v151
  %v862 = vunpack.c.h.b16 %v151
  %v863 = vunpack.c.l.b16 %v152
  %v864 = vunpack.c.h.b16 %v152
  %v865 = vunpack.c.l.b16 %v153
  %v866 = vunpack.c.h.b16 %v153
  %v867 = vunpack.c.l.b16 %v154
  %v868 = vunpack.c.h.b16 %v154
  %v869 = vunpack.c.l.b16 %v155
  %v870 = vunpack.c.h.b16 %v155
  %v871 = vunpack.c.l.b16 %v156
  %v872 = vunpack.c.h.b16 %v156
  %v873 = vunpack.c.l.b16 %v157
  %v874 = vunpack.c.h.b16 %v157
  %v875 = vunpack.c.l.b16 %v158
  %v876 = vunpack.c.h.b16 %v158
  %v877 = vunpack.c.l.b16 %v159
  %v878 = vunpack.c.h.b16 %v159
  %v879 = vunpack.c.l.b16 %v160
  %v880 = vunpack.c.h.b16 %v160
  %v881 = vunpack.c.l.b16 %v161
  %v882 = vunpack.c.h.b16 %v161
  %v883 = vunpack.c.l.b16 %v162
  %v884 = vunpack.c.h.b16 %v162
  %v885 = vunpack.c.l.b16 %v163
  %v886 = vunpack.c.h.b16 %v163
  %v887 = vunpack.c.l.b16 %v164
  %v888 = vunpack.c.h.b16 %v164
  %v889 = vunpack.c.l.b16 %v165
  %v890 = vunpack.c.h.b16 %v165
  %v891 = vunpack.c.l.b16 %v166
  %v892 = vunpack.c.h.b16 %v166
  %v893 = vunpack.c.l.b16 %v167
  %v894 = vunpack.c.h.b16 %v167
  %v895 = vunpack.c.l.b16 %v168
  %v896 = vunpack.c.h.b16 %v168
  %v897 = vunpack.c.l.b16 %v169
  %v898 = vunpack.c.h.b16 %v169
  %v899 = vunpack.c.l.b16 %v170
  %v900 = vunpack.c.h.b16 %v170
  %v901 = vunpack.c.l.b16 %v171
  %v902 = vunpack.c.h.b16 %v171
  %v903 = vunpack.c.l.b16 %v172
  %v904 = vunpack.c.h.b16 %v172
  %v905 = vunpack.c.l.b16 %v173
  %v906 = vunpack.c.h.b16 %v173
  %v907 = vunpack.c.l.b16 %v174
  %v908 = vunpack.c.h.b16 %v174
  %v909 = vunpack.c.l.b16 %v175
  %v910 = vunpack.c.h.b16 %v175
  %v911 = vunpack.c.l.b16 %v176
  %v912 = vunpack.c.h.b16 %v176
  %v913 = vunpack.c.l.b16 %v177
  %v914 = vunpack.c.h.b16 %v177
  %v915 = vunpack.c.l.b16 %v178
  %v916 = vunpack.c.h.b16 %v178
  %v917 = vunpack.c.l.b16 %v179
  %v918 = vunpack.c.h.b16 %v179
  %v919 = vunpack.c.l.b16 %v180
  %v920 = vunpack.c.h.b16 %v180
  %v921 = vunpack.c.l.b16 %v181
  %v922 = vunpack.c.h.b16 %v181
  %v923 = vunpack.c.l.b16 %v182
  %v924 = vunpack.c.h.b16 %v182
  %v925 = vunpack.c.l.b16 %v183
  %v926 = vunpack.c.h.b16 %v183
  %v927 = vunpack.c.l.b16 %v184
  %v928 = vunpack.c.h.b16 %v184
  %v929 = vunpack.c.l.b16 %v185
  %v930 = vunpack.c.h.b16 %v185
  %v931 = vunpack.c.l.b16 %v186
  %v932 = vunpack.c.h.b16 %v186
  %v933 = vunpack.c.l.b16 %v187
  %v934 = vunpack.c.h.b16 %v187
  %v935 = vunpack.c.l.b16 %v188
  %v936 = vunpack.c.h.b16 %v188
  %v937 = vunpack.c.l.b16 %v189
  %v938 = vunpack.c.h.b16 %v189
  %v939 = vunpack.c.l.b16 %v190
  %v940 = vunpack.c.h.b16 %v190
  %v941 = vunpack.c.l.b16 %v191
  %v942 = vunpack.c.h.b16 %v191
  %v943 = vunpack.c.l.b16 %v192
  %v944 = vunpack.c.h.b16 %v192
  %v945 = vunpack.c.l.b16 %v193
  %v946 = vunpack.c.h.b16 %v193
  %v947 = vunpack.c.l.b16 %v194
  %v948 = vunpack.c.h.b16 %v194
  %v949 = vunpack.c.l.b16 %v195
  %v950 = vunpack.c.h.b16 %v195
  %v951 = vunpack.c.l.b16 %v196
  %v952 = vunpack.c.h.b16 %v196
  %v953 = vunpack.c.l.b16 %v197
  %v954 = vunpack.c.h.b16 %v197
  %v955 = vunpack.c.l.b16 %v198
  %v956 = vunpack.c.h.b16 %v198
  %v957 = vunpack.c.l.b16 %v199
  %v958 = vunpack.c.h.b16 %v199
  %v959 = vunpack.c.l.b16 %v200
  %v960 = vunpack.c.h.b16 %v200
  %v961 = vunpack.c.l.b16 %v201
  %v962 = vunpack.c.h.b16 %v201
  %v963 = vunpack.c.l.b16 %v202
  %v964 = vunpack.c.h.b16 %v202
  %v965 = vunpack.c.l.b16 %v203
  %v966 = vunpack.c.h.b16 %v203
  %v967 = vunpack.c.l.b16 %v204
  %v968 = vunpack.c.h.b16 %v204
  %v969 = vunpack.c.l.b16 %v205
  %v970 = vunpack.c.h.b16 %v205
  %v971 = vunpack.c.l.b16 %v206
  %v972 = vunpack.c.h.b16 %v206
  %v973 = vunpack.c.l.b16 %v207
  %v974 = vunpack.c.h.b16 %v207
  %v975 = vunpack.c.l.b16 %v208
  %v976 = vunpack.c.h.b16 %v208
  %v977 = vunpack.c.l.b16 %v209
  %v978 = vunpack.c.h.b16 %v209
  %v979 = vunpack.c.l.b16 %v210
  %v980 = vunpack.c.h.b16 %v210
  %v981 = vunpack.c.l.b16 %v211
  %v982 = vunpack.c.h.b16 %v211
  %v983 = vunpack.c.l.b16 %v212
  %v984 = vunpack.c.h.b16 %v212
  %v985 = vunpack.c.l.b16 %v213
  %v986 = vunpack.c.h.b16 %v213
  %v987 = vunpack.c.l.b16 %v214
  %v988 = vunpack.c.h.b16 %v214
  %v989 = vunpack.c.l.b16 %v215
  %v990 = vunpack.c.h.b16 %v215
  %v991 = vunpack.c.l.b16 %v216
  %v992 = vunpack.c.h.b16 %v216
  %v993 = vunpack.c.l.b16 %v217
  %v994 = vunpack.c.h.b16 %v217
  %v995 = vunpack.c.l.b16 %v218
  %v996 = vunpack.c.h.b16 %v218
  %v997 = vunpack.c.l.b16 %v219
  %v998 = vunpack.c.h.b16 %v219
  %v999 = vunpack.c.l.b16 %v220
  %v1000 = vunpack.c.h.b16 %v220
  %v1001 = vunpack.c.l.b16 %v221
  %v1002 = vunpack.c.h.b16 %v221
  %v1003 = vunpack.c.l.b16 %v222
  %v1004 = vunpack.c.h.b16 %v222
  %v1005 = vunpack.c.l.b16 %v223
  %v1006 = vunpack.c.h.b16 %v223
  %v1007 = vunpack.c.l.b16 %v224
  %v1008 = vunpack.c.h.b16 %v224
  %v1009 = vunpack.c.l.b16 %v225
  %v1010 = vunpack.c.h.b16 %v225
  %v1011 = vunpack.c.l.b16 %v226
  %v1012 = vunpack.c.h.b16 %v226
  %v1013 = vunpack.c.l.b16 %v227
  %v1014 = vunpack.c.h.b16 %v227
  %v1015 = vunpack.c.l.b16 %v228
  %v1016 = vunpack.c.h.b16 %v228
  %v1017 = vunpack.c.l.b16 %v229
  %v1018 = vunpack.c.h.b16 %v229
  %v1019 = vunpack.c.l.b16 %v230
  %v1020 = vunpack.c.h.b16 %v230
  %v1021 = vunpack.c.l.b16 %v231
  %v1022 = vunpack.c.h.b16 %v231
  %v1023 = vunpack.c.l.b16 %v232
  %v1024 = vunpack.c.h.b16 %v232
  %v1025 = vunpack.c.l.b16 %v233
  %v1026 = vunpack.c.h.b16 %v233
  %v1027 = vunpack.c.l.b16 %v234
  %v1028 = vunpack.c.h.b16 %v234
  %v1029 = vunpack.c.l.b16 %v235
  %v1030 = vunpack.c.h.b16 %v235
  %v1031 = vunpack.c.l.b16 %v236
  %v1032 = vunpack.c.h.b16 %v236
  %v1033 = vunpack.c.l.b16 %v237
  %v1034 = vunpack.c.h.b16 %v237
  %v1035 = vunpack.c.l.b16 %v238
  %v1036 = vunpack.c.h.b16 %v238
  %v1037 = vunpack.c.l.b16 %v239
  %v1038 = vunpack.c.h.b16 %v239
  %v1039 = vunpack.c.l.b16 %v240
  %v1040 = vunpack.c.h.b16 %v240
  %v1041 = vunpack.c.l.b16 %v241
  %v1042 = vunpack.c.h.b16 %v241
  %v1043 = vunpack.c.l.b16 %v242
  %v1044 = vunpack.c.h.b16 %v242
  %v1045 = vunpack.c.l.b16 %v243
  %v1046 = vunpack.c.h.b16 %v243
  %v1047 = vunpack.c.l.b16 %v244
  %v1048 = vunpack.c.h.b16 %v244
  %v1049 = vunpack.c.l.b16 %v245
  %v1050 = vunpack.c.h.b16 %v245
  %v1051 = vunpack.c.l.b16 %v246
  %v1052 = vunpack.c.h.b16 %v246
  %v1053 = vunpack.c.l.b16 %v247
  %v1054 = vunpack.c.h.b16 %v247
  %v1055 = vunpack.c.l.b16 %v248
  %v1056 = vunpack.c.h.b16 %v248
  %v1057 = vunpack.c.l.b16 %v249
  %v1058 = vunpack.c.h.b16 %v249
  %v1059 = vunpack.c.l.b16 %v250
  %v1060 = vunpack.c.h.b16 %v250
  %v1061 = vunpack.c.l.b16 %v251
  %v1062 = vunpack.c.h.b16 %v251
  %v1063 = vunpack.c.l.b16 %v252
  %v1064 = vunpack.c.h.b16 %v252
  %v1065 = vunpack.c.l.b16 %v253
  %v1066 = vunpack.c.h.b16 %v253
  %v1067 = vunpack.c.l.b16 %v254
  %v1068 = vunpack.c.h.b16 %v254
  %v1069 = vunpack.c.l.b16 %v255
  %v1070 = vunpack.c.h.b16 %v255
  %v1071 = vunpack.c.l.b16 %v256
  %v1072 = vunpack.c.h.b16 %v256
  %v1073 = vunpack.c.l.b16 %v257
  %v1074 = vunpack.c.h.b16 %v257
  %v1075 = vunpack.c.l.b16 %v258
  %v1076 = vunpack.c.h.b16 %v258
  %v1077 = vunpack.c.l.b16 %v259
  %v1078 = vunpack.c.h.b16 %v259
  %v1079 = vunpack.c.l.b16 %v260
  %v1080 = vunpack.c.h.b16 %v260
  %v1081 = vunpack.c.l.b16 %v261
  %v1082 = vunpack.c.h.b16 %v261
  %v1083 = vunpack.c.l.b16 %v262
  %v1084 = vunpack.c.h.b16 %v262
  %v1085 = vunpack.c.l.b16 %v263
  %v1086 = vunpack.c.h.b16 %v263
  %v1087 = vunpack.c.l.b16 %v264
  %v1088 = vunpack.c.h.b16 %v264
  %v1089 = vunpack.c.l.b16 %v265
  %v1090 = vunpack.c.h.b16 %v265
  %v1091 = vunpack.c.l.b16 %v266
  %v1092 = vunpack.c.h.b16 %v266
  %v1093 = vunpack.c.l.b16 %v267
  %v1094 = vunpack.c.h.b16 %v267
  %v1095 = vunpack.c.l.b16 %v268
  %v1096 = vunpack.c.h.b16 %v268
  %v1097 = vunpack.c.l.b16 %v269
  %v1098 = vunpack.c.h.b16 %v269
  %v1099 = vunpack.c.l.b16 %v270
  %v1100 = vunpack.c.h.b16 %v270
  %v1101 = vunpack.c.l.b16 %v271
  %v1102 = vunpack.c.h.b16 %v271
  %v1103 = vunpack.c.l.b16 %v272
  %v1104 = vunpack.c.h.b16 %v272
  %v1105 = vunpack.c.l.b16 %v273
  %v1106 = vunpack.c.h.b16 %v273
  %v1107 = vunpack.c.l.b16 %v274
  %v1108 = vunpack.c.h.b16 %v274
  %v1109 = vunpack.c.l.b16 %v275
  %v1110 = vunpack.c.h.b16 %v275
  %v1111 = vunpack.c.l.b16 %v276
  %v1112 = vunpack.c.h.b16 %v276
  %v1113 = vunpack.c.l.b16 %v277
  %v1114 = vunpack.c.h.b16 %v277
  %v1115 = vunpack.c.l.b16 %v278
  %v1116 = vunpack.c.h.b16 %v278
  %v1117 = vunpack.c.l.b16 %v279
  %v1118 = vunpack.c.h.b16 %v279
  %v1119 = vunpack.c.l.b16 %v280
  %v1120 = vunpack.c.h.b16 %v280
  %v1121 = vunpack.c.l.b16 %v281
  %v1122 = vunpack.c.h.b16 %v281
  %v1123 = vunpack.c.l.b16 %v282
  %v1124 = vunpack.c.h.b16 %v282
  %v1125 = vunpack.c.l.b16 %v283
  %v1126 = vunpack.c.h.b16 %v283
  %v1127 = vunpack.c.l.b16 %v284
  %v1128 = vunpack.c.h.b16 %v284
  %v1129 = vunpack.c.l.b16 %v285
  %v1130 = vunpack.c.h.b16 %v285
  %v1131 = vunpack.c.l.b16 %v286
  %v1132 = vunpack.c.h.b16 %v286
  %v1133 = vunpack.c.l.b16 %v287
  %v1134 = vunpack.c.h.b16 %v287
  %v1135 = vunpack.c.l.b16 %v288
  %v1136 = vunpack.c.h.b16 %v288
  %v1137 = vunpack.c.l.b16 %v289
  %v1138 = vunpack.c.h.b16 %v289
  %v1139 = vunpack.c.l.b16 %v290
  %v1140 = vunpack.c.h.b16 %v290
  %v1141 = vunpack.c.l.b16 %v291
  %v1142 = vunpack.c.h.b16 %v291
  %v1143 = vunpack.c.l.b16 %v292
  %v1144 = vunpack.c.h.b16 %v292
  %v1145 = vunpack.c.l.b16 %v293
  %v1146 = vunpack.c.h.b16 %v293
  %v1147 = vunpack.c.l.b16 %v294
  %v1148 = vunpack.c.h.b16 %v294
  %v1149 = vunpack.c.l.b16 %v295
  %v1150 = vunpack.c.h.b16 %v295
  %v1151 = vunpack.c.l.b16 %v296
  %v1152 = vunpack.c.h.b16 %v296
  %v1153 = vunpack.c.l.b16 %v297
  %v1154 = vunpack.c.h.b16 %v297
  %v1155 = vunpack.c.l.b16 %v298
  %v1156 = vunpack.c.h.b16 %v298
  %v1157 = vunpack.c.l.b16 %v299
  %v1158 = vunpack.c.h.b16 %v299
  %v1159 = vunpack.c.l.b16 %v300
  %v1160 = vunpack.c.h.b16 %v300
  %v1161 = vpack.c.b16 %v651, %v649
  %v1162 = vpack.c.b16 %v652, %v650
  %v1163 = vpack.c.b16 %v655, %v653
  %v1164 = vpack.c.b16 %v656, %v654
  %v1165 = vpack.c.b16 %v659, %v657
  %v1166 = vpack.c.b16 %v660, %v658
  %v1167 = vpack.c.b16 %v663, %v661
  %v1168 = vpack.c.b16 %v664, %v662
  %v1169 = vpack.c.b16 %v667, %v665
  %v1170 = vpack.c.b16 %v668, %v666
  %v1171 = vpack.c.b16 %v671, %v669
  %v1172 = vpack.c.b16 %v672, %v670
  %v1173 = vpack.c.b16 %v675, %v673
  %v1174 = vpack.c.b16 %v676, %v674
  %v1175 = vpack.c.b16 %v679, %v677
  %v1176 = vpack.c.b16 %v680, %v678
  %v1177 = vpack.c.b16 %v683, %v681
  %v1178 = vpack.c.b16 %v684, %v682
  %v1179 = vpack.c.b16 %v687, %v685
  %v1180 = vpack.c.b16 %v688, %v686
  %v1181 = vpack.c.b16 %v691, %v689
  %v1182 = vpack.c.b16 %v692, %v690
  %v1183 = vpack.c.b16 %v695, %v693
  %v1184 = vpack.c.b16 %v696, %v694
  %v1185 = vpack.c.b16 %v699, %v697
  %v1186 = vpack.c.b16 %v700, %v698
  %v1187 = vpack.c.b16 %v703, %v701
  %v1188 = vpack.c.b16 %v704, %v702
  %v1189 = vpack.c.b16 %v707, %v705
  %v1190 = vpack.c.b16 %v708, %v706
  %v1191 = vpack.c.b16 %v711, %v709
  %v1192 = vpack.c.b16 %v712, %v710
  %v1193 = vpack.c.b16 %v715, %v713
  %v1194 = vpack.c.b16 %v716, %v714
  %v1195 = vpack.c.b16 %v719, %v717
  %v1196 = vpack.c.b16 %v720, %v718
  %v1197 = vpack.c.b16 %v723, %v721
  %v1198 = vpack.c.b16 %v724, %v722
  %v1199 = vpack.c.b16 %v727, %v725
  %v1200 = vpack.c.b16 %v728, %v726
  %v1201 = vpack.c.b16 %v731, %v729
  %v1202 = vpack.c.b16 %v732, %v730
  %v1203 = vpack.c.b16 %v735, %v733
  %v1204 = vpack.c.b16 %v736, %v734
  %v1205 = vpack.c.b16 %v739, %v737
  %v1206 = vpack.c.b16 %v740, %v738
  %v1207 = vpack.c.b16 %v743, %v741
  %v1208 = vpack.c.b16 %v744, %v742
  %v1209 = vpack.c.b16 %v747, %v745
  %v1210 = vpack.c.b16 %v748, %v746
  %v1211 = vpack.c.b16 %v751, %v749
  %v1212 = vpack.c.b16 %v752, %v750
  %v1213 = vpack.c.b16 %v755, %v753
  %v1214 = vpack.c.b16 %v756, %v754
  %v1215 = vpack.c.b16 %v759, %v757
  %v1216 = vpack.c.b16 %v760, %v758
  %v1217 = vpack.c.b16 %v763, %v761
  %v1218 = vpack.c.b16 %v764, %v762
  %v1219 = vpack.c.b16 %v767, %v765
  %v1220 = vpack.c.b16 %v768, %v766
  %v1221 = vpack.c.b16 %v771, %v769
  %v1222 = vpack.c.b16 %v772, %v770
  %v1223 = vpack.c.b16 %v775, %v773
  %v1224 = vpack.c.b16 %v776, %v774
  %v1225 = vpack.c.b16 %v779, %v777
  %v1226 = vpack.c.b16 %v780, %v778
  %v1227 = vpack.c.b16 %v783, %v781
  %v1228 = vpack.c.b16 %v784, %v782
  %v1229 = vpack.c.b16 %v787, %v785
  %v1230 = vpack.c.b16 %v788, %v786
  %v1231 = vpack.c.b16 %v791, %v789
  %v1232 = vpack.c.b16 %v792, %v790
  %v1233 = vpack.c.b16 %v795, %v793
  %v1234 = vpack.c.b16 %v796, %v794
  %v1235 = vpack.c.b16 %v799, %v797
  %v1236 = vpack.c.b16 %v800, %v798
  %v1237 = vpack.c.b16 %v803, %v801
  %v1238 = vpack.c.b16 %v804, %v802
  %v1239 = vpack.c.b16 %v807, %v805
  %v1240 = vpack.c.b16 %v808, %v806
  %v1241 = vpack.c.b16 %v811, %v809
  %v1242 = vpack.c.b16 %v812, %v810
  %v1243 = vpack.c.b16 %v815, %v813
  %v1244 = vpack.c.b16 %v816, %v814
  %v1245 = vpack.c.b16 %v819, %v817
  %v1246 = vpack.c.b16 %v820, %v818
  %v1247 = vpack.c.b16 %v823, %v821
  %v1248 = vpack.c.b16 %v824, %v822
  %v1249 = vpack.c.b16 %v827, %v825
  %v1250 = vpack.c.b16 %v828, %v826
  %v1251 = vpack.c.b16 %v831, %v829
  %v1252 = vpack.c.b16 %v832, %v830
  %v1253 = vpack.c.b16 %v835, %v833
  %v1254 = vpack.c.b16 %v836, %v834
  %v1255 = vpack.c.b16 %v839, %v837
  %v1256 = vpack.c.b16 %v840, %v838
  %v1257 = vpack.c.b16 %v843, %v841
  %v1258 = vpack.c.b16 %v844, %v842
  %v1259 = vpack.c.b16 %v847, %v845
  %v1260 = vpack.c.b16 %v848, %v846
  %v1261 = vpack.c.b16 %v851, %v849
  %v1262 = vpack.c.b16 %v852, %v850
  %v1263 = vpack.c.b16 %v855, %v853
  %v1264 = vpack.c.b16 %v856, %v854
  %v1265 = vpack.c.b16 %v859, %v857
  %v1266 = vpack.c.b16 %v860, %v858
  %v1267 = vpack.c.b16 %v863, %v861
  %v1268 = vpack.c.b16 %v864, %v862
  %v1269 = vpack.c.b16 %v867, %v865
  %v1270 = vpack.c.b16 %v868, %v866
  %v1271 = vpack.c.b16 %v871, %v869
  %v1272 = vpack.c.b16 %v872, %v870
  %v1273 = vpack.c.b16 %v875, %v873
  %v1274 = vpack.c.b16 %v876, %v874
  %v1275 = vpack.c.b16 %v879, %v877
  %v1276 = vpack.c.b16 %v880, %v878
  %v1277 = vpack.c.b16 %v883, %v881
  %v1278 = vpack.c.b16 %v884, %v882
  %v1279 = vpack.c.b16 %v887, %v885
  %v1280 = vpack.c.b16 %v888, %v886
  %v1281 = vpack.c.b16 %v891, %v889
  %v1282 = vpack.c.b16 %v892, %v890
  %v1283 = vpack.c.b16 %v895, %v893
  %v1284 = vpack.c.b16 %v896, %v894
  %v1285 = vpack.c.b16 %v899, %v897
  %v1286 = vpack.c.b16 %v900, %v898
  %v1287 = vpack.c.b16 %v903, %v901
  %v1288 = vpack.c.b16 %v904, %v902
  %v1289 = vpack.c.b16 %v907, %v905
  %v1290 = vpack.c.b16 %v908, %v906
  %v1291 = vpack.c.b16 %v911, %v909
  %v1292 = vpack.c.b16 %v912, %v910
  %v1293 = vpack.c.b16 %v915, %v913
  %v1294 = vpack.c.b16 %v916, %v914
  %v1295 = vpack.c.b16 %v919, %v917
  %v1296 = vpack.c.b16 %v920, %v918
  %v1297 = vpack.c.b16 %v923, %v921
  %v1298 = vpack.c.b16 %v924, %v922
  %v1299 = vpack.c.b16 %v927, %v925
  %v1300 = vpack.c.b16 %v928, %v926
  %v1301 = vpack.c.b16 %v931, %v929
  %v1302 = vpack.c.b16 %v932, %v930
  %v1303 = vpack.c.b16 %v935, %v933
  %v1304 = vpack.c.b16 %v936, %v934
  %v1305 = vpack.c.b16 %v939, %v937
  %v1306 = vpack.c.b16 %v940, %v938
  %v1307 = vpack.c.b16 %v943, %v941
  %v1308 = vpack.c.b16 %v944, %v942
  %v1309 = vpack.c.b16 %v947, %v945
  %v1310 = vpack.c.b16 %v948, %v946
  %v1311 = vpack.c.b16 %v951, %v949
  %v1312 = vpack.c.b16 %v952, %v950
  %v1313 = vpack.c.b16 %v955, %v953
  %v1314 = vpack.c.b16 %v956, %v954
  %v1315 = vpack.c.b16 %v959, %v957
  %v1316 = vpack.c.b16 %v960, %v958
  %v1317 = vpack.c.b16 %v963, %v961
  %v1318 = vpack.c.b16 %v964, %v962
  %v1319 = vpack.c.b16 %v967, %v965
  %v1320 = vpack.c.b16 %v968, %v966
  %v1321 = vpack.c.b16 %v971, %v969
  %v1322 = vpack.c.b16 %v972, %v970
  %v1323 = vpack.c.b16 %v975, %v973
  %v1324 = vpack.c.b16 %v976, %v974
  %v1325 = vpack.c.b16 %v979, %v977
  %v1326 = vpack.c.b16 %v980, %v978
  %v1327 = vpack.c.b16 %v983, %v981
  %v1328 = vpack.c.b16 %v984, %v982
  %v1329 = vpack.c.b16 %v987, %v985
  %v1330 = vpack.c.b16 %v988, %v986
  %v1331 = vpack.c.b16 %v991, %v989
  %v1332 = vpack.c.b16 %v992, %v990
  %v1333 = vpack.c.b16 %v995, %v993
  %v1334 = vpack.c.b16 %v996, %v994
  %v1335 = vpack.c.b16 %v999, %v997
  %v1336 = vpack.c.b16 %v1000, %v998
  %v1337 = vpack.c.b16 %v1003, %v1001
  %v1338 = vpack.c.b16 %v1004, %v1002
  %v1339 = vpack.c.b16 %v1007, %v1005
  %v1340 = vpack.c.b16 %v1008, %v1006
  %v1341 = vpack.c.b16 %v1011, %v1009
  %v1342 = vpack.c.b16 %v1012, %v1010
  %v1343 = vpack.c.b16 %v1015, %v1013
  %v1344 = vpack.c.b16 %v1016, %v1014
  %v1345 = vpack.c.b16 %v1019, %v1017
  %v1346 = vpack.c.b16 %v1020, %v1018
  %v1347 = vpack.c.b16 %v1023, %v1021
  %v1348 = vpack.c.b16 %v1024, %v1022
  %v1349 = vpack.c.b16 %v1027, %v1025
  %v1350 = vpack.c.b16 %v1028, %v1026
  %v1351 = vpack.c.b16 %v1031, %v1029
  %v1352 = vpack.c.b16 %v1032, %v1030
  %v1353 = vpack.c.b16 %v1035, %v1033
  %v1354 = vpack.c.b16 %v1036, %v1034
  %v1355 = vpack.c.b16 %v1039, %v1037
  %v1356 = vpack.c.b16 %v1040, %v1038
  %v1357 = vpack.c.b16 %v1043, %v1041
  %v1358 = vpack.c.b16 %v1044, %v1042
  %v1359 = vpack.c.b16 %v1047, %v1045
  %v1360 = vpack.c.b16 %v1048, %v1046
  %v1361 = vpack.c.b16 %v1051, %v1049
  %v1362 = vpack.c.b16 %v1052, %v1050
  %v1363 = vpack.c.b16 %v1055, %v1053
  %v1364 = vpack.c.b16 %v1056, %v1054
  %v1365 = vpack.c.b16 %v1059, %v1057
  %v1366 = vpack.c.b16 %v1060, %v1058
  %v1367 = vpack.c.b16 %v1063, %v1061
  %v1368 = vpack.c.b16 %v1064, %v1062
  %v1369 = vpack.c.b16 %v1067, %v1065
  %v1370 = vpack.c.b16 %v1068, %v1066
  %v1371 = vpack.c.b16 %v1071, %v1069
  %v1372 = vpack.c.b16 %v1072, %v1070
  %v1373 = vpack.c.b16 %v1075, %v1073
  %v1374 = vpack.c.b16 %v1076, %v1074
  %v1375 = vpack.c.b16 %v1079, %v1077
  %v1376 = vpack.c.b16 %v1080, %v1078
  %v1377 = vpack.c.b16 %v1083, %v1081
  %v1378 = vpack.c.b16 %v1084, %v1082
  %v1379 = vpack.c.b16 %v1087, %v1085
  %v1380 = vpack.c.b16 %v1088, %v1086
  %v1381 = vpack.c.b16 %v1091, %v1089
  %v1382 = vpack.c.b16 %v1092, %v1090
  %v1383 = vpack.c.b16 %v1095, %v1093
  %v1384 = vpack.c.b16 %v1096, %v1094
  %v1385 = vpack.c.b16 %v1099, %v1097
  %v1386 = vpack.c.b16 %v1100, %v1098
  %v1387 = vpack.c.b16 %v1103, %v1101
  %v1388 = vpack.c.b16 %v1104, %v1102
  %v1389 = vpack.c.b16 %v1107, %v1105
  %v1390 = vpack.c.b16 %v1108, %v1106
  %v1391 = vpack.c.b16 %v1111, %v1109
  %v1392 = vpack.c.b16 %v1112, %v1110
  %v1393 = vpack.c.b16 %v1115, %v1113
  %v1394 = vpack.c.b16 %v1116, %v1114
  %v1395 = vpack.c.b16 %v1119, %v1117
  %v1396 = vpack.c.b16 %v1120, %v1118
  %v1397 = vpack.c.b16 %v1123, %v1121
  %v1398 = vpack.c.b16 %v1124, %v1122
  %v1399 = vpack.c.b16 %v1127, %v1125
  %v1400 = vpack.c.b16 %v1128, %v1126
  %v1401 = vpack.c.b16 %v1131, %v1129
  %v1402 = vpack.c.b16 %v1132, %v1130
  %v1403 = vpack.c.b16 %v1135, %v1133
  %v1404 = vpack.c.b16 %v1136, %v1134
  %v1405 = vpack.c.b16 %v1139, %v1137
  %v1406 = vpack.c.b16 %v1140, %v1138
  %v1407 = vpack.c.b16 %v1143, %v1141
  %v1408 = vpack.c.b16 %v1144, %v1142
  %v1409 = vpack.c.b16 %v1147, %v1145
  %v1410 = vpack.c.b16 %v1148, %v1146
  %v1411 = vpack.c.b16 %v1151, %v1149
  %v1412 = vpack.c.b16 %v1152, %v1150
  %v1413 = vpack.c.b16 %v1155, %v1153
  %v1414 = vpack.c.b16 %v1156, %v1154
  %v1415 = vpack.c.b16 %v1159, %v1157
  %v1416 = vpack.c.b16 %v1160, %v1158
  %1673 = vmatprep.subr.bf16.mxu0 %v1162
  %1674 = vmatpush1.bf16.msra.mxu0 %v1161
  %1675 = vmatprep.subr.bf16.mxu0 %v1164
  %1676 = vmatpush1.bf16.msra.mxu0 %v1163
  %1677 = vmatprep.subr.bf16.mxu0 %v1166
  %1678 = vmatpush1.bf16.msra.mxu0 %v1165
  %1679 = vmatprep.subr.bf16.mxu0 %v1168
  %1680 = vmatpush1.bf16.msra.mxu0 %v1167
  %1681 = vmatprep.subr.bf16.mxu0 %v1170
  %1682 = vmatpush1.bf16.msra.mxu0 %v1169
  %1683 = vmatprep.subr.bf16.mxu0 %v1172
  %1684 = vmatpush1.bf16.msra.mxu0 %v1171
  %1685 = vmatprep.subr.bf16.mxu0 %v1174
  %1686 = vmatpush1.bf16.msra.mxu0 %v1173
  %1687 = vmatprep.subr.bf16.mxu0 %v1176
  %1688 = vmatpush1.bf16.msra.mxu0 %v1175
  %1689 = vmatprep.subr.bf16.mxu0 %v1178
  %1690 = vmatpush1.bf16.msra.mxu0 %v1177
  %1691 = vmatprep.subr.bf16.mxu0 %v1180
  %1692 = vmatpush1.bf16.msra.mxu0 %v1179
  %1693 = vmatprep.subr.bf16.mxu0 %v1182
  %1694 = vmatpush1.bf16.msra.mxu0 %v1181
  %1695 = vmatprep.subr.bf16.mxu0 %v1184
  %1696 = vmatpush1.bf16.msra.mxu0 %v1183
  %1697 = vmatprep.subr.bf16.mxu0 %v1186
  %1698 = vmatpush1.bf16.msra.mxu0 %v1185
  %1699 = vmatprep.subr.bf16.mxu0 %v1188
  %1700 = vmatpush1.bf16.msra.mxu0 %v1187
  %1701 = vmatprep.subr.bf16.mxu0 %v1190
  %1702 = vmatpush1.bf16.msra.mxu0 %v1189
  %1703 = vmatprep.subr.bf16.mxu0 %v1192
  %1704 = vmatpush1.bf16.msra.mxu0 %v1191
  %1705 = vmatprep.mubr.bf16.mxu0 %v362
  %1706 = vmatmul.mubr.bf16.gmra.mrb[0].mxu0 %v361
  %v1707 = vpop.f32.mrb[0].mxu0
  %v1708 = vadd.f32 %v306, %v1707
  %v1709 = vpop.f32.mrb[0].mxu0
  %v1710 = vadd.f32 %v310, %v1709
  %v1711 = vpop.f32.mrb[0].mxu0
  %v1712 = vadd.f32 %v306, %v1711
  %v1713 = vpop.f32.mrb[0].mxu0
  %v1714 = vadd.f32 %v310, %v1713
  %1715 = vdwg.mxu0
  %1716 = vmatprep.subr.bf16.mxu0 %v1194
  %1717 = vmatpush1.bf16.msra.mxu0 %v1193
  %1718 = vmatprep.subr.bf16.mxu0 %v1196
  %1719 = vmatpush1.bf16.msra.mxu0 %v1195
  %1720 = vmatprep.subr.bf16.mxu0 %v1198
  %1721 = vmatpush1.bf16.msra.mxu0 %v1197
  %1722 = vmatprep.subr.bf16.mxu0 %v1200
  %1723 = vmatpush1.bf16.msra.mxu0 %v1199
  %1724 = vmatprep.subr.bf16.mxu0 %v1202
  %1725 = vmatpush1.bf16.msra.mxu0 %v1201
  %1726 = vmatprep.subr.bf16.mxu0 %v1204
  %1727 = vmatpush1.bf16.msra.mxu0 %v1203
  %1728 = vmatprep.subr.bf16.mxu0 %v1206
  %1729 = vmatpush1.bf16.msra.mxu0 %v1205
  %1730 = vmatprep.subr.bf16.mxu0 %v1208
  %1731 = vmatpush1.bf16.msra.mxu0 %v1207
  %1732 = vmatprep.subr.bf16.mxu0 %v1210
  %1733 = vmatpush1.bf16.msra.mxu0 %v1209
  %1734 = vmatprep.subr.bf16.mxu0 %v1212
  %1735 = vmatpush1.bf16.msra.mxu0 %v1211
  %1736 = vmatprep.subr.bf16.mxu0 %v1214
  %1737 = vmatpush1.bf16.msra.mxu0 %v1213
  %1738 = vmatprep.subr.bf16.mxu0 %v1216
  %1739 = vmatpush1.bf16.msra.mxu0 %v1215
  %1740 = vmatprep.subr.bf16.mxu0 %v1218
  %1741 = vmatpush1.bf16.msra.mxu0 %v1217
  %1742 = vmatprep.subr.bf16.mxu0 %v1220
  %1743 = vmatpush1.bf16.msra.mxu0 %v1219
  %1744 = vmatprep.subr.bf16.mxu0 %v1222
  %1745 = vmatpush1.bf16.msra.mxu0 %v1221
  %1746 = vmatprep.subr.bf16.mxu0 %v1224
  %1747 = vmatpush1.bf16.msra.mxu0 %v1223
  %1748 = vmatprep.mubr.bf16.mxu0 %v364
  %1749 = vmatmul.mubr.bf16.gmra.mrb[0].mxu0 %v363
  %v1750 = vpop.f32.mrb[0].mxu0
  %v1751 = vadd.f32 %v1708, %v1750
  %v1752 = vpop.f32.mrb[0].mxu0
  %v1753 = vadd.f32 %v1710, %v1752
  %v1754 = vpop.f32.mrb[0].mxu0
  %v1755 = vadd.f32 %v1712, %v1754
  %v1756 = vpop.f32.mrb[0].mxu0
  %v1757 = vadd.f32 %v1714, %v1756
  %1758 = vdwg.mxu0
  %1759 = vmatprep.subr.bf16.mxu0 %v1226
  %1760 = vmatpush1.bf16.msra.mxu0 %v1225
  %1761 = vmatprep.subr.bf16.mxu0 %v1228
  %1762 = vmatpush1.bf16.msra.mxu0 %v1227
  %1763 = vmatprep.subr.bf16.mxu0 %v1230
  %1764 = vmatpush1.bf16.msra.mxu0 %v1229
  %1765 = vmatprep.subr.bf16.mxu0 %v1232
  %1766 = vmatpush1.bf16.msra.mxu0 %v1231
  %1767 = vmatprep.subr.bf16.mxu0 %v1234
  %1768 = vmatpush1.bf16.msra.mxu0 %v1233
  %1769 = vmatprep.subr.bf16.mxu0 %v1236
  %1770 = vmatpush1.bf16.msra.mxu0 %v1235
  %1771 = vmatprep.subr.bf16.mxu0 %v1238
  %1772 = vmatpush1.bf16.msra.mxu0 %v1237
  %1773 = vmatprep.subr.bf16.mxu0 %v1240
  %1774 = vmatpush1.bf16.msra.mxu0 %v1239
  %1775 = vmatprep.subr.bf16.mxu0 %v1242
  %1776 = vmatpush1.bf16.msra.mxu0 %v1241
  %1777 = vmatprep.subr.bf16.mxu0 %v1244
  %1778 = vmatpush1.bf16.msra.mxu0 %v1243
  %1779 = vmatprep.subr.bf16.mxu0 %v1246
  %1780 = vmatpush1.bf16.msra.mxu0 %v1245
  %1781 = vmatprep.subr.bf16.mxu0 %v1248
  %1782 = vmatpush1.bf16.msra.mxu0 %v1247
  %1783 = vmatprep.subr.bf16.mxu0 %v1250
  %1784 = vmatpush1.bf16.msra.mxu0 %v1249
  %1785 = vmatprep.subr.bf16.mxu0 %v1252
  %1786 = vmatpush1.bf16.msra.mxu0 %v1251
  %1787 = vmatprep.subr.bf16.mxu0 %v1254
  %1788 = vmatpush1.bf16.msra.mxu0 %v1253
  %1789 = vmatprep.subr.bf16.mxu0 %v1256
  %1790 = vmatpush1.bf16.msra.mxu0 %v1255
  %1791 = vmatprep.mubr.bf16.mxu0 %v366
  %1792 = vmatmul.mubr.bf16.gmra.mrb[0].mxu0 %v365
  %v1793 = vpop.f32.mrb[0].mxu0
  %v1794 = vadd.f32 %v1751, %v1793
  %v1795 = vpop.f32.mrb[0].mxu0
  %v1796 = vadd.f32 %v1753, %v1795
  %v1797 = vpop.f32.mrb[0].mxu0
  %v1798 = vadd.f32 %v1755, %v1797
  %v1799 = vpop.f32.mrb[0].mxu0
  %v1800 = vadd.f32 %v1757, %v1799
  %1801 = vdwg.mxu0
  %1802 = vmatprep.subr.bf16.mxu0 %v1258
  %1803 = vmatpush1.bf16.msra.mxu0 %v1257
  %1804 = vmatprep.subr.bf16.mxu0 %v1260
  %1805 = vmatpush1.bf16.msra.mxu0 %v1259
  %1806 = vmatprep.subr.bf16.mxu0 %v1262
  %1807 = vmatpush1.bf16.msra.mxu0 %v1261
  %1808 = vmatprep.subr.bf16.mxu0 %v1264
  %1809 = vmatpush1.bf16.msra.mxu0 %v1263
  %1810 = vmatprep.subr.bf16.mxu0 %v1266
  %1811 = vmatpush1.bf16.msra.mxu0 %v1265
  %1812 = vmatprep.subr.bf16.mxu0 %v1268
  %1813 = vmatpush1.bf16.msra.mxu0 %v1267
  %1814 = vmatprep.subr.bf16.mxu0 %v1270
  %1815 = vmatpush1.bf16.msra.mxu0 %v1269
  %1816 = vmatprep.subr.bf16.mxu0 %v1272
  %1817 = vmatpush1.bf16.msra.mxu0 %v1271
  %1818 = vmatprep.subr.bf16.mxu0 %v1274
  %1819 = vmatpush1.bf16.msra.mxu0 %v1273
  %1820 = vmatprep.subr.bf16.mxu0 %v1276
  %1821 = vmatpush1.bf16.msra.mxu0 %v1275
  %1822 = vmatprep.subr.bf16.mxu0 %v1278
  %1823 = vmatpush1.bf16.msra.mxu0 %v1277
  %1824 = vmatprep.subr.bf16.mxu0 %v1280
  %1825 = vmatpush1.bf16.msra.mxu0 %v1279
  %1826 = vmatprep.subr.bf16.mxu0 %v1282
  %1827 = vmatpush1.bf16.msra.mxu0 %v1281
  %1828 = vmatprep.subr.bf16.mxu0 %v1284
  %1829 = vmatpush1.bf16.msra.mxu0 %v1283
  %1830 = vmatprep.subr.bf16.mxu0 %v1286
  %1831 = vmatpush1.bf16.msra.mxu0 %v1285
  %1832 = vmatprep.subr.bf16.mxu0 %v1288
  %1833 = vmatpush1.bf16.msra.mxu0 %v1287
  %1834 = vmatprep.mubr.bf16.mxu0 %v368
  %1835 = vmatmul.mubr.bf16.gmra.mrb[0].mxu0 %v367
  %v1836 = vpop.f32.mrb[0].mxu0
  %v1837 = vadd.f32 %v1794, %v1836
  %v1838 = vpop.f32.mrb[0].mxu0
  %v1839 = vadd.f32 %v1796, %v1838
  %v1840 = vpop.f32.mrb[0].mxu0
  %v1841 = vadd.f32 %v1798, %v1840
  %v1842 = vpop.f32.mrb[0].mxu0
  %v1843 = vadd.f32 %v1800, %v1842
  %1844 = vdwg.mxu0
  %1845 = vmatprep.subr.bf16.mxu0 %v1290
  %1846 = vmatpush1.bf16.msra.mxu0 %v1289
  %1847 = vmatprep.subr.bf16.mxu0 %v1292
  %1848 = vmatpush1.bf16.msra.mxu0 %v1291
  %1849 = vmatprep.subr.bf16.mxu0 %v1294
  %1850 = vmatpush1.bf16.msra.mxu0 %v1293
  %1851 = vmatprep.subr.bf16.mxu0 %v1296
  %1852 = vmatpush1.bf16.msra.mxu0 %v1295
  %1853 = vmatprep.subr.bf16.mxu0 %v1298
  %1854 = vmatpush1.bf16.msra.mxu0 %v1297
  %1855 = vmatprep.subr.bf16.mxu0 %v1300
  %1856 = vmatpush1.bf16.msra.mxu0 %v1299
  %1857 = vmatprep.subr.bf16.mxu0 %v1302
  %1858 = vmatpush1.bf16.msra.mxu0 %v1301
  %1859 = vmatprep.subr.bf16.mxu0 %v1304
  %1860 = vmatpush1.bf16.msra.mxu0 %v1303
  %1861 = vmatprep.subr.bf16.mxu0 %v1306
  %1862 = vmatpush1.bf16.msra.mxu0 %v1305
  %1863 = vmatprep.subr.bf16.mxu0 %v1308
  %1864 = vmatpush1.bf16.msra.mxu0 %v1307
  %1865 = vmatprep.subr.bf16.mxu0 %v1310
  %1866 = vmatpush1.bf16.msra.mxu0 %v1309
  %1867 = vmatprep.subr.bf16.mxu0 %v1312
  %1868 = vmatpush1.bf16.msra.mxu0 %v1311
  %1869 = vmatprep.subr.bf16.mxu0 %v1314
  %1870 = vmatpush1.bf16.msra.mxu0 %v1313
  %1871 = vmatprep.subr.bf16.mxu0 %v1316
  %1872 = vmatpush1.bf16.msra.mxu0 %v1315
  %1873 = vmatprep.subr.bf16.mxu0 %v1318
  %1874 = vmatpush1.bf16.msra.mxu0 %v1317
  %1875 = vmatprep.subr.bf16.mxu0 %v1320
  %1876 = vmatpush1.bf16.msra.mxu0 %v1319
  %1877 = vmatprep.mubr.bf16.mxu0 %v370
  %1878 = vmatmul.mubr.bf16.gmra.mrb[0].mxu0 %v369
  %v1879 = vpop.f32.mrb[0].mxu0
  %v1880 = vadd.f32 %v1837, %v1879
  %v1881 = vpop.f32.mrb[0].mxu0
  %v1882 = vadd.f32 %v1839, %v1881
  %v1883 = vpop.f32.mrb[0].mxu0
  %v1884 = vadd.f32 %v1841, %v1883
  %v1885 = vpop.f32.mrb[0].mxu0
  %v1886 = vadd.f32 %v1843, %v1885
  %1887 = vdwg.mxu0
  %1888 = vmatprep.subr.bf16.mxu0 %v1322
  %1889 = vmatpush1.bf16.msra.mxu0 %v1321
  %1890 = vmatprep.subr.bf16.mxu0 %v1324
  %1891 = vmatpush1.bf16.msra.mxu0 %v1323
  %1892 = vmatprep.subr.bf16.mxu0 %v1326
  %1893 = vmatpush1.bf16.msra.mxu0 %v1325
  %1894 = vmatprep.subr.bf16.mxu0 %v1328
  %1895 = vmatpush1.bf16.msra.mxu0 %v1327
  %1896 = vmatprep.subr.bf16.mxu0 %v1330
  %1897 = vmatpush1.bf16.msra.mxu0 %v1329
  %1898 = vmatprep.subr.bf16.mxu0 %v1332
  %1899 = vmatpush1.bf16.msra.mxu0 %v1331
  %1900 = vmatprep.subr.bf16.mxu0 %v1334
  %1901 = vmatpush1.bf16.msra.mxu0 %v1333
  %1902 = vmatprep.subr.bf16.mxu0 %v1336
  %1903 = vmatpush1.bf16.msra.mxu0 %v1335
  %1904 = vmatprep.subr.bf16.mxu0 %v1338
  %1905 = vmatpush1.bf16.msra.mxu0 %v1337
  %1906 = vmatprep.subr.bf16.mxu0 %v1340
  %1907 = vmatpush1.bf16.msra.mxu0 %v1339
  %1908 = vmatprep.subr.bf16.mxu0 %v1342
  %1909 = vmatpush1.bf16.msra.mxu0 %v1341
  %1910 = vmatprep.subr.bf16.mxu0 %v1344
  %1911 = vmatpush1.bf16.msra.mxu0 %v1343
  %1912 = vmatprep.subr.bf16.mxu0 %v1346
  %1913 = vmatpush1.bf16.msra.mxu0 %v1345
  %1914 = vmatprep.subr.bf16.mxu0 %v1348
  %1915 = vmatpush1.bf16.msra.mxu0 %v1347
  %1916 = vmatprep.subr.bf16.mxu0 %v1350
  %1917 = vmatpush1.bf16.msra.mxu0 %v1349
  %1918 = vmatprep.subr.bf16.mxu0 %v1352
  %1919 = vmatpush1.bf16.msra.mxu0 %v1351
  %1920 = vmatprep.mubr.bf16.mxu0 %v372
  %1921 = vmatmul.mubr.bf16.gmra.mrb[0].mxu0 %v371
  %v1922 = vpop.f32.mrb[0].mxu0
  %v1923 = vadd.f32 %v1880, %v1922
  %v1924 = vpop.f32.mrb[0].mxu0
  %v1925 = vadd.f32 %v1882, %v1924
  %v1926 = vpop.f32.mrb[0].mxu0
  %v1927 = vadd.f32 %v1884, %v1926
  %v1928 = vpop.f32.mrb[0].mxu0
  %v1929 = vadd.f32 %v1886, %v1928
  %1930 = vdwg.mxu0
  %1931 = vmatprep.subr.bf16.mxu0 %v1354
  %1932 = vmatpush1.bf16.msra.mxu0 %v1353
  %1933 = vmatprep.subr.bf16.mxu0 %v1356
  %1934 = vmatpush1.bf16.msra.mxu0 %v1355
  %1935 = vmatprep.subr.bf16.mxu0 %v1358
  %1936 = vmatpush1.bf16.msra.mxu0 %v1357
  %1937 = vmatprep.subr.bf16.mxu0 %v1360
  %1938 = vmatpush1.bf16.msra.mxu0 %v1359
  %1939 = vmatprep.subr.bf16.mxu0 %v1362
  %1940 = vmatpush1.bf16.msra.mxu0 %v1361
  %1941 = vmatprep.subr.bf16.mxu0 %v1364
  %1942 = vmatpush1.bf16.msra.mxu0 %v1363
  %1943 = vmatprep.subr.bf16.mxu0 %v1366
  %1944 = vmatpush1.bf16.msra.mxu0 %v1365
  %1945 = vmatprep.subr.bf16.mxu0 %v1368
  %1946 = vmatpush1.bf16.msra.mxu0 %v1367
  %1947 = vmatprep.subr.bf16.mxu0 %v1370
  %1948 = vmatpush1.bf16.msra.mxu0 %v1369
  %1949 = vmatprep.subr.bf16.mxu0 %v1372
  %1950 = vmatpush1.bf16.msra.mxu0 %v1371
  %1951 = vmatprep.subr.bf16.mxu0 %v1374
  %1952 = vmatpush1.bf16.msra.mxu0 %v1373
  %1953 = vmatprep.subr.bf16.mxu0 %v1376
  %1954 = vmatpush1.bf16.msra.mxu0 %v1375
  %1955 = vmatprep.subr.bf16.mxu0 %v1378
  %1956 = vmatpush1.bf16.msra.mxu0 %v1377
  %1957 = vmatprep.subr.bf16.mxu0 %v1380
  %1958 = vmatpush1.bf16.msra.mxu0 %v1379
  %1959 = vmatprep.subr.bf16.mxu0 %v1382
  %1960 = vmatpush1.bf16.msra.mxu0 %v1381
  %1961 = vmatprep.subr.bf16.mxu0 %v1384
  %1962 = vmatpush1.bf16.msra.mxu0 %v1383
  %1963 = vmatprep.mubr.bf16.mxu0 %v374
  %1964 = vmatmul.mubr.bf16.gmra.mrb[0].mxu0 %v373
  %v1965 = vpop.f32.mrb[0].mxu0
  %v1966 = vadd.f32 %v1923, %v1965
  %v1967 = vpop.f32.mrb[0].mxu0
  %v1968 = vadd.f32 %v1925, %v1967
  %v1969 = vpop.f32.mrb[0].mxu0
  %v1970 = vadd.f32 %v1927, %v1969
  %v1971 = vpop.f32.mrb[0].mxu0
  %v1972 = vadd.f32 %v1929, %v1971
  %1973 = vdwg.mxu0
  %1974 = vmatprep.subr.bf16.mxu0 %v1386
  %1975 = vmatpush1.bf16.msra.mxu0 %v1385
  %1976 = vmatprep.subr.bf16.mxu0 %v1388
  %1977 = vmatpush1.bf16.msra.mxu0 %v1387
  %1978 = vmatprep.subr.bf16.mxu0 %v1390
  %1979 = vmatpush1.bf16.msra.mxu0 %v1389
  %1980 = vmatprep.subr.bf16.mxu0 %v1392
  %1981 = vmatpush1.bf16.msra.mxu0 %v1391
  %1982 = vmatprep.subr.bf16.mxu0 %v1394
  %1983 = vmatpush1.bf16.msra.mxu0 %v1393
  %1984 = vmatprep.subr.bf16.mxu0 %v1396
  %1985 = vmatpush1.bf16.msra.mxu0 %v1395
  %1986 = vmatprep.subr.bf16.mxu0 %v1398
  %1987 = vmatpush1.bf16.msra.mxu0 %v1397
  %1988 = vmatprep.subr.bf16.mxu0 %v1400
  %1989 = vmatpush1.bf16.msra.mxu0 %v1399
  %1990 = vmatprep.subr.bf16.mxu0 %v1402
  %1991 = vmatpush1.bf16.msra.mxu0 %v1401
  %1992 = vmatprep.subr.bf16.mxu0 %v1404
  %1993 = vmatpush1.bf16.msra.mxu0 %v1403
  %1994 = vmatprep.subr.bf16.mxu0 %v1406
  %1995 = vmatpush1.bf16.msra.mxu0 %v1405
  %1996 = vmatprep.subr.bf16.mxu0 %v1408
  %1997 = vmatpush1.bf16.msra.mxu0 %v1407
  %1998 = vmatprep.subr.bf16.mxu0 %v1410
  %1999 = vmatpush1.bf16.msra.mxu0 %v1409
  %2000 = vmatprep.subr.bf16.mxu0 %v1412
  %2001 = vmatpush1.bf16.msra.mxu0 %v1411
  %2002 = vmatprep.subr.bf16.mxu0 %v1414
  %2003 = vmatpush1.bf16.msra.mxu0 %v1413
  %2004 = vmatprep.subr.bf16.mxu0 %v1416
  %2005 = vmatpush1.bf16.msra.mxu0 %v1415
  %2006 = vmatprep.mubr.bf16.mxu0 %v376
  %2007 = vmatmul.mubr.bf16.gmra.mrb[0].mxu0 %v375
  %v2008 = vpop.f32.mrb[0].mxu0
  %v2009 = vadd.f32 %v1966, %v2008
  %v2010 = vpop.f32.mrb[0].mxu0
  %v2011 = vadd.f32 %v1968, %v2010
  %v2012 = vpop.f32.mrb[0].mxu0
  %v2013 = vadd.f32 %v1970, %v2012
  %v2014 = vpop.f32.mrb[0].mxu0
  %v2015 = vadd.f32 %v1972, %v2014
  %2016 = vdwg.mxu0
  %v2017 = vmax.f32 %v2009, 0.0
  %v2018 = vmax.f32 %v2011, 0.0
  %v2019 = vmax.f32 %v2013, 0.0
  %v2020 = vmax.f32 %v2015, 0.0
  %v2021 = vpack.c.bf16 %v2019, %v2017
  %v2022 = vpack.c.bf16 %v2020, %v2018
  %v2023 = vld [vmem:[%s3] sm:$0xf]
  %v2024 = vld [vmem:[%s3 + $0x4] sm:$0xf]
  %v2025 = vld [vmem:[%s3 + $0x8] sm:$0xf]
  %v2026 = vld [vmem:[%s3 + $0xc] sm:$0xf]
  %v2027 = vld [vmem:[%s3 + $0x10] sm:$0xf]
  %v2028 = vld [vmem:[%s3 + $0x14] sm:$0xf]
  %v2029 = vld [vmem:[%s3 + $0x18] sm:$0xf]
  %v2030 = vld [vmem:[%s3 + $0x1c] sm:$0xf]
  %v2031 = vld [vmem:[%s3 + $0x20] sm:$0xf]
  %v2032 = vld [vmem:[%s3 + $0x24] sm:$0xf]
  %v2033 = vld [vmem:[%s3 + $0x28] sm:$0xf]
  %v2034 = vld [vmem:[%s3 + $0x2c] sm:$0xf]
  %v2035 = vld [vmem:[%s3 + $0x30] sm:$0xf]
  %v2036 = vld [vmem:[%s3 + $0x34] sm:$0xf]
  %v2037 = vld [vmem:[%s3 + $0x38] sm:$0xf]
  %v2038 = vld [vmem:[%s3 + $0x3c] sm:$0xf]
  %v2039 = vld [vmem:[%s3 + $0x40] sm:$0xf]
  %v2040 = vld [vmem:[%s3 + $0x44] sm:$0xf]
  %v2041 = vld [vmem:[%s3 + $0x48] sm:$0xf]
  %v2042 = vld [vmem:[%s3 + $0x4c] sm:$0xf]
  %v2043 = vld [vmem:[%s3 + $0x50] sm:$0xf]
  %v2044 = vld [vmem:[%s3 + $0x54] sm:$0xf]
  %v2045 = vld [vmem:[%s3 + $0x58] sm:$0xf]
  %v2046 = vld [vmem:[%s3 + $0x5c] sm:$0xf]
  %v2047 = vld [vmem:[%s3 + $0x60] sm:$0xf]
  %v2048 = vld [vmem:[%s3 + $0x64] sm:$0xf]
  %v2049 = vld [vmem:[%s3 + $0x68] sm:$0xf]
  %v2050 = vld [vmem:[%s3 + $0x6c] sm:$0xf]
  %v2051 = vld [vmem:[%s3 + $0x70] sm:$0xf]
  %v2052 = vld [vmem:[%s3 + $0x74] sm:$0xf]
  %v2053 = vld [vmem:[%s3 + $0x78] sm:$0xf]
  %v2054 = vld [vmem:[%s3 + $0x7c] sm:$0xf]
  %v2055 = vld [vmem:[%s4] sm:$0x1]
  %v2057 = vlaneseq
  %v2058 = vshrl.u32 %v2057, 7
  %v2059 = vsub.s32 0, %v2058
  %v2060 = vrot.slane %v2055, %v2059
  %v2094 = vunpack.c.l.b16 %v2023
  %v2095 = vunpack.c.l.b16 %v2024
  %v2096 = vunpack.c.l.b16 %v2025
  %v2097 = vunpack.c.l.b16 %v2026
  %v2098 = vunpack.c.l.b16 %v2027
  %v2099 = vunpack.c.l.b16 %v2028
  %v2100 = vunpack.c.l.b16 %v2029
  %v2101 = vunpack.c.l.b16 %v2030
  %v2102 = vunpack.c.l.b16 %v2031
  %v2103 = vunpack.c.l.b16 %v2032
  %v2104 = vunpack.c.l.b16 %v2033
  %v2105 = vunpack.c.l.b16 %v2034
  %v2106 = vunpack.c.l.b16 %v2035
  %v2107 = vunpack.c.l.b16 %v2036
  %v2108 = vunpack.c.l.b16 %v2037
  %v2109 = vunpack.c.l.b16 %v2038
  %v2110 = vunpack.c.l.b16 %v2039
  %v2111 = vunpack.c.l.b16 %v2040
  %v2112 = vunpack.c.l.b16 %v2041
  %v2113 = vunpack.c.l.b16 %v2042
  %v2114 = vunpack.c.l.b16 %v2043
  %v2115 = vunpack.c.l.b16 %v2044
  %v2116 = vunpack.c.l.b16 %v2045
  %v2117 = vunpack.c.l.b16 %v2046
  %v2118 = vunpack.c.l.b16 %v2047
  %v2119 = vunpack.c.l.b16 %v2048
  %v2120 = vunpack.c.l.b16 %v2049
  %v2121 = vunpack.c.l.b16 %v2050
  %v2122 = vunpack.c.l.b16 %v2051
  %v2123 = vunpack.c.l.b16 %v2052
  %v2124 = vunpack.c.l.b16 %v2053
  %v2125 = vunpack.c.l.b16 %v2054
  %v2126 = vpack.c.b16 %v2095, %v2094
  %v2127 = vpack.c.b16 %v2097, %v2096
  %v2128 = vpack.c.b16 %v2099, %v2098
  %v2129 = vpack.c.b16 %v2101, %v2100
  %v2130 = vpack.c.b16 %v2103, %v2102
  %v2131 = vpack.c.b16 %v2105, %v2104
  %v2132 = vpack.c.b16 %v2107, %v2106
  %v2133 = vpack.c.b16 %v2109, %v2108
  %v2134 = vpack.c.b16 %v2111, %v2110
  %v2135 = vpack.c.b16 %v2113, %v2112
  %v2136 = vpack.c.b16 %v2115, %v2114
  %v2137 = vpack.c.b16 %v2117, %v2116
  %v2138 = vpack.c.b16 %v2119, %v2118
  %v2139 = vpack.c.b16 %v2121, %v2120
  %v2140 = vpack.c.b16 %v2123, %v2122
  %v2141 = vpack.c.b16 %v2125, %v2124
  %2158 = vmatprep.subr.bf16.mxu0 0
  %2159 = vmatpush1.bf16.msra.mxu0 %v2126
  %2160 = vmatprep.subr.bf16.mxu0 0
  %2161 = vmatpush1.bf16.msra.mxu0 %v2127
  %2162 = vmatprep.subr.bf16.mxu0 0
  %2163 = vmatpush1.bf16.msra.mxu0 %v2128
  %2164 = vmatprep.subr.bf16.mxu0 0
  %2165 = vmatpush1.bf16.msra.mxu0 %v2129
  %2166 = vmatprep.subr.bf16.mxu0 0
  %2167 = vmatpush1.bf16.msra.mxu0 %v2130
  %2168 = vmatprep.subr.bf16.mxu0 0
  %2169 = vmatpush1.bf16.msra.mxu0 %v2131
  %2170 = vmatprep.subr.bf16.mxu0 0
  %2171 = vmatpush1.bf16.msra.mxu0 %v2132
  %2172 = vmatprep.subr.bf16.mxu0 0
  %2173 = vmatpush1.bf16.msra.mxu0 %v2133
  %2174 = vmatprep.subr.bf16.mxu0 0
  %2175 = vmatpush1.bf16.msra.mxu0 %v2134
  %2176 = vmatprep.subr.bf16.mxu0 0
  %2177 = vmatpush1.bf16.msra.mxu0 %v2135
  %2178 = vmatprep.subr.bf16.mxu0 0
  %2179 = vmatpush1.bf16.msra.mxu0 %v2136
  %2180 = vmatprep.subr.bf16.mxu0 0
  %2181 = vmatpush1.bf16.msra.mxu0 %v2137
  %2182 = vmatprep.subr.bf16.mxu0 0
  %2183 = vmatpush1.bf16.msra.mxu0 %v2138
  %2184 = vmatprep.subr.bf16.mxu0 0
  %2185 = vmatpush1.bf16.msra.mxu0 %v2139
  %2186 = vmatprep.subr.bf16.mxu0 0
  %2187 = vmatpush1.bf16.msra.mxu0 %v2140
  %2188 = vmatprep.subr.bf16.mxu0 0
  %2189 = vmatpush1.bf16.msra.mxu0 %v2141
  %2190 = vmatprep.mubr.bf16.mxu0 %v2022
  %2191 = vmatmul.mubr.bf16.gmra.mrb[0].mxu0 %v2021
  %v2192 = vpop.f32.mrb[0].mxu0
  %v2193 = vadd.f32 %v2060, %v2192
  %v2194 = vpop.f32.mrb[0].mxu0
  %v2195 = vpop.f32.mrb[0].mxu0
  %v2196 = vadd.f32 %v2060, %v2195
  %v2197 = vpop.f32.mrb[0].mxu0
  %2198 = vdwg.mxu0
  %v2199 = vmax.f32 %v2193, 0.0
  %v2200 = vmax.f32 %v2196, 0.0
  %v2201 = vld [vmem:[%s5] sm:$0x1]
  %v2203 = vlaneseq
  %v2204 = vshrl.u32 %v2203, 7
  %v2205 = vsub.s32 0, %v2204
  %v2206 = vrot.slane %v2201, %v2205
  %v2208 = vmul.f32 %v2199, %v2206
  %v2209 = vmul.f32 %v2200, %v2206
  %2210 = vadd.xlane.f32.xlu0 %v2208
  %v2211 = vpop.xlane.xlu0 %2210
  %2212 = vadd.xlane.f32.xlu0 %v2209
  %v2213 = vpop.xlane.xlu0 %2212
  %v2214 = vld [vmem:[#allocation2] sm:$0x1]
  %v2216 = vlaneseq
  %v2217 = vshrl.u32 %v2216, 7
  %v2218 = vsub.s32 0, %v2217
  %v2219 = vrot.slane %v2214, %v2218
  %v2221 = vadd.f32 %v2211, %v2219
  %v2222 = vadd.f32 %v2213, %v2219
  %v2223 = vxor.u32 %v2221, 2147483648
  %v2224 = vxor.u32 %v2222, 2147483648
  %v2225 = vmul.f32 %v2223, 1.442695
  %v2226 = vpow.pop %v2225
  %v2227 = vmul.f32 %v2224, 1.442695
  %v2228 = vpow.pop %v2227
  %v2229 = vadd.f32 %v2226, 1.0
  %v2230 = vadd.f32 %v2228, 1.0
  %v2231 = vrcp.pop %v2229
  %v2232 = vmul.f32 1.0, %v2231
  %v2233 = vrcp.pop %v2230
  %v2234 = vmul.f32 1.0, %v2233
  %vm2235 = vcmask 7168
  %2236 = vst.msk [vmem:[%s7] sm:$0xff] %vm2235, %v2232
  %2237 = vst.msk [vmem:[%s7 + $0x8] sm:$0xff] %vm2235, %v2234
  // Predicated region
  $region30: #{gender_classifier_cnn_forward.3} parent=0 // pred_check
    _
  $region31: #{gender_classifier_cnn_forward.3} parent=0 // pred_check_branch
    %2239 = sbr.rel (0) target = $region33
  $region32: #{gender_classifier_cnn_forward.3} parent=0 // pred_region
    _
  $region33: #{gender_classifier_cnn_forward.3} parent=0 // pred_fallthru
    _
  // Predicated region
  $region34: #{gender_classifier_cnn_forward.3} parent=0 // pred_check
    _
  $region35: #{gender_classifier_cnn_forward.3} parent=0 // pred_check_branch
    %2241 = sbr.rel (0) target = $region37
  $region36: #{gender_classifier_cnn_forward.3} parent=0 // pred_region
    _
  $region37: #{gender_classifier_cnn_forward.3} parent=0 // pred_fallthru
    _

</llo_original>
